<compile_context>
chip_gen: v6e
topology: v6e:2x2x1
jax: 0.10.0
libtpu: 0.0.40
codegen_flags: <defaults>
</compile_context>

<pallas_src>
import functools

import jax
import jax.numpy as jnp
from jax.experimental import pallas as pl
from jax.experimental.pallas import tpu as pltpu


def _round_up(x, m):
    return ((x + m - 1) // m) * m


# ---------------------------------------------------------------------------
# Fused Pallas kernel: encoder (layer-major) + autoregressive decoder + Linear.
# ---------------------------------------------------------------------------
def seq2seq_kernel(x_ref, dec0_ref,
                   enc_wi_ref, enc_wh_ref, enc_bi_ref, enc_bh_ref,
                   dec_w_ref, dec_b_ref, lin_w_ref, lin_b_ref,
                   out_ref):
    """Whole Seq2Seq forward in one kernel (no grid, everything VMEM-resident).

    Padded shapes (HP = round_up(hidden*30, 128), BP = round_up(batch, 8)):
      x_ref      (T_in*BP, HP)     encoder input, time-major, zero-padded
      dec0_ref   (BP, HP)          first decoder input (last_location)
      enc_wi_ref (L, HP, 3*HP)     encoder x-side weights, gates [r|z|n]
      enc_wh_ref (L, HP, 3*HP)     encoder h-side weights
      enc_bi_ref (L, BP, 3*HP)     encoder x-side biases, pre-broadcast
      enc_bh_ref (L, BP, 3*HP)     encoder h-side biases, pre-broadcast
      dec_w_ref  (L, 2*HP, 4*HP)   decoder fused [x|h] weights [r|z|n_i|n_h]
      dec_b_ref  (L, BP, 4*HP)     decoder fused biases, pre-broadcast
      lin_w_ref  (HP, HP)          output Linear (in x out), zero-padded
      lin_b_ref  (BP, HP)          Linear bias, pre-broadcast
      out_ref    (P, BP, HP)
    """
    L = enc_wi_ref.shape[0]
    HP = enc_wh_ref.shape[1]
    P, BP, _ = out_ref.shape
    T_in = x_ref.shape[0] // BP
    f32 = jnp.float32

    # ---- Encoder: layer-major; one batched x-side matmul per layer, only the
    # h-side matmul stays on the serial dependency chain.
    x_all = x_ref[...]                                  # (T_in*BP, HP)
    enc_h = []
    for l in range(L):
        wi = enc_wi_ref[l]
        wh = enc_wh_ref[l]
        bi = enc_bi_ref[l]                              # (BP, 3*HP)
        bh = enc_bh_ref[l]
        gi_all = jnp.dot(x_all, wi, preferred_element_type=f32)  # (T_in*BP, 3*HP)
        outs = []
        h = None
        for t in range(T_in):
            gi = gi_all[t * BP:(t + 1) * BP] + bi
            if h is None:
                # t == 0: hidden is exactly zero -> gh = bh, h' = (1 - z) * n.
                r = jax.nn.sigmoid(gi[:, :HP] + bh[:, :HP])
                z = jax.nn.sigmoid(gi[:, HP:2 * HP] + bh[:, HP:2 * HP])
                n = jnp.tanh(gi[:, 2 * HP:] + r * bh[:, 2 * HP:])
                h = (1.0 - z) * n
            else:
                gh = jnp.dot(h, wh, preferred_element_type=f32) + bh
                r = jax.nn.sigmoid(gi[:, :HP] + gh[:, :HP])
                z = jax.nn.sigmoid(gi[:, HP:2 * HP] + gh[:, HP:2 * HP])
                n = jnp.tanh(gi[:, 2 * HP:] + r * gh[:, 2 * HP:])
                h = (1.0 - z) * n + z * h
            outs.append(h)
        enc_h.append(h)
        if l + 1 < L:
            x_all = jnp.concatenate(outs, axis=0)       # next layer's input

    # ---- Decoder: autoregressive (teacher_forcing_ratio = 0); ONE fused
    # matmul per GRU cell; Linear + residual fused into the same kernel.
    # TODO(synk): nn.Dropout(p=0.5) is identity in eval mode; training-mode
    # dropout mask and the teacher-forcing branch are not implemented.
    dec_w = [dec_w_ref[l] for l in range(L)]
    dec_b = [dec_b_ref[l] for l in range(L)]
    lin_w = lin_w_ref[...]
    lin_b = lin_b_ref[...]
    hidden = list(enc_h)
    dec_in = dec0_ref[...]
    for t in range(P):
        x = dec_in
        for l in range(L):
            h = hidden[l]
            g = jnp.dot(jnp.concatenate([x, h], axis=1), dec_w[l],
                        preferred_element_type=f32) + dec_b[l]
            r = jax.nn.sigmoid(g[:, :HP])
            z = jax.nn.sigmoid(g[:, HP:2 * HP])
            n = jnp.tanh(g[:, 2 * HP:3 * HP] + r * g[:, 3 * HP:])
            h = (1.0 - z) * n + z * h
            hidden[l] = h
            x = h
        out = jnp.dot(x, lin_w, preferred_element_type=f32) + lin_b + dec_in
        out_ref[t] = out
        dec_in = out


_VMEM = pl.BlockSpec(memory_space=pltpu.MemorySpace.VMEM)


# ---------------------------------------------------------------------------
# Wrapper: pad + pre-broadcast once, one pallas_call, slice real region at end.
# ---------------------------------------------------------------------------
def seq2seq_forward(params, in_data, last_location, *, pred_length, out_size):
    """in_data (B, T_in, input_size), last_location (B, 1, out_size)
       -> (B, pred_length, out_size)."""
    B, T_in, input_size = in_data.shape
    L = params["enc_wi"].shape[0]
    HP = params["enc_wh"].shape[1]
    BP = _round_up(max(B, 8), 8)

    # Pad batch -> BP sublanes, features -> HP lanes; time-major flat rows.
    x = jnp.transpose(in_data, (1, 0, 2))                         # (T_in, B, in)
    x = jnp.pad(x, ((0, 0), (0, BP - B), (0, HP - input_size)))
    x = x.reshape(T_in * BP, HP)
    d0 = last_location[:, 0, :]
    d0 = jnp.pad(d0, ((0, BP - B), (0, HP - d0.shape[1])))

    # Pre-broadcast every bias to (BP, width) once (hoisted out of the kernel).
    bcast = lambda b: jnp.broadcast_to(b[:, None, :], (L, BP, b.shape[-1]))
    enc_bi = bcast(params["enc_bi"])
    enc_bh = bcast(params["enc_bh"])
    dec_b = bcast(params["dec_b"])
    lin_b = jnp.broadcast_to(params["lin_b"][None, :], (BP, HP))

    out = pl.pallas_call(
        seq2seq_kernel,
        out_shape=jax.ShapeDtypeStruct((pred_length, BP, HP), jnp.float32),
        in_specs=[_VMEM] * 10,
        out_specs=_VMEM,
    )(x, d0,
      params["enc_wi"], params["enc_wh"], enc_bi, enc_bh,
      params["dec_w"], dec_b, params["lin_w"], lin_b)

    return jnp.transpose(out, (1, 0, 2))[:B, :, :out_size]


# ---------------------------------------------------------------------------
# Parameter init (PyTorch-style uniform(-1/sqrt(H), 1/sqrt(H))) + packing.
# ---------------------------------------------------------------------------
def _init_gru_layer(key, in_dim, hidden):
    k = 1.0 / jnp.sqrt(jnp.float32(hidden))
    ks = jax.random.split(key, 4)
    u = lambda kk, shape: jax.random.uniform(kk, shape, jnp.float32, -k, k)
    return dict(w_ih=u(ks[0], (3 * hidden, in_dim)),
                w_hh=u(ks[1], (3 * hidden, hidden)),
                b_ih=u(ks[2], (3 * hidden,)),
                b_hh=u(ks[3], (3 * hidden,)))


def _pack_enc_layer(raw, H, HP):
    """Encoder layer: gate-concatenated (HP, 3*HP) x-/h-side weights + (3*HP,)
    biases; each gate block individually zero-padded (lane-aligned slices)."""
    def pack_w(w):                                       # (3H, in_dim) PyTorch
        blocks = []
        for g in range(3):
            wg = w[g * H:(g + 1) * H, :].T               # (in_dim, H)
            wg = jnp.pad(wg, ((0, HP - wg.shape[0]), (0, HP - H)))
            blocks.append(wg)
        return jnp.concatenate(blocks, axis=1)           # (HP, 3*HP)

    def pack_b(b):
        return jnp.concatenate(
            [jnp.pad(b[g * H:(g + 1) * H], (0, HP - H)) for g in range(3)])

    return (pack_w(raw["w_ih"]), pack_w(raw["w_hh"]),
            pack_b(raw["b_ih"]), pack_b(raw["b_hh"]))


def _pack_dec_layer(raw, H, HP):
    """Decoder layer: single fused (2*HP, 4*HP) block matrix so one matmul on
    [x|h] yields [r_sum | z_sum | n_i | n_h]; bias pre-combined accordingly."""
    pad_w = lambda w: jnp.pad(w, ((0, HP - w.shape[0]), (0, HP - w.shape[1])))
    wi = [pad_w(raw["w_ih"][g * H:(g + 1) * H, :].T) for g in range(3)]
    wh = [pad_w(raw["w_hh"][g * H:(g + 1) * H, :].T) for g in range(3)]
    zero = jnp.zeros((HP, HP), jnp.float32)
    top = jnp.concatenate([wi[0], wi[1], wi[2], zero], axis=1)   # x rows
    bot = jnp.concatenate([wh[0], wh[1], zero, wh[2]], axis=1)   # h rows
    w_fused = jnp.concatenate([top, bot], axis=0)                # (2HP, 4HP)

    pb = lambda b: jnp.pad(b, (0, HP - H))
    bi = [pb(raw["b_ih"][g * H:(g + 1) * H]) for g in range(3)]
    bh = [pb(raw["b_hh"][g * H:(g + 1) * H]) for g in range(3)]
    b_fused = jnp.concatenate([bi[0] + bh[0], bi[1] + bh[1], bi[2], bh[2]])
    return w_fused, b_fused


def init_seq2seq_params(key, input_size, hidden_size, num_layers):
    H = hidden_size * 30                       # GRU hidden = output_size * 30
    HP = _round_up(H, 128)
    assert input_size <= HP and hidden_size <= HP

    keys = jax.random.split(key, 2 * num_layers + 1)
    enc_raw, dec_raw, enc_pk, dec_pk = [], [], [], []
    for l in range(num_layers):
        enc_in = input_size if l == 0 else H
        dec_in = hidden_size if l == 0 else H
        er = _init_gru_layer(keys[2 * l], enc_in, H)
        dr = _init_gru_layer(keys[2 * l + 1], dec_in, H)
        enc_raw.append(er)
        dec_raw.append(dr)
        enc_pk.append(_pack_enc_layer(er, H, HP))
        dec_pk.append(_pack_dec_layer(dr, H, HP))

    stack = lambda seq, i: jnp.stack([s[i] for s in seq], axis=0)

    # Linear(H -> hidden_size), PyTorch uniform(-1/sqrt(in), 1/sqrt(in)).
    klin = 1.0 / jnp.sqrt(jnp.float32(H))
    kw, kb = jax.random.split(keys[-1])
    lin_w_raw = jax.random.uniform(kw, (hidden_size, H), jnp.float32, -klin, klin)
    lin_b_raw = jax.random.uniform(kb, (hidden_size,), jnp.float32, -klin, klin)
    lin_w = jnp.pad(lin_w_raw.T, ((0, HP - H), (0, HP - hidden_size)))
    lin_b = jnp.pad(lin_b_raw, (0, HP - hidden_size))

    packed = dict(
        enc_wi=stack(enc_pk, 0), enc_wh=stack(enc_pk, 1),
        enc_bi=stack(enc_pk, 2), enc_bh=stack(enc_pk, 3),
        dec_w=stack(dec_pk, 0), dec_b=stack(dec_pk, 1),
        lin_w=lin_w, lin_b=lin_b)
    raw = dict(enc=enc_raw, dec=dec_raw, lin_w=lin_w_raw, lin_b=lin_b_raw)
    return packed, raw


# ---------------------------------------------------------------------------
# Pure-JAX reference on the UNPADDED params (checks Pallas lowering + packing).
# ---------------------------------------------------------------------------
def _gru_cell_ref(x, h, p, H):
    gi = x @ p["w_ih"].T + p["b_ih"]
    gh = h @ p["w_hh"].T + p["b_hh"]
    r = jax.nn.sigmoid(gi[:, :H] + gh[:, :H])
    z = jax.nn.sigmoid(gi[:, H:2 * H] + gh[:, H:2 * H])
    n = jnp.tanh(gi[:, 2 * H:] + r * gh[:, 2 * H:])
    return (1.0 - z) * n + z * h


def seq2seq_ref(raw, in_data, last_location, pred_length):
    enc, dec = raw["enc"], raw["dec"]
    L = len(enc)
    H = enc[0]["w_hh"].shape[1]
    B, T_in, _ = in_data.shape
    hidden = [jnp.zeros((B, H), jnp.float32) for _ in range(L)]
    for t in range(T_in):
        x = in_data[:, t, :]
        for l in range(L):
            hidden[l] = _gru_cell_ref(x, hidden[l], enc[l], H)
            x = hidden[l]
    dec_in = last_location[:, 0, :]
    outs = []
    for _ in range(pred_length):
        x = dec_in
        for l in range(L):
            hidden[l] = _gru_cell_ref(x, hidden[l], dec[l], H)
            x = hidden[l]
        out = x @ raw["lin_w"].T + raw["lin_b"] + dec_in
        outs.append(out)
        dec_in = out
    return jnp.stack(outs, axis=1)


# ---------------------------------------------------------------------------
if __name__ == "__main__":
    input_size = 4
    hidden_size = 4          # GRU hidden = hidden_size * 30 = 120 (-> pad 128)
    num_layers = 2
    B, T_in, pred_length = 2, 8, 4

    key = jax.random.PRNGKey(0)
    k_params, k_x, k_loc = jax.random.split(key, 3)

    packed, raw = init_seq2seq_params(k_params, input_size, hidden_size,
                                      num_layers)
    in_data = jax.random.normal(k_x, (B, T_in, input_size), jnp.float32)
    last_location = jax.random.normal(k_loc, (B, 1, hidden_size), jnp.float32)

    fwd = jax.jit(functools.partial(seq2seq_forward,
                                    pred_length=pred_length,
                                    out_size=hidden_size))
    out = fwd(packed, in_data, last_location)
    jax.block_until_ready(out)

    assert out.shape == (B, pred_length, hidden_size), out.shape
    ref = seq2seq_ref(raw, in_data, last_location, pred_length)
    err = float(jnp.max(jnp.abs(out - ref)))
    assert err < 1e-3, err

    print("KERNEL_OK")
</pallas_src>

<mosaic_0001>
module attributes {stable_mosaic.version = 11 : i64} {
  func.func @seq2seq_kernel(%arg0: memref<64x128xf32, #tpu.memory_space<vmem>>, %arg1: memref<8x128xf32, #tpu.memory_space<vmem>>, %arg2: memref<2x128x384xf32, #tpu.memory_space<vmem>>, %arg3: memref<2x128x384xf32, #tpu.memory_space<vmem>>, %arg4: memref<2x8x384xf32, #tpu.memory_space<vmem>>, %arg5: memref<2x8x384xf32, #tpu.memory_space<vmem>>, %arg6: memref<2x256x512xf32, #tpu.memory_space<vmem>>, %arg7: memref<2x8x512xf32, #tpu.memory_space<vmem>>, %arg8: memref<128x128xf32, #tpu.memory_space<vmem>>, %arg9: memref<8x128xf32, #tpu.memory_space<vmem>>, %arg10: memref<4x8x128xf32, #tpu.memory_space<vmem>>) attributes {dimension_semantics = [], scalar_prefetch = 0 : i64, scratch_operands = 0 : i64, tpu.core_type = #tpu.core_type<tc>} {
    %c0 = arith.constant 0 : index
    %c0_0 = arith.constant 0 : index
    %0 = vector.load %arg0[%c0, %c0_0] : memref<64x128xf32, #tpu.memory_space<vmem>>, vector<64x128xf32>
    %c0_1 = arith.constant 0 : index
    %c0_2 = arith.constant 0 : index
    %c0_3 = arith.constant 0 : index
    %1 = vector.load %arg2[%c0_1, %c0_2, %c0_3] : memref<2x128x384xf32, #tpu.memory_space<vmem>>, vector<1x128x384xf32>
    %2 = vector.shape_cast %1 : vector<1x128x384xf32> to vector<128x384xf32>
    %c0_4 = arith.constant 0 : index
    %c0_5 = arith.constant 0 : index
    %c0_6 = arith.constant 0 : index
    %3 = vector.load %arg3[%c0_4, %c0_5, %c0_6] : memref<2x128x384xf32, #tpu.memory_space<vmem>>, vector<1x128x384xf32>
    %4 = vector.shape_cast %3 : vector<1x128x384xf32> to vector<128x384xf32>
    %c0_7 = arith.constant 0 : index
    %c0_8 = arith.constant 0 : index
    %c0_9 = arith.constant 0 : index
    %5 = vector.load %arg4[%c0_7, %c0_8, %c0_9] : memref<2x8x384xf32, #tpu.memory_space<vmem>>, vector<1x8x384xf32>
    %6 = vector.shape_cast %5 : vector<1x8x384xf32> to vector<8x384xf32>
    %c0_10 = arith.constant 0 : index
    %c0_11 = arith.constant 0 : index
    %c0_12 = arith.constant 0 : index
    %7 = vector.load %arg5[%c0_10, %c0_11, %c0_12] : memref<2x8x384xf32, #tpu.memory_space<vmem>>, vector<1x8x384xf32>
    %8 = vector.shape_cast %7 : vector<1x8x384xf32> to vector<8x384xf32>
    %cst = arith.constant dense<0.000000e+00> : vector<64x384xf32>
    %9 = tpu.matmul %0, %2, %cst {dimension_numbers = #tpu.dot_dimension_numbers<[1], [0], [0], [1], [0, 0, 1, 1], [], []>} : vector<64x128xf32>, vector<128x384xf32>, vector<64x384xf32> -> vector<64x384xf32>
    %10 = vector.extract_strided_slice %9 {offsets = [0, 0], sizes = [8, 384], strides = [1, 1]} : vector<64x384xf32> to vector<8x384xf32>
    %11 = arith.addf %10, %6 : vector<8x384xf32>
    %12 = vector.extract_strided_slice %11 {offsets = [0, 0], sizes = [8, 128], strides = [1, 1]} : vector<8x384xf32> to vector<8x128xf32>
    %13 = vector.extract_strided_slice %8 {offsets = [0, 0], sizes = [8, 128], strides = [1, 1]} : vector<8x384xf32> to vector<8x128xf32>
    %14 = arith.addf %12, %13 : vector<8x128xf32>
    %15 = arith.negf %14 : vector<8x128xf32>
    %16 = math.exp %15 : vector<8x128xf32>
    %cst_13 = arith.constant 1.000000e+00 : f32
    %17 = vector.broadcast %cst_13 : f32 to vector<8x128xf32>
    %18 = arith.addf %17, %16 : vector<8x128xf32>
    %19 = arith.divf %17, %18 : vector<8x128xf32>
    %20 = vector.extract_strided_slice %11 {offsets = [0, 128], sizes = [8, 128], strides = [1, 1]} : vector<8x384xf32> to vector<8x128xf32>
    %21 = vector.extract_strided_slice %8 {offsets = [0, 128], sizes = [8, 128], strides = [1, 1]} : vector<8x384xf32> to vector<8x128xf32>
    %22 = arith.addf %20, %21 : vector<8x128xf32>
    %23 = arith.negf %22 : vector<8x128xf32>
    %24 = math.exp %23 : vector<8x128xf32>
    %cst_14 = arith.constant 1.000000e+00 : f32
    %25 = vector.broadcast %cst_14 : f32 to vector<8x128xf32>
    %26 = arith.addf %25, %24 : vector<8x128xf32>
    %27 = arith.divf %25, %26 : vector<8x128xf32>
    %28 = vector.extract_strided_slice %11 {offsets = [0, 256], sizes = [8, 128], strides = [1, 1]} : vector<8x384xf32> to vector<8x128xf32>
    %29 = vector.extract_strided_slice %8 {offsets = [0, 256], sizes = [8, 128], strides = [1, 1]} : vector<8x384xf32> to vector<8x128xf32>
    %30 = arith.mulf %19, %29 : vector<8x128xf32>
    %31 = arith.addf %28, %30 : vector<8x128xf32>
    %32 = math.tanh %31 : vector<8x128xf32>
    %cst_15 = arith.constant 1.000000e+00 : f32
    %33 = vector.broadcast %cst_15 : f32 to vector<8x128xf32>
    %34 = arith.subf %33, %27 : vector<8x128xf32>
    %35 = arith.mulf %34, %32 : vector<8x128xf32>
    %36 = vector.extract_strided_slice %9 {offsets = [8, 0], sizes = [8, 384], strides = [1, 1]} : vector<64x384xf32> to vector<8x384xf32>
    %37 = arith.addf %36, %6 : vector<8x384xf32>
    %cst_16 = arith.constant dense<0.000000e+00> : vector<8x384xf32>
    %38 = tpu.matmul %35, %4, %cst_16 {dimension_numbers = #tpu.dot_dimension_numbers<[1], [0], [0], [1], [0, 0, 1, 1], [], []>} : vector<8x128xf32>, vector<128x384xf32>, vector<8x384xf32> -> vector<8x384xf32>
    %39 = arith.addf %38, %8 : vector<8x384xf32>
    %40 = vector.extract_strided_slice %37 {offsets = [0, 0], sizes = [8, 128], strides = [1, 1]} : vector<8x384xf32> to vector<8x128xf32>
    %41 = vector.extract_strided_slice %39 {offsets = [0, 0], sizes = [8, 128], strides = [1, 1]} : vector<8x384xf32> to vector<8x128xf32>
    %42 = arith.addf %40, %41 : vector<8x128xf32>
    %43 = arith.negf %42 : vector<8x128xf32>
    %44 = math.exp %43 : vector<8x128xf32>
    %cst_17 = arith.constant 1.000000e+00 : f32
    %45 = vector.broadcast %cst_17 : f32 to vector<8x128xf32>
    %46 = arith.addf %45, %44 : vector<8x128xf32>
    %47 = arith.divf %45, %46 : vector<8x128xf32>
    %48 = vector.extract_strided_slice %37 {offsets = [0, 128], sizes = [8, 128], strides = [1, 1]} : vector<8x384xf32> to vector<8x128xf32>
    %49 = vector.extract_strided_slice %39 {offsets = [0, 128], sizes = [8, 128], strides = [1, 1]} : vector<8x384xf32> to vector<8x128xf32>
    %50 = arith.addf %48, %49 : vector<8x128xf32>
    %51 = arith.negf %50 : vector<8x128xf32>
    %52 = math.exp %51 : vector<8x128xf32>
    %cst_18 = arith.constant 1.000000e+00 : f32
    %53 = vector.broadcast %cst_18 : f32 to vector<8x128xf32>
    %54 = arith.addf %53, %52 : vector<8x128xf32>
    %55 = arith.divf %53, %54 : vector<8x128xf32>
    %56 = vector.extract_strided_slice %37 {offsets = [0, 256], sizes = [8, 128], strides = [1, 1]} : vector<8x384xf32> to vector<8x128xf32>
    %57 = vector.extract_strided_slice %39 {offsets = [0, 256], sizes = [8, 128], strides = [1, 1]} : vector<8x384xf32> to vector<8x128xf32>
    %58 = arith.mulf %47, %57 : vector<8x128xf32>
    %59 = arith.addf %56, %58 : vector<8x128xf32>
    %60 = math.tanh %59 : vector<8x128xf32>
    %cst_19 = arith.constant 1.000000e+00 : f32
    %61 = vector.broadcast %cst_19 : f32 to vector<8x128xf32>
    %62 = arith.subf %61, %55 : vector<8x128xf32>
    %63 = arith.mulf %62, %60 : vector<8x128xf32>
    %64 = arith.mulf %55, %35 : vector<8x128xf32>
    %65 = arith.addf %63, %64 : vector<8x128xf32>
    %66 = vector.extract_strided_slice %9 {offsets = [16, 0], sizes = [8, 384], strides = [1, 1]} : vector<64x384xf32> to vector<8x384xf32>
    %67 = arith.addf %66, %6 : vector<8x384xf32>
    %cst_20 = arith.constant dense<0.000000e+00> : vector<8x384xf32>
    %68 = tpu.matmul %65, %4, %cst_20 {dimension_numbers = #tpu.dot_dimension_numbers<[1], [0], [0], [1], [0, 0, 1, 1], [], []>} : vector<8x128xf32>, vector<128x384xf32>, vector<8x384xf32> -> vector<8x384xf32>
    %69 = arith.addf %68, %8 : vector<8x384xf32>
    %70 = vector.extract_strided_slice %67 {offsets = [0, 0], sizes = [8, 128], strides = [1, 1]} : vector<8x384xf32> to vector<8x128xf32>
    %71 = vector.extract_strided_slice %69 {offsets = [0, 0], sizes = [8, 128], strides = [1, 1]} : vector<8x384xf32> to vector<8x128xf32>
    %72 = arith.addf %70, %71 : vector<8x128xf32>
    %73 = arith.negf %72 : vector<8x128xf32>
    %74 = math.exp %73 : vector<8x128xf32>
    %cst_21 = arith.constant 1.000000e+00 : f32
    %75 = vector.broadcast %cst_21 : f32 to vector<8x128xf32>
    %76 = arith.addf %75, %74 : vector<8x128xf32>
    %77 = arith.divf %75, %76 : vector<8x128xf32>
    %78 = vector.extract_strided_slice %67 {offsets = [0, 128], sizes = [8, 128], strides = [1, 1]} : vector<8x384xf32> to vector<8x128xf32>
    %79 = vector.extract_strided_slice %69 {offsets = [0, 128], sizes = [8, 128], strides = [1, 1]} : vector<8x384xf32> to vector<8x128xf32>
    %80 = arith.addf %78, %79 : vector<8x128xf32>
    %81 = arith.negf %80 : vector<8x128xf32>
    %82 = math.exp %81 : vector<8x128xf32>
    %cst_22 = arith.constant 1.000000e+00 : f32
    %83 = vector.broadcast %cst_22 : f32 to vector<8x128xf32>
    %84 = arith.addf %83, %82 : vector<8x128xf32>
    %85 = arith.divf %83, %84 : vector<8x128xf32>
    %86 = vector.extract_strided_slice %67 {offsets = [0, 256], sizes = [8, 128], strides = [1, 1]} : vector<8x384xf32> to vector<8x128xf32>
    %87 = vector.extract_strided_slice %69 {offsets = [0, 256], sizes = [8, 128], strides = [1, 1]} : vector<8x384xf32> to vector<8x128xf32>
    %88 = arith.mulf %77, %87 : vector<8x128xf32>
    %89 = arith.addf %86, %88 : vector<8x128xf32>
    %90 = math.tanh %89 : vector<8x128xf32>
    %cst_23 = arith.constant 1.000000e+00 : f32
    %91 = vector.broadcast %cst_23 : f32 to vector<8x128xf32>
    %92 = arith.subf %91, %85 : vector<8x128xf32>
    %93 = arith.mulf %92, %90 : vector<8x128xf32>
    %94 = arith.mulf %85, %65 : vector<8x128xf32>
    %95 = arith.addf %93, %94 : vector<8x128xf32>
    %96 = vector.extract_strided_slice %9 {offsets = [24, 0], sizes = [8, 384], strides = [1, 1]} : vector<64x384xf32> to vector<8x384xf32>
    %97 = arith.addf %96, %6 : vector<8x384xf32>
    %cst_24 = arith.constant dense<0.000000e+00> : vector<8x384xf32>
    %98 = tpu.matmul %95, %4, %cst_24 {dimension_numbers = #tpu.dot_dimension_numbers<[1], [0], [0], [1], [0, 0, 1, 1], [], []>} : vector<8x128xf32>, vector<128x384xf32>, vector<8x384xf32> -> vector<8x384xf32>
    %99 = arith.addf %98, %8 : vector<8x384xf32>
    %100 = vector.extract_strided_slice %97 {offsets = [0, 0], sizes = [8, 128], strides = [1, 1]} : vector<8x384xf32> to vector<8x128xf32>
    %101 = vector.extract_strided_slice %99 {offsets = [0, 0], sizes = [8, 128], strides = [1, 1]} : vector<8x384xf32> to vector<8x128xf32>
    %102 = arith.addf %100, %101 : vector<8x128xf32>
    %103 = arith.negf %102 : vector<8x128xf32>
    %104 = math.exp %103 : vector<8x128xf32>
    %cst_25 = arith.constant 1.000000e+00 : f32
    %105 = vector.broadcast %cst_25 : f32 to vector<8x128xf32>
    %106 = arith.addf %105, %104 : vector<8x128xf32>
    %107 = arith.divf %105, %106 : vector<8x128xf32>
    %108 = vector.extract_strided_slice %97 {offsets = [0, 128], sizes = [8, 128], strides = [1, 1]} : vector<8x384xf32> to vector<8x128xf32>
    %109 = vector.extract_strided_slice %99 {offsets = [0, 128], sizes = [8, 128], strides = [1, 1]} : vector<8x384xf32> to vector<8x128xf32>
    %110 = arith.addf %108, %109 : vector<8x128xf32>
    %111 = arith.negf %110 : vector<8x128xf32>
    %112 = math.exp %111 : vector<8x128xf32>
    %cst_26 = arith.constant 1.000000e+00 : f32
    %113 = vector.broadcast %cst_26 : f32 to vector<8x128xf32>
    %114 = arith.addf %113, %112 : vector<8x128xf32>
    %115 = arith.divf %113, %114 : vector<8x128xf32>
    %116 = vector.extract_strided_slice %97 {offsets = [0, 256], sizes = [8, 128], strides = [1, 1]} : vector<8x384xf32> to vector<8x128xf32>
    %117 = vector.extract_strided_slice %99 {offsets = [0, 256], sizes = [8, 128], strides = [1, 1]} : vector<8x384xf32> to vector<8x128xf32>
    %118 = arith.mulf %107, %117 : vector<8x128xf32>
    %119 = arith.addf %116, %118 : vector<8x128xf32>
    %120 = math.tanh %119 : vector<8x128xf32>
    %cst_27 = arith.constant 1.000000e+00 : f32
    %121 = vector.broadcast %cst_27 : f32 to vector<8x128xf32>
    %122 = arith.subf %121, %115 : vector<8x128xf32>
    %123 = arith.mulf %122, %120 : vector<8x128xf32>
    %124 = arith.mulf %115, %95 : vector<8x128xf32>
    %125 = arith.addf %123, %124 : vector<8x128xf32>
    %126 = vector.extract_strided_slice %9 {offsets = [32, 0], sizes = [8, 384], strides = [1, 1]} : vector<64x384xf32> to vector<8x384xf32>
    %127 = arith.addf %126, %6 : vector<8x384xf32>
    %cst_28 = arith.constant dense<0.000000e+00> : vector<8x384xf32>
    %128 = tpu.matmul %125, %4, %cst_28 {dimension_numbers = #tpu.dot_dimension_numbers<[1], [0], [0], [1], [0, 0, 1, 1], [], []>} : vector<8x128xf32>, vector<128x384xf32>, vector<8x384xf32> -> vector<8x384xf32>
    %129 = arith.addf %128, %8 : vector<8x384xf32>
    %130 = vector.extract_strided_slice %127 {offsets = [0, 0], sizes = [8, 128], strides = [1, 1]} : vector<8x384xf32> to vector<8x128xf32>
    %131 = vector.extract_strided_slice %129 {offsets = [0, 0], sizes = [8, 128], strides = [1, 1]} : vector<8x384xf32> to vector<8x128xf32>
    %132 = arith.addf %130, %131 : vector<8x128xf32>
    %133 = arith.negf %132 : vector<8x128xf32>
    %134 = math.exp %133 : vector<8x128xf32>
    %cst_29 = arith.constant 1.000000e+00 : f32
    %135 = vector.broadcast %cst_29 : f32 to vector<8x128xf32>
    %136 = arith.addf %135, %134 : vector<8x128xf32>
    %137 = arith.divf %135, %136 : vector<8x128xf32>
    %138 = vector.extract_strided_slice %127 {offsets = [0, 128], sizes = [8, 128], strides = [1, 1]} : vector<8x384xf32> to vector<8x128xf32>
    %139 = vector.extract_strided_slice %129 {offsets = [0, 128], sizes = [8, 128], strides = [1, 1]} : vector<8x384xf32> to vector<8x128xf32>
    %140 = arith.addf %138, %139 : vector<8x128xf32>
    %141 = arith.negf %140 : vector<8x128xf32>
    %142 = math.exp %141 : vector<8x128xf32>
    %cst_30 = arith.constant 1.000000e+00 : f32
    %143 = vector.broadcast %cst_30 : f32 to vector<8x128xf32>
    %144 = arith.addf %143, %142 : vector<8x128xf32>
    %145 = arith.divf %143, %144 : vector<8x128xf32>
    %146 = vector.extract_strided_slice %127 {offsets = [0, 256], sizes = [8, 128], strides = [1, 1]} : vector<8x384xf32> to vector<8x128xf32>
    %147 = vector.extract_strided_slice %129 {offsets = [0, 256], sizes = [8, 128], strides = [1, 1]} : vector<8x384xf32> to vector<8x128xf32>
    %148 = arith.mulf %137, %147 : vector<8x128xf32>
    %149 = arith.addf %146, %148 : vector<8x128xf32>
    %150 = math.tanh %149 : vector<8x128xf32>
    %cst_31 = arith.constant 1.000000e+00 : f32
    %151 = vector.broadcast %cst_31 : f32 to vector<8x128xf32>
    %152 = arith.subf %151, %145 : vector<8x128xf32>
    %153 = arith.mulf %152, %150 : vector<8x128xf32>
    %154 = arith.mulf %145, %125 : vector<8x128xf32>
    %155 = arith.addf %153, %154 : vector<8x128xf32>
    %156 = vector.extract_strided_slice %9 {offsets = [40, 0], sizes = [8, 384], strides = [1, 1]} : vector<64x384xf32> to vector<8x384xf32>
    %157 = arith.addf %156, %6 : vector<8x384xf32>
    %cst_32 = arith.constant dense<0.000000e+00> : vector<8x384xf32>
    %158 = tpu.matmul %155, %4, %cst_32 {dimension_numbers = #tpu.dot_dimension_numbers<[1], [0], [0], [1], [0, 0, 1, 1], [], []>} : vector<8x128xf32>, vector<128x384xf32>, vector<8x384xf32> -> vector<8x384xf32>
    %159 = arith.addf %158, %8 : vector<8x384xf32>
    %160 = vector.extract_strided_slice %157 {offsets = [0, 0], sizes = [8, 128], strides = [1, 1]} : vector<8x384xf32> to vector<8x128xf32>
    %161 = vector.extract_strided_slice %159 {offsets = [0, 0], sizes = [8, 128], strides = [1, 1]} : vector<8x384xf32> to vector<8x128xf32>
    %162 = arith.addf %160, %161 : vector<8x128xf32>
    %163 = arith.negf %162 : vector<8x128xf32>
    %164 = math.exp %163 : vector<8x128xf32>
    %cst_33 = arith.constant 1.000000e+00 : f32
    %165 = vector.broadcast %cst_33 : f32 to vector<8x128xf32>
    %166 = arith.addf %165, %164 : vector<8x128xf32>
    %167 = arith.divf %165, %166 : vector<8x128xf32>
    %168 = vector.extract_strided_slice %157 {offsets = [0, 128], sizes = [8, 128], strides = [1, 1]} : vector<8x384xf32> to vector<8x128xf32>
    %169 = vector.extract_strided_slice %159 {offsets = [0, 128], sizes = [8, 128], strides = [1, 1]} : vector<8x384xf32> to vector<8x128xf32>
    %170 = arith.addf %168, %169 : vector<8x128xf32>
    %171 = arith.negf %170 : vector<8x128xf32>
    %172 = math.exp %171 : vector<8x128xf32>
    %cst_34 = arith.constant 1.000000e+00 : f32
    %173 = vector.broadcast %cst_34 : f32 to vector<8x128xf32>
    %174 = arith.addf %173, %172 : vector<8x128xf32>
    %175 = arith.divf %173, %174 : vector<8x128xf32>
    %176 = vector.extract_strided_slice %157 {offsets = [0, 256], sizes = [8, 128], strides = [1, 1]} : vector<8x384xf32> to vector<8x128xf32>
    %177 = vector.extract_strided_slice %159 {offsets = [0, 256], sizes = [8, 128], strides = [1, 1]} : vector<8x384xf32> to vector<8x128xf32>
    %178 = arith.mulf %167, %177 : vector<8x128xf32>
    %179 = arith.addf %176, %178 : vector<8x128xf32>
    %180 = math.tanh %179 : vector<8x128xf32>
    %cst_35 = arith.constant 1.000000e+00 : f32
    %181 = vector.broadcast %cst_35 : f32 to vector<8x128xf32>
    %182 = arith.subf %181, %175 : vector<8x128xf32>
    %183 = arith.mulf %182, %180 : vector<8x128xf32>
    %184 = arith.mulf %175, %155 : vector<8x128xf32>
    %185 = arith.addf %183, %184 : vector<8x128xf32>
    %186 = vector.extract_strided_slice %9 {offsets = [48, 0], sizes = [8, 384], strides = [1, 1]} : vector<64x384xf32> to vector<8x384xf32>
    %187 = arith.addf %186, %6 : vector<8x384xf32>
    %cst_36 = arith.constant dense<0.000000e+00> : vector<8x384xf32>
    %188 = tpu.matmul %185, %4, %cst_36 {dimension_numbers = #tpu.dot_dimension_numbers<[1], [0], [0], [1], [0, 0, 1, 1], [], []>} : vector<8x128xf32>, vector<128x384xf32>, vector<8x384xf32> -> vector<8x384xf32>
    %189 = arith.addf %188, %8 : vector<8x384xf32>
    %190 = vector.extract_strided_slice %187 {offsets = [0, 0], sizes = [8, 128], strides = [1, 1]} : vector<8x384xf32> to vector<8x128xf32>
    %191 = vector.extract_strided_slice %189 {offsets = [0, 0], sizes = [8, 128], strides = [1, 1]} : vector<8x384xf32> to vector<8x128xf32>
    %192 = arith.addf %190, %191 : vector<8x128xf32>
    %193 = arith.negf %192 : vector<8x128xf32>
    %194 = math.exp %193 : vector<8x128xf32>
    %cst_37 = arith.constant 1.000000e+00 : f32
    %195 = vector.broadcast %cst_37 : f32 to vector<8x128xf32>
    %196 = arith.addf %195, %194 : vector<8x128xf32>
    %197 = arith.divf %195, %196 : vector<8x128xf32>
    %198 = vector.extract_strided_slice %187 {offsets = [0, 128], sizes = [8, 128], strides = [1, 1]} : vector<8x384xf32> to vector<8x128xf32>
    %199 = vector.extract_strided_slice %189 {offsets = [0, 128], sizes = [8, 128], strides = [1, 1]} : vector<8x384xf32> to vector<8x128xf32>
    %200 = arith.addf %198, %199 : vector<8x128xf32>
    %201 = arith.negf %200 : vector<8x128xf32>
    %202 = math.exp %201 : vector<8x128xf32>
    %cst_38 = arith.constant 1.000000e+00 : f32
    %203 = vector.broadcast %cst_38 : f32 to vector<8x128xf32>
    %204 = arith.addf %203, %202 : vector<8x128xf32>
    %205 = arith.divf %203, %204 : vector<8x128xf32>
    %206 = vector.extract_strided_slice %187 {offsets = [0, 256], sizes = [8, 128], strides = [1, 1]} : vector<8x384xf32> to vector<8x128xf32>
    %207 = vector.extract_strided_slice %189 {offsets = [0, 256], sizes = [8, 128], strides = [1, 1]} : vector<8x384xf32> to vector<8x128xf32>
    %208 = arith.mulf %197, %207 : vector<8x128xf32>
    %209 = arith.addf %206, %208 : vector<8x128xf32>
    %210 = math.tanh %209 : vector<8x128xf32>
    %cst_39 = arith.constant 1.000000e+00 : f32
    %211 = vector.broadcast %cst_39 : f32 to vector<8x128xf32>
    %212 = arith.subf %211, %205 : vector<8x128xf32>
    %213 = arith.mulf %212, %210 : vector<8x128xf32>
    %214 = arith.mulf %205, %185 : vector<8x128xf32>
    %215 = arith.addf %213, %214 : vector<8x128xf32>
    %216 = vector.extract_strided_slice %9 {offsets = [56, 0], sizes = [8, 384], strides = [1, 1]} : vector<64x384xf32> to vector<8x384xf32>
    %217 = arith.addf %216, %6 : vector<8x384xf32>
    %cst_40 = arith.constant dense<0.000000e+00> : vector<8x384xf32>
    %218 = tpu.matmul %215, %4, %cst_40 {dimension_numbers = #tpu.dot_dimension_numbers<[1], [0], [0], [1], [0, 0, 1, 1], [], []>} : vector<8x128xf32>, vector<128x384xf32>, vector<8x384xf32> -> vector<8x384xf32>
    %219 = arith.addf %218, %8 : vector<8x384xf32>
    %220 = vector.extract_strided_slice %217 {offsets = [0, 0], sizes = [8, 128], strides = [1, 1]} : vector<8x384xf32> to vector<8x128xf32>
    %221 = vector.extract_strided_slice %219 {offsets = [0, 0], sizes = [8, 128], strides = [1, 1]} : vector<8x384xf32> to vector<8x128xf32>
    %222 = arith.addf %220, %221 : vector<8x128xf32>
    %223 = arith.negf %222 : vector<8x128xf32>
    %224 = math.exp %223 : vector<8x128xf32>
    %cst_41 = arith.constant 1.000000e+00 : f32
    %225 = vector.broadcast %cst_41 : f32 to vector<8x128xf32>
    %226 = arith.addf %225, %224 : vector<8x128xf32>
    %227 = arith.divf %225, %226 : vector<8x128xf32>
    %228 = vector.extract_strided_slice %217 {offsets = [0, 128], sizes = [8, 128], strides = [1, 1]} : vector<8x384xf32> to vector<8x128xf32>
    %229 = vector.extract_strided_slice %219 {offsets = [0, 128], sizes = [8, 128], strides = [1, 1]} : vector<8x384xf32> to vector<8x128xf32>
    %230 = arith.addf %228, %229 : vector<8x128xf32>
    %231 = arith.negf %230 : vector<8x128xf32>
    %232 = math.exp %231 : vector<8x128xf32>
    %cst_42 = arith.constant 1.000000e+00 : f32
    %233 = vector.broadcast %cst_42 : f32 to vector<8x128xf32>
    %234 = arith.addf %233, %232 : vector<8x128xf32>
    %235 = arith.divf %233, %234 : vector<8x128xf32>
    %236 = vector.extract_strided_slice %217 {offsets = [0, 256], sizes = [8, 128], strides = [1, 1]} : vector<8x384xf32> to vector<8x128xf32>
    %237 = vector.extract_strided_slice %219 {offsets = [0, 256], sizes = [8, 128], strides = [1, 1]} : vector<8x384xf32> to vector<8x128xf32>
    %238 = arith.mulf %227, %237 : vector<8x128xf32>
    %239 = arith.addf %236, %238 : vector<8x128xf32>
    %240 = math.tanh %239 : vector<8x128xf32>
    %cst_43 = arith.constant 1.000000e+00 : f32
    %241 = vector.broadcast %cst_43 : f32 to vector<8x128xf32>
    %242 = arith.subf %241, %235 : vector<8x128xf32>
    %243 = arith.mulf %242, %240 : vector<8x128xf32>
    %244 = arith.mulf %235, %215 : vector<8x128xf32>
    %245 = arith.addf %243, %244 : vector<8x128xf32>
    %246 = tpu.concatenate %35, %65, %95, %125, %155, %185, %215, %245 in 0 : vector<8x128xf32>, vector<8x128xf32>, vector<8x128xf32>, vector<8x128xf32>, vector<8x128xf32>, vector<8x128xf32>, vector<8x128xf32>, vector<8x128xf32> -> vector<64x128xf32>
    %c1 = arith.constant 1 : index
    %c0_44 = arith.constant 0 : index
    %c0_45 = arith.constant 0 : index
    %247 = vector.load %arg2[%c1, %c0_44, %c0_45] : memref<2x128x384xf32, #tpu.memory_space<vmem>>, vector<1x128x384xf32>
    %248 = vector.shape_cast %247 : vector<1x128x384xf32> to vector<128x384xf32>
    %c1_46 = arith.constant 1 : index
    %c0_47 = arith.constant 0 : index
    %c0_48 = arith.constant 0 : index
    %249 = vector.load %arg3[%c1_46, %c0_47, %c0_48] : memref<2x128x384xf32, #tpu.memory_space<vmem>>, vector<1x128x384xf32>
    %250 = vector.shape_cast %249 : vector<1x128x384xf32> to vector<128x384xf32>
    %c1_49 = arith.constant 1 : index
    %c0_50 = arith.constant 0 : index
    %c0_51 = arith.constant 0 : index
    %251 = vector.load %arg4[%c1_49, %c0_50, %c0_51] : memref<2x8x384xf32, #tpu.memory_space<vmem>>, vector<1x8x384xf32>
    %252 = vector.shape_cast %251 : vector<1x8x384xf32> to vector<8x384xf32>
    %c1_52 = arith.constant 1 : index
    %c0_53 = arith.constant 0 : index
    %c0_54 = arith.constant 0 : index
    %253 = vector.load %arg5[%c1_52, %c0_53, %c0_54] : memref<2x8x384xf32, #tpu.memory_space<vmem>>, vector<1x8x384xf32>
    %254 = vector.shape_cast %253 : vector<1x8x384xf32> to vector<8x384xf32>
    %cst_55 = arith.constant dense<0.000000e+00> : vector<64x384xf32>
    %255 = tpu.matmul %246, %248, %cst_55 {dimension_numbers = #tpu.dot_dimension_numbers<[1], [0], [0], [1], [0, 0, 1, 1], [], []>} : vector<64x128xf32>, vector<128x384xf32>, vector<64x384xf32> -> vector<64x384xf32>
    %256 = vector.extract_strided_slice %255 {offsets = [0, 0], sizes = [8, 384], strides = [1, 1]} : vector<64x384xf32> to vector<8x384xf32>
    %257 = arith.addf %256, %252 : vector<8x384xf32>
    %258 = vector.extract_strided_slice %257 {offsets = [0, 0], sizes = [8, 128], strides = [1, 1]} : vector<8x384xf32> to vector<8x128xf32>
    %259 = vector.extract_strided_slice %254 {offsets = [0, 0], sizes = [8, 128], strides = [1, 1]} : vector<8x384xf32> to vector<8x128xf32>
    %260 = arith.addf %258, %259 : vector<8x128xf32>
    %261 = arith.negf %260 : vector<8x128xf32>
    %262 = math.exp %261 : vector<8x128xf32>
    %cst_56 = arith.constant 1.000000e+00 : f32
    %263 = vector.broadcast %cst_56 : f32 to vector<8x128xf32>
    %264 = arith.addf %263, %262 : vector<8x128xf32>
    %265 = arith.divf %263, %264 : vector<8x128xf32>
    %266 = vector.extract_strided_slice %257 {offsets = [0, 128], sizes = [8, 128], strides = [1, 1]} : vector<8x384xf32> to vector<8x128xf32>
    %267 = vector.extract_strided_slice %254 {offsets = [0, 128], sizes = [8, 128], strides = [1, 1]} : vector<8x384xf32> to vector<8x128xf32>
    %268 = arith.addf %266, %267 : vector<8x128xf32>
    %269 = arith.negf %268 : vector<8x128xf32>
    %270 = math.exp %269 : vector<8x128xf32>
    %cst_57 = arith.constant 1.000000e+00 : f32
    %271 = vector.broadcast %cst_57 : f32 to vector<8x128xf32>
    %272 = arith.addf %271, %270 : vector<8x128xf32>
    %273 = arith.divf %271, %272 : vector<8x128xf32>
    %274 = vector.extract_strided_slice %257 {offsets = [0, 256], sizes = [8, 128], strides = [1, 1]} : vector<8x384xf32> to vector<8x128xf32>
    %275 = vector.extract_strided_slice %254 {offsets = [0, 256], sizes = [8, 128], strides = [1, 1]} : vector<8x384xf32> to vector<8x128xf32>
    %276 = arith.mulf %265, %275 : vector<8x128xf32>
    %277 = arith.addf %274, %276 : vector<8x128xf32>
    %278 = math.tanh %277 : vector<8x128xf32>
    %cst_58 = arith.constant 1.000000e+00 : f32
    %279 = vector.broadcast %cst_58 : f32 to vector<8x128xf32>
    %280 = arith.subf %279, %273 : vector<8x128xf32>
    %281 = arith.mulf %280, %278 : vector<8x128xf32>
    %282 = vector.extract_strided_slice %255 {offsets = [8, 0], sizes = [8, 384], strides = [1, 1]} : vector<64x384xf32> to vector<8x384xf32>
    %283 = arith.addf %282, %252 : vector<8x384xf32>
    %cst_59 = arith.constant dense<0.000000e+00> : vector<8x384xf32>
    %284 = tpu.matmul %281, %250, %cst_59 {dimension_numbers = #tpu.dot_dimension_numbers<[1], [0], [0], [1], [0, 0, 1, 1], [], []>} : vector<8x128xf32>, vector<128x384xf32>, vector<8x384xf32> -> vector<8x384xf32>
    %285 = arith.addf %284, %254 : vector<8x384xf32>
    %286 = vector.extract_strided_slice %283 {offsets = [0, 0], sizes = [8, 128], strides = [1, 1]} : vector<8x384xf32> to vector<8x128xf32>
    %287 = vector.extract_strided_slice %285 {offsets = [0, 0], sizes = [8, 128], strides = [1, 1]} : vector<8x384xf32> to vector<8x128xf32>
    %288 = arith.addf %286, %287 : vector<8x128xf32>
    %289 = arith.negf %288 : vector<8x128xf32>
    %290 = math.exp %289 : vector<8x128xf32>
    %cst_60 = arith.constant 1.000000e+00 : f32
    %291 = vector.broadcast %cst_60 : f32 to vector<8x128xf32>
    %292 = arith.addf %291, %290 : vector<8x128xf32>
    %293 = arith.divf %291, %292 : vector<8x128xf32>
    %294 = vector.extract_strided_slice %283 {offsets = [0, 128], sizes = [8, 128], strides = [1, 1]} : vector<8x384xf32> to vector<8x128xf32>
    %295 = vector.extract_strided_slice %285 {offsets = [0, 128], sizes = [8, 128], strides = [1, 1]} : vector<8x384xf32> to vector<8x128xf32>
    %296 = arith.addf %294, %295 : vector<8x128xf32>
    %297 = arith.negf %296 : vector<8x128xf32>
    %298 = math.exp %297 : vector<8x128xf32>
    %cst_61 = arith.constant 1.000000e+00 : f32
    %299 = vector.broadcast %cst_61 : f32 to vector<8x128xf32>
    %300 = arith.addf %299, %298 : vector<8x128xf32>
    %301 = arith.divf %299, %300 : vector<8x128xf32>
    %302 = vector.extract_strided_slice %283 {offsets = [0, 256], sizes = [8, 128], strides = [1, 1]} : vector<8x384xf32> to vector<8x128xf32>
    %303 = vector.extract_strided_slice %285 {offsets = [0, 256], sizes = [8, 128], strides = [1, 1]} : vector<8x384xf32> to vector<8x128xf32>
    %304 = arith.mulf %293, %303 : vector<8x128xf32>
    %305 = arith.addf %302, %304 : vector<8x128xf32>
    %306 = math.tanh %305 : vector<8x128xf32>
    %cst_62 = arith.constant 1.000000e+00 : f32
    %307 = vector.broadcast %cst_62 : f32 to vector<8x128xf32>
    %308 = arith.subf %307, %301 : vector<8x128xf32>
    %309 = arith.mulf %308, %306 : vector<8x128xf32>
    %310 = arith.mulf %301, %281 : vector<8x128xf32>
    %311 = arith.addf %309, %310 : vector<8x128xf32>
    %312 = vector.extract_strided_slice %255 {offsets = [16, 0], sizes = [8, 384], strides = [1, 1]} : vector<64x384xf32> to vector<8x384xf32>
    %313 = arith.addf %312, %252 : vector<8x384xf32>
    %cst_63 = arith.constant dense<0.000000e+00> : vector<8x384xf32>
    %314 = tpu.matmul %311, %250, %cst_63 {dimension_numbers = #tpu.dot_dimension_numbers<[1], [0], [0], [1], [0, 0, 1, 1], [], []>} : vector<8x128xf32>, vector<128x384xf32>, vector<8x384xf32> -> vector<8x384xf32>
    %315 = arith.addf %314, %254 : vector<8x384xf32>
    %316 = vector.extract_strided_slice %313 {offsets = [0, 0], sizes = [8, 128], strides = [1, 1]} : vector<8x384xf32> to vector<8x128xf32>
    %317 = vector.extract_strided_slice %315 {offsets = [0, 0], sizes = [8, 128], strides = [1, 1]} : vector<8x384xf32> to vector<8x128xf32>
    %318 = arith.addf %316, %317 : vector<8x128xf32>
    %319 = arith.negf %318 : vector<8x128xf32>
    %320 = math.exp %319 : vector<8x128xf32>
    %cst_64 = arith.constant 1.000000e+00 : f32
    %321 = vector.broadcast %cst_64 : f32 to vector<8x128xf32>
    %322 = arith.addf %321, %320 : vector<8x128xf32>
    %323 = arith.divf %321, %322 : vector<8x128xf32>
    %324 = vector.extract_strided_slice %313 {offsets = [0, 128], sizes = [8, 128], strides = [1, 1]} : vector<8x384xf32> to vector<8x128xf32>
    %325 = vector.extract_strided_slice %315 {offsets = [0, 128], sizes = [8, 128], strides = [1, 1]} : vector<8x384xf32> to vector<8x128xf32>
    %326 = arith.addf %324, %325 : vector<8x128xf32>
    %327 = arith.negf %326 : vector<8x128xf32>
    %328 = math.exp %327 : vector<8x128xf32>
    %cst_65 = arith.constant 1.000000e+00 : f32
    %329 = vector.broadcast %cst_65 : f32 to vector<8x128xf32>
    %330 = arith.addf %329, %328 : vector<8x128xf32>
    %331 = arith.divf %329, %330 : vector<8x128xf32>
    %332 = vector.extract_strided_slice %313 {offsets = [0, 256], sizes = [8, 128], strides = [1, 1]} : vector<8x384xf32> to vector<8x128xf32>
    %333 = vector.extract_strided_slice %315 {offsets = [0, 256], sizes = [8, 128], strides = [1, 1]} : vector<8x384xf32> to vector<8x128xf32>
    %334 = arith.mulf %323, %333 : vector<8x128xf32>
    %335 = arith.addf %332, %334 : vector<8x128xf32>
    %336 = math.tanh %335 : vector<8x128xf32>
    %cst_66 = arith.constant 1.000000e+00 : f32
    %337 = vector.broadcast %cst_66 : f32 to vector<8x128xf32>
    %338 = arith.subf %337, %331 : vector<8x128xf32>
    %339 = arith.mulf %338, %336 : vector<8x128xf32>
    %340 = arith.mulf %331, %311 : vector<8x128xf32>
    %341 = arith.addf %339, %340 : vector<8x128xf32>
    %342 = vector.extract_strided_slice %255 {offsets = [24, 0], sizes = [8, 384], strides = [1, 1]} : vector<64x384xf32> to vector<8x384xf32>
    %343 = arith.addf %342, %252 : vector<8x384xf32>
    %cst_67 = arith.constant dense<0.000000e+00> : vector<8x384xf32>
    %344 = tpu.matmul %341, %250, %cst_67 {dimension_numbers = #tpu.dot_dimension_numbers<[1], [0], [0], [1], [0, 0, 1, 1], [], []>} : vector<8x128xf32>, vector<128x384xf32>, vector<8x384xf32> -> vector<8x384xf32>
    %345 = arith.addf %344, %254 : vector<8x384xf32>
    %346 = vector.extract_strided_slice %343 {offsets = [0, 0], sizes = [8, 128], strides = [1, 1]} : vector<8x384xf32> to vector<8x128xf32>
    %347 = vector.extract_strided_slice %345 {offsets = [0, 0], sizes = [8, 128], strides = [1, 1]} : vector<8x384xf32> to vector<8x128xf32>
    %348 = arith.addf %346, %347 : vector<8x128xf32>
    %349 = arith.negf %348 : vector<8x128xf32>
    %350 = math.exp %349 : vector<8x128xf32>
    %cst_68 = arith.constant 1.000000e+00 : f32
    %351 = vector.broadcast %cst_68 : f32 to vector<8x128xf32>
    %352 = arith.addf %351, %350 : vector<8x128xf32>
    %353 = arith.divf %351, %352 : vector<8x128xf32>
    %354 = vector.extract_strided_slice %343 {offsets = [0, 128], sizes = [8, 128], strides = [1, 1]} : vector<8x384xf32> to vector<8x128xf32>
    %355 = vector.extract_strided_slice %345 {offsets = [0, 128], sizes = [8, 128], strides = [1, 1]} : vector<8x384xf32> to vector<8x128xf32>
    %356 = arith.addf %354, %355 : vector<8x128xf32>
    %357 = arith.negf %356 : vector<8x128xf32>
    %358 = math.exp %357 : vector<8x128xf32>
    %cst_69 = arith.constant 1.000000e+00 : f32
    %359 = vector.broadcast %cst_69 : f32 to vector<8x128xf32>
    %360 = arith.addf %359, %358 : vector<8x128xf32>
    %361 = arith.divf %359, %360 : vector<8x128xf32>
    %362 = vector.extract_strided_slice %343 {offsets = [0, 256], sizes = [8, 128], strides = [1, 1]} : vector<8x384xf32> to vector<8x128xf32>
    %363 = vector.extract_strided_slice %345 {offsets = [0, 256], sizes = [8, 128], strides = [1, 1]} : vector<8x384xf32> to vector<8x128xf32>
    %364 = arith.mulf %353, %363 : vector<8x128xf32>
    %365 = arith.addf %362, %364 : vector<8x128xf32>
    %366 = math.tanh %365 : vector<8x128xf32>
    %cst_70 = arith.constant 1.000000e+00 : f32
    %367 = vector.broadcast %cst_70 : f32 to vector<8x128xf32>
    %368 = arith.subf %367, %361 : vector<8x128xf32>
    %369 = arith.mulf %368, %366 : vector<8x128xf32>
    %370 = arith.mulf %361, %341 : vector<8x128xf32>
    %371 = arith.addf %369, %370 : vector<8x128xf32>
    %372 = vector.extract_strided_slice %255 {offsets = [32, 0], sizes = [8, 384], strides = [1, 1]} : vector<64x384xf32> to vector<8x384xf32>
    %373 = arith.addf %372, %252 : vector<8x384xf32>
    %cst_71 = arith.constant dense<0.000000e+00> : vector<8x384xf32>
    %374 = tpu.matmul %371, %250, %cst_71 {dimension_numbers = #tpu.dot_dimension_numbers<[1], [0], [0], [1], [0, 0, 1, 1], [], []>} : vector<8x128xf32>, vector<128x384xf32>, vector<8x384xf32> -> vector<8x384xf32>
    %375 = arith.addf %374, %254 : vector<8x384xf32>
    %376 = vector.extract_strided_slice %373 {offsets = [0, 0], sizes = [8, 128], strides = [1, 1]} : vector<8x384xf32> to vector<8x128xf32>
    %377 = vector.extract_strided_slice %375 {offsets = [0, 0], sizes = [8, 128], strides = [1, 1]} : vector<8x384xf32> to vector<8x128xf32>
    %378 = arith.addf %376, %377 : vector<8x128xf32>
    %379 = arith.negf %378 : vector<8x128xf32>
    %380 = math.exp %379 : vector<8x128xf32>
    %cst_72 = arith.constant 1.000000e+00 : f32
    %381 = vector.broadcast %cst_72 : f32 to vector<8x128xf32>
    %382 = arith.addf %381, %380 : vector<8x128xf32>
    %383 = arith.divf %381, %382 : vector<8x128xf32>
    %384 = vector.extract_strided_slice %373 {offsets = [0, 128], sizes = [8, 128], strides = [1, 1]} : vector<8x384xf32> to vector<8x128xf32>
    %385 = vector.extract_strided_slice %375 {offsets = [0, 128], sizes = [8, 128], strides = [1, 1]} : vector<8x384xf32> to vector<8x128xf32>
    %386 = arith.addf %384, %385 : vector<8x128xf32>
    %387 = arith.negf %386 : vector<8x128xf32>
    %388 = math.exp %387 : vector<8x128xf32>
    %cst_73 = arith.constant 1.000000e+00 : f32
    %389 = vector.broadcast %cst_73 : f32 to vector<8x128xf32>
    %390 = arith.addf %389, %388 : vector<8x128xf32>
    %391 = arith.divf %389, %390 : vector<8x128xf32>
    %392 = vector.extract_strided_slice %373 {offsets = [0, 256], sizes = [8, 128], strides = [1, 1]} : vector<8x384xf32> to vector<8x128xf32>
    %393 = vector.extract_strided_slice %375 {offsets = [0, 256], sizes = [8, 128], strides = [1, 1]} : vector<8x384xf32> to vector<8x128xf32>
    %394 = arith.mulf %383, %393 : vector<8x128xf32>
    %395 = arith.addf %392, %394 : vector<8x128xf32>
    %396 = math.tanh %395 : vector<8x128xf32>
    %cst_74 = arith.constant 1.000000e+00 : f32
    %397 = vector.broadcast %cst_74 : f32 to vector<8x128xf32>
    %398 = arith.subf %397, %391 : vector<8x128xf32>
    %399 = arith.mulf %398, %396 : vector<8x128xf32>
    %400 = arith.mulf %391, %371 : vector<8x128xf32>
    %401 = arith.addf %399, %400 : vector<8x128xf32>
    %402 = vector.extract_strided_slice %255 {offsets = [40, 0], sizes = [8, 384], strides = [1, 1]} : vector<64x384xf32> to vector<8x384xf32>
    %403 = arith.addf %402, %252 : vector<8x384xf32>
    %cst_75 = arith.constant dense<0.000000e+00> : vector<8x384xf32>
    %404 = tpu.matmul %401, %250, %cst_75 {dimension_numbers = #tpu.dot_dimension_numbers<[1], [0], [0], [1], [0, 0, 1, 1], [], []>} : vector<8x128xf32>, vector<128x384xf32>, vector<8x384xf32> -> vector<8x384xf32>
    %405 = arith.addf %404, %254 : vector<8x384xf32>
    %406 = vector.extract_strided_slice %403 {offsets = [0, 0], sizes = [8, 128], strides = [1, 1]} : vector<8x384xf32> to vector<8x128xf32>
    %407 = vector.extract_strided_slice %405 {offsets = [0, 0], sizes = [8, 128], strides = [1, 1]} : vector<8x384xf32> to vector<8x128xf32>
    %408 = arith.addf %406, %407 : vector<8x128xf32>
    %409 = arith.negf %408 : vector<8x128xf32>
    %410 = math.exp %409 : vector<8x128xf32>
    %cst_76 = arith.constant 1.000000e+00 : f32
    %411 = vector.broadcast %cst_76 : f32 to vector<8x128xf32>
    %412 = arith.addf %411, %410 : vector<8x128xf32>
    %413 = arith.divf %411, %412 : vector<8x128xf32>
    %414 = vector.extract_strided_slice %403 {offsets = [0, 128], sizes = [8, 128], strides = [1, 1]} : vector<8x384xf32> to vector<8x128xf32>
    %415 = vector.extract_strided_slice %405 {offsets = [0, 128], sizes = [8, 128], strides = [1, 1]} : vector<8x384xf32> to vector<8x128xf32>
    %416 = arith.addf %414, %415 : vector<8x128xf32>
    %417 = arith.negf %416 : vector<8x128xf32>
    %418 = math.exp %417 : vector<8x128xf32>
    %cst_77 = arith.constant 1.000000e+00 : f32
    %419 = vector.broadcast %cst_77 : f32 to vector<8x128xf32>
    %420 = arith.addf %419, %418 : vector<8x128xf32>
    %421 = arith.divf %419, %420 : vector<8x128xf32>
    %422 = vector.extract_strided_slice %403 {offsets = [0, 256], sizes = [8, 128], strides = [1, 1]} : vector<8x384xf32> to vector<8x128xf32>
    %423 = vector.extract_strided_slice %405 {offsets = [0, 256], sizes = [8, 128], strides = [1, 1]} : vector<8x384xf32> to vector<8x128xf32>
    %424 = arith.mulf %413, %423 : vector<8x128xf32>
    %425 = arith.addf %422, %424 : vector<8x128xf32>
    %426 = math.tanh %425 : vector<8x128xf32>
    %cst_78 = arith.constant 1.000000e+00 : f32
    %427 = vector.broadcast %cst_78 : f32 to vector<8x128xf32>
    %428 = arith.subf %427, %421 : vector<8x128xf32>
    %429 = arith.mulf %428, %426 : vector<8x128xf32>
    %430 = arith.mulf %421, %401 : vector<8x128xf32>
    %431 = arith.addf %429, %430 : vector<8x128xf32>
    %432 = vector.extract_strided_slice %255 {offsets = [48, 0], sizes = [8, 384], strides = [1, 1]} : vector<64x384xf32> to vector<8x384xf32>
    %433 = arith.addf %432, %252 : vector<8x384xf32>
    %cst_79 = arith.constant dense<0.000000e+00> : vector<8x384xf32>
    %434 = tpu.matmul %431, %250, %cst_79 {dimension_numbers = #tpu.dot_dimension_numbers<[1], [0], [0], [1], [0, 0, 1, 1], [], []>} : vector<8x128xf32>, vector<128x384xf32>, vector<8x384xf32> -> vector<8x384xf32>
    %435 = arith.addf %434, %254 : vector<8x384xf32>
    %436 = vector.extract_strided_slice %433 {offsets = [0, 0], sizes = [8, 128], strides = [1, 1]} : vector<8x384xf32> to vector<8x128xf32>
    %437 = vector.extract_strided_slice %435 {offsets = [0, 0], sizes = [8, 128], strides = [1, 1]} : vector<8x384xf32> to vector<8x128xf32>
    %438 = arith.addf %436, %437 : vector<8x128xf32>
    %439 = arith.negf %438 : vector<8x128xf32>
    %440 = math.exp %439 : vector<8x128xf32>
    %cst_80 = arith.constant 1.000000e+00 : f32
    %441 = vector.broadcast %cst_80 : f32 to vector<8x128xf32>
    %442 = arith.addf %441, %440 : vector<8x128xf32>
    %443 = arith.divf %441, %442 : vector<8x128xf32>
    %444 = vector.extract_strided_slice %433 {offsets = [0, 128], sizes = [8, 128], strides = [1, 1]} : vector<8x384xf32> to vector<8x128xf32>
    %445 = vector.extract_strided_slice %435 {offsets = [0, 128], sizes = [8, 128], strides = [1, 1]} : vector<8x384xf32> to vector<8x128xf32>
    %446 = arith.addf %444, %445 : vector<8x128xf32>
    %447 = arith.negf %446 : vector<8x128xf32>
    %448 = math.exp %447 : vector<8x128xf32>
    %cst_81 = arith.constant 1.000000e+00 : f32
    %449 = vector.broadcast %cst_81 : f32 to vector<8x128xf32>
    %450 = arith.addf %449, %448 : vector<8x128xf32>
    %451 = arith.divf %449, %450 : vector<8x128xf32>
    %452 = vector.extract_strided_slice %433 {offsets = [0, 256], sizes = [8, 128], strides = [1, 1]} : vector<8x384xf32> to vector<8x128xf32>
    %453 = vector.extract_strided_slice %435 {offsets = [0, 256], sizes = [8, 128], strides = [1, 1]} : vector<8x384xf32> to vector<8x128xf32>
    %454 = arith.mulf %443, %453 : vector<8x128xf32>
    %455 = arith.addf %452, %454 : vector<8x128xf32>
    %456 = math.tanh %455 : vector<8x128xf32>
    %cst_82 = arith.constant 1.000000e+00 : f32
    %457 = vector.broadcast %cst_82 : f32 to vector<8x128xf32>
    %458 = arith.subf %457, %451 : vector<8x128xf32>
    %459 = arith.mulf %458, %456 : vector<8x128xf32>
    %460 = arith.mulf %451, %431 : vector<8x128xf32>
    %461 = arith.addf %459, %460 : vector<8x128xf32>
    %462 = vector.extract_strided_slice %255 {offsets = [56, 0], sizes = [8, 384], strides = [1, 1]} : vector<64x384xf32> to vector<8x384xf32>
    %463 = arith.addf %462, %252 : vector<8x384xf32>
    %cst_83 = arith.constant dense<0.000000e+00> : vector<8x384xf32>
    %464 = tpu.matmul %461, %250, %cst_83 {dimension_numbers = #tpu.dot_dimension_numbers<[1], [0], [0], [1], [0, 0, 1, 1], [], []>} : vector<8x128xf32>, vector<128x384xf32>, vector<8x384xf32> -> vector<8x384xf32>
    %465 = arith.addf %464, %254 : vector<8x384xf32>
    %466 = vector.extract_strided_slice %463 {offsets = [0, 0], sizes = [8, 128], strides = [1, 1]} : vector<8x384xf32> to vector<8x128xf32>
    %467 = vector.extract_strided_slice %465 {offsets = [0, 0], sizes = [8, 128], strides = [1, 1]} : vector<8x384xf32> to vector<8x128xf32>
    %468 = arith.addf %466, %467 : vector<8x128xf32>
    %469 = arith.negf %468 : vector<8x128xf32>
    %470 = math.exp %469 : vector<8x128xf32>
    %cst_84 = arith.constant 1.000000e+00 : f32
    %471 = vector.broadcast %cst_84 : f32 to vector<8x128xf32>
    %472 = arith.addf %471, %470 : vector<8x128xf32>
    %473 = arith.divf %471, %472 : vector<8x128xf32>
    %474 = vector.extract_strided_slice %463 {offsets = [0, 128], sizes = [8, 128], strides = [1, 1]} : vector<8x384xf32> to vector<8x128xf32>
    %475 = vector.extract_strided_slice %465 {offsets = [0, 128], sizes = [8, 128], strides = [1, 1]} : vector<8x384xf32> to vector<8x128xf32>
    %476 = arith.addf %474, %475 : vector<8x128xf32>
    %477 = arith.negf %476 : vector<8x128xf32>
    %478 = math.exp %477 : vector<8x128xf32>
    %cst_85 = arith.constant 1.000000e+00 : f32
    %479 = vector.broadcast %cst_85 : f32 to vector<8x128xf32>
    %480 = arith.addf %479, %478 : vector<8x128xf32>
    %481 = arith.divf %479, %480 : vector<8x128xf32>
    %482 = vector.extract_strided_slice %463 {offsets = [0, 256], sizes = [8, 128], strides = [1, 1]} : vector<8x384xf32> to vector<8x128xf32>
    %483 = vector.extract_strided_slice %465 {offsets = [0, 256], sizes = [8, 128], strides = [1, 1]} : vector<8x384xf32> to vector<8x128xf32>
    %484 = arith.mulf %473, %483 : vector<8x128xf32>
    %485 = arith.addf %482, %484 : vector<8x128xf32>
    %486 = math.tanh %485 : vector<8x128xf32>
    %cst_86 = arith.constant 1.000000e+00 : f32
    %487 = vector.broadcast %cst_86 : f32 to vector<8x128xf32>
    %488 = arith.subf %487, %481 : vector<8x128xf32>
    %489 = arith.mulf %488, %486 : vector<8x128xf32>
    %490 = arith.mulf %481, %461 : vector<8x128xf32>
    %491 = arith.addf %489, %490 : vector<8x128xf32>
    %c0_87 = arith.constant 0 : index
    %c0_88 = arith.constant 0 : index
    %c0_89 = arith.constant 0 : index
    %492 = vector.load %arg6[%c0_87, %c0_88, %c0_89] : memref<2x256x512xf32, #tpu.memory_space<vmem>>, vector<1x256x512xf32>
    %493 = vector.shape_cast %492 : vector<1x256x512xf32> to vector<256x512xf32>
    %c1_90 = arith.constant 1 : index
    %c0_91 = arith.constant 0 : index
    %c0_92 = arith.constant 0 : index
    %494 = vector.load %arg6[%c1_90, %c0_91, %c0_92] : memref<2x256x512xf32, #tpu.memory_space<vmem>>, vector<1x256x512xf32>
    %495 = vector.shape_cast %494 : vector<1x256x512xf32> to vector<256x512xf32>
    %c0_93 = arith.constant 0 : index
    %c0_94 = arith.constant 0 : index
    %c0_95 = arith.constant 0 : index
    %496 = vector.load %arg7[%c0_93, %c0_94, %c0_95] : memref<2x8x512xf32, #tpu.memory_space<vmem>>, vector<1x8x512xf32>
    %497 = vector.shape_cast %496 : vector<1x8x512xf32> to vector<8x512xf32>
    %c1_96 = arith.constant 1 : index
    %c0_97 = arith.constant 0 : index
    %c0_98 = arith.constant 0 : index
    %498 = vector.load %arg7[%c1_96, %c0_97, %c0_98] : memref<2x8x512xf32, #tpu.memory_space<vmem>>, vector<1x8x512xf32>
    %499 = vector.shape_cast %498 : vector<1x8x512xf32> to vector<8x512xf32>
    %c0_99 = arith.constant 0 : index
    %c0_100 = arith.constant 0 : index
    %500 = vector.load %arg8[%c0_99, %c0_100] : memref<128x128xf32, #tpu.memory_space<vmem>>, vector<128x128xf32>
    %c0_101 = arith.constant 0 : index
    %c0_102 = arith.constant 0 : index
    %501 = vector.load %arg9[%c0_101, %c0_102] : memref<8x128xf32, #tpu.memory_space<vmem>>, vector<8x128xf32>
    %c0_103 = arith.constant 0 : index
    %c0_104 = arith.constant 0 : index
    %502 = vector.load %arg1[%c0_103, %c0_104] : memref<8x128xf32, #tpu.memory_space<vmem>>, vector<8x128xf32>
    %503 = tpu.concatenate %502, %245 in 1 : vector<8x128xf32>, vector<8x128xf32> -> vector<8x256xf32>
    %cst_105 = arith.constant dense<0.000000e+00> : vector<8x512xf32>
    %504 = tpu.matmul %503, %493, %cst_105 {dimension_numbers = #tpu.dot_dimension_numbers<[1], [0], [0], [1], [0, 0, 1, 1], [], []>} : vector<8x256xf32>, vector<256x512xf32>, vector<8x512xf32> -> vector<8x512xf32>
    %505 = arith.addf %504, %497 : vector<8x512xf32>
    %506 = vector.extract_strided_slice %505 {offsets = [0, 0], sizes = [8, 128], strides = [1, 1]} : vector<8x512xf32> to vector<8x128xf32>
    %507 = arith.negf %506 : vector<8x128xf32>
    %508 = math.exp %507 : vector<8x128xf32>
    %cst_106 = arith.constant 1.000000e+00 : f32
    %509 = vector.broadcast %cst_106 : f32 to vector<8x128xf32>
    %510 = arith.addf %509, %508 : vector<8x128xf32>
    %511 = arith.divf %509, %510 : vector<8x128xf32>
    %512 = vector.extract_strided_slice %505 {offsets = [0, 128], sizes = [8, 128], strides = [1, 1]} : vector<8x512xf32> to vector<8x128xf32>
    %513 = arith.negf %512 : vector<8x128xf32>
    %514 = math.exp %513 : vector<8x128xf32>
    %cst_107 = arith.constant 1.000000e+00 : f32
    %515 = vector.broadcast %cst_107 : f32 to vector<8x128xf32>
    %516 = arith.addf %515, %514 : vector<8x128xf32>
    %517 = arith.divf %515, %516 : vector<8x128xf32>
    %518 = vector.extract_strided_slice %505 {offsets = [0, 256], sizes = [8, 128], strides = [1, 1]} : vector<8x512xf32> to vector<8x128xf32>
    %519 = vector.extract_strided_slice %505 {offsets = [0, 384], sizes = [8, 128], strides = [1, 1]} : vector<8x512xf32> to vector<8x128xf32>
    %520 = arith.mulf %511, %519 : vector<8x128xf32>
    %521 = arith.addf %518, %520 : vector<8x128xf32>
    %522 = math.tanh %521 : vector<8x128xf32>
    %cst_108 = arith.constant 1.000000e+00 : f32
    %523 = vector.broadcast %cst_108 : f32 to vector<8x128xf32>
    %524 = arith.subf %523, %517 : vector<8x128xf32>
    %525 = arith.mulf %524, %522 : vector<8x128xf32>
    %526 = arith.mulf %517, %245 : vector<8x128xf32>
    %527 = arith.addf %525, %526 : vector<8x128xf32>
    %528 = tpu.concatenate %527, %491 in 1 : vector<8x128xf32>, vector<8x128xf32> -> vector<8x256xf32>
    %cst_109 = arith.constant dense<0.000000e+00> : vector<8x512xf32>
    %529 = tpu.matmul %528, %495, %cst_109 {dimension_numbers = #tpu.dot_dimension_numbers<[1], [0], [0], [1], [0, 0, 1, 1], [], []>} : vector<8x256xf32>, vector<256x512xf32>, vector<8x512xf32> -> vector<8x512xf32>
    %530 = arith.addf %529, %499 : vector<8x512xf32>
    %531 = vector.extract_strided_slice %530 {offsets = [0, 0], sizes = [8, 128], strides = [1, 1]} : vector<8x512xf32> to vector<8x128xf32>
    %532 = arith.negf %531 : vector<8x128xf32>
    %533 = math.exp %532 : vector<8x128xf32>
    %cst_110 = arith.constant 1.000000e+00 : f32
    %534 = vector.broadcast %cst_110 : f32 to vector<8x128xf32>
    %535 = arith.addf %534, %533 : vector<8x128xf32>
    %536 = arith.divf %534, %535 : vector<8x128xf32>
    %537 = vector.extract_strided_slice %530 {offsets = [0, 128], sizes = [8, 128], strides = [1, 1]} : vector<8x512xf32> to vector<8x128xf32>
    %538 = arith.negf %537 : vector<8x128xf32>
    %539 = math.exp %538 : vector<8x128xf32>
    %cst_111 = arith.constant 1.000000e+00 : f32
    %540 = vector.broadcast %cst_111 : f32 to vector<8x128xf32>
    %541 = arith.addf %540, %539 : vector<8x128xf32>
    %542 = arith.divf %540, %541 : vector<8x128xf32>
    %543 = vector.extract_strided_slice %530 {offsets = [0, 256], sizes = [8, 128], strides = [1, 1]} : vector<8x512xf32> to vector<8x128xf32>
    %544 = vector.extract_strided_slice %530 {offsets = [0, 384], sizes = [8, 128], strides = [1, 1]} : vector<8x512xf32> to vector<8x128xf32>
    %545 = arith.mulf %536, %544 : vector<8x128xf32>
    %546 = arith.addf %543, %545 : vector<8x128xf32>
    %547 = math.tanh %546 : vector<8x128xf32>
    %cst_112 = arith.constant 1.000000e+00 : f32
    %548 = vector.broadcast %cst_112 : f32 to vector<8x128xf32>
    %549 = arith.subf %548, %542 : vector<8x128xf32>
    %550 = arith.mulf %549, %547 : vector<8x128xf32>
    %551 = arith.mulf %542, %491 : vector<8x128xf32>
    %552 = arith.addf %550, %551 : vector<8x128xf32>
    %cst_113 = arith.constant dense<0.000000e+00> : vector<8x128xf32>
    %553 = tpu.matmul %552, %500, %cst_113 {dimension_numbers = #tpu.dot_dimension_numbers<[1], [0], [0], [1], [0, 0, 1, 1], [], []>} : vector<8x128xf32>, vector<128x128xf32>, vector<8x128xf32> -> vector<8x128xf32>
    %554 = arith.addf %553, %501 : vector<8x128xf32>
    %555 = arith.addf %554, %502 : vector<8x128xf32>
    %c0_114 = arith.constant 0 : index
    %c0_115 = arith.constant 0 : index
    %c0_116 = arith.constant 0 : index
    %556 = vector.load %arg10[%c0_114, %c0_115, %c0_116] : memref<4x8x128xf32, #tpu.memory_space<vmem>>, vector<1x8x128xf32>
    %557 = vector.shape_cast %556 : vector<1x8x128xf32> to vector<8x128xf32>
    %558 = vector.shape_cast %555 : vector<8x128xf32> to vector<1x8x128xf32>
    tpu.vector_store %arg10[%c0_114, %c0_115, %c0_116], %558 {strides = array<i32>} : memref<4x8x128xf32, #tpu.memory_space<vmem>>, vector<1x8x128xf32>,
    %559 = tpu.concatenate %555, %527 in 1 : vector<8x128xf32>, vector<8x128xf32> -> vector<8x256xf32>
    %cst_117 = arith.constant dense<0.000000e+00> : vector<8x512xf32>
    %560 = tpu.matmul %559, %493, %cst_117 {dimension_numbers = #tpu.dot_dimension_numbers<[1], [0], [0], [1], [0, 0, 1, 1], [], []>} : vector<8x256xf32>, vector<256x512xf32>, vector<8x512xf32> -> vector<8x512xf32>
    %561 = arith.addf %560, %497 : vector<8x512xf32>
    %562 = vector.extract_strided_slice %561 {offsets = [0, 0], sizes = [8, 128], strides = [1, 1]} : vector<8x512xf32> to vector<8x128xf32>
    %563 = arith.negf %562 : vector<8x128xf32>
    %564 = math.exp %563 : vector<8x128xf32>
    %cst_118 = arith.constant 1.000000e+00 : f32
    %565 = vector.broadcast %cst_118 : f32 to vector<8x128xf32>
    %566 = arith.addf %565, %564 : vector<8x128xf32>
    %567 = arith.divf %565, %566 : vector<8x128xf32>
    %568 = vector.extract_strided_slice %561 {offsets = [0, 128], sizes = [8, 128], strides = [1, 1]} : vector<8x512xf32> to vector<8x128xf32>
    %569 = arith.negf %568 : vector<8x128xf32>
    %570 = math.exp %569 : vector<8x128xf32>
    %cst_119 = arith.constant 1.000000e+00 : f32
    %571 = vector.broadcast %cst_119 : f32 to vector<8x128xf32>
    %572 = arith.addf %571, %570 : vector<8x128xf32>
    %573 = arith.divf %571, %572 : vector<8x128xf32>
    %574 = vector.extract_strided_slice %561 {offsets = [0, 256], sizes = [8, 128], strides = [1, 1]} : vector<8x512xf32> to vector<8x128xf32>
    %575 = vector.extract_strided_slice %561 {offsets = [0, 384], sizes = [8, 128], strides = [1, 1]} : vector<8x512xf32> to vector<8x128xf32>
    %576 = arith.mulf %567, %575 : vector<8x128xf32>
    %577 = arith.addf %574, %576 : vector<8x128xf32>
    %578 = math.tanh %577 : vector<8x128xf32>
    %cst_120 = arith.constant 1.000000e+00 : f32
    %579 = vector.broadcast %cst_120 : f32 to vector<8x128xf32>
    %580 = arith.subf %579, %573 : vector<8x128xf32>
    %581 = arith.mulf %580, %578 : vector<8x128xf32>
    %582 = arith.mulf %573, %527 : vector<8x128xf32>
    %583 = arith.addf %581, %582 : vector<8x128xf32>
    %584 = tpu.concatenate %583, %552 in 1 : vector<8x128xf32>, vector<8x128xf32> -> vector<8x256xf32>
    %cst_121 = arith.constant dense<0.000000e+00> : vector<8x512xf32>
    %585 = tpu.matmul %584, %495, %cst_121 {dimension_numbers = #tpu.dot_dimension_numbers<[1], [0], [0], [1], [0, 0, 1, 1], [], []>} : vector<8x256xf32>, vector<256x512xf32>, vector<8x512xf32> -> vector<8x512xf32>
    %586 = arith.addf %585, %499 : vector<8x512xf32>
    %587 = vector.extract_strided_slice %586 {offsets = [0, 0], sizes = [8, 128], strides = [1, 1]} : vector<8x512xf32> to vector<8x128xf32>
    %588 = arith.negf %587 : vector<8x128xf32>
    %589 = math.exp %588 : vector<8x128xf32>
    %cst_122 = arith.constant 1.000000e+00 : f32
    %590 = vector.broadcast %cst_122 : f32 to vector<8x128xf32>
    %591 = arith.addf %590, %589 : vector<8x128xf32>
    %592 = arith.divf %590, %591 : vector<8x128xf32>
    %593 = vector.extract_strided_slice %586 {offsets = [0, 128], sizes = [8, 128], strides = [1, 1]} : vector<8x512xf32> to vector<8x128xf32>
    %594 = arith.negf %593 : vector<8x128xf32>
    %595 = math.exp %594 : vector<8x128xf32>
    %cst_123 = arith.constant 1.000000e+00 : f32
    %596 = vector.broadcast %cst_123 : f32 to vector<8x128xf32>
    %597 = arith.addf %596, %595 : vector<8x128xf32>
    %598 = arith.divf %596, %597 : vector<8x128xf32>
    %599 = vector.extract_strided_slice %586 {offsets = [0, 256], sizes = [8, 128], strides = [1, 1]} : vector<8x512xf32> to vector<8x128xf32>
    %600 = vector.extract_strided_slice %586 {offsets = [0, 384], sizes = [8, 128], strides = [1, 1]} : vector<8x512xf32> to vector<8x128xf32>
    %601 = arith.mulf %592, %600 : vector<8x128xf32>
    %602 = arith.addf %599, %601 : vector<8x128xf32>
    %603 = math.tanh %602 : vector<8x128xf32>
    %cst_124 = arith.constant 1.000000e+00 : f32
    %604 = vector.broadcast %cst_124 : f32 to vector<8x128xf32>
    %605 = arith.subf %604, %598 : vector<8x128xf32>
    %606 = arith.mulf %605, %603 : vector<8x128xf32>
    %607 = arith.mulf %598, %552 : vector<8x128xf32>
    %608 = arith.addf %606, %607 : vector<8x128xf32>
    %cst_125 = arith.constant dense<0.000000e+00> : vector<8x128xf32>
    %609 = tpu.matmul %608, %500, %cst_125 {dimension_numbers = #tpu.dot_dimension_numbers<[1], [0], [0], [1], [0, 0, 1, 1], [], []>} : vector<8x128xf32>, vector<128x128xf32>, vector<8x128xf32> -> vector<8x128xf32>
    %610 = arith.addf %609, %501 : vector<8x128xf32>
    %611 = arith.addf %610, %555 : vector<8x128xf32>
    %c1_126 = arith.constant 1 : index
    %c0_127 = arith.constant 0 : index
    %c0_128 = arith.constant 0 : index
    %612 = vector.load %arg10[%c1_126, %c0_127, %c0_128] : memref<4x8x128xf32, #tpu.memory_space<vmem>>, vector<1x8x128xf32>
    %613 = vector.shape_cast %612 : vector<1x8x128xf32> to vector<8x128xf32>
    %614 = vector.shape_cast %611 : vector<8x128xf32> to vector<1x8x128xf32>
    tpu.vector_store %arg10[%c1_126, %c0_127, %c0_128], %614 {strides = array<i32>} : memref<4x8x128xf32, #tpu.memory_space<vmem>>, vector<1x8x128xf32>,
    %615 = tpu.concatenate %611, %583 in 1 : vector<8x128xf32>, vector<8x128xf32> -> vector<8x256xf32>
    %cst_129 = arith.constant dense<0.000000e+00> : vector<8x512xf32>
    %616 = tpu.matmul %615, %493, %cst_129 {dimension_numbers = #tpu.dot_dimension_numbers<[1], [0], [0], [1], [0, 0, 1, 1], [], []>} : vector<8x256xf32>, vector<256x512xf32>, vector<8x512xf32> -> vector<8x512xf32>
    %617 = arith.addf %616, %497 : vector<8x512xf32>
    %618 = vector.extract_strided_slice %617 {offsets = [0, 0], sizes = [8, 128], strides = [1, 1]} : vector<8x512xf32> to vector<8x128xf32>
    %619 = arith.negf %618 : vector<8x128xf32>
    %620 = math.exp %619 : vector<8x128xf32>
    %cst_130 = arith.constant 1.000000e+00 : f32
    %621 = vector.broadcast %cst_130 : f32 to vector<8x128xf32>
    %622 = arith.addf %621, %620 : vector<8x128xf32>
    %623 = arith.divf %621, %622 : vector<8x128xf32>
    %624 = vector.extract_strided_slice %617 {offsets = [0, 128], sizes = [8, 128], strides = [1, 1]} : vector<8x512xf32> to vector<8x128xf32>
    %625 = arith.negf %624 : vector<8x128xf32>
    %626 = math.exp %625 : vector<8x128xf32>
    %cst_131 = arith.constant 1.000000e+00 : f32
    %627 = vector.broadcast %cst_131 : f32 to vector<8x128xf32>
    %628 = arith.addf %627, %626 : vector<8x128xf32>
    %629 = arith.divf %627, %628 : vector<8x128xf32>
    %630 = vector.extract_strided_slice %617 {offsets = [0, 256], sizes = [8, 128], strides = [1, 1]} : vector<8x512xf32> to vector<8x128xf32>
    %631 = vector.extract_strided_slice %617 {offsets = [0, 384], sizes = [8, 128], strides = [1, 1]} : vector<8x512xf32> to vector<8x128xf32>
    %632 = arith.mulf %623, %631 : vector<8x128xf32>
    %633 = arith.addf %630, %632 : vector<8x128xf32>
    %634 = math.tanh %633 : vector<8x128xf32>
    %cst_132 = arith.constant 1.000000e+00 : f32
    %635 = vector.broadcast %cst_132 : f32 to vector<8x128xf32>
    %636 = arith.subf %635, %629 : vector<8x128xf32>
    %637 = arith.mulf %636, %634 : vector<8x128xf32>
    %638 = arith.mulf %629, %583 : vector<8x128xf32>
    %639 = arith.addf %637, %638 : vector<8x128xf32>
    %640 = tpu.concatenate %639, %608 in 1 : vector<8x128xf32>, vector<8x128xf32> -> vector<8x256xf32>
    %cst_133 = arith.constant dense<0.000000e+00> : vector<8x512xf32>
    %641 = tpu.matmul %640, %495, %cst_133 {dimension_numbers = #tpu.dot_dimension_numbers<[1], [0], [0], [1], [0, 0, 1, 1], [], []>} : vector<8x256xf32>, vector<256x512xf32>, vector<8x512xf32> -> vector<8x512xf32>
    %642 = arith.addf %641, %499 : vector<8x512xf32>
    %643 = vector.extract_strided_slice %642 {offsets = [0, 0], sizes = [8, 128], strides = [1, 1]} : vector<8x512xf32> to vector<8x128xf32>
    %644 = arith.negf %643 : vector<8x128xf32>
    %645 = math.exp %644 : vector<8x128xf32>
    %cst_134 = arith.constant 1.000000e+00 : f32
    %646 = vector.broadcast %cst_134 : f32 to vector<8x128xf32>
    %647 = arith.addf %646, %645 : vector<8x128xf32>
    %648 = arith.divf %646, %647 : vector<8x128xf32>
    %649 = vector.extract_strided_slice %642 {offsets = [0, 128], sizes = [8, 128], strides = [1, 1]} : vector<8x512xf32> to vector<8x128xf32>
    %650 = arith.negf %649 : vector<8x128xf32>
    %651 = math.exp %650 : vector<8x128xf32>
    %cst_135 = arith.constant 1.000000e+00 : f32
    %652 = vector.broadcast %cst_135 : f32 to vector<8x128xf32>
    %653 = arith.addf %652, %651 : vector<8x128xf32>
    %654 = arith.divf %652, %653 : vector<8x128xf32>
    %655 = vector.extract_strided_slice %642 {offsets = [0, 256], sizes = [8, 128], strides = [1, 1]} : vector<8x512xf32> to vector<8x128xf32>
    %656 = vector.extract_strided_slice %642 {offsets = [0, 384], sizes = [8, 128], strides = [1, 1]} : vector<8x512xf32> to vector<8x128xf32>
    %657 = arith.mulf %648, %656 : vector<8x128xf32>
    %658 = arith.addf %655, %657 : vector<8x128xf32>
    %659 = math.tanh %658 : vector<8x128xf32>
    %cst_136 = arith.constant 1.000000e+00 : f32
    %660 = vector.broadcast %cst_136 : f32 to vector<8x128xf32>
    %661 = arith.subf %660, %654 : vector<8x128xf32>
    %662 = arith.mulf %661, %659 : vector<8x128xf32>
    %663 = arith.mulf %654, %608 : vector<8x128xf32>
    %664 = arith.addf %662, %663 : vector<8x128xf32>
    %cst_137 = arith.constant dense<0.000000e+00> : vector<8x128xf32>
    %665 = tpu.matmul %664, %500, %cst_137 {dimension_numbers = #tpu.dot_dimension_numbers<[1], [0], [0], [1], [0, 0, 1, 1], [], []>} : vector<8x128xf32>, vector<128x128xf32>, vector<8x128xf32> -> vector<8x128xf32>
    %666 = arith.addf %665, %501 : vector<8x128xf32>
    %667 = arith.addf %666, %611 : vector<8x128xf32>
    %c2 = arith.constant 2 : index
    %c0_138 = arith.constant 0 : index
    %c0_139 = arith.constant 0 : index
    %668 = vector.load %arg10[%c2, %c0_138, %c0_139] : memref<4x8x128xf32, #tpu.memory_space<vmem>>, vector<1x8x128xf32>
    %669 = vector.shape_cast %668 : vector<1x8x128xf32> to vector<8x128xf32>
    %670 = vector.shape_cast %667 : vector<8x128xf32> to vector<1x8x128xf32>
    tpu.vector_store %arg10[%c2, %c0_138, %c0_139], %670 {strides = array<i32>} : memref<4x8x128xf32, #tpu.memory_space<vmem>>, vector<1x8x128xf32>,
    %671 = tpu.concatenate %667, %639 in 1 : vector<8x128xf32>, vector<8x128xf32> -> vector<8x256xf32>
    %cst_140 = arith.constant dense<0.000000e+00> : vector<8x512xf32>
    %672 = tpu.matmul %671, %493, %cst_140 {dimension_numbers = #tpu.dot_dimension_numbers<[1], [0], [0], [1], [0, 0, 1, 1], [], []>} : vector<8x256xf32>, vector<256x512xf32>, vector<8x512xf32> -> vector<8x512xf32>
    %673 = arith.addf %672, %497 : vector<8x512xf32>
    %674 = vector.extract_strided_slice %673 {offsets = [0, 0], sizes = [8, 128], strides = [1, 1]} : vector<8x512xf32> to vector<8x128xf32>
    %675 = arith.negf %674 : vector<8x128xf32>
    %676 = math.exp %675 : vector<8x128xf32>
    %cst_141 = arith.constant 1.000000e+00 : f32
    %677 = vector.broadcast %cst_141 : f32 to vector<8x128xf32>
    %678 = arith.addf %677, %676 : vector<8x128xf32>
    %679 = arith.divf %677, %678 : vector<8x128xf32>
    %680 = vector.extract_strided_slice %673 {offsets = [0, 128], sizes = [8, 128], strides = [1, 1]} : vector<8x512xf32> to vector<8x128xf32>
    %681 = arith.negf %680 : vector<8x128xf32>
    %682 = math.exp %681 : vector<8x128xf32>
    %cst_142 = arith.constant 1.000000e+00 : f32
    %683 = vector.broadcast %cst_142 : f32 to vector<8x128xf32>
    %684 = arith.addf %683, %682 : vector<8x128xf32>
    %685 = arith.divf %683, %684 : vector<8x128xf32>
    %686 = vector.extract_strided_slice %673 {offsets = [0, 256], sizes = [8, 128], strides = [1, 1]} : vector<8x512xf32> to vector<8x128xf32>
    %687 = vector.extract_strided_slice %673 {offsets = [0, 384], sizes = [8, 128], strides = [1, 1]} : vector<8x512xf32> to vector<8x128xf32>
    %688 = arith.mulf %679, %687 : vector<8x128xf32>
    %689 = arith.addf %686, %688 : vector<8x128xf32>
    %690 = math.tanh %689 : vector<8x128xf32>
    %cst_143 = arith.constant 1.000000e+00 : f32
    %691 = vector.broadcast %cst_143 : f32 to vector<8x128xf32>
    %692 = arith.subf %691, %685 : vector<8x128xf32>
    %693 = arith.mulf %692, %690 : vector<8x128xf32>
    %694 = arith.mulf %685, %639 : vector<8x128xf32>
    %695 = arith.addf %693, %694 : vector<8x128xf32>
    %696 = tpu.concatenate %695, %664 in 1 : vector<8x128xf32>, vector<8x128xf32> -> vector<8x256xf32>
    %cst_144 = arith.constant dense<0.000000e+00> : vector<8x512xf32>
    %697 = tpu.matmul %696, %495, %cst_144 {dimension_numbers = #tpu.dot_dimension_numbers<[1], [0], [0], [1], [0, 0, 1, 1], [], []>} : vector<8x256xf32>, vector<256x512xf32>, vector<8x512xf32> -> vector<8x512xf32>
    %698 = arith.addf %697, %499 : vector<8x512xf32>
    %699 = vector.extract_strided_slice %698 {offsets = [0, 0], sizes = [8, 128], strides = [1, 1]} : vector<8x512xf32> to vector<8x128xf32>
    %700 = arith.negf %699 : vector<8x128xf32>
    %701 = math.exp %700 : vector<8x128xf32>
    %cst_145 = arith.constant 1.000000e+00 : f32
    %702 = vector.broadcast %cst_145 : f32 to vector<8x128xf32>
    %703 = arith.addf %702, %701 : vector<8x128xf32>
    %704 = arith.divf %702, %703 : vector<8x128xf32>
    %705 = vector.extract_strided_slice %698 {offsets = [0, 128], sizes = [8, 128], strides = [1, 1]} : vector<8x512xf32> to vector<8x128xf32>
    %706 = arith.negf %705 : vector<8x128xf32>
    %707 = math.exp %706 : vector<8x128xf32>
    %cst_146 = arith.constant 1.000000e+00 : f32
    %708 = vector.broadcast %cst_146 : f32 to vector<8x128xf32>
    %709 = arith.addf %708, %707 : vector<8x128xf32>
    %710 = arith.divf %708, %709 : vector<8x128xf32>
    %711 = vector.extract_strided_slice %698 {offsets = [0, 256], sizes = [8, 128], strides = [1, 1]} : vector<8x512xf32> to vector<8x128xf32>
    %712 = vector.extract_strided_slice %698 {offsets = [0, 384], sizes = [8, 128], strides = [1, 1]} : vector<8x512xf32> to vector<8x128xf32>
    %713 = arith.mulf %704, %712 : vector<8x128xf32>
    %714 = arith.addf %711, %713 : vector<8x128xf32>
    %715 = math.tanh %714 : vector<8x128xf32>
    %cst_147 = arith.constant 1.000000e+00 : f32
    %716 = vector.broadcast %cst_147 : f32 to vector<8x128xf32>
    %717 = arith.subf %716, %710 : vector<8x128xf32>
    %718 = arith.mulf %717, %715 : vector<8x128xf32>
    %719 = arith.mulf %710, %664 : vector<8x128xf32>
    %720 = arith.addf %718, %719 : vector<8x128xf32>
    %cst_148 = arith.constant dense<0.000000e+00> : vector<8x128xf32>
    %721 = tpu.matmul %720, %500, %cst_148 {dimension_numbers = #tpu.dot_dimension_numbers<[1], [0], [0], [1], [0, 0, 1, 1], [], []>} : vector<8x128xf32>, vector<128x128xf32>, vector<8x128xf32> -> vector<8x128xf32>
    %722 = arith.addf %721, %501 : vector<8x128xf32>
    %723 = arith.addf %722, %667 : vector<8x128xf32>
    %c3 = arith.constant 3 : index
    %c0_149 = arith.constant 0 : index
    %c0_150 = arith.constant 0 : index
    %724 = vector.load %arg10[%c3, %c0_149, %c0_150] : memref<4x8x128xf32, #tpu.memory_space<vmem>>, vector<1x8x128xf32>
    %725 = vector.shape_cast %724 : vector<1x8x128xf32> to vector<8x128xf32>
    %726 = vector.shape_cast %723 : vector<8x128xf32> to vector<1x8x128xf32>
    tpu.vector_store %arg10[%c3, %c0_149, %c0_150], %726 {strides = array<i32>} : memref<4x8x128xf32, #tpu.memory_space<vmem>>, vector<1x8x128xf32>,
    return
  }
}

</mosaic_0001>

<llo_original>
// kernel: seq2seq_forward.1
$region0: #{seq2seq_forward.1}
  #allocation0 [shape = 'u32[]', space=smem, size = 0x4, offset = 0x4, fixed_abs, tag = 'smem constant byte address 0x4 - core index']
  #allocation1 [shape = 'u32[144,128]{1,0:T(1,128)}', space=vmem, size = 0x12000, scoped, tag = 'internal scratch']
  %s0 = inlined_call_operand.vmem [shape: f32[64,128], index: 0, kind: input, shape index: {}]
  %s1 = inlined_call_operand.vmem [shape: f32[8,128], index: 1, kind: input, shape index: {}]
  %s2 = inlined_call_operand.hbm [shape: f32[2,128,384], index: 2, kind: input, shape index: {}]
  %s3 = inlined_call_operand.hbm [shape: f32[2,128,384], index: 3, kind: input, shape index: {}]
  %s4 = inlined_call_operand.vmem [shape: f32[2,8,384], index: 4, kind: input, shape index: {}]
  %s5 = inlined_call_operand.vmem [shape: f32[2,8,384], index: 5, kind: input, shape index: {}]
  %s6 = inlined_call_operand.hbm [shape: f32[2,256,512], index: 6, kind: input, shape index: {}]
  %s7 = inlined_call_operand.vmem [shape: f32[2,8,512], index: 7, kind: input, shape index: {}]
  %s8 = inlined_call_operand.vmem [shape: f32[128,128], index: 8, kind: input, shape index: {}]
  %s9 = inlined_call_operand.vmem [shape: f32[8,128], index: 9, kind: input, shape index: {}]
  %s10 = inlined_call_operand.vmem [shape: f32[4,8,128], index: 10, kind: output, shape index: {}]
  %s11 = sld [smem:[#allocation0]]
  $region62: #{seq2seq_forward.1} parent=0
    _
  %s13 = ssub.s32 1, %s11
  %s14 = scalar_select 0, %s13, %s11
  $region1: #{seq2seq_forward.1} parent=0
    #allocation2 [shape = 'u8[393216]{0}', space=vmem, size = 0x60000, scoped, tag = 'input window, operand 2, single buffered']
    #allocation3 [shape = 's32[1]{0}', space=sflag, size = 0x4, scoped, tag = 'scoped memory for seq2seq_forward.1']
    #allocation4 [shape = 'u8[393216]{0}', space=vmem, size = 0x60000, scoped, tag = 'input window, operand 3, single buffered']
    #allocation5 [shape = 's32[1]{0}', space=sflag, size = 0x4, scoped, tag = 'scoped memory for seq2seq_forward.1']
    #allocation6 [shape = 'u8[1048576]{0}', space=vmem, size = 0x100000, scoped, tag = 'input window, operand 6, single buffered']
    %15 = vsyncpa [#allocation3], 0
    %16 = vsyncpa [#allocation5], 0
    // Predicated region
    $region2: #{seq2seq_forward.1} parent=1 // pred_check
      _
    $region3: #{seq2seq_forward.1} parent=1 // pred_check_branch
      %18 = sbr.rel (0) target = $region5
    $region4: #{seq2seq_forward.1} parent=1 // pred_region
      _
    $region5: #{seq2seq_forward.1} parent=1 // pred_fallthru
      _
    // Predicated region
    $region6: #{seq2seq_forward.1} parent=1 // pred_check
      _
    $region7: #{seq2seq_forward.1} parent=1 // pred_check_branch
      %20 = sbr.rel (0) target = $region9
    $region8: #{seq2seq_forward.1} parent=1 // pred_region
      _
    $region9: #{seq2seq_forward.1} parent=1 // pred_fallthru
      _
    // Predicated region
    $region10: #{seq2seq_forward.1} parent=1 // pred_check
      _
    $region11: #{seq2seq_forward.1} parent=1 // pred_check_branch
      %22 = sbr.rel (0) target = $region13
    $region12: #{seq2seq_forward.1} parent=1 // pred_region
      %s24 = ssub.s32 12288, 12288
      %25 = vsyncadd [#allocation3], %s24
      %s26 = sshll.u32 [#allocation2], 4
      %s27 = int_to_ptr.vmem [resolvable:$true] %s26
      %32 = dma.hbm_to_vmem [thread:$0]  %s2, 12288, %s27, [#allocation3], 384, 384, 24
    $region13: #{seq2seq_forward.1} parent=1 // pred_fallthru
      _
    // Predicated region
    $region14: #{seq2seq_forward.1} parent=1 // pred_check
      _
    $region15: #{seq2seq_forward.1} parent=1 // pred_check_branch
      %34 = sbr.rel (0) target = $region17
    $region16: #{seq2seq_forward.1} parent=1 // pred_region
      %s36 = ssub.s32 12288, 12288
      %37 = vsyncadd [#allocation5], %s36
      %s38 = sshll.u32 [#allocation4], 4
      %s39 = int_to_ptr.vmem [resolvable:$true] %s38
      %44 = dma.hbm_to_vmem [thread:$0]  %s3, 12288, %s39, [#allocation5], 384, 384, 24
    $region17: #{seq2seq_forward.1} parent=1 // pred_fallthru
      _
    // Predicated region
    $region18: #{seq2seq_forward.1} parent=1 // pred_check
      _
    $region19: #{seq2seq_forward.1} parent=1 // pred_check_branch
      %46 = sbr.rel (0) target = $region21
    $region20: #{seq2seq_forward.1} parent=1 // pred_region
      _
    $region21: #{seq2seq_forward.1} parent=1 // pred_fallthru
      _
    // Predicated region
    $region22: #{seq2seq_forward.1} parent=1 // pred_check
      _
    $region23: #{seq2seq_forward.1} parent=1 // pred_check_branch
      %48 = sbr.rel (0) target = $region25
    $region24: #{seq2seq_forward.1} parent=1 // pred_region
      _
    $region25: #{seq2seq_forward.1} parent=1 // pred_fallthru
      _
    // Predicated region
    $region26: #{seq2seq_forward.1} parent=1 // pred_check
      _
    $region27: #{seq2seq_forward.1} parent=1 // pred_check_branch
      %50 = sbr.rel (0) target = $region29
    $region28: #{seq2seq_forward.1} parent=1 // pred_region
      %s52 = ssub.s32 32768, 32768
      %53 = vsyncadd [#allocation5], %s52
      %s54 = sshll.u32 [#allocation6], 4
      %s55 = int_to_ptr.vmem [resolvable:$true] %s54
      %60 = dma.hbm_to_vmem [thread:$0]  %s6, 32768, %s55, [#allocation5], 512, 512, 32
    $region29: #{seq2seq_forward.1} parent=1 // pred_fallthru
      _
    // Predicated region
    $region30: #{seq2seq_forward.1} parent=1 // pred_check
      _
    $region31: #{seq2seq_forward.1} parent=1 // pred_check_branch
      %62 = sbr.rel (0) target = $region33
    $region32: #{seq2seq_forward.1} parent=1 // pred_region
      _
    $region33: #{seq2seq_forward.1} parent=1 // pred_fallthru
      _
    // Predicated region
    $region34: #{seq2seq_forward.1} parent=1 // pred_check
      _
    $region35: #{seq2seq_forward.1} parent=1 // pred_check_branch
      %64 = sbr.rel (0) target = $region37
    $region36: #{seq2seq_forward.1} parent=1 // pred_region
      _
    $region37: #{seq2seq_forward.1} parent=1 // pred_fallthru
      _
    // Predicated region
    $region38: #{seq2seq_forward.1} parent=1 // pred_check
      _
    $region39: #{seq2seq_forward.1} parent=1 // pred_check_branch
      %66 = sbr.rel (0) target = $region41
    $region40: #{seq2seq_forward.1} parent=1 // pred_region
      _
    $region41: #{seq2seq_forward.1} parent=1 // pred_fallthru
      _
    // Predicated region
    $region42: #{seq2seq_forward.1} parent=1 // pred_check
      _
    $region43: #{seq2seq_forward.1} parent=1 // pred_check_branch
      %68 = sbr.rel (0) target = $region45
    $region44: #{seq2seq_forward.1} parent=1 // pred_region
      %69 = dma.done [#allocation3], 12288
    $region45: #{seq2seq_forward.1} parent=1 // pred_fallthru
      _
    // Predicated region
    $region46: #{seq2seq_forward.1} parent=1 // pred_check
      _
    $region47: #{seq2seq_forward.1} parent=1 // pred_check_branch
      %71 = sbr.rel (0) target = $region49
    $region48: #{seq2seq_forward.1} parent=1 // pred_region
      %72 = dma.done [#allocation5], 12288
    $region49: #{seq2seq_forward.1} parent=1 // pred_fallthru
      _
    // Predicated region
    $region50: #{seq2seq_forward.1} parent=1 // pred_check
      _
    $region51: #{seq2seq_forward.1} parent=1 // pred_check_branch
      %74 = sbr.rel (0) target = $region53
    $region52: #{seq2seq_forward.1} parent=1 // pred_region
      %75 = dma.done [#allocation5], 32768
    $region53: #{seq2seq_forward.1} parent=1 // pred_fallthru
      _
    %v76 = vld [vmem:[%s0] sm:$0xff]
    %v77 = vld [vmem:[%s0 + $0x8] sm:$0xff]
    %v78 = vld [vmem:[%s0 + $0x10] sm:$0xff]
    %v79 = vld [vmem:[%s0 + $0x18] sm:$0xff]
    %v80 = vld [vmem:[%s0 + $0x20] sm:$0xff]
    %v81 = vld [vmem:[%s0 + $0x28] sm:$0xff]
    %v82 = vld [vmem:[%s0 + $0x30] sm:$0xff]
    %v83 = vld [vmem:[%s0 + $0x38] sm:$0xff]
    %v84 = vld [vmem:[#allocation2] sm:$0xff]
    %v85 = vld [vmem:[#allocation2 + $0x8] sm:$0xff]
    %v86 = vld [vmem:[#allocation2 + $0x10] sm:$0xff]
    %v87 = vld [vmem:[#allocation2 + $0x18] sm:$0xff]
    %v88 = vld [vmem:[#allocation2 + $0x20] sm:$0xff]
    %v89 = vld [vmem:[#allocation2 + $0x28] sm:$0xff]
    %v90 = vld [vmem:[#allocation2 + $0x30] sm:$0xff]
    %v91 = vld [vmem:[#allocation2 + $0x38] sm:$0xff]
    %v92 = vld [vmem:[#allocation2 + $0x40] sm:$0xff]
    %v93 = vld [vmem:[#allocation2 + $0x48] sm:$0xff]
    %v94 = vld [vmem:[#allocation2 + $0x50] sm:$0xff]
    %v95 = vld [vmem:[#allocation2 + $0x58] sm:$0xff]
    %v96 = vld [vmem:[#allocation2 + $0x60] sm:$0xff]
    %v97 = vld [vmem:[#allocation2 + $0x68] sm:$0xff]
    %v98 = vld [vmem:[#allocation2 + $0x70] sm:$0xff]
    %v99 = vld [vmem:[#allocation2 + $0x78] sm:$0xff]
    %v100 = vld [vmem:[#allocation2 + $0x80] sm:$0xff]
    %v101 = vld [vmem:[#allocation2 + $0x88] sm:$0xff]
    %v102 = vld [vmem:[#allocation2 + $0x90] sm:$0xff]
    %v103 = vld [vmem:[#allocation2 + $0x98] sm:$0xff]
    %v104 = vld [vmem:[#allocation2 + $0xa0] sm:$0xff]
    %v105 = vld [vmem:[#allocation2 + $0xa8] sm:$0xff]
    %v106 = vld [vmem:[#allocation2 + $0xb0] sm:$0xff]
    %v107 = vld [vmem:[#allocation2 + $0xb8] sm:$0xff]
    %v108 = vld [vmem:[#allocation2 + $0xc0] sm:$0xff]
    %v109 = vld [vmem:[#allocation2 + $0xc8] sm:$0xff]
    %v110 = vld [vmem:[#allocation2 + $0xd0] sm:$0xff]
    %v111 = vld [vmem:[#allocation2 + $0xd8] sm:$0xff]
    %v112 = vld [vmem:[#allocation2 + $0xe0] sm:$0xff]
    %v113 = vld [vmem:[#allocation2 + $0xe8] sm:$0xff]
    %v114 = vld [vmem:[#allocation2 + $0xf0] sm:$0xff]
    %v115 = vld [vmem:[#allocation2 + $0xf8] sm:$0xff]
    %v116 = vld [vmem:[#allocation2 + $0x100] sm:$0xff]
    %v117 = vld [vmem:[#allocation2 + $0x108] sm:$0xff]
    %v118 = vld [vmem:[#allocation2 + $0x110] sm:$0xff]
    %v119 = vld [vmem:[#allocation2 + $0x118] sm:$0xff]
    %v120 = vld [vmem:[#allocation2 + $0x120] sm:$0xff]
    %v121 = vld [vmem:[#allocation2 + $0x128] sm:$0xff]
    %v122 = vld [vmem:[#allocation2 + $0x130] sm:$0xff]
    %v123 = vld [vmem:[#allocation2 + $0x138] sm:$0xff]
    %v124 = vld [vmem:[#allocation2 + $0x140] sm:$0xff]
    %v125 = vld [vmem:[#allocation2 + $0x148] sm:$0xff]
    %v126 = vld [vmem:[#allocation2 + $0x150] sm:$0xff]
    %v127 = vld [vmem:[#allocation2 + $0x158] sm:$0xff]
    %v128 = vld [vmem:[#allocation2 + $0x160] sm:$0xff]
    %v129 = vld [vmem:[#allocation2 + $0x168] sm:$0xff]
    %v130 = vld [vmem:[#allocation2 + $0x170] sm:$0xff]
    %v131 = vld [vmem:[#allocation2 + $0x178] sm:$0xff]
    %v132 = vld [vmem:[#allocation4] sm:$0xff]
    %v133 = vld [vmem:[#allocation4 + $0x8] sm:$0xff]
    %v134 = vld [vmem:[#allocation4 + $0x10] sm:$0xff]
    %v135 = vld [vmem:[#allocation4 + $0x18] sm:$0xff]
    %v136 = vld [vmem:[#allocation4 + $0x20] sm:$0xff]
    %v137 = vld [vmem:[#allocation4 + $0x28] sm:$0xff]
    %v138 = vld [vmem:[#allocation4 + $0x30] sm:$0xff]
    %v139 = vld [vmem:[#allocation4 + $0x38] sm:$0xff]
    %v140 = vld [vmem:[#allocation4 + $0x40] sm:$0xff]
    %v141 = vld [vmem:[#allocation4 + $0x48] sm:$0xff]
    %v142 = vld [vmem:[#allocation4 + $0x50] sm:$0xff]
    %v143 = vld [vmem:[#allocation4 + $0x58] sm:$0xff]
    %v144 = vld [vmem:[#allocation4 + $0x60] sm:$0xff]
    %v145 = vld [vmem:[#allocation4 + $0x68] sm:$0xff]
    %v146 = vld [vmem:[#allocation4 + $0x70] sm:$0xff]
    %v147 = vld [vmem:[#allocation4 + $0x78] sm:$0xff]
    %v148 = vld [vmem:[#allocation4 + $0x80] sm:$0xff]
    %v149 = vld [vmem:[#allocation4 + $0x88] sm:$0xff]
    %v150 = vld [vmem:[#allocation4 + $0x90] sm:$0xff]
    %v151 = vld [vmem:[#allocation4 + $0x98] sm:$0xff]
    %v152 = vld [vmem:[#allocation4 + $0xa0] sm:$0xff]
    %v153 = vld [vmem:[#allocation4 + $0xa8] sm:$0xff]
    %v154 = vld [vmem:[#allocation4 + $0xb0] sm:$0xff]
    %v155 = vld [vmem:[#allocation4 + $0xb8] sm:$0xff]
    %v156 = vld [vmem:[#allocation4 + $0xc0] sm:$0xff]
    %v157 = vld [vmem:[#allocation4 + $0xc8] sm:$0xff]
    %v158 = vld [vmem:[#allocation4 + $0xd0] sm:$0xff]
    %v159 = vld [vmem:[#allocation4 + $0xd8] sm:$0xff]
    %v160 = vld [vmem:[#allocation4 + $0xe0] sm:$0xff]
    %v161 = vld [vmem:[#allocation4 + $0xe8] sm:$0xff]
    %v162 = vld [vmem:[#allocation4 + $0xf0] sm:$0xff]
    %v163 = vld [vmem:[#allocation4 + $0xf8] sm:$0xff]
    %v164 = vld [vmem:[#allocation4 + $0x100] sm:$0xff]
    %v165 = vld [vmem:[#allocation4 + $0x108] sm:$0xff]
    %v166 = vld [vmem:[#allocation4 + $0x110] sm:$0xff]
    %v167 = vld [vmem:[#allocation4 + $0x118] sm:$0xff]
    %v168 = vld [vmem:[#allocation4 + $0x120] sm:$0xff]
    %v169 = vld [vmem:[#allocation4 + $0x128] sm:$0xff]
    %v170 = vld [vmem:[#allocation4 + $0x130] sm:$0xff]
    %v171 = vld [vmem:[#allocation4 + $0x138] sm:$0xff]
    %v172 = vld [vmem:[#allocation4 + $0x140] sm:$0xff]
    %v173 = vld [vmem:[#allocation4 + $0x148] sm:$0xff]
    %v174 = vld [vmem:[#allocation4 + $0x150] sm:$0xff]
    %v175 = vld [vmem:[#allocation4 + $0x158] sm:$0xff]
    %v176 = vld [vmem:[#allocation4 + $0x160] sm:$0xff]
    %v177 = vld [vmem:[#allocation4 + $0x168] sm:$0xff]
    %v178 = vld [vmem:[#allocation4 + $0x170] sm:$0xff]
    %v179 = vld [vmem:[#allocation4 + $0x178] sm:$0xff]
    %v180 = vld [vmem:[%s4] sm:$0xff]
    %v181 = vld [vmem:[%s4 + $0x8] sm:$0xff]
    %v182 = vld [vmem:[%s4 + $0x10] sm:$0xff]
    %v183 = vld [vmem:[%s5] sm:$0xff]
    %v184 = vld [vmem:[%s5 + $0x8] sm:$0xff]
    %v185 = vld [vmem:[%s5 + $0x10] sm:$0xff]
    %186 = vmatprep.subr.mxu0 %v130
    %187 = vmatpush1.msra.mxu0 %v129
    %188 = vmatprep.subr.mxu0 %v127
    %189 = vmatpush1.msra.mxu0 %v126
    %190 = vmatprep.subr.mxu0 %v124
    %191 = vmatpush1.msra.mxu0 %v123
    %192 = vmatprep.subr.mxu0 %v121
    %193 = vmatpush1.msra.mxu0 %v120
    %194 = vmatprep.subr.mxu0 %v118
    %195 = vmatpush1.msra.mxu0 %v117
    %196 = vmatprep.subr.mxu0 %v115
    %197 = vmatpush1.msra.mxu0 %v114
    %198 = vmatprep.subr.mxu0 %v112
    %199 = vmatpush1.msra.mxu0 %v111
    %200 = vmatprep.subr.mxu0 %v109
    %201 = vmatpush1.msra.mxu0 %v108
    %202 = vmatprep.subr.mxu0 %v106
    %203 = vmatpush1.msra.mxu0 %v105
    %204 = vmatprep.subr.mxu0 %v103
    %205 = vmatpush1.msra.mxu0 %v102
    %206 = vmatprep.subr.mxu0 %v100
    %207 = vmatpush1.msra.mxu0 %v99
    %208 = vmatprep.subr.mxu0 %v97
    %209 = vmatpush1.msra.mxu0 %v96
    %210 = vmatprep.subr.mxu0 %v94
    %211 = vmatpush1.msra.mxu0 %v93
    %212 = vmatprep.subr.mxu0 %v91
    %213 = vmatpush1.msra.mxu0 %v90
    %214 = vmatprep.subr.mxu0 %v88
    %215 = vmatpush1.msra.mxu0 %v87
    %216 = vmatprep.subr.mxu0 %v85
    %217 = vmatpush1.msra.mxu0 %v84
    %218 = vmatprep.subr.mxu0 0.0
    %219 = vmatpush2.msra.mxu0 0.0
    %220 = vmatprep.subr.mxu0 0.0
    %221 = vmatpush2.msra.mxu0 0.0
    %222 = vmatprep.subr.mxu0 0.0
    %223 = vmatpush2.msra.mxu0 0.0
    %224 = vmatprep.subr.mxu0 0.0
    %225 = vmatpush2.msra.mxu0 0.0
    %226 = vmatprep.subr.mxu0 0.0
    %227 = vmatpush2.msra.mxu0 0.0
    %228 = vmatprep.subr.mxu0 0.0
    %229 = vmatpush2.msra.mxu0 0.0
    %230 = vmatprep.subr.mxu0 0.0
    %231 = vmatpush2.msra.mxu0 0.0
    %232 = vmatprep.subr.mxu0 0.0
    %233 = vmatpush2.msra.mxu0 0.0
    %234 = vmatprep.subr.mxu0 0.0
    %235 = vmatpush2.msra.mxu0 0.0
    %236 = vmatprep.subr.mxu0 0.0
    %237 = vmatpush2.msra.mxu0 0.0
    %238 = vmatprep.subr.mxu0 0.0
    %239 = vmatpush2.msra.mxu0 0.0
    %240 = vmatprep.subr.mxu0 0.0
    %241 = vmatpush2.msra.mxu0 0.0
    %242 = vmatprep.subr.mxu0 0.0
    %243 = vmatpush2.msra.mxu0 0.0
    %244 = vmatprep.subr.mxu0 0.0
    %245 = vmatpush2.msra.mxu0 0.0
    %246 = vmatprep.subr.mxu0 0.0
    %247 = vmatpush2.msra.mxu0 0.0
    %248 = vmatprep.subr.mxu0 0.0
    %249 = vmatpush2.msra.mxu0 0.0
    %250 = vmatprep.mubr.f32.mxu0 0.0
    %251 = vmatmul.mubr.f32.gmra.mxu0 %v76
    %v252 = vpop.f32.mrf.mxu0
    %v253 = vadd.f32 0.0, %v252
    %v254 = vpop.f32.mrf.mxu0
    %v255 = vadd.f32 0.0, %v254
    %256 = vmatprep.mubr.f32.mxu0 0.0
    %257 = vmatmul.mubr.f32.gmra.mxu0 %v77
    %v258 = vpop.f32.mrf.mxu0
    %v259 = vadd.f32 0.0, %v258
    %v260 = vpop.f32.mrf.mxu0
    %v261 = vadd.f32 0.0, %v260
    %262 = vmatprep.mubr.f32.mxu0 0.0
    %263 = vmatmul.mubr.f32.gmra.mxu0 %v78
    %v264 = vpop.f32.mrf.mxu0
    %v265 = vadd.f32 0.0, %v264
    %v266 = vpop.f32.mrf.mxu0
    %v267 = vadd.f32 0.0, %v266
    %268 = vmatprep.mubr.f32.mxu0 0.0
    %269 = vmatmul.mubr.f32.gmra.mxu0 %v79
    %v270 = vpop.f32.mrf.mxu0
    %v271 = vadd.f32 0.0, %v270
    %v272 = vpop.f32.mrf.mxu0
    %v273 = vadd.f32 0.0, %v272
    %274 = vmatprep.mubr.f32.mxu0 0.0
    %275 = vmatmul.mubr.f32.gmra.mxu0 %v80
    %v276 = vpop.f32.mrf.mxu0
    %v277 = vadd.f32 0.0, %v276
    %v278 = vpop.f32.mrf.mxu0
    %v279 = vadd.f32 0.0, %v278
    %280 = vmatprep.mubr.f32.mxu0 0.0
    %281 = vmatmul.mubr.f32.gmra.mxu0 %v81
    %v282 = vpop.f32.mrf.mxu0
    %v283 = vadd.f32 0.0, %v282
    %v284 = vpop.f32.mrf.mxu0
    %v285 = vadd.f32 0.0, %v284
    %286 = vmatprep.mubr.f32.mxu0 0.0
    %287 = vmatmul.mubr.f32.gmra.mxu0 %v82
    %v288 = vpop.f32.mrf.mxu0
    %v289 = vadd.f32 0.0, %v288
    %v290 = vpop.f32.mrf.mxu0
    %v291 = vadd.f32 0.0, %v290
    %292 = vmatprep.mubr.f32.mxu0 0.0
    %293 = vmatmul.mubr.f32.gmra.mxu0 %v83
    %v294 = vpop.f32.mrf.mxu0
    %v295 = vadd.f32 0.0, %v294
    %v296 = vpop.f32.mrf.mxu0
    %v297 = vadd.f32 0.0, %v296
    %298 = vdwg.mxu0
    %299 = vmatprep.subr.mxu0 0.0
    %300 = vmatpush1.msra.mxu0 %v131
    %301 = vmatprep.subr.mxu0 0.0
    %302 = vmatpush1.msra.mxu0 %v128
    %303 = vmatprep.subr.mxu0 0.0
    %304 = vmatpush1.msra.mxu0 %v125
    %305 = vmatprep.subr.mxu0 0.0
    %306 = vmatpush1.msra.mxu0 %v122
    %307 = vmatprep.subr.mxu0 0.0
    %308 = vmatpush1.msra.mxu0 %v119
    %309 = vmatprep.subr.mxu0 0.0
    %310 = vmatpush1.msra.mxu0 %v116
    %311 = vmatprep.subr.mxu0 0.0
    %312 = vmatpush1.msra.mxu0 %v113
    %313 = vmatprep.subr.mxu0 0.0
    %314 = vmatpush1.msra.mxu0 %v110
    %315 = vmatprep.subr.mxu0 0.0
    %316 = vmatpush1.msra.mxu0 %v107
    %317 = vmatprep.subr.mxu0 0.0
    %318 = vmatpush1.msra.mxu0 %v104
    %319 = vmatprep.subr.mxu0 0.0
    %320 = vmatpush1.msra.mxu0 %v101
    %321 = vmatprep.subr.mxu0 0.0
    %322 = vmatpush1.msra.mxu0 %v98
    %323 = vmatprep.subr.mxu0 0.0
    %324 = vmatpush1.msra.mxu0 %v95
    %325 = vmatprep.subr.mxu0 0.0
    %326 = vmatpush1.msra.mxu0 %v92
    %327 = vmatprep.subr.mxu0 0.0
    %328 = vmatpush1.msra.mxu0 %v89
    %329 = vmatprep.subr.mxu0 0.0
    %330 = vmatpush1.msra.mxu0 %v86
    %331 = vmatprep.subr.mxu0 0.0
    %332 = vmatpush2.msra.mxu0 0.0
    %333 = vmatprep.subr.mxu0 0.0
    %334 = vmatpush2.msra.mxu0 0.0
    %335 = vmatprep.subr.mxu0 0.0
    %336 = vmatpush2.msra.mxu0 0.0
    %337 = vmatprep.subr.mxu0 0.0
    %338 = vmatpush2.msra.mxu0 0.0
    %339 = vmatprep.subr.mxu0 0.0
    %340 = vmatpush2.msra.mxu0 0.0
    %341 = vmatprep.subr.mxu0 0.0
    %342 = vmatpush2.msra.mxu0 0.0
    %343 = vmatprep.subr.mxu0 0.0
    %344 = vmatpush2.msra.mxu0 0.0
    %345 = vmatprep.subr.mxu0 0.0
    %346 = vmatpush2.msra.mxu0 0.0
    %347 = vmatprep.subr.mxu0 0.0
    %348 = vmatpush2.msra.mxu0 0.0
    %349 = vmatprep.subr.mxu0 0.0
    %350 = vmatpush2.msra.mxu0 0.0
    %351 = vmatprep.subr.mxu0 0.0
    %352 = vmatpush2.msra.mxu0 0.0
    %353 = vmatprep.subr.mxu0 0.0
    %354 = vmatpush2.msra.mxu0 0.0
    %355 = vmatprep.subr.mxu0 0.0
    %356 = vmatpush2.msra.mxu0 0.0
    %357 = vmatprep.subr.mxu0 0.0
    %358 = vmatpush2.msra.mxu0 0.0
    %359 = vmatprep.subr.mxu0 0.0
    %360 = vmatpush2.msra.mxu0 0.0
    %361 = vmatprep.subr.mxu0 0.0
    %362 = vmatpush2.msra.mxu0 0.0
    %363 = vmatprep.mubr.f32.mxu0 0.0
    %364 = vmatmul.mubr.f32.gmra.mxu0 %v76
    %v365 = vpop.f32.mrf.mxu0
    %v366 = vadd.f32 0.0, %v365
    %v367 = vpop.f32.mrf.mxu0
    %368 = vmatprep.mubr.f32.mxu0 0.0
    %369 = vmatmul.mubr.f32.gmra.mxu0 %v77
    %v370 = vpop.f32.mrf.mxu0
    %v371 = vadd.f32 0.0, %v370
    %v372 = vpop.f32.mrf.mxu0
    %373 = vmatprep.mubr.f32.mxu0 0.0
    %374 = vmatmul.mubr.f32.gmra.mxu0 %v78
    %v375 = vpop.f32.mrf.mxu0
    %v376 = vadd.f32 0.0, %v375
    %v377 = vpop.f32.mrf.mxu0
    %378 = vmatprep.mubr.f32.mxu0 0.0
    %379 = vmatmul.mubr.f32.gmra.mxu0 %v79
    %v380 = vpop.f32.mrf.mxu0
    %v381 = vadd.f32 0.0, %v380
    %v382 = vpop.f32.mrf.mxu0
    %383 = vmatprep.mubr.f32.mxu0 0.0
    %384 = vmatmul.mubr.f32.gmra.mxu0 %v80
    %v385 = vpop.f32.mrf.mxu0
    %v386 = vadd.f32 0.0, %v385
    %v387 = vpop.f32.mrf.mxu0
    %388 = vmatprep.mubr.f32.mxu0 0.0
    %389 = vmatmul.mubr.f32.gmra.mxu0 %v81
    %v390 = vpop.f32.mrf.mxu0
    %v391 = vadd.f32 0.0, %v390
    %v392 = vpop.f32.mrf.mxu0
    %393 = vmatprep.mubr.f32.mxu0 0.0
    %394 = vmatmul.mubr.f32.gmra.mxu0 %v82
    %v395 = vpop.f32.mrf.mxu0
    %v396 = vadd.f32 0.0, %v395
    %v397 = vpop.f32.mrf.mxu0
    %398 = vmatprep.mubr.f32.mxu0 0.0
    %399 = vmatmul.mubr.f32.gmra.mxu0 %v83
    %v400 = vpop.f32.mrf.mxu0
    %v401 = vadd.f32 0.0, %v400
    %v402 = vpop.f32.mrf.mxu0
    %403 = vdwg.mxu0
    %v404 = vadd.f32 %v253, %v180
    %v405 = vadd.f32 %v255, %v181
    %v406 = vadd.f32 %v366, %v182
    %v407 = vadd.f32 %v404, %v183
    %v408 = vxor.u32 %v407, 2147483648
    %v409 = vmul.f32 %v408, 1.442695
    %v410 = vpow.pop %v409
    %v411 = vadd.f32 %v410, 1.0
    %v412 = vrcp.pop %v411
    %v413 = vmul.f32 1.0, %v412
    %v414 = vadd.f32 %v405, %v184
    %v415 = vxor.u32 %v414, 2147483648
    %v416 = vmul.f32 %v415, 1.442695
    %v417 = vpow.pop %v416
    %v418 = vadd.f32 %v417, 1.0
    %v419 = vrcp.pop %v418
    %v420 = vmul.f32 1.0, %v419
    %v421 = vmul.f32 %v413, %v185
    %v422 = vadd.f32 %v406, %v421
    %v423 = vtanh.pop %v422
    %v424 = vsub.f32 1.0, %v420
    %v425 = vmul.f32 %v424, %v423
    %v426 = vadd.f32 %v259, %v180
    %v427 = vadd.f32 %v261, %v181
    %v428 = vadd.f32 %v371, %v182
    %429 = vmatprep.subr.mxu0 %v178
    %430 = vmatpush1.msra.mxu0 %v177
    %431 = vmatprep.subr.mxu0 %v175
    %432 = vmatpush1.msra.mxu0 %v174
    %433 = vmatprep.subr.mxu0 %v172
    %434 = vmatpush1.msra.mxu0 %v171
    %435 = vmatprep.subr.mxu0 %v169
    %436 = vmatpush1.msra.mxu0 %v168
    %437 = vmatprep.subr.mxu0 %v166
    %438 = vmatpush1.msra.mxu0 %v165
    %439 = vmatprep.subr.mxu0 %v163
    %440 = vmatpush1.msra.mxu0 %v162
    %441 = vmatprep.subr.mxu0 %v160
    %442 = vmatpush1.msra.mxu0 %v159
    %443 = vmatprep.subr.mxu0 %v157
    %444 = vmatpush1.msra.mxu0 %v156
    %445 = vmatprep.subr.mxu0 %v154
    %446 = vmatpush1.msra.mxu0 %v153
    %447 = vmatprep.subr.mxu0 %v151
    %448 = vmatpush1.msra.mxu0 %v150
    %449 = vmatprep.subr.mxu0 %v148
    %450 = vmatpush1.msra.mxu0 %v147
    %451 = vmatprep.subr.mxu0 %v145
    %452 = vmatpush1.msra.mxu0 %v144
    %453 = vmatprep.subr.mxu0 %v142
    %454 = vmatpush1.msra.mxu0 %v141
    %455 = vmatprep.subr.mxu0 %v139
    %456 = vmatpush1.msra.mxu0 %v138
    %457 = vmatprep.subr.mxu0 %v136
    %458 = vmatpush1.msra.mxu0 %v135
    %459 = vmatprep.subr.mxu0 %v133
    %460 = vmatpush1.msra.mxu0 %v132
    %461 = vmatprep.subr.mxu0 0.0
    %462 = vmatpush2.msra.mxu0 0.0
    %463 = vmatprep.subr.mxu0 0.0
    %464 = vmatpush2.msra.mxu0 0.0
    %465 = vmatprep.subr.mxu0 0.0
    %466 = vmatpush2.msra.mxu0 0.0
    %467 = vmatprep.subr.mxu0 0.0
    %468 = vmatpush2.msra.mxu0 0.0
    %469 = vmatprep.subr.mxu0 0.0
    %470 = vmatpush2.msra.mxu0 0.0
    %471 = vmatprep.subr.mxu0 0.0
    %472 = vmatpush2.msra.mxu0 0.0
    %473 = vmatprep.subr.mxu0 0.0
    %474 = vmatpush2.msra.mxu0 0.0
    %475 = vmatprep.subr.mxu0 0.0
    %476 = vmatpush2.msra.mxu0 0.0
    %477 = vmatprep.subr.mxu0 0.0
    %478 = vmatpush2.msra.mxu0 0.0
    %479 = vmatprep.subr.mxu0 0.0
    %480 = vmatpush2.msra.mxu0 0.0
    %481 = vmatprep.subr.mxu0 0.0
    %482 = vmatpush2.msra.mxu0 0.0
    %483 = vmatprep.subr.mxu0 0.0
    %484 = vmatpush2.msra.mxu0 0.0
    %485 = vmatprep.subr.mxu0 0.0
    %486 = vmatpush2.msra.mxu0 0.0
    %487 = vmatprep.subr.mxu0 0.0
    %488 = vmatpush2.msra.mxu0 0.0
    %489 = vmatprep.subr.mxu0 0.0
    %490 = vmatpush2.msra.mxu0 0.0
    %491 = vmatprep.subr.mxu0 0.0
    %492 = vmatpush2.msra.mxu0 0.0
    %493 = vmatprep.mubr.f32.mxu0 0.0
    %494 = vmatmul.mubr.f32.gmra.mxu0 %v425
    %v495 = vpop.f32.mrf.mxu0
    %v496 = vadd.f32 %v183, %v495
    %v497 = vpop.f32.mrf.mxu0
    %v498 = vadd.f32 %v184, %v497
    %499 = vdwg.mxu0
    %500 = vmatprep.subr.mxu0 0.0
    %501 = vmatpush1.msra.mxu0 %v179
    %502 = vmatprep.subr.mxu0 0.0
    %503 = vmatpush1.msra.mxu0 %v176
    %504 = vmatprep.subr.mxu0 0.0
    %505 = vmatpush1.msra.mxu0 %v173
    %506 = vmatprep.subr.mxu0 0.0
    %507 = vmatpush1.msra.mxu0 %v170
    %508 = vmatprep.subr.mxu0 0.0
    %509 = vmatpush1.msra.mxu0 %v167
    %510 = vmatprep.subr.mxu0 0.0
    %511 = vmatpush1.msra.mxu0 %v164
    %512 = vmatprep.subr.mxu0 0.0
    %513 = vmatpush1.msra.mxu0 %v161
    %514 = vmatprep.subr.mxu0 0.0
    %515 = vmatpush1.msra.mxu0 %v158
    %516 = vmatprep.subr.mxu0 0.0
    %517 = vmatpush1.msra.mxu0 %v155
    %518 = vmatprep.subr.mxu0 0.0
    %519 = vmatpush1.msra.mxu0 %v152
    %520 = vmatprep.subr.mxu0 0.0
    %521 = vmatpush1.msra.mxu0 %v149
    %522 = vmatprep.subr.mxu0 0.0
    %523 = vmatpush1.msra.mxu0 %v146
    %524 = vmatprep.subr.mxu0 0.0
    %525 = vmatpush1.msra.mxu0 %v143
    %526 = vmatprep.subr.mxu0 0.0
    %527 = vmatpush1.msra.mxu0 %v140
    %528 = vmatprep.subr.mxu0 0.0
    %529 = vmatpush1.msra.mxu0 %v137
    %530 = vmatprep.subr.mxu0 0.0
    %531 = vmatpush1.msra.mxu0 %v134
    %532 = vmatprep.subr.mxu0 0.0
    %533 = vmatpush2.msra.mxu0 0.0
    %534 = vmatprep.subr.mxu0 0.0
    %535 = vmatpush2.msra.mxu0 0.0
    %536 = vmatprep.subr.mxu0 0.0
    %537 = vmatpush2.msra.mxu0 0.0
    %538 = vmatprep.subr.mxu0 0.0
    %539 = vmatpush2.msra.mxu0 0.0
    %540 = vmatprep.subr.mxu0 0.0
    %541 = vmatpush2.msra.mxu0 0.0
    %542 = vmatprep.subr.mxu0 0.0
    %543 = vmatpush2.msra.mxu0 0.0
    %544 = vmatprep.subr.mxu0 0.0
    %545 = vmatpush2.msra.mxu0 0.0
    %546 = vmatprep.subr.mxu0 0.0
    %547 = vmatpush2.msra.mxu0 0.0
    %548 = vmatprep.subr.mxu0 0.0
    %549 = vmatpush2.msra.mxu0 0.0
    %550 = vmatprep.subr.mxu0 0.0
    %551 = vmatpush2.msra.mxu0 0.0
    %552 = vmatprep.subr.mxu0 0.0
    %553 = vmatpush2.msra.mxu0 0.0
    %554 = vmatprep.subr.mxu0 0.0
    %555 = vmatpush2.msra.mxu0 0.0
    %556 = vmatprep.subr.mxu0 0.0
    %557 = vmatpush2.msra.mxu0 0.0
    %558 = vmatprep.subr.mxu0 0.0
    %559 = vmatpush2.msra.mxu0 0.0
    %560 = vmatprep.subr.mxu0 0.0
    %561 = vmatpush2.msra.mxu0 0.0
    %562 = vmatprep.subr.mxu0 0.0
    %563 = vmatpush2.msra.mxu0 0.0
    %564 = vmatprep.mubr.f32.mxu0 0.0
    %565 = vmatmul.mubr.f32.gmra.mxu0 %v425
    %v566 = vpop.f32.mrf.mxu0
    %v567 = vadd.f32 %v185, %v566
    %v568 = vpop.f32.mrf.mxu0
    %569 = vdwg.mxu0
    %v570 = vadd.f32 %v426, %v496
    %v571 = vxor.u32 %v570, 2147483648
    %v572 = vmul.f32 %v571, 1.442695
    %v573 = vpow.pop %v572
    %v574 = vadd.f32 %v573, 1.0
    %v575 = vrcp.pop %v574
    %v576 = vmul.f32 1.0, %v575
    %v577 = vadd.f32 %v427, %v498
    %v578 = vxor.u32 %v577, 2147483648
    %v579 = vmul.f32 %v578, 1.442695
    %v580 = vpow.pop %v579
    %v581 = vadd.f32 %v580, 1.0
    %v582 = vrcp.pop %v581
    %v583 = vmul.f32 1.0, %v582
    %v584 = vmul.f32 %v576, %v567
    %v585 = vadd.f32 %v428, %v584
    %v586 = vtanh.pop %v585
    %v587 = vsub.f32 1.0, %v583
    %v588 = vmul.f32 %v587, %v586
    %v589 = vmul.f32 %v583, %v425
    %v590 = vadd.f32 %v588, %v589
    %v591 = vadd.f32 %v265, %v180
    %v592 = vadd.f32 %v267, %v181
    %v593 = vadd.f32 %v376, %v182
    %594 = vmatprep.subr.mxu0 %v178
    %595 = vmatpush1.msra.mxu0 %v177
    %596 = vmatprep.subr.mxu0 %v175
    %597 = vmatpush1.msra.mxu0 %v174
    %598 = vmatprep.subr.mxu0 %v172
    %599 = vmatpush1.msra.mxu0 %v171
    %600 = vmatprep.subr.mxu0 %v169
    %601 = vmatpush1.msra.mxu0 %v168
    %602 = vmatprep.subr.mxu0 %v166
    %603 = vmatpush1.msra.mxu0 %v165
    %604 = vmatprep.subr.mxu0 %v163
    %605 = vmatpush1.msra.mxu0 %v162
    %606 = vmatprep.subr.mxu0 %v160
    %607 = vmatpush1.msra.mxu0 %v159
    %608 = vmatprep.subr.mxu0 %v157
    %609 = vmatpush1.msra.mxu0 %v156
    %610 = vmatprep.subr.mxu0 %v154
    %611 = vmatpush1.msra.mxu0 %v153
    %612 = vmatprep.subr.mxu0 %v151
    %613 = vmatpush1.msra.mxu0 %v150
    %614 = vmatprep.subr.mxu0 %v148
    %615 = vmatpush1.msra.mxu0 %v147
    %616 = vmatprep.subr.mxu0 %v145
    %617 = vmatpush1.msra.mxu0 %v144
    %618 = vmatprep.subr.mxu0 %v142
    %619 = vmatpush1.msra.mxu0 %v141
    %620 = vmatprep.subr.mxu0 %v139
    %621 = vmatpush1.msra.mxu0 %v138
    %622 = vmatprep.subr.mxu0 %v136
    %623 = vmatpush1.msra.mxu0 %v135
    %624 = vmatprep.subr.mxu0 %v133
    %625 = vmatpush1.msra.mxu0 %v132
    %626 = vmatprep.subr.mxu0 0.0
    %627 = vmatpush2.msra.mxu0 0.0
    %628 = vmatprep.subr.mxu0 0.0
    %629 = vmatpush2.msra.mxu0 0.0
    %630 = vmatprep.subr.mxu0 0.0
    %631 = vmatpush2.msra.mxu0 0.0
    %632 = vmatprep.subr.mxu0 0.0
    %633 = vmatpush2.msra.mxu0 0.0
    %634 = vmatprep.subr.mxu0 0.0
    %635 = vmatpush2.msra.mxu0 0.0
    %636 = vmatprep.subr.mxu0 0.0
    %637 = vmatpush2.msra.mxu0 0.0
    %638 = vmatprep.subr.mxu0 0.0
    %639 = vmatpush2.msra.mxu0 0.0
    %640 = vmatprep.subr.mxu0 0.0
    %641 = vmatpush2.msra.mxu0 0.0
    %642 = vmatprep.subr.mxu0 0.0
    %643 = vmatpush2.msra.mxu0 0.0
    %644 = vmatprep.subr.mxu0 0.0
    %645 = vmatpush2.msra.mxu0 0.0
    %646 = vmatprep.subr.mxu0 0.0
    %647 = vmatpush2.msra.mxu0 0.0
    %648 = vmatprep.subr.mxu0 0.0
    %649 = vmatpush2.msra.mxu0 0.0
    %650 = vmatprep.subr.mxu0 0.0
    %651 = vmatpush2.msra.mxu0 0.0
    %652 = vmatprep.subr.mxu0 0.0
    %653 = vmatpush2.msra.mxu0 0.0
    %654 = vmatprep.subr.mxu0 0.0
    %655 = vmatpush2.msra.mxu0 0.0
    %656 = vmatprep.subr.mxu0 0.0
    %657 = vmatpush2.msra.mxu0 0.0
    %658 = vmatprep.mubr.f32.mxu0 0.0
    %659 = vmatmul.mubr.f32.gmra.mxu0 %v590
    %v660 = vpop.f32.mrf.mxu0
    %v661 = vadd.f32 %v183, %v660
    %v662 = vpop.f32.mrf.mxu0
    %v663 = vadd.f32 %v184, %v662
    %664 = vdwg.mxu0
    %665 = vmatprep.subr.mxu0 0.0
    %666 = vmatpush1.msra.mxu0 %v179
    %667 = vmatprep.subr.mxu0 0.0
    %668 = vmatpush1.msra.mxu0 %v176
    %669 = vmatprep.subr.mxu0 0.0
    %670 = vmatpush1.msra.mxu0 %v173
    %671 = vmatprep.subr.mxu0 0.0
    %672 = vmatpush1.msra.mxu0 %v170
    %673 = vmatprep.subr.mxu0 0.0
    %674 = vmatpush1.msra.mxu0 %v167
    %675 = vmatprep.subr.mxu0 0.0
    %676 = vmatpush1.msra.mxu0 %v164
    %677 = vmatprep.subr.mxu0 0.0
    %678 = vmatpush1.msra.mxu0 %v161
    %679 = vmatprep.subr.mxu0 0.0
    %680 = vmatpush1.msra.mxu0 %v158
    %681 = vmatprep.subr.mxu0 0.0
    %682 = vmatpush1.msra.mxu0 %v155
    %683 = vmatprep.subr.mxu0 0.0
    %684 = vmatpush1.msra.mxu0 %v152
    %685 = vmatprep.subr.mxu0 0.0
    %686 = vmatpush1.msra.mxu0 %v149
    %687 = vmatprep.subr.mxu0 0.0
    %688 = vmatpush1.msra.mxu0 %v146
    %689 = vmatprep.subr.mxu0 0.0
    %690 = vmatpush1.msra.mxu0 %v143
    %691 = vmatprep.subr.mxu0 0.0
    %692 = vmatpush1.msra.mxu0 %v140
    %693 = vmatprep.subr.mxu0 0.0
    %694 = vmatpush1.msra.mxu0 %v137
    %695 = vmatprep.subr.mxu0 0.0
    %696 = vmatpush1.msra.mxu0 %v134
    %697 = vmatprep.subr.mxu0 0.0
    %698 = vmatpush2.msra.mxu0 0.0
    %699 = vmatprep.subr.mxu0 0.0
    %700 = vmatpush2.msra.mxu0 0.0
    %701 = vmatprep.subr.mxu0 0.0
    %702 = vmatpush2.msra.mxu0 0.0
    %703 = vmatprep.subr.mxu0 0.0
    %704 = vmatpush2.msra.mxu0 0.0
    %705 = vmatprep.subr.mxu0 0.0
    %706 = vmatpush2.msra.mxu0 0.0
    %707 = vmatprep.subr.mxu0 0.0
    %708 = vmatpush2.msra.mxu0 0.0
    %709 = vmatprep.subr.mxu0 0.0
    %710 = vmatpush2.msra.mxu0 0.0
    %711 = vmatprep.subr.mxu0 0.0
    %712 = vmatpush2.msra.mxu0 0.0
    %713 = vmatprep.subr.mxu0 0.0
    %714 = vmatpush2.msra.mxu0 0.0
    %715 = vmatprep.subr.mxu0 0.0
    %716 = vmatpush2.msra.mxu0 0.0
    %717 = vmatprep.subr.mxu0 0.0
    %718 = vmatpush2.msra.mxu0 0.0
    %719 = vmatprep.subr.mxu0 0.0
    %720 = vmatpush2.msra.mxu0 0.0
    %721 = vmatprep.subr.mxu0 0.0
    %722 = vmatpush2.msra.mxu0 0.0
    %723 = vmatprep.subr.mxu0 0.0
    %724 = vmatpush2.msra.mxu0 0.0
    %725 = vmatprep.subr.mxu0 0.0
    %726 = vmatpush2.msra.mxu0 0.0
    %727 = vmatprep.subr.mxu0 0.0
    %728 = vmatpush2.msra.mxu0 0.0
    %729 = vmatprep.mubr.f32.mxu0 0.0
    %730 = vmatmul.mubr.f32.gmra.mxu0 %v590
    %v731 = vpop.f32.mrf.mxu0
    %v732 = vadd.f32 %v185, %v731
    %v733 = vpop.f32.mrf.mxu0
    %734 = vdwg.mxu0
    %v735 = vadd.f32 %v591, %v661
    %v736 = vxor.u32 %v735, 2147483648
    %v737 = vmul.f32 %v736, 1.442695
    %v738 = vpow.pop %v737
    %v739 = vadd.f32 %v738, 1.0
    %v740 = vrcp.pop %v739
    %v741 = vmul.f32 1.0, %v740
    %v742 = vadd.f32 %v592, %v663
    %v743 = vxor.u32 %v742, 2147483648
    %v744 = vmul.f32 %v743, 1.442695
    %v745 = vpow.pop %v744
    %v746 = vadd.f32 %v745, 1.0
    %v747 = vrcp.pop %v746
    %v748 = vmul.f32 1.0, %v747
    %v749 = vmul.f32 %v741, %v732
    %v750 = vadd.f32 %v593, %v749
    %v751 = vtanh.pop %v750
    %v752 = vsub.f32 1.0, %v748
    %v753 = vmul.f32 %v752, %v751
    %v754 = vmul.f32 %v748, %v590
    %v755 = vadd.f32 %v753, %v754
    %v756 = vadd.f32 %v271, %v180
    %v757 = vadd.f32 %v273, %v181
    %v758 = vadd.f32 %v381, %v182
    %759 = vmatprep.subr.mxu0 %v178
    %760 = vmatpush1.msra.mxu0 %v177
    %761 = vmatprep.subr.mxu0 %v175
    %762 = vmatpush1.msra.mxu0 %v174
    %763 = vmatprep.subr.mxu0 %v172
    %764 = vmatpush1.msra.mxu0 %v171
    %765 = vmatprep.subr.mxu0 %v169
    %766 = vmatpush1.msra.mxu0 %v168
    %767 = vmatprep.subr.mxu0 %v166
    %768 = vmatpush1.msra.mxu0 %v165
    %769 = vmatprep.subr.mxu0 %v163
    %770 = vmatpush1.msra.mxu0 %v162
    %771 = vmatprep.subr.mxu0 %v160
    %772 = vmatpush1.msra.mxu0 %v159
    %773 = vmatprep.subr.mxu0 %v157
    %774 = vmatpush1.msra.mxu0 %v156
    %775 = vmatprep.subr.mxu0 %v154
    %776 = vmatpush1.msra.mxu0 %v153
    %777 = vmatprep.subr.mxu0 %v151
    %778 = vmatpush1.msra.mxu0 %v150
    %779 = vmatprep.subr.mxu0 %v148
    %780 = vmatpush1.msra.mxu0 %v147
    %781 = vmatprep.subr.mxu0 %v145
    %782 = vmatpush1.msra.mxu0 %v144
    %783 = vmatprep.subr.mxu0 %v142
    %784 = vmatpush1.msra.mxu0 %v141
    %785 = vmatprep.subr.mxu0 %v139
    %786 = vmatpush1.msra.mxu0 %v138
    %787 = vmatprep.subr.mxu0 %v136
    %788 = vmatpush1.msra.mxu0 %v135
    %789 = vmatprep.subr.mxu0 %v133
    %790 = vmatpush1.msra.mxu0 %v132
    %791 = vmatprep.subr.mxu0 0.0
    %792 = vmatpush2.msra.mxu0 0.0
    %793 = vmatprep.subr.mxu0 0.0
    %794 = vmatpush2.msra.mxu0 0.0
    %795 = vmatprep.subr.mxu0 0.0
    %796 = vmatpush2.msra.mxu0 0.0
    %797 = vmatprep.subr.mxu0 0.0
    %798 = vmatpush2.msra.mxu0 0.0
    %799 = vmatprep.subr.mxu0 0.0
    %800 = vmatpush2.msra.mxu0 0.0
    %801 = vmatprep.subr.mxu0 0.0
    %802 = vmatpush2.msra.mxu0 0.0
    %803 = vmatprep.subr.mxu0 0.0
    %804 = vmatpush2.msra.mxu0 0.0
    %805 = vmatprep.subr.mxu0 0.0
    %806 = vmatpush2.msra.mxu0 0.0
    %807 = vmatprep.subr.mxu0 0.0
    %808 = vmatpush2.msra.mxu0 0.0
    %809 = vmatprep.subr.mxu0 0.0
    %810 = vmatpush2.msra.mxu0 0.0
    %811 = vmatprep.subr.mxu0 0.0
    %812 = vmatpush2.msra.mxu0 0.0
    %813 = vmatprep.subr.mxu0 0.0
    %814 = vmatpush2.msra.mxu0 0.0
    %815 = vmatprep.subr.mxu0 0.0
    %816 = vmatpush2.msra.mxu0 0.0
    %817 = vmatprep.subr.mxu0 0.0
    %818 = vmatpush2.msra.mxu0 0.0
    %819 = vmatprep.subr.mxu0 0.0
    %820 = vmatpush2.msra.mxu0 0.0
    %821 = vmatprep.subr.mxu0 0.0
    %822 = vmatpush2.msra.mxu0 0.0
    %823 = vmatprep.mubr.f32.mxu0 0.0
    %824 = vmatmul.mubr.f32.gmra.mxu0 %v755
    %v825 = vpop.f32.mrf.mxu0
    %v826 = vadd.f32 %v183, %v825
    %v827 = vpop.f32.mrf.mxu0
    %v828 = vadd.f32 %v184, %v827
    %829 = vdwg.mxu0
    %830 = vmatprep.subr.mxu0 0.0
    %831 = vmatpush1.msra.mxu0 %v179
    %832 = vmatprep.subr.mxu0 0.0
    %833 = vmatpush1.msra.mxu0 %v176
    %834 = vmatprep.subr.mxu0 0.0
    %835 = vmatpush1.msra.mxu0 %v173
    %836 = vmatprep.subr.mxu0 0.0
    %837 = vmatpush1.msra.mxu0 %v170
    %838 = vmatprep.subr.mxu0 0.0
    %839 = vmatpush1.msra.mxu0 %v167
    %840 = vmatprep.subr.mxu0 0.0
    %841 = vmatpush1.msra.mxu0 %v164
    %842 = vmatprep.subr.mxu0 0.0
    %843 = vmatpush1.msra.mxu0 %v161
    %844 = vmatprep.subr.mxu0 0.0
    %845 = vmatpush1.msra.mxu0 %v158
    %846 = vmatprep.subr.mxu0 0.0
    %847 = vmatpush1.msra.mxu0 %v155
    %848 = vmatprep.subr.mxu0 0.0
    %849 = vmatpush1.msra.mxu0 %v152
    %850 = vmatprep.subr.mxu0 0.0
    %851 = vmatpush1.msra.mxu0 %v149
    %852 = vmatprep.subr.mxu0 0.0
    %853 = vmatpush1.msra.mxu0 %v146
    %854 = vmatprep.subr.mxu0 0.0
    %855 = vmatpush1.msra.mxu0 %v143
    %856 = vmatprep.subr.mxu0 0.0
    %857 = vmatpush1.msra.mxu0 %v140
    %858 = vmatprep.subr.mxu0 0.0
    %859 = vmatpush1.msra.mxu0 %v137
    %860 = vmatprep.subr.mxu0 0.0
    %861 = vmatpush1.msra.mxu0 %v134
    %862 = vmatprep.subr.mxu0 0.0
    %863 = vmatpush2.msra.mxu0 0.0
    %864 = vmatprep.subr.mxu0 0.0
    %865 = vmatpush2.msra.mxu0 0.0
    %866 = vmatprep.subr.mxu0 0.0
    %867 = vmatpush2.msra.mxu0 0.0
    %868 = vmatprep.subr.mxu0 0.0
    %869 = vmatpush2.msra.mxu0 0.0
    %870 = vmatprep.subr.mxu0 0.0
    %871 = vmatpush2.msra.mxu0 0.0
    %872 = vmatprep.subr.mxu0 0.0
    %873 = vmatpush2.msra.mxu0 0.0
    %874 = vmatprep.subr.mxu0 0.0
    %875 = vmatpush2.msra.mxu0 0.0
    %876 = vmatprep.subr.mxu0 0.0
    %877 = vmatpush2.msra.mxu0 0.0
    %878 = vmatprep.subr.mxu0 0.0
    %879 = vmatpush2.msra.mxu0 0.0
    %880 = vmatprep.subr.mxu0 0.0
    %881 = vmatpush2.msra.mxu0 0.0
    %882 = vmatprep.subr.mxu0 0.0
    %883 = vmatpush2.msra.mxu0 0.0
    %884 = vmatprep.subr.mxu0 0.0
    %885 = vmatpush2.msra.mxu0 0.0
    %886 = vmatprep.subr.mxu0 0.0
    %887 = vmatpush2.msra.mxu0 0.0
    %888 = vmatprep.subr.mxu0 0.0
    %889 = vmatpush2.msra.mxu0 0.0
    %890 = vmatprep.subr.mxu0 0.0
    %891 = vmatpush2.msra.mxu0 0.0
    %892 = vmatprep.subr.mxu0 0.0
    %893 = vmatpush2.msra.mxu0 0.0
    %894 = vmatprep.mubr.f32.mxu0 0.0
    %895 = vmatmul.mubr.f32.gmra.mxu0 %v755
    %v896 = vpop.f32.mrf.mxu0
    %v897 = vadd.f32 %v185, %v896
    %v898 = vpop.f32.mrf.mxu0
    %899 = vdwg.mxu0
    %v900 = vadd.f32 %v756, %v826
    %v901 = vxor.u32 %v900, 2147483648
    %v902 = vmul.f32 %v901, 1.442695
    %v903 = vpow.pop %v902
    %v904 = vadd.f32 %v903, 1.0
    %v905 = vrcp.pop %v904
    %v906 = vmul.f32 1.0, %v905
    %v907 = vadd.f32 %v757, %v828
    %v908 = vxor.u32 %v907, 2147483648
    %v909 = vmul.f32 %v908, 1.442695
    %v910 = vpow.pop %v909
    %v911 = vadd.f32 %v910, 1.0
    %v912 = vrcp.pop %v911
    %v913 = vmul.f32 1.0, %v912
    %v914 = vmul.f32 %v906, %v897
    %v915 = vadd.f32 %v758, %v914
    %v916 = vtanh.pop %v915
    %v917 = vsub.f32 1.0, %v913
    %v918 = vmul.f32 %v917, %v916
    %v919 = vmul.f32 %v913, %v755
    %v920 = vadd.f32 %v918, %v919
    %v921 = vadd.f32 %v277, %v180
    %v922 = vadd.f32 %v279, %v181
    %v923 = vadd.f32 %v386, %v182
    %924 = vmatprep.subr.mxu0 %v178
    %925 = vmatpush1.msra.mxu0 %v177
    %926 = vmatprep.subr.mxu0 %v175
    %927 = vmatpush1.msra.mxu0 %v174
    %928 = vmatprep.subr.mxu0 %v172
    %929 = vmatpush1.msra.mxu0 %v171
    %930 = vmatprep.subr.mxu0 %v169
    %931 = vmatpush1.msra.mxu0 %v168
    %932 = vmatprep.subr.mxu0 %v166
    %933 = vmatpush1.msra.mxu0 %v165
    %934 = vmatprep.subr.mxu0 %v163
    %935 = vmatpush1.msra.mxu0 %v162
    %936 = vmatprep.subr.mxu0 %v160
    %937 = vmatpush1.msra.mxu0 %v159
    %938 = vmatprep.subr.mxu0 %v157
    %939 = vmatpush1.msra.mxu0 %v156
    %940 = vmatprep.subr.mxu0 %v154
    %941 = vmatpush1.msra.mxu0 %v153
    %942 = vmatprep.subr.mxu0 %v151
    %943 = vmatpush1.msra.mxu0 %v150
    %944 = vmatprep.subr.mxu0 %v148
    %945 = vmatpush1.msra.mxu0 %v147
    %946 = vmatprep.subr.mxu0 %v145
    %947 = vmatpush1.msra.mxu0 %v144
    %948 = vmatprep.subr.mxu0 %v142
    %949 = vmatpush1.msra.mxu0 %v141
    %950 = vmatprep.subr.mxu0 %v139
    %951 = vmatpush1.msra.mxu0 %v138
    %952 = vmatprep.subr.mxu0 %v136
    %953 = vmatpush1.msra.mxu0 %v135
    %954 = vmatprep.subr.mxu0 %v133
    %955 = vmatpush1.msra.mxu0 %v132
    %956 = vmatprep.subr.mxu0 0.0
    %957 = vmatpush2.msra.mxu0 0.0
    %958 = vmatprep.subr.mxu0 0.0
    %959 = vmatpush2.msra.mxu0 0.0
    %960 = vmatprep.subr.mxu0 0.0
    %961 = vmatpush2.msra.mxu0 0.0
    %962 = vmatprep.subr.mxu0 0.0
    %963 = vmatpush2.msra.mxu0 0.0
    %964 = vmatprep.subr.mxu0 0.0
    %965 = vmatpush2.msra.mxu0 0.0
    %966 = vmatprep.subr.mxu0 0.0
    %967 = vmatpush2.msra.mxu0 0.0
    %968 = vmatprep.subr.mxu0 0.0
    %969 = vmatpush2.msra.mxu0 0.0
    %970 = vmatprep.subr.mxu0 0.0
    %971 = vmatpush2.msra.mxu0 0.0
    %972 = vmatprep.subr.mxu0 0.0
    %973 = vmatpush2.msra.mxu0 0.0
    %974 = vmatprep.subr.mxu0 0.0
    %975 = vmatpush2.msra.mxu0 0.0
    %976 = vmatprep.subr.mxu0 0.0
    %977 = vmatpush2.msra.mxu0 0.0
    %978 = vmatprep.subr.mxu0 0.0
    %979 = vmatpush2.msra.mxu0 0.0
    %980 = vmatprep.subr.mxu0 0.0
    %981 = vmatpush2.msra.mxu0 0.0
    %982 = vmatprep.subr.mxu0 0.0
    %983 = vmatpush2.msra.mxu0 0.0
    %984 = vmatprep.subr.mxu0 0.0
    %985 = vmatpush2.msra.mxu0 0.0
    %986 = vmatprep.subr.mxu0 0.0
    %987 = vmatpush2.msra.mxu0 0.0
    %988 = vmatprep.mubr.f32.mxu0 0.0
    %989 = vmatmul.mubr.f32.gmra.mxu0 %v920
    %v990 = vpop.f32.mrf.mxu0
    %v991 = vadd.f32 %v183, %v990
    %v992 = vpop.f32.mrf.mxu0
    %v993 = vadd.f32 %v184, %v992
    %994 = vdwg.mxu0
    %995 = vmatprep.subr.mxu0 0.0
    %996 = vmatpush1.msra.mxu0 %v179
    %997 = vmatprep.subr.mxu0 0.0
    %998 = vmatpush1.msra.mxu0 %v176
    %999 = vmatprep.subr.mxu0 0.0
    %1000 = vmatpush1.msra.mxu0 %v173
    %1001 = vmatprep.subr.mxu0 0.0
    %1002 = vmatpush1.msra.mxu0 %v170
    %1003 = vmatprep.subr.mxu0 0.0
    %1004 = vmatpush1.msra.mxu0 %v167
    %1005 = vmatprep.subr.mxu0 0.0
    %1006 = vmatpush1.msra.mxu0 %v164
    %1007 = vmatprep.subr.mxu0 0.0
    %1008 = vmatpush1.msra.mxu0 %v161
    %1009 = vmatprep.subr.mxu0 0.0
    %1010 = vmatpush1.msra.mxu0 %v158
    %1011 = vmatprep.subr.mxu0 0.0
    %1012 = vmatpush1.msra.mxu0 %v155
    %1013 = vmatprep.subr.mxu0 0.0
    %1014 = vmatpush1.msra.mxu0 %v152
    %1015 = vmatprep.subr.mxu0 0.0
    %1016 = vmatpush1.msra.mxu0 %v149
    %1017 = vmatprep.subr.mxu0 0.0
    %1018 = vmatpush1.msra.mxu0 %v146
    %1019 = vmatprep.subr.mxu0 0.0
    %1020 = vmatpush1.msra.mxu0 %v143
    %1021 = vmatprep.subr.mxu0 0.0
    %1022 = vmatpush1.msra.mxu0 %v140
    %1023 = vmatprep.subr.mxu0 0.0
    %1024 = vmatpush1.msra.mxu0 %v137
    %1025 = vmatprep.subr.mxu0 0.0
    %1026 = vmatpush1.msra.mxu0 %v134
    %1027 = vmatprep.subr.mxu0 0.0
    %1028 = vmatpush2.msra.mxu0 0.0
    %1029 = vmatprep.subr.mxu0 0.0
    %1030 = vmatpush2.msra.mxu0 0.0
    %1031 = vmatprep.subr.mxu0 0.0
    %1032 = vmatpush2.msra.mxu0 0.0
    %1033 = vmatprep.subr.mxu0 0.0
    %1034 = vmatpush2.msra.mxu0 0.0
    %1035 = vmatprep.subr.mxu0 0.0
    %1036 = vmatpush2.msra.mxu0 0.0
    %1037 = vmatprep.subr.mxu0 0.0
    %1038 = vmatpush2.msra.mxu0 0.0
    %1039 = vmatprep.subr.mxu0 0.0
    %1040 = vmatpush2.msra.mxu0 0.0
    %1041 = vmatprep.subr.mxu0 0.0
    %1042 = vmatpush2.msra.mxu0 0.0
    %1043 = vmatprep.subr.mxu0 0.0
    %1044 = vmatpush2.msra.mxu0 0.0
    %1045 = vmatprep.subr.mxu0 0.0
    %1046 = vmatpush2.msra.mxu0 0.0
    %1047 = vmatprep.subr.mxu0 0.0
    %1048 = vmatpush2.msra.mxu0 0.0
    %1049 = vmatprep.subr.mxu0 0.0
    %1050 = vmatpush2.msra.mxu0 0.0
    %1051 = vmatprep.subr.mxu0 0.0
    %1052 = vmatpush2.msra.mxu0 0.0
    %1053 = vmatprep.subr.mxu0 0.0
    %1054 = vmatpush2.msra.mxu0 0.0
    %1055 = vmatprep.subr.mxu0 0.0
    %1056 = vmatpush2.msra.mxu0 0.0
    %1057 = vmatprep.subr.mxu0 0.0
    %1058 = vmatpush2.msra.mxu0 0.0
    %1059 = vmatprep.mubr.f32.mxu0 0.0
    %1060 = vmatmul.mubr.f32.gmra.mxu0 %v920
    %v1061 = vpop.f32.mrf.mxu0
    %v1062 = vadd.f32 %v185, %v1061
    %v1063 = vpop.f32.mrf.mxu0
    %1064 = vdwg.mxu0
    %v1065 = vadd.f32 %v921, %v991
    %v1066 = vxor.u32 %v1065, 2147483648
    %v1067 = vmul.f32 %v1066, 1.442695
    %v1068 = vpow.pop %v1067
    %v1069 = vadd.f32 %v1068, 1.0
    %v1070 = vrcp.pop %v1069
    %v1071 = vmul.f32 1.0, %v1070
    %v1072 = vadd.f32 %v922, %v993
    %v1073 = vxor.u32 %v1072, 2147483648
    %v1074 = vmul.f32 %v1073, 1.442695
    %v1075 = vpow.pop %v1074
    %v1076 = vadd.f32 %v1075, 1.0
    %v1077 = vrcp.pop %v1076
    %v1078 = vmul.f32 1.0, %v1077
    %v1079 = vmul.f32 %v1071, %v1062
    %v1080 = vadd.f32 %v923, %v1079
    %v1081 = vtanh.pop %v1080
    %v1082 = vsub.f32 1.0, %v1078
    %v1083 = vmul.f32 %v1082, %v1081
    %v1084 = vmul.f32 %v1078, %v920
    %v1085 = vadd.f32 %v1083, %v1084
    %v1086 = vadd.f32 %v283, %v180
    %v1087 = vadd.f32 %v285, %v181
    %v1088 = vadd.f32 %v391, %v182
    %1089 = vmatprep.subr.mxu0 %v178
    %1090 = vmatpush1.msra.mxu0 %v177
    %1091 = vmatprep.subr.mxu0 %v175
    %1092 = vmatpush1.msra.mxu0 %v174
    %1093 = vmatprep.subr.mxu0 %v172
    %1094 = vmatpush1.msra.mxu0 %v171
    %1095 = vmatprep.subr.mxu0 %v169
    %1096 = vmatpush1.msra.mxu0 %v168
    %1097 = vmatprep.subr.mxu0 %v166
    %1098 = vmatpush1.msra.mxu0 %v165
    %1099 = vmatprep.subr.mxu0 %v163
    %1100 = vmatpush1.msra.mxu0 %v162
    %1101 = vmatprep.subr.mxu0 %v160
    %1102 = vmatpush1.msra.mxu0 %v159
    %1103 = vmatprep.subr.mxu0 %v157
    %1104 = vmatpush1.msra.mxu0 %v156
    %1105 = vmatprep.subr.mxu0 %v154
    %1106 = vmatpush1.msra.mxu0 %v153
    %1107 = vmatprep.subr.mxu0 %v151
    %1108 = vmatpush1.msra.mxu0 %v150
    %1109 = vmatprep.subr.mxu0 %v148
    %1110 = vmatpush1.msra.mxu0 %v147
    %1111 = vmatprep.subr.mxu0 %v145
    %1112 = vmatpush1.msra.mxu0 %v144
    %1113 = vmatprep.subr.mxu0 %v142
    %1114 = vmatpush1.msra.mxu0 %v141
    %1115 = vmatprep.subr.mxu0 %v139
    %1116 = vmatpush1.msra.mxu0 %v138
    %1117 = vmatprep.subr.mxu0 %v136
    %1118 = vmatpush1.msra.mxu0 %v135
    %1119 = vmatprep.subr.mxu0 %v133
    %1120 = vmatpush1.msra.mxu0 %v132
    %1121 = vmatprep.subr.mxu0 0.0
    %1122 = vmatpush2.msra.mxu0 0.0
    %1123 = vmatprep.subr.mxu0 0.0
    %1124 = vmatpush2.msra.mxu0 0.0
    %1125 = vmatprep.subr.mxu0 0.0
    %1126 = vmatpush2.msra.mxu0 0.0
    %1127 = vmatprep.subr.mxu0 0.0
    %1128 = vmatpush2.msra.mxu0 0.0
    %1129 = vmatprep.subr.mxu0 0.0
    %1130 = vmatpush2.msra.mxu0 0.0
    %1131 = vmatprep.subr.mxu0 0.0
    %1132 = vmatpush2.msra.mxu0 0.0
    %1133 = vmatprep.subr.mxu0 0.0
    %1134 = vmatpush2.msra.mxu0 0.0
    %1135 = vmatprep.subr.mxu0 0.0
    %1136 = vmatpush2.msra.mxu0 0.0
    %1137 = vmatprep.subr.mxu0 0.0
    %1138 = vmatpush2.msra.mxu0 0.0
    %1139 = vmatprep.subr.mxu0 0.0
    %1140 = vmatpush2.msra.mxu0 0.0
    %1141 = vmatprep.subr.mxu0 0.0
    %1142 = vmatpush2.msra.mxu0 0.0
    %1143 = vmatprep.subr.mxu0 0.0
    %1144 = vmatpush2.msra.mxu0 0.0
    %1145 = vmatprep.subr.mxu0 0.0
    %1146 = vmatpush2.msra.mxu0 0.0
    %1147 = vmatprep.subr.mxu0 0.0
    %1148 = vmatpush2.msra.mxu0 0.0
    %1149 = vmatprep.subr.mxu0 0.0
    %1150 = vmatpush2.msra.mxu0 0.0
    %1151 = vmatprep.subr.mxu0 0.0
    %1152 = vmatpush2.msra.mxu0 0.0
    %1153 = vmatprep.mubr.f32.mxu0 0.0
    %1154 = vmatmul.mubr.f32.gmra.mxu0 %v1085
    %v1155 = vpop.f32.mrf.mxu0
    %v1156 = vadd.f32 %v183, %v1155
    %v1157 = vpop.f32.mrf.mxu0
    %v1158 = vadd.f32 %v184, %v1157
    %1159 = vdwg.mxu0
    %1160 = vmatprep.subr.mxu0 0.0
    %1161 = vmatpush1.msra.mxu0 %v179
    %1162 = vmatprep.subr.mxu0 0.0
    %1163 = vmatpush1.msra.mxu0 %v176
    %1164 = vmatprep.subr.mxu0 0.0
    %1165 = vmatpush1.msra.mxu0 %v173
    %1166 = vmatprep.subr.mxu0 0.0
    %1167 = vmatpush1.msra.mxu0 %v170
    %1168 = vmatprep.subr.mxu0 0.0
    %1169 = vmatpush1.msra.mxu0 %v167
    %1170 = vmatprep.subr.mxu0 0.0
    %1171 = vmatpush1.msra.mxu0 %v164
    %1172 = vmatprep.subr.mxu0 0.0
    %1173 = vmatpush1.msra.mxu0 %v161
    %1174 = vmatprep.subr.mxu0 0.0
    %1175 = vmatpush1.msra.mxu0 %v158
    %1176 = vmatprep.subr.mxu0 0.0
    %1177 = vmatpush1.msra.mxu0 %v155
    %1178 = vmatprep.subr.mxu0 0.0
    %1179 = vmatpush1.msra.mxu0 %v152
    %1180 = vmatprep.subr.mxu0 0.0
    %1181 = vmatpush1.msra.mxu0 %v149
    %1182 = vmatprep.subr.mxu0 0.0
    %1183 = vmatpush1.msra.mxu0 %v146
    %1184 = vmatprep.subr.mxu0 0.0
    %1185 = vmatpush1.msra.mxu0 %v143
    %1186 = vmatprep.subr.mxu0 0.0
    %1187 = vmatpush1.msra.mxu0 %v140
    %1188 = vmatprep.subr.mxu0 0.0
    %1189 = vmatpush1.msra.mxu0 %v137
    %1190 = vmatprep.subr.mxu0 0.0
    %1191 = vmatpush1.msra.mxu0 %v134
    %1192 = vmatprep.subr.mxu0 0.0
    %1193 = vmatpush2.msra.mxu0 0.0
    %1194 = vmatprep.subr.mxu0 0.0
    %1195 = vmatpush2.msra.mxu0 0.0
    %1196 = vmatprep.subr.mxu0 0.0
    %1197 = vmatpush2.msra.mxu0 0.0
    %1198 = vmatprep.subr.mxu0 0.0
    %1199 = vmatpush2.msra.mxu0 0.0
    %1200 = vmatprep.subr.mxu0 0.0
    %1201 = vmatpush2.msra.mxu0 0.0
    %1202 = vmatprep.subr.mxu0 0.0
    %1203 = vmatpush2.msra.mxu0 0.0
    %1204 = vmatprep.subr.mxu0 0.0
    %1205 = vmatpush2.msra.mxu0 0.0
    %1206 = vmatprep.subr.mxu0 0.0
    %1207 = vmatpush2.msra.mxu0 0.0
    %1208 = vmatprep.subr.mxu0 0.0
    %1209 = vmatpush2.msra.mxu0 0.0
    %1210 = vmatprep.subr.mxu0 0.0
    %1211 = vmatpush2.msra.mxu0 0.0
    %1212 = vmatprep.subr.mxu0 0.0
    %1213 = vmatpush2.msra.mxu0 0.0
    %1214 = vmatprep.subr.mxu0 0.0
    %1215 = vmatpush2.msra.mxu0 0.0
    %1216 = vmatprep.subr.mxu0 0.0
    %1217 = vmatpush2.msra.mxu0 0.0
    %1218 = vmatprep.subr.mxu0 0.0
    %1219 = vmatpush2.msra.mxu0 0.0
    %1220 = vmatprep.subr.mxu0 0.0
    %1221 = vmatpush2.msra.mxu0 0.0
    %1222 = vmatprep.subr.mxu0 0.0
    %1223 = vmatpush2.msra.mxu0 0.0
    %1224 = vmatprep.mubr.f32.mxu0 0.0
    %1225 = vmatmul.mubr.f32.gmra.mxu0 %v1085
    %v1226 = vpop.f32.mrf.mxu0
    %v1227 = vadd.f32 %v185, %v1226
    %v1228 = vpop.f32.mrf.mxu0
    %1229 = vdwg.mxu0
    %v1230 = vadd.f32 %v1086, %v1156
    %v1231 = vxor.u32 %v1230, 2147483648
    %v1232 = vmul.f32 %v1231, 1.442695
    %v1233 = vpow.pop %v1232
    %v1234 = vadd.f32 %v1233, 1.0
    %v1235 = vrcp.pop %v1234
    %v1236 = vmul.f32 1.0, %v1235
    %v1237 = vadd.f32 %v1087, %v1158
    %v1238 = vxor.u32 %v1237, 2147483648
    %v1239 = vmul.f32 %v1238, 1.442695
    %v1240 = vpow.pop %v1239
    %v1241 = vadd.f32 %v1240, 1.0
    %v1242 = vrcp.pop %v1241
    %v1243 = vmul.f32 1.0, %v1242
    %v1244 = vmul.f32 %v1236, %v1227
    %v1245 = vadd.f32 %v1088, %v1244
    %v1246 = vtanh.pop %v1245
    %v1247 = vsub.f32 1.0, %v1243
    %v1248 = vmul.f32 %v1247, %v1246
    %v1249 = vmul.f32 %v1243, %v1085
    %v1250 = vadd.f32 %v1248, %v1249
    %v1251 = vadd.f32 %v289, %v180
    %v1252 = vadd.f32 %v291, %v181
    %v1253 = vadd.f32 %v396, %v182
    %1254 = vmatprep.subr.mxu0 %v178
    %1255 = vmatpush1.msra.mxu0 %v177
    %1256 = vmatprep.subr.mxu0 %v175
    %1257 = vmatpush1.msra.mxu0 %v174
    %1258 = vmatprep.subr.mxu0 %v172
    %1259 = vmatpush1.msra.mxu0 %v171
    %1260 = vmatprep.subr.mxu0 %v169
    %1261 = vmatpush1.msra.mxu0 %v168
    %1262 = vmatprep.subr.mxu0 %v166
    %1263 = vmatpush1.msra.mxu0 %v165
    %1264 = vmatprep.subr.mxu0 %v163
    %1265 = vmatpush1.msra.mxu0 %v162
    %1266 = vmatprep.subr.mxu0 %v160
    %1267 = vmatpush1.msra.mxu0 %v159
    %1268 = vmatprep.subr.mxu0 %v157
    %1269 = vmatpush1.msra.mxu0 %v156
    %1270 = vmatprep.subr.mxu0 %v154
    %1271 = vmatpush1.msra.mxu0 %v153
    %1272 = vmatprep.subr.mxu0 %v151
    %1273 = vmatpush1.msra.mxu0 %v150
    %1274 = vmatprep.subr.mxu0 %v148
    %1275 = vmatpush1.msra.mxu0 %v147
    %1276 = vmatprep.subr.mxu0 %v145
    %1277 = vmatpush1.msra.mxu0 %v144
    %1278 = vmatprep.subr.mxu0 %v142
    %1279 = vmatpush1.msra.mxu0 %v141
    %1280 = vmatprep.subr.mxu0 %v139
    %1281 = vmatpush1.msra.mxu0 %v138
    %1282 = vmatprep.subr.mxu0 %v136
    %1283 = vmatpush1.msra.mxu0 %v135
    %1284 = vmatprep.subr.mxu0 %v133
    %1285 = vmatpush1.msra.mxu0 %v132
    %1286 = vmatprep.subr.mxu0 0.0
    %1287 = vmatpush2.msra.mxu0 0.0
    %1288 = vmatprep.subr.mxu0 0.0
    %1289 = vmatpush2.msra.mxu0 0.0
    %1290 = vmatprep.subr.mxu0 0.0
    %1291 = vmatpush2.msra.mxu0 0.0
    %1292 = vmatprep.subr.mxu0 0.0
    %1293 = vmatpush2.msra.mxu0 0.0
    %1294 = vmatprep.subr.mxu0 0.0
    %1295 = vmatpush2.msra.mxu0 0.0
    %1296 = vmatprep.subr.mxu0 0.0
    %1297 = vmatpush2.msra.mxu0 0.0
    %1298 = vmatprep.subr.mxu0 0.0
    %1299 = vmatpush2.msra.mxu0 0.0
    %1300 = vmatprep.subr.mxu0 0.0
    %1301 = vmatpush2.msra.mxu0 0.0
    %1302 = vmatprep.subr.mxu0 0.0
    %1303 = vmatpush2.msra.mxu0 0.0
    %1304 = vmatprep.subr.mxu0 0.0
    %1305 = vmatpush2.msra.mxu0 0.0
    %1306 = vmatprep.subr.mxu0 0.0
    %1307 = vmatpush2.msra.mxu0 0.0
    %1308 = vmatprep.subr.mxu0 0.0
    %1309 = vmatpush2.msra.mxu0 0.0
    %1310 = vmatprep.subr.mxu0 0.0
    %1311 = vmatpush2.msra.mxu0 0.0
    %1312 = vmatprep.subr.mxu0 0.0
    %1313 = vmatpush2.msra.mxu0 0.0
    %1314 = vmatprep.subr.mxu0 0.0
    %1315 = vmatpush2.msra.mxu0 0.0
    %1316 = vmatprep.subr.mxu0 0.0
    %1317 = vmatpush2.msra.mxu0 0.0
    %1318 = vmatprep.mubr.f32.mxu0 0.0
    %1319 = vmatmul.mubr.f32.gmra.mxu0 %v1250
    %v1320 = vpop.f32.mrf.mxu0
    %v1321 = vadd.f32 %v183, %v1320
    %v1322 = vpop.f32.mrf.mxu0
    %v1323 = vadd.f32 %v184, %v1322
    %1324 = vdwg.mxu0
    %1325 = vmatprep.subr.mxu0 0.0
    %1326 = vmatpush1.msra.mxu0 %v179
    %1327 = vmatprep.subr.mxu0 0.0
    %1328 = vmatpush1.msra.mxu0 %v176
    %1329 = vmatprep.subr.mxu0 0.0
    %1330 = vmatpush1.msra.mxu0 %v173
    %1331 = vmatprep.subr.mxu0 0.0
    %1332 = vmatpush1.msra.mxu0 %v170
    %1333 = vmatprep.subr.mxu0 0.0
    %1334 = vmatpush1.msra.mxu0 %v167
    %1335 = vmatprep.subr.mxu0 0.0
    %1336 = vmatpush1.msra.mxu0 %v164
    %1337 = vmatprep.subr.mxu0 0.0
    %1338 = vmatpush1.msra.mxu0 %v161
    %1339 = vmatprep.subr.mxu0 0.0
    %1340 = vmatpush1.msra.mxu0 %v158
    %1341 = vmatprep.subr.mxu0 0.0
    %1342 = vmatpush1.msra.mxu0 %v155
    %1343 = vmatprep.subr.mxu0 0.0
    %1344 = vmatpush1.msra.mxu0 %v152
    %1345 = vmatprep.subr.mxu0 0.0
    %1346 = vmatpush1.msra.mxu0 %v149
    %1347 = vmatprep.subr.mxu0 0.0
    %1348 = vmatpush1.msra.mxu0 %v146
    %1349 = vmatprep.subr.mxu0 0.0
    %1350 = vmatpush1.msra.mxu0 %v143
    %1351 = vmatprep.subr.mxu0 0.0
    %1352 = vmatpush1.msra.mxu0 %v140
    %1353 = vmatprep.subr.mxu0 0.0
    %1354 = vmatpush1.msra.mxu0 %v137
    %1355 = vmatprep.subr.mxu0 0.0
    %1356 = vmatpush1.msra.mxu0 %v134
    %1357 = vmatprep.subr.mxu0 0.0
    %1358 = vmatpush2.msra.mxu0 0.0
    %1359 = vmatprep.subr.mxu0 0.0
    %1360 = vmatpush2.msra.mxu0 0.0
    %1361 = vmatprep.subr.mxu0 0.0
    %1362 = vmatpush2.msra.mxu0 0.0
    %1363 = vmatprep.subr.mxu0 0.0
    %1364 = vmatpush2.msra.mxu0 0.0
    %1365 = vmatprep.subr.mxu0 0.0
    %1366 = vmatpush2.msra.mxu0 0.0
    %1367 = vmatprep.subr.mxu0 0.0
    %1368 = vmatpush2.msra.mxu0 0.0
    %1369 = vmatprep.subr.mxu0 0.0
    %1370 = vmatpush2.msra.mxu0 0.0
    %1371 = vmatprep.subr.mxu0 0.0
    %1372 = vmatpush2.msra.mxu0 0.0
    %1373 = vmatprep.subr.mxu0 0.0
    %1374 = vmatpush2.msra.mxu0 0.0
    %1375 = vmatprep.subr.mxu0 0.0
    %1376 = vmatpush2.msra.mxu0 0.0
    %1377 = vmatprep.subr.mxu0 0.0
    %1378 = vmatpush2.msra.mxu0 0.0
    %1379 = vmatprep.subr.mxu0 0.0
    %1380 = vmatpush2.msra.mxu0 0.0
    %1381 = vmatprep.subr.mxu0 0.0
    %1382 = vmatpush2.msra.mxu0 0.0
    %1383 = vmatprep.subr.mxu0 0.0
    %1384 = vmatpush2.msra.mxu0 0.0
    %1385 = vmatprep.subr.mxu0 0.0
    %1386 = vmatpush2.msra.mxu0 0.0
    %1387 = vmatprep.subr.mxu0 0.0
    %1388 = vmatpush2.msra.mxu0 0.0
    %1389 = vmatprep.mubr.f32.mxu0 0.0
    %1390 = vmatmul.mubr.f32.gmra.mxu0 %v1250
    %v1391 = vpop.f32.mrf.mxu0
    %v1392 = vadd.f32 %v185, %v1391
    %v1393 = vpop.f32.mrf.mxu0
    %1394 = vdwg.mxu0
    %v1395 = vadd.f32 %v1251, %v1321
    %v1396 = vxor.u32 %v1395, 2147483648
    %v1397 = vmul.f32 %v1396, 1.442695
    %v1398 = vpow.pop %v1397
    %v1399 = vadd.f32 %v1398, 1.0
    %v1400 = vrcp.pop %v1399
    %v1401 = vmul.f32 1.0, %v1400
    %v1402 = vadd.f32 %v1252, %v1323
    %v1403 = vxor.u32 %v1402, 2147483648
    %v1404 = vmul.f32 %v1403, 1.442695
    %v1405 = vpow.pop %v1404
    %v1406 = vadd.f32 %v1405, 1.0
    %v1407 = vrcp.pop %v1406
    %v1408 = vmul.f32 1.0, %v1407
    %v1409 = vmul.f32 %v1401, %v1392
    %v1410 = vadd.f32 %v1253, %v1409
    %v1411 = vtanh.pop %v1410
    %v1412 = vsub.f32 1.0, %v1408
    %v1413 = vmul.f32 %v1412, %v1411
    %v1414 = vmul.f32 %v1408, %v1250
    %v1415 = vadd.f32 %v1413, %v1414
    %v1416 = vadd.f32 %v295, %v180
    %v1417 = vadd.f32 %v297, %v181
    %v1418 = vadd.f32 %v401, %v182
    %1419 = vmatprep.subr.mxu0 %v178
    %1420 = vmatpush1.msra.mxu0 %v177
    %1421 = vmatprep.subr.mxu0 %v175
    %1422 = vmatpush1.msra.mxu0 %v174
    %1423 = vmatprep.subr.mxu0 %v172
    %1424 = vmatpush1.msra.mxu0 %v171
    %1425 = vmatprep.subr.mxu0 %v169
    %1426 = vmatpush1.msra.mxu0 %v168
    %1427 = vmatprep.subr.mxu0 %v166
    %1428 = vmatpush1.msra.mxu0 %v165
    %1429 = vmatprep.subr.mxu0 %v163
    %1430 = vmatpush1.msra.mxu0 %v162
    %1431 = vmatprep.subr.mxu0 %v160
    %1432 = vmatpush1.msra.mxu0 %v159
    %1433 = vmatprep.subr.mxu0 %v157
    %1434 = vmatpush1.msra.mxu0 %v156
    %1435 = vmatprep.subr.mxu0 %v154
    %1436 = vmatpush1.msra.mxu0 %v153
    %1437 = vmatprep.subr.mxu0 %v151
    %1438 = vmatpush1.msra.mxu0 %v150
    %1439 = vmatprep.subr.mxu0 %v148
    %1440 = vmatpush1.msra.mxu0 %v147
    %1441 = vmatprep.subr.mxu0 %v145
    %1442 = vmatpush1.msra.mxu0 %v144
    %1443 = vmatprep.subr.mxu0 %v142
    %1444 = vmatpush1.msra.mxu0 %v141
    %1445 = vmatprep.subr.mxu0 %v139
    %1446 = vmatpush1.msra.mxu0 %v138
    %1447 = vmatprep.subr.mxu0 %v136
    %1448 = vmatpush1.msra.mxu0 %v135
    %1449 = vmatprep.subr.mxu0 %v133
    %1450 = vmatpush1.msra.mxu0 %v132
    %1451 = vmatprep.subr.mxu0 0.0
    %1452 = vmatpush2.msra.mxu0 0.0
    %1453 = vmatprep.subr.mxu0 0.0
    %1454 = vmatpush2.msra.mxu0 0.0
    %1455 = vmatprep.subr.mxu0 0.0
    %1456 = vmatpush2.msra.mxu0 0.0
    %1457 = vmatprep.subr.mxu0 0.0
    %1458 = vmatpush2.msra.mxu0 0.0
    %1459 = vmatprep.subr.mxu0 0.0
    %1460 = vmatpush2.msra.mxu0 0.0
    %1461 = vmatprep.subr.mxu0 0.0
    %1462 = vmatpush2.msra.mxu0 0.0
    %1463 = vmatprep.subr.mxu0 0.0
    %1464 = vmatpush2.msra.mxu0 0.0
    %1465 = vmatprep.subr.mxu0 0.0
    %1466 = vmatpush2.msra.mxu0 0.0
    %1467 = vmatprep.subr.mxu0 0.0
    %1468 = vmatpush2.msra.mxu0 0.0
    %1469 = vmatprep.subr.mxu0 0.0
    %1470 = vmatpush2.msra.mxu0 0.0
    %1471 = vmatprep.subr.mxu0 0.0
    %1472 = vmatpush2.msra.mxu0 0.0
    %1473 = vmatprep.subr.mxu0 0.0
    %1474 = vmatpush2.msra.mxu0 0.0
    %1475 = vmatprep.subr.mxu0 0.0
    %1476 = vmatpush2.msra.mxu0 0.0
    %1477 = vmatprep.subr.mxu0 0.0
    %1478 = vmatpush2.msra.mxu0 0.0
    %1479 = vmatprep.subr.mxu0 0.0
    %1480 = vmatpush2.msra.mxu0 0.0
    %1481 = vmatprep.subr.mxu0 0.0
    %1482 = vmatpush2.msra.mxu0 0.0
    %1483 = vmatprep.mubr.f32.mxu0 0.0
    %1484 = vmatmul.mubr.f32.gmra.mxu0 %v1415
    %v1485 = vpop.f32.mrf.mxu0
    %v1486 = vadd.f32 %v183, %v1485
    %v1487 = vpop.f32.mrf.mxu0
    %v1488 = vadd.f32 %v184, %v1487
    %1489 = vdwg.mxu0
    %1490 = vmatprep.subr.mxu0 0.0
    %1491 = vmatpush1.msra.mxu0 %v179
    %1492 = vmatprep.subr.mxu0 0.0
    %1493 = vmatpush1.msra.mxu0 %v176
    %1494 = vmatprep.subr.mxu0 0.0
    %1495 = vmatpush1.msra.mxu0 %v173
    %1496 = vmatprep.subr.mxu0 0.0
    %1497 = vmatpush1.msra.mxu0 %v170
    %1498 = vmatprep.subr.mxu0 0.0
    %1499 = vmatpush1.msra.mxu0 %v167
    %1500 = vmatprep.subr.mxu0 0.0
    %1501 = vmatpush1.msra.mxu0 %v164
    %1502 = vmatprep.subr.mxu0 0.0
    %1503 = vmatpush1.msra.mxu0 %v161
    %1504 = vmatprep.subr.mxu0 0.0
    %1505 = vmatpush1.msra.mxu0 %v158
    %1506 = vmatprep.subr.mxu0 0.0
    %1507 = vmatpush1.msra.mxu0 %v155
    %1508 = vmatprep.subr.mxu0 0.0
    %1509 = vmatpush1.msra.mxu0 %v152
    %1510 = vmatprep.subr.mxu0 0.0
    %1511 = vmatpush1.msra.mxu0 %v149
    %1512 = vmatprep.subr.mxu0 0.0
    %1513 = vmatpush1.msra.mxu0 %v146
    %1514 = vmatprep.subr.mxu0 0.0
    %1515 = vmatpush1.msra.mxu0 %v143
    %1516 = vmatprep.subr.mxu0 0.0
    %1517 = vmatpush1.msra.mxu0 %v140
    %1518 = vmatprep.subr.mxu0 0.0
    %1519 = vmatpush1.msra.mxu0 %v137
    %1520 = vmatprep.subr.mxu0 0.0
    %1521 = vmatpush1.msra.mxu0 %v134
    %1522 = vmatprep.subr.mxu0 0.0
    %1523 = vmatpush2.msra.mxu0 0.0
    %1524 = vmatprep.subr.mxu0 0.0
    %1525 = vmatpush2.msra.mxu0 0.0
    %1526 = vmatprep.subr.mxu0 0.0
    %1527 = vmatpush2.msra.mxu0 0.0
    %1528 = vmatprep.subr.mxu0 0.0
    %1529 = vmatpush2.msra.mxu0 0.0
    %1530 = vmatprep.subr.mxu0 0.0
    %1531 = vmatpush2.msra.mxu0 0.0
    %1532 = vmatprep.subr.mxu0 0.0
    %1533 = vmatpush2.msra.mxu0 0.0
    %1534 = vmatprep.subr.mxu0 0.0
    %1535 = vmatpush2.msra.mxu0 0.0
    %1536 = vmatprep.subr.mxu0 0.0
    %1537 = vmatpush2.msra.mxu0 0.0
    %1538 = vmatprep.subr.mxu0 0.0
    %1539 = vmatpush2.msra.mxu0 0.0
    %1540 = vmatprep.subr.mxu0 0.0
    %1541 = vmatpush2.msra.mxu0 0.0
    %1542 = vmatprep.subr.mxu0 0.0
    %1543 = vmatpush2.msra.mxu0 0.0
    %1544 = vmatprep.subr.mxu0 0.0
    %1545 = vmatpush2.msra.mxu0 0.0
    %1546 = vmatprep.subr.mxu0 0.0
    %1547 = vmatpush2.msra.mxu0 0.0
    %1548 = vmatprep.subr.mxu0 0.0
    %1549 = vmatpush2.msra.mxu0 0.0
    %1550 = vmatprep.subr.mxu0 0.0
    %1551 = vmatpush2.msra.mxu0 0.0
    %1552 = vmatprep.subr.mxu0 0.0
    %1553 = vmatpush2.msra.mxu0 0.0
    %1554 = vmatprep.mubr.f32.mxu0 0.0
    %1555 = vmatmul.mubr.f32.gmra.mxu0 %v1415
    %v1556 = vpop.f32.mrf.mxu0
    %v1557 = vadd.f32 %v185, %v1556
    %v1558 = vpop.f32.mrf.mxu0
    %1559 = vdwg.mxu0
    %v1560 = vadd.f32 %v1416, %v1486
    %v1561 = vxor.u32 %v1560, 2147483648
    %v1562 = vmul.f32 %v1561, 1.442695
    %v1563 = vpow.pop %v1562
    %v1564 = vadd.f32 %v1563, 1.0
    %v1565 = vrcp.pop %v1564
    %v1566 = vmul.f32 1.0, %v1565
    %v1567 = vadd.f32 %v1417, %v1488
    %v1568 = vxor.u32 %v1567, 2147483648
    %v1569 = vmul.f32 %v1568, 1.442695
    %v1570 = vpow.pop %v1569
    %v1571 = vadd.f32 %v1570, 1.0
    %v1572 = vrcp.pop %v1571
    %v1573 = vmul.f32 1.0, %v1572
    %v1574 = vmul.f32 %v1566, %v1557
    %v1575 = vadd.f32 %v1418, %v1574
    %v1576 = vtanh.pop %v1575
    %v1577 = vsub.f32 1.0, %v1573
    %v1578 = vmul.f32 %v1577, %v1576
    %v1579 = vmul.f32 %v1573, %v1415
    %v1580 = vadd.f32 %v1578, %v1579
    %s1581 = scalar_lea.vmem [#allocation2], 384
    %v1582 = vld [vmem:[%s1581] sm:$0xff]
    %v1583 = vld [vmem:[%s1581 + $0x8] sm:$0xff]
    %v1584 = vld [vmem:[%s1581 + $0x10] sm:$0xff]
    %v1585 = vld [vmem:[%s1581 + $0x18] sm:$0xff]
    %v1586 = vld [vmem:[%s1581 + $0x20] sm:$0xff]
    %v1587 = vld [vmem:[%s1581 + $0x28] sm:$0xff]
    %v1588 = vld [vmem:[%s1581 + $0x30] sm:$0xff]
    %v1589 = vld [vmem:[%s1581 + $0x38] sm:$0xff]
    %v1590 = vld [vmem:[%s1581 + $0x40] sm:$0xff]
    %v1591 = vld [vmem:[%s1581 + $0x48] sm:$0xff]
    %v1592 = vld [vmem:[%s1581 + $0x50] sm:$0xff]
    %v1593 = vld [vmem:[%s1581 + $0x58] sm:$0xff]
    %v1594 = vld [vmem:[%s1581 + $0x60] sm:$0xff]
    %v1595 = vld [vmem:[%s1581 + $0x68] sm:$0xff]
    %v1596 = vld [vmem:[%s1581 + $0x70] sm:$0xff]
    %v1597 = vld [vmem:[%s1581 + $0x78] sm:$0xff]
    %v1598 = vld [vmem:[%s1581 + $0x80] sm:$0xff]
    %v1599 = vld [vmem:[%s1581 + $0x88] sm:$0xff]
    %v1600 = vld [vmem:[%s1581 + $0x90] sm:$0xff]
    %v1601 = vld [vmem:[%s1581 + $0x98] sm:$0xff]
    %v1602 = vld [vmem:[%s1581 + $0xa0] sm:$0xff]
    %v1603 = vld [vmem:[%s1581 + $0xa8] sm:$0xff]
    %v1604 = vld [vmem:[%s1581 + $0xb0] sm:$0xff]
    %v1605 = vld [vmem:[%s1581 + $0xb8] sm:$0xff]
    %v1606 = vld [vmem:[%s1581 + $0xc0] sm:$0xff]
    %v1607 = vld [vmem:[%s1581 + $0xc8] sm:$0xff]
    %v1608 = vld [vmem:[%s1581 + $0xd0] sm:$0xff]
    %v1609 = vld [vmem:[%s1581 + $0xd8] sm:$0xff]
    %v1610 = vld [vmem:[%s1581 + $0xe0] sm:$0xff]
    %v1611 = vld [vmem:[%s1581 + $0xe8] sm:$0xff]
    %v1612 = vld [vmem:[%s1581 + $0xf0] sm:$0xff]
    %v1613 = vld [vmem:[%s1581 + $0xf8] sm:$0xff]
    %v1614 = vld [vmem:[%s1581 + $0x100] sm:$0xff]
    %v1615 = vld [vmem:[%s1581 + $0x108] sm:$0xff]
    %v1616 = vld [vmem:[%s1581 + $0x110] sm:$0xff]
    %v1617 = vld [vmem:[%s1581 + $0x118] sm:$0xff]
    %v1618 = vld [vmem:[%s1581 + $0x120] sm:$0xff]
    %v1619 = vld [vmem:[%s1581 + $0x128] sm:$0xff]
    %v1620 = vld [vmem:[%s1581 + $0x130] sm:$0xff]
    %v1621 = vld [vmem:[%s1581 + $0x138] sm:$0xff]
    %v1622 = vld [vmem:[%s1581 + $0x140] sm:$0xff]
    %v1623 = vld [vmem:[%s1581 + $0x148] sm:$0xff]
    %v1624 = vld [vmem:[%s1581 + $0x150] sm:$0xff]
    %v1625 = vld [vmem:[%s1581 + $0x158] sm:$0xff]
    %v1626 = vld [vmem:[%s1581 + $0x160] sm:$0xff]
    %v1627 = vld [vmem:[%s1581 + $0x168] sm:$0xff]
    %v1628 = vld [vmem:[%s1581 + $0x170] sm:$0xff]
    %v1629 = vld [vmem:[%s1581 + $0x178] sm:$0xff]
    %s1630 = scalar_lea.vmem [#allocation4], 384
    %v1631 = vld [vmem:[%s1630] sm:$0xff]
    %v1632 = vld [vmem:[%s1630 + $0x8] sm:$0xff]
    %v1633 = vld [vmem:[%s1630 + $0x10] sm:$0xff]
    %v1634 = vld [vmem:[%s1630 + $0x18] sm:$0xff]
    %v1635 = vld [vmem:[%s1630 + $0x20] sm:$0xff]
    %v1636 = vld [vmem:[%s1630 + $0x28] sm:$0xff]
    %v1637 = vld [vmem:[%s1630 + $0x30] sm:$0xff]
    %v1638 = vld [vmem:[%s1630 + $0x38] sm:$0xff]
    %v1639 = vld [vmem:[%s1630 + $0x40] sm:$0xff]
    %v1640 = vld [vmem:[%s1630 + $0x48] sm:$0xff]
    %v1641 = vld [vmem:[%s1630 + $0x50] sm:$0xff]
    %v1642 = vld [vmem:[%s1630 + $0x58] sm:$0xff]
    %v1643 = vld [vmem:[%s1630 + $0x60] sm:$0xff]
    %v1644 = vld [vmem:[%s1630 + $0x68] sm:$0xff]
    %v1645 = vld [vmem:[%s1630 + $0x70] sm:$0xff]
    %v1646 = vld [vmem:[%s1630 + $0x78] sm:$0xff]
    %v1647 = vld [vmem:[%s1630 + $0x80] sm:$0xff]
    %v1648 = vld [vmem:[%s1630 + $0x88] sm:$0xff]
    %v1649 = vld [vmem:[%s1630 + $0x90] sm:$0xff]
    %v1650 = vld [vmem:[%s1630 + $0x98] sm:$0xff]
    %v1651 = vld [vmem:[%s1630 + $0xa0] sm:$0xff]
    %v1652 = vld [vmem:[%s1630 + $0xa8] sm:$0xff]
    %v1653 = vld [vmem:[%s1630 + $0xb0] sm:$0xff]
    %v1654 = vld [vmem:[%s1630 + $0xb8] sm:$0xff]
    %v1655 = vld [vmem:[%s1630 + $0xc0] sm:$0xff]
    %v1656 = vld [vmem:[%s1630 + $0xc8] sm:$0xff]
    %v1657 = vld [vmem:[%s1630 + $0xd0] sm:$0xff]
    %v1658 = vld [vmem:[%s1630 + $0xd8] sm:$0xff]
    %v1659 = vld [vmem:[%s1630 + $0xe0] sm:$0xff]
    %v1660 = vld [vmem:[%s1630 + $0xe8] sm:$0xff]
    %v1661 = vld [vmem:[%s1630 + $0xf0] sm:$0xff]
    %v1662 = vld [vmem:[%s1630 + $0xf8] sm:$0xff]
    %v1663 = vld [vmem:[%s1630 + $0x100] sm:$0xff]
    %v1664 = vld [vmem:[%s1630 + $0x108] sm:$0xff]
    %v1665 = vld [vmem:[%s1630 + $0x110] sm:$0xff]
    %v1666 = vld [vmem:[%s1630 + $0x118] sm:$0xff]
    %v1667 = vld [vmem:[%s1630 + $0x120] sm:$0xff]
    %v1668 = vld [vmem:[%s1630 + $0x128] sm:$0xff]
    %v1669 = vld [vmem:[%s1630 + $0x130] sm:$0xff]
    %v1670 = vld [vmem:[%s1630 + $0x138] sm:$0xff]
    %v1671 = vld [vmem:[%s1630 + $0x140] sm:$0xff]
    %v1672 = vld [vmem:[%s1630 + $0x148] sm:$0xff]
    %v1673 = vld [vmem:[%s1630 + $0x150] sm:$0xff]
    %v1674 = vld [vmem:[%s1630 + $0x158] sm:$0xff]
    %v1675 = vld [vmem:[%s1630 + $0x160] sm:$0xff]
    %v1676 = vld [vmem:[%s1630 + $0x168] sm:$0xff]
    %v1677 = vld [vmem:[%s1630 + $0x170] sm:$0xff]
    %v1678 = vld [vmem:[%s1630 + $0x178] sm:$0xff]
    %s1679 = scalar_lea.vmem %s4, 24
    %v1680 = vld [vmem:[%s1679] sm:$0xff]
    %v1681 = vld [vmem:[%s1679 + $0x8] sm:$0xff]
    %v1682 = vld [vmem:[%s1679 + $0x10] sm:$0xff]
    %s1683 = scalar_lea.vmem %s5, 24
    %v1684 = vld [vmem:[%s1683] sm:$0xff]
    %v1685 = vld [vmem:[%s1683 + $0x8] sm:$0xff]
    %v1686 = vld [vmem:[%s1683 + $0x10] sm:$0xff]
    %1687 = vmatprep.subr.mxu0 %v1628
    %1688 = vmatpush1.msra.mxu0 %v1627
    %1689 = vmatprep.subr.mxu0 %v1625
    %1690 = vmatpush1.msra.mxu0 %v1624
    %1691 = vmatprep.subr.mxu0 %v1622
    %1692 = vmatpush1.msra.mxu0 %v1621
    %1693 = vmatprep.subr.mxu0 %v1619
    %1694 = vmatpush1.msra.mxu0 %v1618
    %1695 = vmatprep.subr.mxu0 %v1616
    %1696 = vmatpush1.msra.mxu0 %v1615
    %1697 = vmatprep.subr.mxu0 %v1613
    %1698 = vmatpush1.msra.mxu0 %v1612
    %1699 = vmatprep.subr.mxu0 %v1610
    %1700 = vmatpush1.msra.mxu0 %v1609
    %1701 = vmatprep.subr.mxu0 %v1607
    %1702 = vmatpush1.msra.mxu0 %v1606
    %1703 = vmatprep.subr.mxu0 %v1604
    %1704 = vmatpush1.msra.mxu0 %v1603
    %1705 = vmatprep.subr.mxu0 %v1601
    %1706 = vmatpush1.msra.mxu0 %v1600
    %1707 = vmatprep.subr.mxu0 %v1598
    %1708 = vmatpush1.msra.mxu0 %v1597
    %1709 = vmatprep.subr.mxu0 %v1595
    %1710 = vmatpush1.msra.mxu0 %v1594
    %1711 = vmatprep.subr.mxu0 %v1592
    %1712 = vmatpush1.msra.mxu0 %v1591
    %1713 = vmatprep.subr.mxu0 %v1589
    %1714 = vmatpush1.msra.mxu0 %v1588
    %1715 = vmatprep.subr.mxu0 %v1586
    %1716 = vmatpush1.msra.mxu0 %v1585
    %1717 = vmatprep.subr.mxu0 %v1583
    %1718 = vmatpush1.msra.mxu0 %v1582
    %1719 = vmatprep.subr.mxu0 0.0
    %1720 = vmatpush2.msra.mxu0 0.0
    %1721 = vmatprep.subr.mxu0 0.0
    %1722 = vmatpush2.msra.mxu0 0.0
    %1723 = vmatprep.subr.mxu0 0.0
    %1724 = vmatpush2.msra.mxu0 0.0
    %1725 = vmatprep.subr.mxu0 0.0
    %1726 = vmatpush2.msra.mxu0 0.0
    %1727 = vmatprep.subr.mxu0 0.0
    %1728 = vmatpush2.msra.mxu0 0.0
    %1729 = vmatprep.subr.mxu0 0.0
    %1730 = vmatpush2.msra.mxu0 0.0
    %1731 = vmatprep.subr.mxu0 0.0
    %1732 = vmatpush2.msra.mxu0 0.0
    %1733 = vmatprep.subr.mxu0 0.0
    %1734 = vmatpush2.msra.mxu0 0.0
    %1735 = vmatprep.subr.mxu0 0.0
    %1736 = vmatpush2.msra.mxu0 0.0
    %1737 = vmatprep.subr.mxu0 0.0
    %1738 = vmatpush2.msra.mxu0 0.0
    %1739 = vmatprep.subr.mxu0 0.0
    %1740 = vmatpush2.msra.mxu0 0.0
    %1741 = vmatprep.subr.mxu0 0.0
    %1742 = vmatpush2.msra.mxu0 0.0
    %1743 = vmatprep.subr.mxu0 0.0
    %1744 = vmatpush2.msra.mxu0 0.0
    %1745 = vmatprep.subr.mxu0 0.0
    %1746 = vmatpush2.msra.mxu0 0.0
    %1747 = vmatprep.subr.mxu0 0.0
    %1748 = vmatpush2.msra.mxu0 0.0
    %1749 = vmatprep.subr.mxu0 0.0
    %1750 = vmatpush2.msra.mxu0 0.0
    %1751 = vmatprep.mubr.f32.mxu0 0.0
    %1752 = vmatmul.mubr.f32.gmra.mxu0 %v425
    %v1753 = vpop.f32.mrf.mxu0
    %v1754 = vadd.f32 0.0, %v1753
    %v1755 = vpop.f32.mrf.mxu0
    %v1756 = vadd.f32 0.0, %v1755
    %1757 = vmatprep.mubr.f32.mxu0 0.0
    %1758 = vmatmul.mubr.f32.gmra.mxu0 %v590
    %v1759 = vpop.f32.mrf.mxu0
    %v1760 = vadd.f32 0.0, %v1759
    %v1761 = vpop.f32.mrf.mxu0
    %v1762 = vadd.f32 0.0, %v1761
    %1763 = vmatprep.mubr.f32.mxu0 0.0
    %1764 = vmatmul.mubr.f32.gmra.mxu0 %v755
    %v1765 = vpop.f32.mrf.mxu0
    %v1766 = vadd.f32 0.0, %v1765
    %v1767 = vpop.f32.mrf.mxu0
    %v1768 = vadd.f32 0.0, %v1767
    %1769 = vmatprep.mubr.f32.mxu0 0.0
    %1770 = vmatmul.mubr.f32.gmra.mxu0 %v920
    %v1771 = vpop.f32.mrf.mxu0
    %v1772 = vadd.f32 0.0, %v1771
    %v1773 = vpop.f32.mrf.mxu0
    %v1774 = vadd.f32 0.0, %v1773
    %1775 = vmatprep.mubr.f32.mxu0 0.0
    %1776 = vmatmul.mubr.f32.gmra.mxu0 %v1085
    %v1777 = vpop.f32.mrf.mxu0
    %v1778 = vadd.f32 0.0, %v1777
    %v1779 = vpop.f32.mrf.mxu0
    %v1780 = vadd.f32 0.0, %v1779
    %1781 = vmatprep.mubr.f32.mxu0 0.0
    %1782 = vmatmul.mubr.f32.gmra.mxu0 %v1250
    %v1783 = vpop.f32.mrf.mxu0
    %v1784 = vadd.f32 0.0, %v1783
    %v1785 = vpop.f32.mrf.mxu0
    %v1786 = vadd.f32 0.0, %v1785
    %1787 = vmatprep.mubr.f32.mxu0 0.0
    %1788 = vmatmul.mubr.f32.gmra.mxu0 %v1415
    %v1789 = vpop.f32.mrf.mxu0
    %v1790 = vadd.f32 0.0, %v1789
    %v1791 = vpop.f32.mrf.mxu0
    %v1792 = vadd.f32 0.0, %v1791
    %1793 = vmatprep.mubr.f32.mxu0 0.0
    %1794 = vmatmul.mubr.f32.gmra.mxu0 %v1580
    %v1795 = vpop.f32.mrf.mxu0
    %v1796 = vadd.f32 0.0, %v1795
    %v1797 = vpop.f32.mrf.mxu0
    %v1798 = vadd.f32 0.0, %v1797
    %1799 = vdwg.mxu0
    %1800 = vmatprep.subr.mxu0 0.0
    %1801 = vmatpush1.msra.mxu0 %v1629
    %1802 = vmatprep.subr.mxu0 0.0
    %1803 = vmatpush1.msra.mxu0 %v1626
    %1804 = vmatprep.subr.mxu0 0.0
    %1805 = vmatpush1.msra.mxu0 %v1623
    %1806 = vmatprep.subr.mxu0 0.0
    %1807 = vmatpush1.msra.mxu0 %v1620
    %1808 = vmatprep.subr.mxu0 0.0
    %1809 = vmatpush1.msra.mxu0 %v1617
    %1810 = vmatprep.subr.mxu0 0.0
    %1811 = vmatpush1.msra.mxu0 %v1614
    %1812 = vmatprep.subr.mxu0 0.0
    %1813 = vmatpush1.msra.mxu0 %v1611
    %1814 = vmatprep.subr.mxu0 0.0
    %1815 = vmatpush1.msra.mxu0 %v1608
    %1816 = vmatprep.subr.mxu0 0.0
    %1817 = vmatpush1.msra.mxu0 %v1605
    %1818 = vmatprep.subr.mxu0 0.0
    %1819 = vmatpush1.msra.mxu0 %v1602
    %1820 = vmatprep.subr.mxu0 0.0
    %1821 = vmatpush1.msra.mxu0 %v1599
    %1822 = vmatprep.subr.mxu0 0.0
    %1823 = vmatpush1.msra.mxu0 %v1596
    %1824 = vmatprep.subr.mxu0 0.0
    %1825 = vmatpush1.msra.mxu0 %v1593
    %1826 = vmatprep.subr.mxu0 0.0
    %1827 = vmatpush1.msra.mxu0 %v1590
    %1828 = vmatprep.subr.mxu0 0.0
    %1829 = vmatpush1.msra.mxu0 %v1587
    %1830 = vmatprep.subr.mxu0 0.0
    %1831 = vmatpush1.msra.mxu0 %v1584
    %1832 = vmatprep.subr.mxu0 0.0
    %1833 = vmatpush2.msra.mxu0 0.0
    %1834 = vmatprep.subr.mxu0 0.0
    %1835 = vmatpush2.msra.mxu0 0.0
    %1836 = vmatprep.subr.mxu0 0.0
    %1837 = vmatpush2.msra.mxu0 0.0
    %1838 = vmatprep.subr.mxu0 0.0
    %1839 = vmatpush2.msra.mxu0 0.0
    %1840 = vmatprep.subr.mxu0 0.0
    %1841 = vmatpush2.msra.mxu0 0.0
    %1842 = vmatprep.subr.mxu0 0.0
    %1843 = vmatpush2.msra.mxu0 0.0
    %1844 = vmatprep.subr.mxu0 0.0
    %1845 = vmatpush2.msra.mxu0 0.0
    %1846 = vmatprep.subr.mxu0 0.0
    %1847 = vmatpush2.msra.mxu0 0.0
    %1848 = vmatprep.subr.mxu0 0.0
    %1849 = vmatpush2.msra.mxu0 0.0
    %1850 = vmatprep.subr.mxu0 0.0
    %1851 = vmatpush2.msra.mxu0 0.0
    %1852 = vmatprep.subr.mxu0 0.0
    %1853 = vmatpush2.msra.mxu0 0.0
    %1854 = vmatprep.subr.mxu0 0.0
    %1855 = vmatpush2.msra.mxu0 0.0
    %1856 = vmatprep.subr.mxu0 0.0
    %1857 = vmatpush2.msra.mxu0 0.0
    %1858 = vmatprep.subr.mxu0 0.0
    %1859 = vmatpush2.msra.mxu0 0.0
    %1860 = vmatprep.subr.mxu0 0.0
    %1861 = vmatpush2.msra.mxu0 0.0
    %1862 = vmatprep.subr.mxu0 0.0
    %1863 = vmatpush2.msra.mxu0 0.0
    %1864 = vmatprep.mubr.f32.mxu0 0.0
    %1865 = vmatmul.mubr.f32.gmra.mxu0 %v425
    %v1866 = vpop.f32.mrf.mxu0
    %v1867 = vadd.f32 0.0, %v1866
    %v1868 = vpop.f32.mrf.mxu0
    %1869 = vmatprep.mubr.f32.mxu0 0.0
    %1870 = vmatmul.mubr.f32.gmra.mxu0 %v590
    %v1871 = vpop.f32.mrf.mxu0
    %v1872 = vadd.f32 0.0, %v1871
    %v1873 = vpop.f32.mrf.mxu0
    %1874 = vmatprep.mubr.f32.mxu0 0.0
    %1875 = vmatmul.mubr.f32.gmra.mxu0 %v755
    %v1876 = vpop.f32.mrf.mxu0
    %v1877 = vadd.f32 0.0, %v1876
    %v1878 = vpop.f32.mrf.mxu0
    %1879 = vmatprep.mubr.f32.mxu0 0.0
    %1880 = vmatmul.mubr.f32.gmra.mxu0 %v920
    %v1881 = vpop.f32.mrf.mxu0
    %v1882 = vadd.f32 0.0, %v1881
    %v1883 = vpop.f32.mrf.mxu0
    %1884 = vmatprep.mubr.f32.mxu0 0.0
    %1885 = vmatmul.mubr.f32.gmra.mxu0 %v1085
    %v1886 = vpop.f32.mrf.mxu0
    %v1887 = vadd.f32 0.0, %v1886
    %v1888 = vpop.f32.mrf.mxu0
    %1889 = vmatprep.mubr.f32.mxu0 0.0
    %1890 = vmatmul.mubr.f32.gmra.mxu0 %v1250
    %v1891 = vpop.f32.mrf.mxu0
    %v1892 = vadd.f32 0.0, %v1891
    %v1893 = vpop.f32.mrf.mxu0
    %1894 = vmatprep.mubr.f32.mxu0 0.0
    %1895 = vmatmul.mubr.f32.gmra.mxu0 %v1415
    %v1896 = vpop.f32.mrf.mxu0
    %v1897 = vadd.f32 0.0, %v1896
    %v1898 = vpop.f32.mrf.mxu0
    %1899 = vmatprep.mubr.f32.mxu0 0.0
    %1900 = vmatmul.mubr.f32.gmra.mxu0 %v1580
    %v1901 = vpop.f32.mrf.mxu0
    %v1902 = vadd.f32 0.0, %v1901
    %v1903 = vpop.f32.mrf.mxu0
    %1904 = vdwg.mxu0
    %v1905 = vadd.f32 %v1754, %v1680
    %v1906 = vadd.f32 %v1756, %v1681
    %v1907 = vadd.f32 %v1867, %v1682
    %v1908 = vadd.f32 %v1905, %v1684
    %v1909 = vxor.u32 %v1908, 2147483648
    %v1910 = vmul.f32 %v1909, 1.442695
    %v1911 = vpow.pop %v1910
    %v1912 = vadd.f32 %v1911, 1.0
    %v1913 = vrcp.pop %v1912
    %v1914 = vmul.f32 1.0, %v1913
    %v1915 = vadd.f32 %v1906, %v1685
    %v1916 = vxor.u32 %v1915, 2147483648
    %v1917 = vmul.f32 %v1916, 1.442695
    %v1918 = vpow.pop %v1917
    %v1919 = vadd.f32 %v1918, 1.0
    %v1920 = vrcp.pop %v1919
    %v1921 = vmul.f32 1.0, %v1920
    %v1922 = vmul.f32 %v1914, %v1686
    %v1923 = vadd.f32 %v1907, %v1922
    %v1924 = vtanh.pop %v1923
    %v1925 = vsub.f32 1.0, %v1921
    %v1926 = vmul.f32 %v1925, %v1924
    %v1927 = vadd.f32 %v1760, %v1680
    %v1928 = vadd.f32 %v1762, %v1681
    %v1929 = vadd.f32 %v1872, %v1682
    %1930 = vmatprep.subr.mxu0 %v1677
    %1931 = vmatpush1.msra.mxu0 %v1676
    %1932 = vmatprep.subr.mxu0 %v1674
    %1933 = vmatpush1.msra.mxu0 %v1673
    %1934 = vmatprep.subr.mxu0 %v1671
    %1935 = vmatpush1.msra.mxu0 %v1670
    %1936 = vmatprep.subr.mxu0 %v1668
    %1937 = vmatpush1.msra.mxu0 %v1667
    %1938 = vmatprep.subr.mxu0 %v1665
    %1939 = vmatpush1.msra.mxu0 %v1664
    %1940 = vmatprep.subr.mxu0 %v1662
    %1941 = vmatpush1.msra.mxu0 %v1661
    %1942 = vmatprep.subr.mxu0 %v1659
    %1943 = vmatpush1.msra.mxu0 %v1658
    %1944 = vmatprep.subr.mxu0 %v1656
    %1945 = vmatpush1.msra.mxu0 %v1655
    %1946 = vmatprep.subr.mxu0 %v1653
    %1947 = vmatpush1.msra.mxu0 %v1652
    %1948 = vmatprep.subr.mxu0 %v1650
    %1949 = vmatpush1.msra.mxu0 %v1649
    %1950 = vmatprep.subr.mxu0 %v1647
    %1951 = vmatpush1.msra.mxu0 %v1646
    %1952 = vmatprep.subr.mxu0 %v1644
    %1953 = vmatpush1.msra.mxu0 %v1643
    %1954 = vmatprep.subr.mxu0 %v1641
    %1955 = vmatpush1.msra.mxu0 %v1640
    %1956 = vmatprep.subr.mxu0 %v1638
    %1957 = vmatpush1.msra.mxu0 %v1637
    %1958 = vmatprep.subr.mxu0 %v1635
    %1959 = vmatpush1.msra.mxu0 %v1634
    %1960 = vmatprep.subr.mxu0 %v1632
    %1961 = vmatpush1.msra.mxu0 %v1631
    %1962 = vmatprep.subr.mxu0 0.0
    %1963 = vmatpush2.msra.mxu0 0.0
    %1964 = vmatprep.subr.mxu0 0.0
    %1965 = vmatpush2.msra.mxu0 0.0
    %1966 = vmatprep.subr.mxu0 0.0
    %1967 = vmatpush2.msra.mxu0 0.0
    %1968 = vmatprep.subr.mxu0 0.0
    %1969 = vmatpush2.msra.mxu0 0.0
    %1970 = vmatprep.subr.mxu0 0.0
    %1971 = vmatpush2.msra.mxu0 0.0
    %1972 = vmatprep.subr.mxu0 0.0
    %1973 = vmatpush2.msra.mxu0 0.0
    %1974 = vmatprep.subr.mxu0 0.0
    %1975 = vmatpush2.msra.mxu0 0.0
    %1976 = vmatprep.subr.mxu0 0.0
    %1977 = vmatpush2.msra.mxu0 0.0
    %1978 = vmatprep.subr.mxu0 0.0
    %1979 = vmatpush2.msra.mxu0 0.0
    %1980 = vmatprep.subr.mxu0 0.0
    %1981 = vmatpush2.msra.mxu0 0.0
    %1982 = vmatprep.subr.mxu0 0.0
    %1983 = vmatpush2.msra.mxu0 0.0
    %1984 = vmatprep.subr.mxu0 0.0
    %1985 = vmatpush2.msra.mxu0 0.0
    %1986 = vmatprep.subr.mxu0 0.0
    %1987 = vmatpush2.msra.mxu0 0.0
    %1988 = vmatprep.subr.mxu0 0.0
    %1989 = vmatpush2.msra.mxu0 0.0
    %1990 = vmatprep.subr.mxu0 0.0
    %1991 = vmatpush2.msra.mxu0 0.0
    %1992 = vmatprep.subr.mxu0 0.0
    %1993 = vmatpush2.msra.mxu0 0.0
    %1994 = vmatprep.mubr.f32.mxu0 0.0
    %1995 = vmatmul.mubr.f32.gmra.mxu0 %v1926
    %v1996 = vpop.f32.mrf.mxu0
    %v1997 = vadd.f32 %v1684, %v1996
    %v1998 = vpop.f32.mrf.mxu0
    %v1999 = vadd.f32 %v1685, %v1998
    %2000 = vdwg.mxu0
    %2001 = vmatprep.subr.mxu0 0.0
    %2002 = vmatpush1.msra.mxu0 %v1678
    %2003 = vmatprep.subr.mxu0 0.0
    %2004 = vmatpush1.msra.mxu0 %v1675
    %2005 = vmatprep.subr.mxu0 0.0
    %2006 = vmatpush1.msra.mxu0 %v1672
    %2007 = vmatprep.subr.mxu0 0.0
    %2008 = vmatpush1.msra.mxu0 %v1669
    %2009 = vmatprep.subr.mxu0 0.0
    %2010 = vmatpush1.msra.mxu0 %v1666
    %2011 = vmatprep.subr.mxu0 0.0
    %2012 = vmatpush1.msra.mxu0 %v1663
    %2013 = vmatprep.subr.mxu0 0.0
    %2014 = vmatpush1.msra.mxu0 %v1660
    %2015 = vmatprep.subr.mxu0 0.0
    %2016 = vmatpush1.msra.mxu0 %v1657
    %2017 = vmatprep.subr.mxu0 0.0
    %2018 = vmatpush1.msra.mxu0 %v1654
    %2019 = vmatprep.subr.mxu0 0.0
    %2020 = vmatpush1.msra.mxu0 %v1651
    %2021 = vmatprep.subr.mxu0 0.0
    %2022 = vmatpush1.msra.mxu0 %v1648
    %2023 = vmatprep.subr.mxu0 0.0
    %2024 = vmatpush1.msra.mxu0 %v1645
    %2025 = vmatprep.subr.mxu0 0.0
    %2026 = vmatpush1.msra.mxu0 %v1642
    %2027 = vmatprep.subr.mxu0 0.0
    %2028 = vmatpush1.msra.mxu0 %v1639
    %2029 = vmatprep.subr.mxu0 0.0
    %2030 = vmatpush1.msra.mxu0 %v1636
    %2031 = vmatprep.subr.mxu0 0.0
    %2032 = vmatpush1.msra.mxu0 %v1633
    %2033 = vmatprep.subr.mxu0 0.0
    %2034 = vmatpush2.msra.mxu0 0.0
    %2035 = vmatprep.subr.mxu0 0.0
    %2036 = vmatpush2.msra.mxu0 0.0
    %2037 = vmatprep.subr.mxu0 0.0
    %2038 = vmatpush2.msra.mxu0 0.0
    %2039 = vmatprep.subr.mxu0 0.0
    %2040 = vmatpush2.msra.mxu0 0.0
    %2041 = vmatprep.subr.mxu0 0.0
    %2042 = vmatpush2.msra.mxu0 0.0
    %2043 = vmatprep.subr.mxu0 0.0
    %2044 = vmatpush2.msra.mxu0 0.0
    %2045 = vmatprep.subr.mxu0 0.0
    %2046 = vmatpush2.msra.mxu0 0.0
    %2047 = vmatprep.subr.mxu0 0.0
    %2048 = vmatpush2.msra.mxu0 0.0
    %2049 = vmatprep.subr.mxu0 0.0
    %2050 = vmatpush2.msra.mxu0 0.0
    %2051 = vmatprep.subr.mxu0 0.0
    %2052 = vmatpush2.msra.mxu0 0.0
    %2053 = vmatprep.subr.mxu0 0.0
    %2054 = vmatpush2.msra.mxu0 0.0
    %2055 = vmatprep.subr.mxu0 0.0
    %2056 = vmatpush2.msra.mxu0 0.0
    %2057 = vmatprep.subr.mxu0 0.0
    %2058 = vmatpush2.msra.mxu0 0.0
    %2059 = vmatprep.subr.mxu0 0.0
    %2060 = vmatpush2.msra.mxu0 0.0
    %2061 = vmatprep.subr.mxu0 0.0
    %2062 = vmatpush2.msra.mxu0 0.0
    %2063 = vmatprep.subr.mxu0 0.0
    %2064 = vmatpush2.msra.mxu0 0.0
    %2065 = vmatprep.mubr.f32.mxu0 0.0
    %2066 = vmatmul.mubr.f32.gmra.mxu0 %v1926
    %v2067 = vpop.f32.mrf.mxu0
    %v2068 = vadd.f32 %v1686, %v2067
    %v2069 = vpop.f32.mrf.mxu0
    %2070 = vdwg.mxu0
    %v2071 = vadd.f32 %v1927, %v1997
    %v2072 = vxor.u32 %v2071, 2147483648
    %v2073 = vmul.f32 %v2072, 1.442695
    %v2074 = vpow.pop %v2073
    %v2075 = vadd.f32 %v2074, 1.0
    %v2076 = vrcp.pop %v2075
    %v2077 = vmul.f32 1.0, %v2076
    %v2078 = vadd.f32 %v1928, %v1999
    %v2079 = vxor.u32 %v2078, 2147483648
    %v2080 = vmul.f32 %v2079, 1.442695
    %v2081 = vpow.pop %v2080
    %v2082 = vadd.f32 %v2081, 1.0
    %v2083 = vrcp.pop %v2082
    %v2084 = vmul.f32 1.0, %v2083
    %v2085 = vmul.f32 %v2077, %v2068
    %v2086 = vadd.f32 %v1929, %v2085
    %v2087 = vtanh.pop %v2086
    %v2088 = vsub.f32 1.0, %v2084
    %v2089 = vmul.f32 %v2088, %v2087
    %v2090 = vmul.f32 %v2084, %v1926
    %v2091 = vadd.f32 %v2089, %v2090
    %v2092 = vadd.f32 %v1766, %v1680
    %v2093 = vadd.f32 %v1768, %v1681
    %v2094 = vadd.f32 %v1877, %v1682
    %2095 = vmatprep.subr.mxu0 %v1677
    %2096 = vmatpush1.msra.mxu0 %v1676
    %2097 = vmatprep.subr.mxu0 %v1674
    %2098 = vmatpush1.msra.mxu0 %v1673
    %2099 = vmatprep.subr.mxu0 %v1671
    %2100 = vmatpush1.msra.mxu0 %v1670
    %2101 = vmatprep.subr.mxu0 %v1668
    %2102 = vmatpush1.msra.mxu0 %v1667
    %2103 = vmatprep.subr.mxu0 %v1665
    %2104 = vmatpush1.msra.mxu0 %v1664
    %2105 = vmatprep.subr.mxu0 %v1662
    %2106 = vmatpush1.msra.mxu0 %v1661
    %2107 = vmatprep.subr.mxu0 %v1659
    %2108 = vmatpush1.msra.mxu0 %v1658
    %2109 = vmatprep.subr.mxu0 %v1656
    %2110 = vmatpush1.msra.mxu0 %v1655
    %2111 = vmatprep.subr.mxu0 %v1653
    %2112 = vmatpush1.msra.mxu0 %v1652
    %2113 = vmatprep.subr.mxu0 %v1650
    %2114 = vmatpush1.msra.mxu0 %v1649
    %2115 = vmatprep.subr.mxu0 %v1647
    %2116 = vmatpush1.msra.mxu0 %v1646
    %2117 = vmatprep.subr.mxu0 %v1644
    %2118 = vmatpush1.msra.mxu0 %v1643
    %2119 = vmatprep.subr.mxu0 %v1641
    %2120 = vmatpush1.msra.mxu0 %v1640
    %2121 = vmatprep.subr.mxu0 %v1638
    %2122 = vmatpush1.msra.mxu0 %v1637
    %2123 = vmatprep.subr.mxu0 %v1635
    %2124 = vmatpush1.msra.mxu0 %v1634
    %2125 = vmatprep.subr.mxu0 %v1632
    %2126 = vmatpush1.msra.mxu0 %v1631
    %2127 = vmatprep.subr.mxu0 0.0
    %2128 = vmatpush2.msra.mxu0 0.0
    %2129 = vmatprep.subr.mxu0 0.0
    %2130 = vmatpush2.msra.mxu0 0.0
    %2131 = vmatprep.subr.mxu0 0.0
    %2132 = vmatpush2.msra.mxu0 0.0
    %2133 = vmatprep.subr.mxu0 0.0
    %2134 = vmatpush2.msra.mxu0 0.0
    %2135 = vmatprep.subr.mxu0 0.0
    %2136 = vmatpush2.msra.mxu0 0.0
    %2137 = vmatprep.subr.mxu0 0.0
    %2138 = vmatpush2.msra.mxu0 0.0
    %2139 = vmatprep.subr.mxu0 0.0
    %2140 = vmatpush2.msra.mxu0 0.0
    %2141 = vmatprep.subr.mxu0 0.0
    %2142 = vmatpush2.msra.mxu0 0.0
    %2143 = vmatprep.subr.mxu0 0.0
    %2144 = vmatpush2.msra.mxu0 0.0
    %2145 = vmatprep.subr.mxu0 0.0
    %2146 = vmatpush2.msra.mxu0 0.0
    %2147 = vmatprep.subr.mxu0 0.0
    %2148 = vmatpush2.msra.mxu0 0.0
    %2149 = vmatprep.subr.mxu0 0.0
    %2150 = vmatpush2.msra.mxu0 0.0
    %2151 = vmatprep.subr.mxu0 0.0
    %2152 = vmatpush2.msra.mxu0 0.0
    %2153 = vmatprep.subr.mxu0 0.0
    %2154 = vmatpush2.msra.mxu0 0.0
    %2155 = vmatprep.subr.mxu0 0.0
    %2156 = vmatpush2.msra.mxu0 0.0
    %2157 = vmatprep.subr.mxu0 0.0
    %2158 = vmatpush2.msra.mxu0 0.0
    %2159 = vmatprep.mubr.f32.mxu0 0.0
    %2160 = vmatmul.mubr.f32.gmra.mxu0 %v2091
    %v2161 = vpop.f32.mrf.mxu0
    %v2162 = vadd.f32 %v1684, %v2161
    %v2163 = vpop.f32.mrf.mxu0
    %v2164 = vadd.f32 %v1685, %v2163
    %2165 = vdwg.mxu0
    %2166 = vmatprep.subr.mxu0 0.0
    %2167 = vmatpush1.msra.mxu0 %v1678
    %2168 = vmatprep.subr.mxu0 0.0
    %2169 = vmatpush1.msra.mxu0 %v1675
    %2170 = vmatprep.subr.mxu0 0.0
    %2171 = vmatpush1.msra.mxu0 %v1672
    %2172 = vmatprep.subr.mxu0 0.0
    %2173 = vmatpush1.msra.mxu0 %v1669
    %2174 = vmatprep.subr.mxu0 0.0
    %2175 = vmatpush1.msra.mxu0 %v1666
    %2176 = vmatprep.subr.mxu0 0.0
    %2177 = vmatpush1.msra.mxu0 %v1663
    %2178 = vmatprep.subr.mxu0 0.0
    %2179 = vmatpush1.msra.mxu0 %v1660
    %2180 = vmatprep.subr.mxu0 0.0
    %2181 = vmatpush1.msra.mxu0 %v1657
    %2182 = vmatprep.subr.mxu0 0.0
    %2183 = vmatpush1.msra.mxu0 %v1654
    %2184 = vmatprep.subr.mxu0 0.0
    %2185 = vmatpush1.msra.mxu0 %v1651
    %2186 = vmatprep.subr.mxu0 0.0
    %2187 = vmatpush1.msra.mxu0 %v1648
    %2188 = vmatprep.subr.mxu0 0.0
    %2189 = vmatpush1.msra.mxu0 %v1645
    %2190 = vmatprep.subr.mxu0 0.0
    %2191 = vmatpush1.msra.mxu0 %v1642
    %2192 = vmatprep.subr.mxu0 0.0
    %2193 = vmatpush1.msra.mxu0 %v1639
    %2194 = vmatprep.subr.mxu0 0.0
    %2195 = vmatpush1.msra.mxu0 %v1636
    %2196 = vmatprep.subr.mxu0 0.0
    %2197 = vmatpush1.msra.mxu0 %v1633
    %2198 = vmatprep.subr.mxu0 0.0
    %2199 = vmatpush2.msra.mxu0 0.0
    %2200 = vmatprep.subr.mxu0 0.0
    %2201 = vmatpush2.msra.mxu0 0.0
    %2202 = vmatprep.subr.mxu0 0.0
    %2203 = vmatpush2.msra.mxu0 0.0
    %2204 = vmatprep.subr.mxu0 0.0
    %2205 = vmatpush2.msra.mxu0 0.0
    %2206 = vmatprep.subr.mxu0 0.0
    %2207 = vmatpush2.msra.mxu0 0.0
    %2208 = vmatprep.subr.mxu0 0.0
    %2209 = vmatpush2.msra.mxu0 0.0
    %2210 = vmatprep.subr.mxu0 0.0
    %2211 = vmatpush2.msra.mxu0 0.0
    %2212 = vmatprep.subr.mxu0 0.0
    %2213 = vmatpush2.msra.mxu0 0.0
    %2214 = vmatprep.subr.mxu0 0.0
    %2215 = vmatpush2.msra.mxu0 0.0
    %2216 = vmatprep.subr.mxu0 0.0
    %2217 = vmatpush2.msra.mxu0 0.0
    %2218 = vmatprep.subr.mxu0 0.0
    %2219 = vmatpush2.msra.mxu0 0.0
    %2220 = vmatprep.subr.mxu0 0.0
    %2221 = vmatpush2.msra.mxu0 0.0
    %2222 = vmatprep.subr.mxu0 0.0
    %2223 = vmatpush2.msra.mxu0 0.0
    %2224 = vmatprep.subr.mxu0 0.0
    %2225 = vmatpush2.msra.mxu0 0.0
    %2226 = vmatprep.subr.mxu0 0.0
    %2227 = vmatpush2.msra.mxu0 0.0
    %2228 = vmatprep.subr.mxu0 0.0
    %2229 = vmatpush2.msra.mxu0 0.0
    %2230 = vmatprep.mubr.f32.mxu0 0.0
    %2231 = vmatmul.mubr.f32.gmra.mxu0 %v2091
    %v2232 = vpop.f32.mrf.mxu0
    %v2233 = vadd.f32 %v1686, %v2232
    %v2234 = vpop.f32.mrf.mxu0
    %2235 = vdwg.mxu0
    %v2236 = vadd.f32 %v2092, %v2162
    %v2237 = vxor.u32 %v2236, 2147483648
    %v2238 = vmul.f32 %v2237, 1.442695
    %v2239 = vpow.pop %v2238
    %v2240 = vadd.f32 %v2239, 1.0
    %v2241 = vrcp.pop %v2240
    %v2242 = vmul.f32 1.0, %v2241
    %v2243 = vadd.f32 %v2093, %v2164
    %v2244 = vxor.u32 %v2243, 2147483648
    %v2245 = vmul.f32 %v2244, 1.442695
    %v2246 = vpow.pop %v2245
    %v2247 = vadd.f32 %v2246, 1.0
    %v2248 = vrcp.pop %v2247
    %v2249 = vmul.f32 1.0, %v2248
    %v2250 = vmul.f32 %v2242, %v2233
    %v2251 = vadd.f32 %v2094, %v2250
    %v2252 = vtanh.pop %v2251
    %v2253 = vsub.f32 1.0, %v2249
    %v2254 = vmul.f32 %v2253, %v2252
    %v2255 = vmul.f32 %v2249, %v2091
    %v2256 = vadd.f32 %v2254, %v2255
    %v2257 = vadd.f32 %v1772, %v1680
    %v2258 = vadd.f32 %v1774, %v1681
    %v2259 = vadd.f32 %v1882, %v1682
    %2260 = vmatprep.subr.mxu0 %v1677
    %2261 = vmatpush1.msra.mxu0 %v1676
    %2262 = vmatprep.subr.mxu0 %v1674
    %2263 = vmatpush1.msra.mxu0 %v1673
    %2264 = vmatprep.subr.mxu0 %v1671
    %2265 = vmatpush1.msra.mxu0 %v1670
    %2266 = vmatprep.subr.mxu0 %v1668
    %2267 = vmatpush1.msra.mxu0 %v1667
    %2268 = vmatprep.subr.mxu0 %v1665
    %2269 = vmatpush1.msra.mxu0 %v1664
    %2270 = vmatprep.subr.mxu0 %v1662
    %2271 = vmatpush1.msra.mxu0 %v1661
    %2272 = vmatprep.subr.mxu0 %v1659
    %2273 = vmatpush1.msra.mxu0 %v1658
    %2274 = vmatprep.subr.mxu0 %v1656
    %2275 = vmatpush1.msra.mxu0 %v1655
    %2276 = vmatprep.subr.mxu0 %v1653
    %2277 = vmatpush1.msra.mxu0 %v1652
    %2278 = vmatprep.subr.mxu0 %v1650
    %2279 = vmatpush1.msra.mxu0 %v1649
    %2280 = vmatprep.subr.mxu0 %v1647
    %2281 = vmatpush1.msra.mxu0 %v1646
    %2282 = vmatprep.subr.mxu0 %v1644
    %2283 = vmatpush1.msra.mxu0 %v1643
    %2284 = vmatprep.subr.mxu0 %v1641
    %2285 = vmatpush1.msra.mxu0 %v1640
    %2286 = vmatprep.subr.mxu0 %v1638
    %2287 = vmatpush1.msra.mxu0 %v1637
    %2288 = vmatprep.subr.mxu0 %v1635
    %2289 = vmatpush1.msra.mxu0 %v1634
    %2290 = vmatprep.subr.mxu0 %v1632
    %2291 = vmatpush1.msra.mxu0 %v1631
    %2292 = vmatprep.subr.mxu0 0.0
    %2293 = vmatpush2.msra.mxu0 0.0
    %2294 = vmatprep.subr.mxu0 0.0
    %2295 = vmatpush2.msra.mxu0 0.0
    %2296 = vmatprep.subr.mxu0 0.0
    %2297 = vmatpush2.msra.mxu0 0.0
    %2298 = vmatprep.subr.mxu0 0.0
    %2299 = vmatpush2.msra.mxu0 0.0
    %2300 = vmatprep.subr.mxu0 0.0
    %2301 = vmatpush2.msra.mxu0 0.0
    %2302 = vmatprep.subr.mxu0 0.0
    %2303 = vmatpush2.msra.mxu0 0.0
    %2304 = vmatprep.subr.mxu0 0.0
    %2305 = vmatpush2.msra.mxu0 0.0
    %2306 = vmatprep.subr.mxu0 0.0
    %2307 = vmatpush2.msra.mxu0 0.0
    %2308 = vmatprep.subr.mxu0 0.0
    %2309 = vmatpush2.msra.mxu0 0.0
    %2310 = vmatprep.subr.mxu0 0.0
    %2311 = vmatpush2.msra.mxu0 0.0
    %2312 = vmatprep.subr.mxu0 0.0
    %2313 = vmatpush2.msra.mxu0 0.0
    %2314 = vmatprep.subr.mxu0 0.0
    %2315 = vmatpush2.msra.mxu0 0.0
    %2316 = vmatprep.subr.mxu0 0.0
    %2317 = vmatpush2.msra.mxu0 0.0
    %2318 = vmatprep.subr.mxu0 0.0
    %2319 = vmatpush2.msra.mxu0 0.0
    %2320 = vmatprep.subr.mxu0 0.0
    %2321 = vmatpush2.msra.mxu0 0.0
    %2322 = vmatprep.subr.mxu0 0.0
    %2323 = vmatpush2.msra.mxu0 0.0
    %2324 = vmatprep.mubr.f32.mxu0 0.0
    %2325 = vmatmul.mubr.f32.gmra.mxu0 %v2256
    %v2326 = vpop.f32.mrf.mxu0
    %v2327 = vadd.f32 %v1684, %v2326
    %v2328 = vpop.f32.mrf.mxu0
    %v2329 = vadd.f32 %v1685, %v2328
    %2330 = vdwg.mxu0
    %2331 = vmatprep.subr.mxu0 0.0
    %2332 = vmatpush1.msra.mxu0 %v1678
    %2333 = vmatprep.subr.mxu0 0.0
    %2334 = vmatpush1.msra.mxu0 %v1675
    %2335 = vmatprep.subr.mxu0 0.0
    %2336 = vmatpush1.msra.mxu0 %v1672
    %2337 = vmatprep.subr.mxu0 0.0
    %2338 = vmatpush1.msra.mxu0 %v1669
    %2339 = vmatprep.subr.mxu0 0.0
    %2340 = vmatpush1.msra.mxu0 %v1666
    %2341 = vmatprep.subr.mxu0 0.0
    %2342 = vmatpush1.msra.mxu0 %v1663
    %2343 = vmatprep.subr.mxu0 0.0
    %2344 = vmatpush1.msra.mxu0 %v1660
    %2345 = vmatprep.subr.mxu0 0.0
    %2346 = vmatpush1.msra.mxu0 %v1657
    %2347 = vmatprep.subr.mxu0 0.0
    %2348 = vmatpush1.msra.mxu0 %v1654
    %2349 = vmatprep.subr.mxu0 0.0
    %2350 = vmatpush1.msra.mxu0 %v1651
    %2351 = vmatprep.subr.mxu0 0.0
    %2352 = vmatpush1.msra.mxu0 %v1648
    %2353 = vmatprep.subr.mxu0 0.0
    %2354 = vmatpush1.msra.mxu0 %v1645
    %2355 = vmatprep.subr.mxu0 0.0
    %2356 = vmatpush1.msra.mxu0 %v1642
    %2357 = vmatprep.subr.mxu0 0.0
    %2358 = vmatpush1.msra.mxu0 %v1639
    %2359 = vmatprep.subr.mxu0 0.0
    %2360 = vmatpush1.msra.mxu0 %v1636
    %2361 = vmatprep.subr.mxu0 0.0
    %2362 = vmatpush1.msra.mxu0 %v1633
    %2363 = vmatprep.subr.mxu0 0.0
    %2364 = vmatpush2.msra.mxu0 0.0
    %2365 = vmatprep.subr.mxu0 0.0
    %2366 = vmatpush2.msra.mxu0 0.0
    %2367 = vmatprep.subr.mxu0 0.0
    %2368 = vmatpush2.msra.mxu0 0.0
    %2369 = vmatprep.subr.mxu0 0.0
    %2370 = vmatpush2.msra.mxu0 0.0
    %2371 = vmatprep.subr.mxu0 0.0
    %2372 = vmatpush2.msra.mxu0 0.0
    %2373 = vmatprep.subr.mxu0 0.0
    %2374 = vmatpush2.msra.mxu0 0.0
    %2375 = vmatprep.subr.mxu0 0.0
    %2376 = vmatpush2.msra.mxu0 0.0
    %2377 = vmatprep.subr.mxu0 0.0
    %2378 = vmatpush2.msra.mxu0 0.0
    %2379 = vmatprep.subr.mxu0 0.0
    %2380 = vmatpush2.msra.mxu0 0.0
    %2381 = vmatprep.subr.mxu0 0.0
    %2382 = vmatpush2.msra.mxu0 0.0
    %2383 = vmatprep.subr.mxu0 0.0
    %2384 = vmatpush2.msra.mxu0 0.0
    %2385 = vmatprep.subr.mxu0 0.0
    %2386 = vmatpush2.msra.mxu0 0.0
    %2387 = vmatprep.subr.mxu0 0.0
    %2388 = vmatpush2.msra.mxu0 0.0
    %2389 = vmatprep.subr.mxu0 0.0
    %2390 = vmatpush2.msra.mxu0 0.0
    %2391 = vmatprep.subr.mxu0 0.0
    %2392 = vmatpush2.msra.mxu0 0.0
    %2393 = vmatprep.subr.mxu0 0.0
    %2394 = vmatpush2.msra.mxu0 0.0
    %2395 = vmatprep.mubr.f32.mxu0 0.0
    %2396 = vmatmul.mubr.f32.gmra.mxu0 %v2256
    %v2397 = vpop.f32.mrf.mxu0
    %v2398 = vadd.f32 %v1686, %v2397
    %v2399 = vpop.f32.mrf.mxu0
    %2400 = vdwg.mxu0
    %v2401 = vadd.f32 %v2257, %v2327
    %v2402 = vxor.u32 %v2401, 2147483648
    %v2403 = vmul.f32 %v2402, 1.442695
    %v2404 = vpow.pop %v2403
    %v2405 = vadd.f32 %v2404, 1.0
    %v2406 = vrcp.pop %v2405
    %v2407 = vmul.f32 1.0, %v2406
    %v2408 = vadd.f32 %v2258, %v2329
    %v2409 = vxor.u32 %v2408, 2147483648
    %v2410 = vmul.f32 %v2409, 1.442695
    %v2411 = vpow.pop %v2410
    %v2412 = vadd.f32 %v2411, 1.0
    %v2413 = vrcp.pop %v2412
    %v2414 = vmul.f32 1.0, %v2413
    %v2415 = vmul.f32 %v2407, %v2398
    %v2416 = vadd.f32 %v2259, %v2415
    %v2417 = vtanh.pop %v2416
    %v2418 = vsub.f32 1.0, %v2414
    %v2419 = vmul.f32 %v2418, %v2417
    %v2420 = vmul.f32 %v2414, %v2256
    %v2421 = vadd.f32 %v2419, %v2420
    %v2422 = vadd.f32 %v1778, %v1680
    %v2423 = vadd.f32 %v1780, %v1681
    %v2424 = vadd.f32 %v1887, %v1682
    %2425 = vmatprep.subr.mxu0 %v1677
    %2426 = vmatpush1.msra.mxu0 %v1676
    %2427 = vmatprep.subr.mxu0 %v1674
    %2428 = vmatpush1.msra.mxu0 %v1673
    %2429 = vmatprep.subr.mxu0 %v1671
    %2430 = vmatpush1.msra.mxu0 %v1670
    %2431 = vmatprep.subr.mxu0 %v1668
    %2432 = vmatpush1.msra.mxu0 %v1667
    %2433 = vmatprep.subr.mxu0 %v1665
    %2434 = vmatpush1.msra.mxu0 %v1664
    %2435 = vmatprep.subr.mxu0 %v1662
    %2436 = vmatpush1.msra.mxu0 %v1661
    %2437 = vmatprep.subr.mxu0 %v1659
    %2438 = vmatpush1.msra.mxu0 %v1658
    %2439 = vmatprep.subr.mxu0 %v1656
    %2440 = vmatpush1.msra.mxu0 %v1655
    %2441 = vmatprep.subr.mxu0 %v1653
    %2442 = vmatpush1.msra.mxu0 %v1652
    %2443 = vmatprep.subr.mxu0 %v1650
    %2444 = vmatpush1.msra.mxu0 %v1649
    %2445 = vmatprep.subr.mxu0 %v1647
    %2446 = vmatpush1.msra.mxu0 %v1646
    %2447 = vmatprep.subr.mxu0 %v1644
    %2448 = vmatpush1.msra.mxu0 %v1643
    %2449 = vmatprep.subr.mxu0 %v1641
    %2450 = vmatpush1.msra.mxu0 %v1640
    %2451 = vmatprep.subr.mxu0 %v1638
    %2452 = vmatpush1.msra.mxu0 %v1637
    %2453 = vmatprep.subr.mxu0 %v1635
    %2454 = vmatpush1.msra.mxu0 %v1634
    %2455 = vmatprep.subr.mxu0 %v1632
    %2456 = vmatpush1.msra.mxu0 %v1631
    %2457 = vmatprep.subr.mxu0 0.0
    %2458 = vmatpush2.msra.mxu0 0.0
    %2459 = vmatprep.subr.mxu0 0.0
    %2460 = vmatpush2.msra.mxu0 0.0
    %2461 = vmatprep.subr.mxu0 0.0
    %2462 = vmatpush2.msra.mxu0 0.0
    %2463 = vmatprep.subr.mxu0 0.0
    %2464 = vmatpush2.msra.mxu0 0.0
    %2465 = vmatprep.subr.mxu0 0.0
    %2466 = vmatpush2.msra.mxu0 0.0
    %2467 = vmatprep.subr.mxu0 0.0
    %2468 = vmatpush2.msra.mxu0 0.0
    %2469 = vmatprep.subr.mxu0 0.0
    %2470 = vmatpush2.msra.mxu0 0.0
    %2471 = vmatprep.subr.mxu0 0.0
    %2472 = vmatpush2.msra.mxu0 0.0
    %2473 = vmatprep.subr.mxu0 0.0
    %2474 = vmatpush2.msra.mxu0 0.0
    %2475 = vmatprep.subr.mxu0 0.0
    %2476 = vmatpush2.msra.mxu0 0.0
    %2477 = vmatprep.subr.mxu0 0.0
    %2478 = vmatpush2.msra.mxu0 0.0
    %2479 = vmatprep.subr.mxu0 0.0
    %2480 = vmatpush2.msra.mxu0 0.0
    %2481 = vmatprep.subr.mxu0 0.0
    %2482 = vmatpush2.msra.mxu0 0.0
    %2483 = vmatprep.subr.mxu0 0.0
    %2484 = vmatpush2.msra.mxu0 0.0
    %2485 = vmatprep.subr.mxu0 0.0
    %2486 = vmatpush2.msra.mxu0 0.0
    %2487 = vmatprep.subr.mxu0 0.0
    %2488 = vmatpush2.msra.mxu0 0.0
    %2489 = vmatprep.mubr.f32.mxu0 0.0
    %2490 = vmatmul.mubr.f32.gmra.mxu0 %v2421
    %v2491 = vpop.f32.mrf.mxu0
    %v2492 = vadd.f32 %v1684, %v2491
    %v2493 = vpop.f32.mrf.mxu0
    %v2494 = vadd.f32 %v1685, %v2493
    %2495 = vdwg.mxu0
    %2496 = vmatprep.subr.mxu0 0.0
    %2497 = vmatpush1.msra.mxu0 %v1678
    %2498 = vmatprep.subr.mxu0 0.0
    %2499 = vmatpush1.msra.mxu0 %v1675
    %2500 = vmatprep.subr.mxu0 0.0
    %2501 = vmatpush1.msra.mxu0 %v1672
    %2502 = vmatprep.subr.mxu0 0.0
    %2503 = vmatpush1.msra.mxu0 %v1669
    %2504 = vmatprep.subr.mxu0 0.0
    %2505 = vmatpush1.msra.mxu0 %v1666
    %2506 = vmatprep.subr.mxu0 0.0
    %2507 = vmatpush1.msra.mxu0 %v1663
    %2508 = vmatprep.subr.mxu0 0.0
    %2509 = vmatpush1.msra.mxu0 %v1660
    %2510 = vmatprep.subr.mxu0 0.0
    %2511 = vmatpush1.msra.mxu0 %v1657
    %2512 = vmatprep.subr.mxu0 0.0
    %2513 = vmatpush1.msra.mxu0 %v1654
    %2514 = vmatprep.subr.mxu0 0.0
    %2515 = vmatpush1.msra.mxu0 %v1651
    %2516 = vmatprep.subr.mxu0 0.0
    %2517 = vmatpush1.msra.mxu0 %v1648
    %2518 = vmatprep.subr.mxu0 0.0
    %2519 = vmatpush1.msra.mxu0 %v1645
    %2520 = vmatprep.subr.mxu0 0.0
    %2521 = vmatpush1.msra.mxu0 %v1642
    %2522 = vmatprep.subr.mxu0 0.0
    %2523 = vmatpush1.msra.mxu0 %v1639
    %2524 = vmatprep.subr.mxu0 0.0
    %2525 = vmatpush1.msra.mxu0 %v1636
    %2526 = vmatprep.subr.mxu0 0.0
    %2527 = vmatpush1.msra.mxu0 %v1633
    %2528 = vmatprep.subr.mxu0 0.0
    %2529 = vmatpush2.msra.mxu0 0.0
    %2530 = vmatprep.subr.mxu0 0.0
    %2531 = vmatpush2.msra.mxu0 0.0
    %2532 = vmatprep.subr.mxu0 0.0
    %2533 = vmatpush2.msra.mxu0 0.0
    %2534 = vmatprep.subr.mxu0 0.0
    %2535 = vmatpush2.msra.mxu0 0.0
    %2536 = vmatprep.subr.mxu0 0.0
    %2537 = vmatpush2.msra.mxu0 0.0
    %2538 = vmatprep.subr.mxu0 0.0
    %2539 = vmatpush2.msra.mxu0 0.0
    %2540 = vmatprep.subr.mxu0 0.0
    %2541 = vmatpush2.msra.mxu0 0.0
    %2542 = vmatprep.subr.mxu0 0.0
    %2543 = vmatpush2.msra.mxu0 0.0
    %2544 = vmatprep.subr.mxu0 0.0
    %2545 = vmatpush2.msra.mxu0 0.0
    %2546 = vmatprep.subr.mxu0 0.0
    %2547 = vmatpush2.msra.mxu0 0.0
    %2548 = vmatprep.subr.mxu0 0.0
    %2549 = vmatpush2.msra.mxu0 0.0
    %2550 = vmatprep.subr.mxu0 0.0
    %2551 = vmatpush2.msra.mxu0 0.0
    %2552 = vmatprep.subr.mxu0 0.0
    %2553 = vmatpush2.msra.mxu0 0.0
    %2554 = vmatprep.subr.mxu0 0.0
    %2555 = vmatpush2.msra.mxu0 0.0
    %2556 = vmatprep.subr.mxu0 0.0
    %2557 = vmatpush2.msra.mxu0 0.0
    %2558 = vmatprep.subr.mxu0 0.0
    %2559 = vmatpush2.msra.mxu0 0.0
    %2560 = vmatprep.mubr.f32.mxu0 0.0
    %2561 = vmatmul.mubr.f32.gmra.mxu0 %v2421
    %v2562 = vpop.f32.mrf.mxu0
    %v2563 = vadd.f32 %v1686, %v2562
    %v2564 = vpop.f32.mrf.mxu0
    %2565 = vdwg.mxu0
    %v2566 = vadd.f32 %v2422, %v2492
    %v2567 = vxor.u32 %v2566, 2147483648
    %v2568 = vmul.f32 %v2567, 1.442695
    %v2569 = vpow.pop %v2568
    %v2570 = vadd.f32 %v2569, 1.0
    %v2571 = vrcp.pop %v2570
    %v2572 = vmul.f32 1.0, %v2571
    %v2573 = vadd.f32 %v2423, %v2494
    %v2574 = vxor.u32 %v2573, 2147483648
    %v2575 = vmul.f32 %v2574, 1.442695
    %v2576 = vpow.pop %v2575
    %v2577 = vadd.f32 %v2576, 1.0
    %v2578 = vrcp.pop %v2577
    %v2579 = vmul.f32 1.0, %v2578
    %v2580 = vmul.f32 %v2572, %v2563
    %v2581 = vadd.f32 %v2424, %v2580
    %v2582 = vtanh.pop %v2581
    %v2583 = vsub.f32 1.0, %v2579
    %v2584 = vmul.f32 %v2583, %v2582
    %v2585 = vmul.f32 %v2579, %v2421
    %v2586 = vadd.f32 %v2584, %v2585
    %v2587 = vadd.f32 %v1784, %v1680
    %v2588 = vadd.f32 %v1786, %v1681
    %v2589 = vadd.f32 %v1892, %v1682
    %2590 = vmatprep.subr.mxu0 %v1677
    %2591 = vmatpush1.msra.mxu0 %v1676
    %2592 = vmatprep.subr.mxu0 %v1674
    %2593 = vmatpush1.msra.mxu0 %v1673
    %2594 = vmatprep.subr.mxu0 %v1671
    %2595 = vmatpush1.msra.mxu0 %v1670
    %2596 = vmatprep.subr.mxu0 %v1668
    %2597 = vmatpush1.msra.mxu0 %v1667
    %2598 = vmatprep.subr.mxu0 %v1665
    %2599 = vmatpush1.msra.mxu0 %v1664
    %2600 = vmatprep.subr.mxu0 %v1662
    %2601 = vmatpush1.msra.mxu0 %v1661
    %2602 = vmatprep.subr.mxu0 %v1659
    %2603 = vmatpush1.msra.mxu0 %v1658
    %2604 = vmatprep.subr.mxu0 %v1656
    %2605 = vmatpush1.msra.mxu0 %v1655
    %2606 = vmatprep.subr.mxu0 %v1653
    %2607 = vmatpush1.msra.mxu0 %v1652
    %2608 = vmatprep.subr.mxu0 %v1650
    %2609 = vmatpush1.msra.mxu0 %v1649
    %2610 = vmatprep.subr.mxu0 %v1647
    %2611 = vmatpush1.msra.mxu0 %v1646
    %2612 = vmatprep.subr.mxu0 %v1644
    %2613 = vmatpush1.msra.mxu0 %v1643
    %2614 = vmatprep.subr.mxu0 %v1641
    %2615 = vmatpush1.msra.mxu0 %v1640
    %2616 = vmatprep.subr.mxu0 %v1638
    %2617 = vmatpush1.msra.mxu0 %v1637
    %2618 = vmatprep.subr.mxu0 %v1635
    %2619 = vmatpush1.msra.mxu0 %v1634
    %2620 = vmatprep.subr.mxu0 %v1632
    %2621 = vmatpush1.msra.mxu0 %v1631
    %2622 = vmatprep.subr.mxu0 0.0
    %2623 = vmatpush2.msra.mxu0 0.0
    %2624 = vmatprep.subr.mxu0 0.0
    %2625 = vmatpush2.msra.mxu0 0.0
    %2626 = vmatprep.subr.mxu0 0.0
    %2627 = vmatpush2.msra.mxu0 0.0
    %2628 = vmatprep.subr.mxu0 0.0
    %2629 = vmatpush2.msra.mxu0 0.0
    %2630 = vmatprep.subr.mxu0 0.0
    %2631 = vmatpush2.msra.mxu0 0.0
    %2632 = vmatprep.subr.mxu0 0.0
    %2633 = vmatpush2.msra.mxu0 0.0
    %2634 = vmatprep.subr.mxu0 0.0
    %2635 = vmatpush2.msra.mxu0 0.0
    %2636 = vmatprep.subr.mxu0 0.0
    %2637 = vmatpush2.msra.mxu0 0.0
    %2638 = vmatprep.subr.mxu0 0.0
    %2639 = vmatpush2.msra.mxu0 0.0
    %2640 = vmatprep.subr.mxu0 0.0
    %2641 = vmatpush2.msra.mxu0 0.0
    %2642 = vmatprep.subr.mxu0 0.0
    %2643 = vmatpush2.msra.mxu0 0.0
    %2644 = vmatprep.subr.mxu0 0.0
    %2645 = vmatpush2.msra.mxu0 0.0
    %2646 = vmatprep.subr.mxu0 0.0
    %2647 = vmatpush2.msra.mxu0 0.0
    %2648 = vmatprep.subr.mxu0 0.0
    %2649 = vmatpush2.msra.mxu0 0.0
    %2650 = vmatprep.subr.mxu0 0.0
    %2651 = vmatpush2.msra.mxu0 0.0
    %2652 = vmatprep.subr.mxu0 0.0
    %2653 = vmatpush2.msra.mxu0 0.0
    %2654 = vmatprep.mubr.f32.mxu0 0.0
    %2655 = vmatmul.mubr.f32.gmra.mxu0 %v2586
    %v2656 = vpop.f32.mrf.mxu0
    %v2657 = vadd.f32 %v1684, %v2656
    %v2658 = vpop.f32.mrf.mxu0
    %v2659 = vadd.f32 %v1685, %v2658
    %2660 = vdwg.mxu0
    %2661 = vmatprep.subr.mxu0 0.0
    %2662 = vmatpush1.msra.mxu0 %v1678
    %2663 = vmatprep.subr.mxu0 0.0
    %2664 = vmatpush1.msra.mxu0 %v1675
    %2665 = vmatprep.subr.mxu0 0.0
    %2666 = vmatpush1.msra.mxu0 %v1672
    %2667 = vmatprep.subr.mxu0 0.0
    %2668 = vmatpush1.msra.mxu0 %v1669
    %2669 = vmatprep.subr.mxu0 0.0
    %2670 = vmatpush1.msra.mxu0 %v1666
    %2671 = vmatprep.subr.mxu0 0.0
    %2672 = vmatpush1.msra.mxu0 %v1663
    %2673 = vmatprep.subr.mxu0 0.0
    %2674 = vmatpush1.msra.mxu0 %v1660
    %2675 = vmatprep.subr.mxu0 0.0
    %2676 = vmatpush1.msra.mxu0 %v1657
    %2677 = vmatprep.subr.mxu0 0.0
    %2678 = vmatpush1.msra.mxu0 %v1654
    %2679 = vmatprep.subr.mxu0 0.0
    %2680 = vmatpush1.msra.mxu0 %v1651
    %2681 = vmatprep.subr.mxu0 0.0
    %2682 = vmatpush1.msra.mxu0 %v1648
    %2683 = vmatprep.subr.mxu0 0.0
    %2684 = vmatpush1.msra.mxu0 %v1645
    %2685 = vmatprep.subr.mxu0 0.0
    %2686 = vmatpush1.msra.mxu0 %v1642
    %2687 = vmatprep.subr.mxu0 0.0
    %2688 = vmatpush1.msra.mxu0 %v1639
    %2689 = vmatprep.subr.mxu0 0.0
    %2690 = vmatpush1.msra.mxu0 %v1636
    %2691 = vmatprep.subr.mxu0 0.0
    %2692 = vmatpush1.msra.mxu0 %v1633
    %2693 = vmatprep.subr.mxu0 0.0
    %2694 = vmatpush2.msra.mxu0 0.0
    %2695 = vmatprep.subr.mxu0 0.0
    %2696 = vmatpush2.msra.mxu0 0.0
    %2697 = vmatprep.subr.mxu0 0.0
    %2698 = vmatpush2.msra.mxu0 0.0
    %2699 = vmatprep.subr.mxu0 0.0
    %2700 = vmatpush2.msra.mxu0 0.0
    %2701 = vmatprep.subr.mxu0 0.0
    %2702 = vmatpush2.msra.mxu0 0.0
    %2703 = vmatprep.subr.mxu0 0.0
    %2704 = vmatpush2.msra.mxu0 0.0
    %2705 = vmatprep.subr.mxu0 0.0
    %2706 = vmatpush2.msra.mxu0 0.0
    %2707 = vmatprep.subr.mxu0 0.0
    %2708 = vmatpush2.msra.mxu0 0.0
    %2709 = vmatprep.subr.mxu0 0.0
    %2710 = vmatpush2.msra.mxu0 0.0
    %2711 = vmatprep.subr.mxu0 0.0
    %2712 = vmatpush2.msra.mxu0 0.0
    %2713 = vmatprep.subr.mxu0 0.0
    %2714 = vmatpush2.msra.mxu0 0.0
    %2715 = vmatprep.subr.mxu0 0.0
    %2716 = vmatpush2.msra.mxu0 0.0
    %2717 = vmatprep.subr.mxu0 0.0
    %2718 = vmatpush2.msra.mxu0 0.0
    %2719 = vmatprep.subr.mxu0 0.0
    %2720 = vmatpush2.msra.mxu0 0.0
    %2721 = vmatprep.subr.mxu0 0.0
    %2722 = vmatpush2.msra.mxu0 0.0
    %2723 = vmatprep.subr.mxu0 0.0
    %2724 = vmatpush2.msra.mxu0 0.0
    %2725 = vmatprep.mubr.f32.mxu0 0.0
    %2726 = vmatmul.mubr.f32.gmra.mxu0 %v2586
    %v2727 = vpop.f32.mrf.mxu0
    %v2728 = vadd.f32 %v1686, %v2727
    %v2729 = vpop.f32.mrf.mxu0
    %2730 = vdwg.mxu0
    %v2731 = vadd.f32 %v2587, %v2657
    %v2732 = vxor.u32 %v2731, 2147483648
    %v2733 = vmul.f32 %v2732, 1.442695
    %v2734 = vpow.pop %v2733
    %v2735 = vadd.f32 %v2734, 1.0
    %v2736 = vrcp.pop %v2735
    %v2737 = vmul.f32 1.0, %v2736
    %v2738 = vadd.f32 %v2588, %v2659
    %v2739 = vxor.u32 %v2738, 2147483648
    %v2740 = vmul.f32 %v2739, 1.442695
    %v2741 = vpow.pop %v2740
    %v2742 = vadd.f32 %v2741, 1.0
    %v2743 = vrcp.pop %v2742
    %v2744 = vmul.f32 1.0, %v2743
    %v2745 = vmul.f32 %v2737, %v2728
    %v2746 = vadd.f32 %v2589, %v2745
    %v2747 = vtanh.pop %v2746
    %v2748 = vsub.f32 1.0, %v2744
    %v2749 = vmul.f32 %v2748, %v2747
    %v2750 = vmul.f32 %v2744, %v2586
    %v2751 = vadd.f32 %v2749, %v2750
    %v2752 = vadd.f32 %v1790, %v1680
    %v2753 = vadd.f32 %v1792, %v1681
    %v2754 = vadd.f32 %v1897, %v1682
    %2755 = vmatprep.subr.mxu0 %v1677
    %2756 = vmatpush1.msra.mxu0 %v1676
    %2757 = vmatprep.subr.mxu0 %v1674
    %2758 = vmatpush1.msra.mxu0 %v1673
    %2759 = vmatprep.subr.mxu0 %v1671
    %2760 = vmatpush1.msra.mxu0 %v1670
    %2761 = vmatprep.subr.mxu0 %v1668
    %2762 = vmatpush1.msra.mxu0 %v1667
    %2763 = vmatprep.subr.mxu0 %v1665
    %2764 = vmatpush1.msra.mxu0 %v1664
    %2765 = vmatprep.subr.mxu0 %v1662
    %2766 = vmatpush1.msra.mxu0 %v1661
    %2767 = vmatprep.subr.mxu0 %v1659
    %2768 = vmatpush1.msra.mxu0 %v1658
    %2769 = vmatprep.subr.mxu0 %v1656
    %2770 = vmatpush1.msra.mxu0 %v1655
    %2771 = vmatprep.subr.mxu0 %v1653
    %2772 = vmatpush1.msra.mxu0 %v1652
    %2773 = vmatprep.subr.mxu0 %v1650
    %2774 = vmatpush1.msra.mxu0 %v1649
    %2775 = vmatprep.subr.mxu0 %v1647
    %2776 = vmatpush1.msra.mxu0 %v1646
    %2777 = vmatprep.subr.mxu0 %v1644
    %2778 = vmatpush1.msra.mxu0 %v1643
    %2779 = vmatprep.subr.mxu0 %v1641
    %2780 = vmatpush1.msra.mxu0 %v1640
    %2781 = vmatprep.subr.mxu0 %v1638
    %2782 = vmatpush1.msra.mxu0 %v1637
    %2783 = vmatprep.subr.mxu0 %v1635
    %2784 = vmatpush1.msra.mxu0 %v1634
    %2785 = vmatprep.subr.mxu0 %v1632
    %2786 = vmatpush1.msra.mxu0 %v1631
    %2787 = vmatprep.subr.mxu0 0.0
    %2788 = vmatpush2.msra.mxu0 0.0
    %2789 = vmatprep.subr.mxu0 0.0
    %2790 = vmatpush2.msra.mxu0 0.0
    %2791 = vmatprep.subr.mxu0 0.0
    %2792 = vmatpush2.msra.mxu0 0.0
    %2793 = vmatprep.subr.mxu0 0.0
    %2794 = vmatpush2.msra.mxu0 0.0
    %2795 = vmatprep.subr.mxu0 0.0
    %2796 = vmatpush2.msra.mxu0 0.0
    %2797 = vmatprep.subr.mxu0 0.0
    %2798 = vmatpush2.msra.mxu0 0.0
    %2799 = vmatprep.subr.mxu0 0.0
    %2800 = vmatpush2.msra.mxu0 0.0
    %2801 = vmatprep.subr.mxu0 0.0
    %2802 = vmatpush2.msra.mxu0 0.0
    %2803 = vmatprep.subr.mxu0 0.0
    %2804 = vmatpush2.msra.mxu0 0.0
    %2805 = vmatprep.subr.mxu0 0.0
    %2806 = vmatpush2.msra.mxu0 0.0
    %2807 = vmatprep.subr.mxu0 0.0
    %2808 = vmatpush2.msra.mxu0 0.0
    %2809 = vmatprep.subr.mxu0 0.0
    %2810 = vmatpush2.msra.mxu0 0.0
    %2811 = vmatprep.subr.mxu0 0.0
    %2812 = vmatpush2.msra.mxu0 0.0
    %2813 = vmatprep.subr.mxu0 0.0
    %2814 = vmatpush2.msra.mxu0 0.0
    %2815 = vmatprep.subr.mxu0 0.0
    %2816 = vmatpush2.msra.mxu0 0.0
    %2817 = vmatprep.subr.mxu0 0.0
    %2818 = vmatpush2.msra.mxu0 0.0
    %2819 = vmatprep.mubr.f32.mxu0 0.0
    %2820 = vmatmul.mubr.f32.gmra.mxu0 %v2751
    %v2821 = vpop.f32.mrf.mxu0
    %v2822 = vadd.f32 %v1684, %v2821
    %v2823 = vpop.f32.mrf.mxu0
    %v2824 = vadd.f32 %v1685, %v2823
    %2825 = vdwg.mxu0
    %2826 = vmatprep.subr.mxu0 0.0
    %2827 = vmatpush1.msra.mxu0 %v1678
    %2828 = vmatprep.subr.mxu0 0.0
    %2829 = vmatpush1.msra.mxu0 %v1675
    %2830 = vmatprep.subr.mxu0 0.0
    %2831 = vmatpush1.msra.mxu0 %v1672
    %2832 = vmatprep.subr.mxu0 0.0
    %2833 = vmatpush1.msra.mxu0 %v1669
    %2834 = vmatprep.subr.mxu0 0.0
    %2835 = vmatpush1.msra.mxu0 %v1666
    %2836 = vmatprep.subr.mxu0 0.0
    %2837 = vmatpush1.msra.mxu0 %v1663
    %2838 = vmatprep.subr.mxu0 0.0
    %2839 = vmatpush1.msra.mxu0 %v1660
    %2840 = vmatprep.subr.mxu0 0.0
    %2841 = vmatpush1.msra.mxu0 %v1657
    %2842 = vmatprep.subr.mxu0 0.0
    %2843 = vmatpush1.msra.mxu0 %v1654
    %2844 = vmatprep.subr.mxu0 0.0
    %2845 = vmatpush1.msra.mxu0 %v1651
    %2846 = vmatprep.subr.mxu0 0.0
    %2847 = vmatpush1.msra.mxu0 %v1648
    %2848 = vmatprep.subr.mxu0 0.0
    %2849 = vmatpush1.msra.mxu0 %v1645
    %2850 = vmatprep.subr.mxu0 0.0
    %2851 = vmatpush1.msra.mxu0 %v1642
    %2852 = vmatprep.subr.mxu0 0.0
    %2853 = vmatpush1.msra.mxu0 %v1639
    %2854 = vmatprep.subr.mxu0 0.0
    %2855 = vmatpush1.msra.mxu0 %v1636
    %2856 = vmatprep.subr.mxu0 0.0
    %2857 = vmatpush1.msra.mxu0 %v1633
    %2858 = vmatprep.subr.mxu0 0.0
    %2859 = vmatpush2.msra.mxu0 0.0
    %2860 = vmatprep.subr.mxu0 0.0
    %2861 = vmatpush2.msra.mxu0 0.0
    %2862 = vmatprep.subr.mxu0 0.0
    %2863 = vmatpush2.msra.mxu0 0.0
    %2864 = vmatprep.subr.mxu0 0.0
    %2865 = vmatpush2.msra.mxu0 0.0
    %2866 = vmatprep.subr.mxu0 0.0
    %2867 = vmatpush2.msra.mxu0 0.0
    %2868 = vmatprep.subr.mxu0 0.0
    %2869 = vmatpush2.msra.mxu0 0.0
    %2870 = vmatprep.subr.mxu0 0.0
    %2871 = vmatpush2.msra.mxu0 0.0
    %2872 = vmatprep.subr.mxu0 0.0
    %2873 = vmatpush2.msra.mxu0 0.0
    %2874 = vmatprep.subr.mxu0 0.0
    %2875 = vmatpush2.msra.mxu0 0.0
    %2876 = vmatprep.subr.mxu0 0.0
    %2877 = vmatpush2.msra.mxu0 0.0
    %2878 = vmatprep.subr.mxu0 0.0
    %2879 = vmatpush2.msra.mxu0 0.0
    %2880 = vmatprep.subr.mxu0 0.0
    %2881 = vmatpush2.msra.mxu0 0.0
    %2882 = vmatprep.subr.mxu0 0.0
    %2883 = vmatpush2.msra.mxu0 0.0
    %2884 = vmatprep.subr.mxu0 0.0
    %2885 = vmatpush2.msra.mxu0 0.0
    %2886 = vmatprep.subr.mxu0 0.0
    %2887 = vmatpush2.msra.mxu0 0.0
    %2888 = vmatprep.subr.mxu0 0.0
    %2889 = vmatpush2.msra.mxu0 0.0
    %2890 = vmatprep.mubr.f32.mxu0 0.0
    %2891 = vmatmul.mubr.f32.gmra.mxu0 %v2751
    %v2892 = vpop.f32.mrf.mxu0
    %v2893 = vadd.f32 %v1686, %v2892
    %v2894 = vpop.f32.mrf.mxu0
    %2895 = vdwg.mxu0
    %v2896 = vadd.f32 %v2752, %v2822
    %v2897 = vxor.u32 %v2896, 2147483648
    %v2898 = vmul.f32 %v2897, 1.442695
    %v2899 = vpow.pop %v2898
    %v2900 = vadd.f32 %v2899, 1.0
    %v2901 = vrcp.pop %v2900
    %v2902 = vmul.f32 1.0, %v2901
    %v2903 = vadd.f32 %v2753, %v2824
    %v2904 = vxor.u32 %v2903, 2147483648
    %v2905 = vmul.f32 %v2904, 1.442695
    %v2906 = vpow.pop %v2905
    %v2907 = vadd.f32 %v2906, 1.0
    %v2908 = vrcp.pop %v2907
    %v2909 = vmul.f32 1.0, %v2908
    %v2910 = vmul.f32 %v2902, %v2893
    %v2911 = vadd.f32 %v2754, %v2910
    %v2912 = vtanh.pop %v2911
    %v2913 = vsub.f32 1.0, %v2909
    %v2914 = vmul.f32 %v2913, %v2912
    %v2915 = vmul.f32 %v2909, %v2751
    %v2916 = vadd.f32 %v2914, %v2915
    %v2917 = vadd.f32 %v1796, %v1680
    %v2918 = vadd.f32 %v1798, %v1681
    %v2919 = vadd.f32 %v1902, %v1682
    %2920 = vmatprep.subr.mxu0 %v1677
    %2921 = vmatpush1.msra.mxu0 %v1676
    %2922 = vmatprep.subr.mxu0 %v1674
    %2923 = vmatpush1.msra.mxu0 %v1673
    %2924 = vmatprep.subr.mxu0 %v1671
    %2925 = vmatpush1.msra.mxu0 %v1670
    %2926 = vmatprep.subr.mxu0 %v1668
    %2927 = vmatpush1.msra.mxu0 %v1667
    %2928 = vmatprep.subr.mxu0 %v1665
    %2929 = vmatpush1.msra.mxu0 %v1664
    %2930 = vmatprep.subr.mxu0 %v1662
    %2931 = vmatpush1.msra.mxu0 %v1661
    %2932 = vmatprep.subr.mxu0 %v1659
    %2933 = vmatpush1.msra.mxu0 %v1658
    %2934 = vmatprep.subr.mxu0 %v1656
    %2935 = vmatpush1.msra.mxu0 %v1655
    %2936 = vmatprep.subr.mxu0 %v1653
    %2937 = vmatpush1.msra.mxu0 %v1652
    %2938 = vmatprep.subr.mxu0 %v1650
    %2939 = vmatpush1.msra.mxu0 %v1649
    %2940 = vmatprep.subr.mxu0 %v1647
    %2941 = vmatpush1.msra.mxu0 %v1646
    %2942 = vmatprep.subr.mxu0 %v1644
    %2943 = vmatpush1.msra.mxu0 %v1643
    %2944 = vmatprep.subr.mxu0 %v1641
    %2945 = vmatpush1.msra.mxu0 %v1640
    %2946 = vmatprep.subr.mxu0 %v1638
    %2947 = vmatpush1.msra.mxu0 %v1637
    %2948 = vmatprep.subr.mxu0 %v1635
    %2949 = vmatpush1.msra.mxu0 %v1634
    %2950 = vmatprep.subr.mxu0 %v1632
    %2951 = vmatpush1.msra.mxu0 %v1631
    %2952 = vmatprep.subr.mxu0 0.0
    %2953 = vmatpush2.msra.mxu0 0.0
    %2954 = vmatprep.subr.mxu0 0.0
    %2955 = vmatpush2.msra.mxu0 0.0
    %2956 = vmatprep.subr.mxu0 0.0
    %2957 = vmatpush2.msra.mxu0 0.0
    %2958 = vmatprep.subr.mxu0 0.0
    %2959 = vmatpush2.msra.mxu0 0.0
    %2960 = vmatprep.subr.mxu0 0.0
    %2961 = vmatpush2.msra.mxu0 0.0
    %2962 = vmatprep.subr.mxu0 0.0
    %2963 = vmatpush2.msra.mxu0 0.0
    %2964 = vmatprep.subr.mxu0 0.0
    %2965 = vmatpush2.msra.mxu0 0.0
    %2966 = vmatprep.subr.mxu0 0.0
    %2967 = vmatpush2.msra.mxu0 0.0
    %2968 = vmatprep.subr.mxu0 0.0
    %2969 = vmatpush2.msra.mxu0 0.0
    %2970 = vmatprep.subr.mxu0 0.0
    %2971 = vmatpush2.msra.mxu0 0.0
    %2972 = vmatprep.subr.mxu0 0.0
    %2973 = vmatpush2.msra.mxu0 0.0
    %2974 = vmatprep.subr.mxu0 0.0
    %2975 = vmatpush2.msra.mxu0 0.0
    %2976 = vmatprep.subr.mxu0 0.0
    %2977 = vmatpush2.msra.mxu0 0.0
    %2978 = vmatprep.subr.mxu0 0.0
    %2979 = vmatpush2.msra.mxu0 0.0
    %2980 = vmatprep.subr.mxu0 0.0
    %2981 = vmatpush2.msra.mxu0 0.0
    %2982 = vmatprep.subr.mxu0 0.0
    %2983 = vmatpush2.msra.mxu0 0.0
    %2984 = vmatprep.mubr.f32.mxu0 0.0
    %2985 = vmatmul.mubr.f32.gmra.mxu0 %v2916
    %v2986 = vpop.f32.mrf.mxu0
    %v2987 = vadd.f32 %v1684, %v2986
    %v2988 = vpop.f32.mrf.mxu0
    %v2989 = vadd.f32 %v1685, %v2988
    %2990 = vdwg.mxu0
    %2991 = vmatprep.subr.mxu0 0.0
    %2992 = vmatpush1.msra.mxu0 %v1678
    %2993 = vmatprep.subr.mxu0 0.0
    %2994 = vmatpush1.msra.mxu0 %v1675
    %2995 = vmatprep.subr.mxu0 0.0
    %2996 = vmatpush1.msra.mxu0 %v1672
    %2997 = vmatprep.subr.mxu0 0.0
    %2998 = vmatpush1.msra.mxu0 %v1669
    %2999 = vmatprep.subr.mxu0 0.0
    %3000 = vmatpush1.msra.mxu0 %v1666
    %3001 = vmatprep.subr.mxu0 0.0
    %3002 = vmatpush1.msra.mxu0 %v1663
    %3003 = vmatprep.subr.mxu0 0.0
    %3004 = vmatpush1.msra.mxu0 %v1660
    %3005 = vmatprep.subr.mxu0 0.0
    %3006 = vmatpush1.msra.mxu0 %v1657
    %3007 = vmatprep.subr.mxu0 0.0
    %3008 = vmatpush1.msra.mxu0 %v1654
    %3009 = vmatprep.subr.mxu0 0.0
    %3010 = vmatpush1.msra.mxu0 %v1651
    %3011 = vmatprep.subr.mxu0 0.0
    %3012 = vmatpush1.msra.mxu0 %v1648
    %3013 = vmatprep.subr.mxu0 0.0
    %3014 = vmatpush1.msra.mxu0 %v1645
    %3015 = vmatprep.subr.mxu0 0.0
    %3016 = vmatpush1.msra.mxu0 %v1642
    %3017 = vmatprep.subr.mxu0 0.0
    %3018 = vmatpush1.msra.mxu0 %v1639
    %3019 = vmatprep.subr.mxu0 0.0
    %3020 = vmatpush1.msra.mxu0 %v1636
    %3021 = vmatprep.subr.mxu0 0.0
    %3022 = vmatpush1.msra.mxu0 %v1633
    %3023 = vmatprep.subr.mxu0 0.0
    %3024 = vmatpush2.msra.mxu0 0.0
    %3025 = vmatprep.subr.mxu0 0.0
    %3026 = vmatpush2.msra.mxu0 0.0
    %3027 = vmatprep.subr.mxu0 0.0
    %3028 = vmatpush2.msra.mxu0 0.0
    %3029 = vmatprep.subr.mxu0 0.0
    %3030 = vmatpush2.msra.mxu0 0.0
    %3031 = vmatprep.subr.mxu0 0.0
    %3032 = vmatpush2.msra.mxu0 0.0
    %3033 = vmatprep.subr.mxu0 0.0
    %3034 = vmatpush2.msra.mxu0 0.0
    %3035 = vmatprep.subr.mxu0 0.0
    %3036 = vmatpush2.msra.mxu0 0.0
    %3037 = vmatprep.subr.mxu0 0.0
    %3038 = vmatpush2.msra.mxu0 0.0
    %3039 = vmatprep.subr.mxu0 0.0
    %3040 = vmatpush2.msra.mxu0 0.0
    %3041 = vmatprep.subr.mxu0 0.0
    %3042 = vmatpush2.msra.mxu0 0.0
    %3043 = vmatprep.subr.mxu0 0.0
    %3044 = vmatpush2.msra.mxu0 0.0
    %3045 = vmatprep.subr.mxu0 0.0
    %3046 = vmatpush2.msra.mxu0 0.0
    %3047 = vmatprep.subr.mxu0 0.0
    %3048 = vmatpush2.msra.mxu0 0.0
    %3049 = vmatprep.subr.mxu0 0.0
    %3050 = vmatpush2.msra.mxu0 0.0
    %3051 = vmatprep.subr.mxu0 0.0
    %3052 = vmatpush2.msra.mxu0 0.0
    %3053 = vmatprep.subr.mxu0 0.0
    %3054 = vmatpush2.msra.mxu0 0.0
    %3055 = vmatprep.mubr.f32.mxu0 0.0
    %3056 = vmatmul.mubr.f32.gmra.mxu0 %v2916
    %v3057 = vpop.f32.mrf.mxu0
    %v3058 = vadd.f32 %v1686, %v3057
    %v3059 = vpop.f32.mrf.mxu0
    %3060 = vdwg.mxu0
    %v3061 = vadd.f32 %v2917, %v2987
    %v3062 = vxor.u32 %v3061, 2147483648
    %v3063 = vmul.f32 %v3062, 1.442695
    %v3064 = vpow.pop %v3063
    %v3065 = vadd.f32 %v3064, 1.0
    %v3066 = vrcp.pop %v3065
    %v3067 = vmul.f32 1.0, %v3066
    %v3068 = vadd.f32 %v2918, %v2989
    %v3069 = vxor.u32 %v3068, 2147483648
    %v3070 = vmul.f32 %v3069, 1.442695
    %v3071 = vpow.pop %v3070
    %v3072 = vadd.f32 %v3071, 1.0
    %v3073 = vrcp.pop %v3072
    %v3074 = vmul.f32 1.0, %v3073
    %v3075 = vmul.f32 %v3067, %v3058
    %v3076 = vadd.f32 %v2919, %v3075
    %v3077 = vtanh.pop %v3076
    %v3078 = vsub.f32 1.0, %v3074
    %v3079 = vmul.f32 %v3078, %v3077
    %v3080 = vmul.f32 %v3074, %v2916
    %v3081 = vadd.f32 %v3079, %v3080
    %v3082 = vld [vmem:[#allocation6] sm:$0xff]
    %v3083 = vld [vmem:[#allocation6 + $0x8] sm:$0xff]
    %v3084 = vld [vmem:[#allocation6 + $0x10] sm:$0xff]
    %v3085 = vld [vmem:[#allocation6 + $0x18] sm:$0xff]
    %v3086 = vld [vmem:[#allocation6 + $0x20] sm:$0xff]
    %v3087 = vld [vmem:[#allocation6 + $0x28] sm:$0xff]
    %v3088 = vld [vmem:[#allocation6 + $0x30] sm:$0xff]
    %v3089 = vld [vmem:[#allocation6 + $0x38] sm:$0xff]
    %v3090 = vld [vmem:[#allocation6 + $0x40] sm:$0xff]
    %v3091 = vld [vmem:[#allocation6 + $0x48] sm:$0xff]
    %v3092 = vld [vmem:[#allocation6 + $0x50] sm:$0xff]
    %v3093 = vld [vmem:[#allocation6 + $0x58] sm:$0xff]
    %v3094 = vld [vmem:[#allocation6 + $0x60] sm:$0xff]
    %v3095 = vld [vmem:[#allocation6 + $0x68] sm:$0xff]
    %v3096 = vld [vmem:[#allocation6 + $0x70] sm:$0xff]
    %v3097 = vld [vmem:[#allocation6 + $0x78] sm:$0xff]
    %v3098 = vld [vmem:[#allocation6 + $0x80] sm:$0xff]
    %v3099 = vld [vmem:[#allocation6 + $0x88] sm:$0xff]
    %v3100 = vld [vmem:[#allocation6 + $0x90] sm:$0xff]
    %v3101 = vld [vmem:[#allocation6 + $0x98] sm:$0xff]
    %v3102 = vld [vmem:[#allocation6 + $0xa0] sm:$0xff]
    %v3103 = vld [vmem:[#allocation6 + $0xa8] sm:$0xff]
    %v3104 = vld [vmem:[#allocation6 + $0xb0] sm:$0xff]
    %v3105 = vld [vmem:[#allocation6 + $0xb8] sm:$0xff]
    %v3106 = vld [vmem:[#allocation6 + $0xc0] sm:$0xff]
    %v3107 = vld [vmem:[#allocation6 + $0xc8] sm:$0xff]
    %v3108 = vld [vmem:[#allocation6 + $0xd0] sm:$0xff]
    %v3109 = vld [vmem:[#allocation6 + $0xd8] sm:$0xff]
    %v3110 = vld [vmem:[#allocation6 + $0xe0] sm:$0xff]
    %v3111 = vld [vmem:[#allocation6 + $0xe8] sm:$0xff]
    %v3112 = vld [vmem:[#allocation6 + $0xf0] sm:$0xff]
    %v3113 = vld [vmem:[#allocation6 + $0xf8] sm:$0xff]
    %v3114 = vld [vmem:[#allocation6 + $0x100] sm:$0xff]
    %v3115 = vld [vmem:[#allocation6 + $0x108] sm:$0xff]
    %v3116 = vld [vmem:[#allocation6 + $0x110] sm:$0xff]
    %v3117 = vld [vmem:[#allocation6 + $0x118] sm:$0xff]
    %v3118 = vld [vmem:[#allocation6 + $0x120] sm:$0xff]
    %v3119 = vld [vmem:[#allocation6 + $0x128] sm:$0xff]
    %v3120 = vld [vmem:[#allocation6 + $0x130] sm:$0xff]
    %v3121 = vld [vmem:[#allocation6 + $0x138] sm:$0xff]
    %v3122 = vld [vmem:[#allocation6 + $0x140] sm:$0xff]
    %v3123 = vld [vmem:[#allocation6 + $0x148] sm:$0xff]
    %v3124 = vld [vmem:[#allocation6 + $0x150] sm:$0xff]
    %v3125 = vld [vmem:[#allocation6 + $0x158] sm:$0xff]
    %v3126 = vld [vmem:[#allocation6 + $0x160] sm:$0xff]
    %v3127 = vld [vmem:[#allocation6 + $0x168] sm:$0xff]
    %v3128 = vld [vmem:[#allocation6 + $0x170] sm:$0xff]
    %v3129 = vld [vmem:[#allocation6 + $0x178] sm:$0xff]
    %v3130 = vld [vmem:[#allocation6 + $0x180] sm:$0xff]
    %v3131 = vld [vmem:[#allocation6 + $0x188] sm:$0xff]
    %v3132 = vld [vmem:[#allocation6 + $0x190] sm:$0xff]
    %v3133 = vld [vmem:[#allocation6 + $0x198] sm:$0xff]
    %v3134 = vld [vmem:[#allocation6 + $0x1a0] sm:$0xff]
    %v3135 = vld [vmem:[#allocation6 + $0x1a8] sm:$0xff]
    %v3136 = vld [vmem:[#allocation6 + $0x1b0] sm:$0xff]
    %v3137 = vld [vmem:[#allocation6 + $0x1b8] sm:$0xff]
    %v3138 = vld [vmem:[#allocation6 + $0x1c0] sm:$0xff]
    %v3139 = vld [vmem:[#allocation6 + $0x1c8] sm:$0xff]
    %v3140 = vld [vmem:[#allocation6 + $0x1d0] sm:$0xff]
    %v3141 = vld [vmem:[#allocation6 + $0x1d8] sm:$0xff]
    %v3142 = vld [vmem:[#allocation6 + $0x1e0] sm:$0xff]
    %v3143 = vld [vmem:[#allocation6 + $0x1e8] sm:$0xff]
    %v3144 = vld [vmem:[#allocation6 + $0x1f0] sm:$0xff]
    %v3145 = vld [vmem:[#allocation6 + $0x1f8] sm:$0xff]
    %v3146 = vld [vmem:[#allocation6 + $0x200] sm:$0xff]
    %v3147 = vld [vmem:[#allocation6 + $0x208] sm:$0xff]
    %v3148 = vld [vmem:[#allocation6 + $0x210] sm:$0xff]
    %v3149 = vld [vmem:[#allocation6 + $0x218] sm:$0xff]
    %v3150 = vld [vmem:[#allocation6 + $0x220] sm:$0xff]
    %v3151 = vld [vmem:[#allocation6 + $0x228] sm:$0xff]
    %v3152 = vld [vmem:[#allocation6 + $0x230] sm:$0xff]
    %v3153 = vld [vmem:[#allocation6 + $0x238] sm:$0xff]
    %v3154 = vld [vmem:[#allocation6 + $0x240] sm:$0xff]
    %v3155 = vld [vmem:[#allocation6 + $0x248] sm:$0xff]
    %v3156 = vld [vmem:[#allocation6 + $0x250] sm:$0xff]
    %v3157 = vld [vmem:[#allocation6 + $0x258] sm:$0xff]
    %v3158 = vld [vmem:[#allocation6 + $0x260] sm:$0xff]
    %v3159 = vld [vmem:[#allocation6 + $0x268] sm:$0xff]
    %v3160 = vld [vmem:[#allocation6 + $0x270] sm:$0xff]
    %v3161 = vld [vmem:[#allocation6 + $0x278] sm:$0xff]
    %v3162 = vld [vmem:[#allocation6 + $0x280] sm:$0xff]
    %v3163 = vld [vmem:[#allocation6 + $0x288] sm:$0xff]
    %v3164 = vld [vmem:[#allocation6 + $0x290] sm:$0xff]
    %v3165 = vld [vmem:[#allocation6 + $0x298] sm:$0xff]
    %v3166 = vld [vmem:[#allocation6 + $0x2a0] sm:$0xff]
    %v3167 = vld [vmem:[#allocation6 + $0x2a8] sm:$0xff]
    %v3168 = vld [vmem:[#allocation6 + $0x2b0] sm:$0xff]
    %v3169 = vld [vmem:[#allocation6 + $0x2b8] sm:$0xff]
    %v3170 = vld [vmem:[#allocation6 + $0x2c0] sm:$0xff]
    %v3171 = vld [vmem:[#allocation6 + $0x2c8] sm:$0xff]
    %v3172 = vld [vmem:[#allocation6 + $0x2d0] sm:$0xff]
    %v3173 = vld [vmem:[#allocation6 + $0x2d8] sm:$0xff]
    %v3174 = vld [vmem:[#allocation6 + $0x2e0] sm:$0xff]
    %v3175 = vld [vmem:[#allocation6 + $0x2e8] sm:$0xff]
    %v3176 = vld [vmem:[#allocation6 + $0x2f0] sm:$0xff]
    %v3177 = vld [vmem:[#allocation6 + $0x2f8] sm:$0xff]
    %v3178 = vld [vmem:[#allocation6 + $0x300] sm:$0xff]
    %v3179 = vld [vmem:[#allocation6 + $0x308] sm:$0xff]
    %v3180 = vld [vmem:[#allocation6 + $0x310] sm:$0xff]
    %v3181 = vld [vmem:[#allocation6 + $0x318] sm:$0xff]
    %v3182 = vld [vmem:[#allocation6 + $0x320] sm:$0xff]
    %v3183 = vld [vmem:[#allocation6 + $0x328] sm:$0xff]
    %v3184 = vld [vmem:[#allocation6 + $0x330] sm:$0xff]
    %v3185 = vld [vmem:[#allocation6 + $0x338] sm:$0xff]
    %v3186 = vld [vmem:[#allocation6 + $0x340] sm:$0xff]
    %v3187 = vld [vmem:[#allocation6 + $0x348] sm:$0xff]
    %v3188 = vld [vmem:[#allocation6 + $0x350] sm:$0xff]
    %v3189 = vld [vmem:[#allocation6 + $0x358] sm:$0xff]
    %v3190 = vld [vmem:[#allocation6 + $0x360] sm:$0xff]
    %v3191 = vld [vmem:[#allocation6 + $0x368] sm:$0xff]
    %v3192 = vld [vmem:[#allocation6 + $0x370] sm:$0xff]
    %v3193 = vld [vmem:[#allocation6 + $0x378] sm:$0xff]
    %v3194 = vld [vmem:[#allocation6 + $0x380] sm:$0xff]
    %v3195 = vld [vmem:[#allocation6 + $0x388] sm:$0xff]
    %v3196 = vld [vmem:[#allocation6 + $0x390] sm:$0xff]
    %v3197 = vld [vmem:[#allocation6 + $0x398] sm:$0xff]
    %v3198 = vld [vmem:[#allocation6 + $0x3a0] sm:$0xff]
    %v3199 = vld [vmem:[#allocation6 + $0x3a8] sm:$0xff]
    %v3200 = vld [vmem:[#allocation6 + $0x3b0] sm:$0xff]
    %v3201 = vld [vmem:[#allocation6 + $0x3b8] sm:$0xff]
    %v3202 = vld [vmem:[#allocation6 + $0x3c0] sm:$0xff]
    %v3203 = vld [vmem:[#allocation6 + $0x3c8] sm:$0xff]
    %v3204 = vld [vmem:[#allocation6 + $0x3d0] sm:$0xff]
    %v3205 = vld [vmem:[#allocation6 + $0x3d8] sm:$0xff]
    %v3206 = vld [vmem:[#allocation6 + $0x3e0] sm:$0xff]
    %v3207 = vld [vmem:[#allocation6 + $0x3e8] sm:$0xff]
    %v3208 = vld [vmem:[#allocation6 + $0x3f0] sm:$0xff]
    %v3209 = vld [vmem:[#allocation6 + $0x3f8] sm:$0xff]
    %s3210 = scalar_lea.vmem [#allocation6], 1024
    %v3211 = vld [vmem:[%s3210] sm:$0xff]
    %v3212 = vld [vmem:[%s3210 + $0x8] sm:$0xff]
    %v3213 = vld [vmem:[%s3210 + $0x10] sm:$0xff]
    %v3214 = vld [vmem:[%s3210 + $0x18] sm:$0xff]
    %v3215 = vld [vmem:[%s3210 + $0x20] sm:$0xff]
    %v3216 = vld [vmem:[%s3210 + $0x28] sm:$0xff]
    %v3217 = vld [vmem:[%s3210 + $0x30] sm:$0xff]
    %v3218 = vld [vmem:[%s3210 + $0x38] sm:$0xff]
    %v3219 = vld [vmem:[%s3210 + $0x40] sm:$0xff]
    %v3220 = vld [vmem:[%s3210 + $0x48] sm:$0xff]
    %v3221 = vld [vmem:[%s3210 + $0x50] sm:$0xff]
    %v3222 = vld [vmem:[%s3210 + $0x58] sm:$0xff]
    %v3223 = vld [vmem:[%s3210 + $0x60] sm:$0xff]
    %v3224 = vld [vmem:[%s3210 + $0x68] sm:$0xff]
    %v3225 = vld [vmem:[%s3210 + $0x70] sm:$0xff]
    %v3226 = vld [vmem:[%s3210 + $0x78] sm:$0xff]
    %v3227 = vld [vmem:[%s3210 + $0x80] sm:$0xff]
    %v3228 = vld [vmem:[%s3210 + $0x88] sm:$0xff]
    %v3229 = vld [vmem:[%s3210 + $0x90] sm:$0xff]
    %v3230 = vld [vmem:[%s3210 + $0x98] sm:$0xff]
    %v3231 = vld [vmem:[%s3210 + $0xa0] sm:$0xff]
    %v3232 = vld [vmem:[%s3210 + $0xa8] sm:$0xff]
    %v3233 = vld [vmem:[%s3210 + $0xb0] sm:$0xff]
    %v3234 = vld [vmem:[%s3210 + $0xb8] sm:$0xff]
    %v3235 = vld [vmem:[%s3210 + $0xc0] sm:$0xff]
    %v3236 = vld [vmem:[%s3210 + $0xc8] sm:$0xff]
    %v3237 = vld [vmem:[%s3210 + $0xd0] sm:$0xff]
    %v3238 = vld [vmem:[%s3210 + $0xd8] sm:$0xff]
    %v3239 = vld [vmem:[%s3210 + $0xe0] sm:$0xff]
    %v3240 = vld [vmem:[%s3210 + $0xe8] sm:$0xff]
    %v3241 = vld [vmem:[%s3210 + $0xf0] sm:$0xff]
    %v3242 = vld [vmem:[%s3210 + $0xf8] sm:$0xff]
    %v3243 = vld [vmem:[%s3210 + $0x100] sm:$0xff]
    %v3244 = vld [vmem:[%s3210 + $0x108] sm:$0xff]
    %v3245 = vld [vmem:[%s3210 + $0x110] sm:$0xff]
    %v3246 = vld [vmem:[%s3210 + $0x118] sm:$0xff]
    %v3247 = vld [vmem:[%s3210 + $0x120] sm:$0xff]
    %v3248 = vld [vmem:[%s3210 + $0x128] sm:$0xff]
    %v3249 = vld [vmem:[%s3210 + $0x130] sm:$0xff]
    %v3250 = vld [vmem:[%s3210 + $0x138] sm:$0xff]
    %v3251 = vld [vmem:[%s3210 + $0x140] sm:$0xff]
    %v3252 = vld [vmem:[%s3210 + $0x148] sm:$0xff]
    %v3253 = vld [vmem:[%s3210 + $0x150] sm:$0xff]
    %v3254 = vld [vmem:[%s3210 + $0x158] sm:$0xff]
    %v3255 = vld [vmem:[%s3210 + $0x160] sm:$0xff]
    %v3256 = vld [vmem:[%s3210 + $0x168] sm:$0xff]
    %v3257 = vld [vmem:[%s3210 + $0x170] sm:$0xff]
    %v3258 = vld [vmem:[%s3210 + $0x178] sm:$0xff]
    %v3259 = vld [vmem:[%s3210 + $0x180] sm:$0xff]
    %v3260 = vld [vmem:[%s3210 + $0x188] sm:$0xff]
    %v3261 = vld [vmem:[%s3210 + $0x190] sm:$0xff]
    %v3262 = vld [vmem:[%s3210 + $0x198] sm:$0xff]
    %v3263 = vld [vmem:[%s3210 + $0x1a0] sm:$0xff]
    %v3264 = vld [vmem:[%s3210 + $0x1a8] sm:$0xff]
    %v3265 = vld [vmem:[%s3210 + $0x1b0] sm:$0xff]
    %v3266 = vld [vmem:[%s3210 + $0x1b8] sm:$0xff]
    %v3267 = vld [vmem:[%s3210 + $0x1c0] sm:$0xff]
    %v3268 = vld [vmem:[%s3210 + $0x1c8] sm:$0xff]
    %v3269 = vld [vmem:[%s3210 + $0x1d0] sm:$0xff]
    %v3270 = vld [vmem:[%s3210 + $0x1d8] sm:$0xff]
    %v3271 = vld [vmem:[%s3210 + $0x1e0] sm:$0xff]
    %v3272 = vld [vmem:[%s3210 + $0x1e8] sm:$0xff]
    %v3273 = vld [vmem:[%s3210 + $0x1f0] sm:$0xff]
    %v3274 = vld [vmem:[%s3210 + $0x1f8] sm:$0xff]
    %v3275 = vld [vmem:[%s3210 + $0x200] sm:$0xff]
    %v3276 = vld [vmem:[%s3210 + $0x208] sm:$0xff]
    %v3277 = vld [vmem:[%s3210 + $0x210] sm:$0xff]
    %v3278 = vld [vmem:[%s3210 + $0x218] sm:$0xff]
    %v3279 = vld [vmem:[%s3210 + $0x220] sm:$0xff]
    %v3280 = vld [vmem:[%s3210 + $0x228] sm:$0xff]
    %v3281 = vld [vmem:[%s3210 + $0x230] sm:$0xff]
    %v3282 = vld [vmem:[%s3210 + $0x238] sm:$0xff]
    %v3283 = vld [vmem:[%s3210 + $0x240] sm:$0xff]
    %v3284 = vld [vmem:[%s3210 + $0x248] sm:$0xff]
    %v3285 = vld [vmem:[%s3210 + $0x250] sm:$0xff]
    %v3286 = vld [vmem:[%s3210 + $0x258] sm:$0xff]
    %v3287 = vld [vmem:[%s3210 + $0x260] sm:$0xff]
    %v3288 = vld [vmem:[%s3210 + $0x268] sm:$0xff]
    %v3289 = vld [vmem:[%s3210 + $0x270] sm:$0xff]
    %v3290 = vld [vmem:[%s3210 + $0x278] sm:$0xff]
    %v3291 = vld [vmem:[%s3210 + $0x280] sm:$0xff]
    %v3292 = vld [vmem:[%s3210 + $0x288] sm:$0xff]
    %v3293 = vld [vmem:[%s3210 + $0x290] sm:$0xff]
    %v3294 = vld [vmem:[%s3210 + $0x298] sm:$0xff]
    %v3295 = vld [vmem:[%s3210 + $0x2a0] sm:$0xff]
    %v3296 = vld [vmem:[%s3210 + $0x2a8] sm:$0xff]
    %v3297 = vld [vmem:[%s3210 + $0x2b0] sm:$0xff]
    %v3298 = vld [vmem:[%s3210 + $0x2b8] sm:$0xff]
    %v3299 = vld [vmem:[%s3210 + $0x2c0] sm:$0xff]
    %v3300 = vld [vmem:[%s3210 + $0x2c8] sm:$0xff]
    %v3301 = vld [vmem:[%s3210 + $0x2d0] sm:$0xff]
    %v3302 = vld [vmem:[%s3210 + $0x2d8] sm:$0xff]
    %v3303 = vld [vmem:[%s3210 + $0x2e0] sm:$0xff]
    %v3304 = vld [vmem:[%s3210 + $0x2e8] sm:$0xff]
    %v3305 = vld [vmem:[%s3210 + $0x2f0] sm:$0xff]
    %v3306 = vld [vmem:[%s3210 + $0x2f8] sm:$0xff]
    %v3307 = vld [vmem:[%s3210 + $0x300] sm:$0xff]
    %v3308 = vld [vmem:[%s3210 + $0x308] sm:$0xff]
    %v3309 = vld [vmem:[%s3210 + $0x310] sm:$0xff]
    %v3310 = vld [vmem:[%s3210 + $0x318] sm:$0xff]
    %v3311 = vld [vmem:[%s3210 + $0x320] sm:$0xff]
    %v3312 = vld [vmem:[%s3210 + $0x328] sm:$0xff]
    %v3313 = vld [vmem:[%s3210 + $0x330] sm:$0xff]
    %v3314 = vld [vmem:[%s3210 + $0x338] sm:$0xff]
    %v3315 = vld [vmem:[%s3210 + $0x340] sm:$0xff]
    %v3316 = vld [vmem:[%s3210 + $0x348] sm:$0xff]
    %v3317 = vld [vmem:[%s3210 + $0x350] sm:$0xff]
    %v3318 = vld [vmem:[%s3210 + $0x358] sm:$0xff]
    %v3319 = vld [vmem:[%s3210 + $0x360] sm:$0xff]
    %v3320 = vld [vmem:[%s3210 + $0x368] sm:$0xff]
    %v3321 = vld [vmem:[%s3210 + $0x370] sm:$0xff]
    %v3322 = vld [vmem:[%s3210 + $0x378] sm:$0xff]
    %v3323 = vld [vmem:[%s3210 + $0x380] sm:$0xff]
    %v3324 = vld [vmem:[%s3210 + $0x388] sm:$0xff]
    %v3325 = vld [vmem:[%s3210 + $0x390] sm:$0xff]
    %v3326 = vld [vmem:[%s3210 + $0x398] sm:$0xff]
    %v3327 = vld [vmem:[%s3210 + $0x3a0] sm:$0xff]
    %v3328 = vld [vmem:[%s3210 + $0x3a8] sm:$0xff]
    %v3329 = vld [vmem:[%s3210 + $0x3b0] sm:$0xff]
    %v3330 = vld [vmem:[%s3210 + $0x3b8] sm:$0xff]
    %v3331 = vld [vmem:[%s3210 + $0x3c0] sm:$0xff]
    %v3332 = vld [vmem:[%s3210 + $0x3c8] sm:$0xff]
    %v3333 = vld [vmem:[%s3210 + $0x3d0] sm:$0xff]
    %v3334 = vld [vmem:[%s3210 + $0x3d8] sm:$0xff]
    %v3335 = vld [vmem:[%s3210 + $0x3e0] sm:$0xff]
    %v3336 = vld [vmem:[%s3210 + $0x3e8] sm:$0xff]
    %v3337 = vld [vmem:[%s3210 + $0x3f0] sm:$0xff]
    %v3338 = vld [vmem:[%s3210 + $0x3f8] sm:$0xff]
    %v3339 = vld [vmem:[%s7] sm:$0xff]
    %v3340 = vld [vmem:[%s7 + $0x8] sm:$0xff]
    %v3341 = vld [vmem:[%s7 + $0x10] sm:$0xff]
    %v3342 = vld [vmem:[%s7 + $0x18] sm:$0xff]
    %s3343 = scalar_lea.vmem %s7, 32
    %v3344 = vld [vmem:[%s3343] sm:$0xff]
    %v3345 = vld [vmem:[%s3343 + $0x8] sm:$0xff]
    %v3346 = vld [vmem:[%s3343 + $0x10] sm:$0xff]
    %v3347 = vld [vmem:[%s3343 + $0x18] sm:$0xff]
    %v3348 = vld [vmem:[%s8] sm:$0xff]
    %v3349 = vld [vmem:[%s8 + $0x8] sm:$0xff]
    %v3350 = vld [vmem:[%s8 + $0x10] sm:$0xff]
    %v3351 = vld [vmem:[%s8 + $0x18] sm:$0xff]
    %v3352 = vld [vmem:[%s8 + $0x20] sm:$0xff]
    %v3353 = vld [vmem:[%s8 + $0x28] sm:$0xff]
    %v3354 = vld [vmem:[%s8 + $0x30] sm:$0xff]
    %v3355 = vld [vmem:[%s8 + $0x38] sm:$0xff]
    %v3356 = vld [vmem:[%s8 + $0x40] sm:$0xff]
    %v3357 = vld [vmem:[%s8 + $0x48] sm:$0xff]
    %v3358 = vld [vmem:[%s8 + $0x50] sm:$0xff]
    %v3359 = vld [vmem:[%s8 + $0x58] sm:$0xff]
    %v3360 = vld [vmem:[%s8 + $0x60] sm:$0xff]
    %v3361 = vld [vmem:[%s8 + $0x68] sm:$0xff]
    %v3362 = vld [vmem:[%s8 + $0x70] sm:$0xff]
    %v3363 = vld [vmem:[%s8 + $0x78] sm:$0xff]
    %v3364 = vld [vmem:[%s9] sm:$0xff]
    %v3365 = vld [vmem:[%s1] sm:$0xff]
    %3366 = vmatprep.subr.mxu0 %v3143
    %3367 = vmatpush1.msra.mxu0 %v3142
    %3368 = vmatprep.subr.mxu0 %v3139
    %3369 = vmatpush1.msra.mxu0 %v3138
    %3370 = vmatprep.subr.mxu0 %v3135
    %3371 = vmatpush1.msra.mxu0 %v3134
    %3372 = vmatprep.subr.mxu0 %v3131
    %3373 = vmatpush1.msra.mxu0 %v3130
    %3374 = vmatprep.subr.mxu0 %v3127
    %3375 = vmatpush1.msra.mxu0 %v3126
    %3376 = vmatprep.subr.mxu0 %v3123
    %3377 = vmatpush1.msra.mxu0 %v3122
    %3378 = vmatprep.subr.mxu0 %v3119
    %3379 = vmatpush1.msra.mxu0 %v3118
    %3380 = vmatprep.subr.mxu0 %v3115
    %3381 = vmatpush1.msra.mxu0 %v3114
    %3382 = vmatprep.subr.mxu0 %v3111
    %3383 = vmatpush1.msra.mxu0 %v3110
    %3384 = vmatprep.subr.mxu0 %v3107
    %3385 = vmatpush1.msra.mxu0 %v3106
    %3386 = vmatprep.subr.mxu0 %v3103
    %3387 = vmatpush1.msra.mxu0 %v3102
    %3388 = vmatprep.subr.mxu0 %v3099
    %3389 = vmatpush1.msra.mxu0 %v3098
    %3390 = vmatprep.subr.mxu0 %v3095
    %3391 = vmatpush1.msra.mxu0 %v3094
    %3392 = vmatprep.subr.mxu0 %v3091
    %3393 = vmatpush1.msra.mxu0 %v3090
    %3394 = vmatprep.subr.mxu0 %v3087
    %3395 = vmatpush1.msra.mxu0 %v3086
    %3396 = vmatprep.subr.mxu0 %v3083
    %3397 = vmatpush1.msra.mxu0 %v3082
    %3398 = vmatprep.subr.mxu0 %v3207
    %3399 = vmatpush2.msra.mxu0 %v3206
    %3400 = vmatprep.subr.mxu0 %v3203
    %3401 = vmatpush2.msra.mxu0 %v3202
    %3402 = vmatprep.subr.mxu0 %v3199
    %3403 = vmatpush2.msra.mxu0 %v3198
    %3404 = vmatprep.subr.mxu0 %v3195
    %3405 = vmatpush2.msra.mxu0 %v3194
    %3406 = vmatprep.subr.mxu0 %v3191
    %3407 = vmatpush2.msra.mxu0 %v3190
    %3408 = vmatprep.subr.mxu0 %v3187
    %3409 = vmatpush2.msra.mxu0 %v3186
    %3410 = vmatprep.subr.mxu0 %v3183
    %3411 = vmatpush2.msra.mxu0 %v3182
    %3412 = vmatprep.subr.mxu0 %v3179
    %3413 = vmatpush2.msra.mxu0 %v3178
    %3414 = vmatprep.subr.mxu0 %v3175
    %3415 = vmatpush2.msra.mxu0 %v3174
    %3416 = vmatprep.subr.mxu0 %v3171
    %3417 = vmatpush2.msra.mxu0 %v3170
    %3418 = vmatprep.subr.mxu0 %v3167
    %3419 = vmatpush2.msra.mxu0 %v3166
    %3420 = vmatprep.subr.mxu0 %v3163
    %3421 = vmatpush2.msra.mxu0 %v3162
    %3422 = vmatprep.subr.mxu0 %v3159
    %3423 = vmatpush2.msra.mxu0 %v3158
    %3424 = vmatprep.subr.mxu0 %v3155
    %3425 = vmatpush2.msra.mxu0 %v3154
    %3426 = vmatprep.subr.mxu0 %v3151
    %3427 = vmatpush2.msra.mxu0 %v3150
    %3428 = vmatprep.subr.mxu0 %v3147
    %3429 = vmatpush2.msra.mxu0 %v3146
    %3430 = vmatprep.mubr.f32.mxu0 %v1580
    %3431 = vmatmul.mubr.f32.gmra.mxu0 %v3365
    %v3432 = vpop.f32.mrf.mxu0
    %v3433 = vadd.f32 %v3339, %v3432
    %v3434 = vpop.f32.mrf.mxu0
    %v3435 = vadd.f32 %v3340, %v3434
    %3436 = vdwg.mxu0
    %3437 = vmatprep.subr.mxu0 %v3145
    %3438 = vmatpush1.msra.mxu0 %v3144
    %3439 = vmatprep.subr.mxu0 %v3141
    %3440 = vmatpush1.msra.mxu0 %v3140
    %3441 = vmatprep.subr.mxu0 %v3137
    %3442 = vmatpush1.msra.mxu0 %v3136
    %3443 = vmatprep.subr.mxu0 %v3133
    %3444 = vmatpush1.msra.mxu0 %v3132
    %3445 = vmatprep.subr.mxu0 %v3129
    %3446 = vmatpush1.msra.mxu0 %v3128
    %3447 = vmatprep.subr.mxu0 %v3125
    %3448 = vmatpush1.msra.mxu0 %v3124
    %3449 = vmatprep.subr.mxu0 %v3121
    %3450 = vmatpush1.msra.mxu0 %v3120
    %3451 = vmatprep.subr.mxu0 %v3117
    %3452 = vmatpush1.msra.mxu0 %v3116
    %3453 = vmatprep.subr.mxu0 %v3113
    %3454 = vmatpush1.msra.mxu0 %v3112
    %3455 = vmatprep.subr.mxu0 %v3109
    %3456 = vmatpush1.msra.mxu0 %v3108
    %3457 = vmatprep.subr.mxu0 %v3105
    %3458 = vmatpush1.msra.mxu0 %v3104
    %3459 = vmatprep.subr.mxu0 %v3101
    %3460 = vmatpush1.msra.mxu0 %v3100
    %3461 = vmatprep.subr.mxu0 %v3097
    %3462 = vmatpush1.msra.mxu0 %v3096
    %3463 = vmatprep.subr.mxu0 %v3093
    %3464 = vmatpush1.msra.mxu0 %v3092
    %3465 = vmatprep.subr.mxu0 %v3089
    %3466 = vmatpush1.msra.mxu0 %v3088
    %3467 = vmatprep.subr.mxu0 %v3085
    %3468 = vmatpush1.msra.mxu0 %v3084
    %3469 = vmatprep.subr.mxu0 %v3209
    %3470 = vmatpush2.msra.mxu0 %v3208
    %3471 = vmatprep.subr.mxu0 %v3205
    %3472 = vmatpush2.msra.mxu0 %v3204
    %3473 = vmatprep.subr.mxu0 %v3201
    %3474 = vmatpush2.msra.mxu0 %v3200
    %3475 = vmatprep.subr.mxu0 %v3197
    %3476 = vmatpush2.msra.mxu0 %v3196
    %3477 = vmatprep.subr.mxu0 %v3193
    %3478 = vmatpush2.msra.mxu0 %v3192
    %3479 = vmatprep.subr.mxu0 %v3189
    %3480 = vmatpush2.msra.mxu0 %v3188
    %3481 = vmatprep.subr.mxu0 %v3185
    %3482 = vmatpush2.msra.mxu0 %v3184
    %3483 = vmatprep.subr.mxu0 %v3181
    %3484 = vmatpush2.msra.mxu0 %v3180
    %3485 = vmatprep.subr.mxu0 %v3177
    %3486 = vmatpush2.msra.mxu0 %v3176
    %3487 = vmatprep.subr.mxu0 %v3173
    %3488 = vmatpush2.msra.mxu0 %v3172
    %3489 = vmatprep.subr.mxu0 %v3169
    %3490 = vmatpush2.msra.mxu0 %v3168
    %3491 = vmatprep.subr.mxu0 %v3165
    %3492 = vmatpush2.msra.mxu0 %v3164
    %3493 = vmatprep.subr.mxu0 %v3161
    %3494 = vmatpush2.msra.mxu0 %v3160
    %3495 = vmatprep.subr.mxu0 %v3157
    %3496 = vmatpush2.msra.mxu0 %v3156
    %3497 = vmatprep.subr.mxu0 %v3153
    %3498 = vmatpush2.msra.mxu0 %v3152
    %3499 = vmatprep.subr.mxu0 %v3149
    %3500 = vmatpush2.msra.mxu0 %v3148
    %3501 = vmatprep.mubr.f32.mxu0 %v1580
    %3502 = vmatmul.mubr.f32.gmra.mxu0 %v3365
    %v3503 = vpop.f32.mrf.mxu0
    %v3504 = vadd.f32 %v3341, %v3503
    %v3505 = vpop.f32.mrf.mxu0
    %v3506 = vadd.f32 %v3342, %v3505
    %3507 = vdwg.mxu0
    %v3508 = vxor.u32 %v3433, 2147483648
    %v3509 = vmul.f32 %v3508, 1.442695
    %v3510 = vpow.pop %v3509
    %v3511 = vadd.f32 %v3510, 1.0
    %v3512 = vrcp.pop %v3511
    %v3513 = vmul.f32 1.0, %v3512
    %v3514 = vxor.u32 %v3435, 2147483648
    %v3515 = vmul.f32 %v3514, 1.442695
    %v3516 = vpow.pop %v3515
    %v3517 = vadd.f32 %v3516, 1.0
    %v3518 = vrcp.pop %v3517
    %v3519 = vmul.f32 1.0, %v3518
    %v3520 = vmul.f32 %v3513, %v3506
    %v3521 = vadd.f32 %v3504, %v3520
    %v3522 = vtanh.pop %v3521
    %v3523 = vsub.f32 1.0, %v3519
    %v3524 = vmul.f32 %v3523, %v3522
    %v3525 = vmul.f32 %v3519, %v1580
    %v3526 = vadd.f32 %v3524, %v3525
    %3527 = vmatprep.subr.mxu0 %v3272
    %3528 = vmatpush1.msra.mxu0 %v3271
    %3529 = vmatprep.subr.mxu0 %v3268
    %3530 = vmatpush1.msra.mxu0 %v3267
    %3531 = vmatprep.subr.mxu0 %v3264
    %3532 = vmatpush1.msra.mxu0 %v3263
    %3533 = vmatprep.subr.mxu0 %v3260
    %3534 = vmatpush1.msra.mxu0 %v3259
    %3535 = vmatprep.subr.mxu0 %v3256
    %3536 = vmatpush1.msra.mxu0 %v3255
    %3537 = vmatprep.subr.mxu0 %v3252
    %3538 = vmatpush1.msra.mxu0 %v3251
    %3539 = vmatprep.subr.mxu0 %v3248
    %3540 = vmatpush1.msra.mxu0 %v3247
    %3541 = vmatprep.subr.mxu0 %v3244
    %3542 = vmatpush1.msra.mxu0 %v3243
    %3543 = vmatprep.subr.mxu0 %v3240
    %3544 = vmatpush1.msra.mxu0 %v3239
    %3545 = vmatprep.subr.mxu0 %v3236
    %3546 = vmatpush1.msra.mxu0 %v3235
    %3547 = vmatprep.subr.mxu0 %v3232
    %3548 = vmatpush1.msra.mxu0 %v3231
    %3549 = vmatprep.subr.mxu0 %v3228
    %3550 = vmatpush1.msra.mxu0 %v3227
    %3551 = vmatprep.subr.mxu0 %v3224
    %3552 = vmatpush1.msra.mxu0 %v3223
    %3553 = vmatprep.subr.mxu0 %v3220
    %3554 = vmatpush1.msra.mxu0 %v3219
    %3555 = vmatprep.subr.mxu0 %v3216
    %3556 = vmatpush1.msra.mxu0 %v3215
    %3557 = vmatprep.subr.mxu0 %v3212
    %3558 = vmatpush1.msra.mxu0 %v3211
    %3559 = vmatprep.subr.mxu0 %v3336
    %3560 = vmatpush2.msra.mxu0 %v3335
    %3561 = vmatprep.subr.mxu0 %v3332
    %3562 = vmatpush2.msra.mxu0 %v3331
    %3563 = vmatprep.subr.mxu0 %v3328
    %3564 = vmatpush2.msra.mxu0 %v3327
    %3565 = vmatprep.subr.mxu0 %v3324
    %3566 = vmatpush2.msra.mxu0 %v3323
    %3567 = vmatprep.subr.mxu0 %v3320
    %3568 = vmatpush2.msra.mxu0 %v3319
    %3569 = vmatprep.subr.mxu0 %v3316
    %3570 = vmatpush2.msra.mxu0 %v3315
    %3571 = vmatprep.subr.mxu0 %v3312
    %3572 = vmatpush2.msra.mxu0 %v3311
    %3573 = vmatprep.subr.mxu0 %v3308
    %3574 = vmatpush2.msra.mxu0 %v3307
    %3575 = vmatprep.subr.mxu0 %v3304
    %3576 = vmatpush2.msra.mxu0 %v3303
    %3577 = vmatprep.subr.mxu0 %v3300
    %3578 = vmatpush2.msra.mxu0 %v3299
    %3579 = vmatprep.subr.mxu0 %v3296
    %3580 = vmatpush2.msra.mxu0 %v3295
    %3581 = vmatprep.subr.mxu0 %v3292
    %3582 = vmatpush2.msra.mxu0 %v3291
    %3583 = vmatprep.subr.mxu0 %v3288
    %3584 = vmatpush2.msra.mxu0 %v3287
    %3585 = vmatprep.subr.mxu0 %v3284
    %3586 = vmatpush2.msra.mxu0 %v3283
    %3587 = vmatprep.subr.mxu0 %v3280
    %3588 = vmatpush2.msra.mxu0 %v3279
    %3589 = vmatprep.subr.mxu0 %v3276
    %3590 = vmatpush2.msra.mxu0 %v3275
    %3591 = vmatprep.mubr.f32.mxu0 %v3081
    %3592 = vmatmul.mubr.f32.gmra.mxu0 %v3526
    %v3593 = vpop.f32.mrf.mxu0
    %v3594 = vadd.f32 %v3344, %v3593
    %v3595 = vpop.f32.mrf.mxu0
    %v3596 = vadd.f32 %v3345, %v3595
    %3597 = vdwg.mxu0
    %3598 = vmatprep.subr.mxu0 %v3274
    %3599 = vmatpush1.msra.mxu0 %v3273
    %3600 = vmatprep.subr.mxu0 %v3270
    %3601 = vmatpush1.msra.mxu0 %v3269
    %3602 = vmatprep.subr.mxu0 %v3266
    %3603 = vmatpush1.msra.mxu0 %v3265
    %3604 = vmatprep.subr.mxu0 %v3262
    %3605 = vmatpush1.msra.mxu0 %v3261
    %3606 = vmatprep.subr.mxu0 %v3258
    %3607 = vmatpush1.msra.mxu0 %v3257
    %3608 = vmatprep.subr.mxu0 %v3254
    %3609 = vmatpush1.msra.mxu0 %v3253
    %3610 = vmatprep.subr.mxu0 %v3250
    %3611 = vmatpush1.msra.mxu0 %v3249
    %3612 = vmatprep.subr.mxu0 %v3246
    %3613 = vmatpush1.msra.mxu0 %v3245
    %3614 = vmatprep.subr.mxu0 %v3242
    %3615 = vmatpush1.msra.mxu0 %v3241
    %3616 = vmatprep.subr.mxu0 %v3238
    %3617 = vmatpush1.msra.mxu0 %v3237
    %3618 = vmatprep.subr.mxu0 %v3234
    %3619 = vmatpush1.msra.mxu0 %v3233
    %3620 = vmatprep.subr.mxu0 %v3230
    %3621 = vmatpush1.msra.mxu0 %v3229
    %3622 = vmatprep.subr.mxu0 %v3226
    %3623 = vmatpush1.msra.mxu0 %v3225
    %3624 = vmatprep.subr.mxu0 %v3222
    %3625 = vmatpush1.msra.mxu0 %v3221
    %3626 = vmatprep.subr.mxu0 %v3218
    %3627 = vmatpush1.msra.mxu0 %v3217
    %3628 = vmatprep.subr.mxu0 %v3214
    %3629 = vmatpush1.msra.mxu0 %v3213
    %3630 = vmatprep.subr.mxu0 %v3338
    %3631 = vmatpush2.msra.mxu0 %v3337
    %3632 = vmatprep.subr.mxu0 %v3334
    %3633 = vmatpush2.msra.mxu0 %v3333
    %3634 = vmatprep.subr.mxu0 %v3330
    %3635 = vmatpush2.msra.mxu0 %v3329
    %3636 = vmatprep.subr.mxu0 %v3326
    %3637 = vmatpush2.msra.mxu0 %v3325
    %3638 = vmatprep.subr.mxu0 %v3322
    %3639 = vmatpush2.msra.mxu0 %v3321
    %3640 = vmatprep.subr.mxu0 %v3318
    %3641 = vmatpush2.msra.mxu0 %v3317
    %3642 = vmatprep.subr.mxu0 %v3314
    %3643 = vmatpush2.msra.mxu0 %v3313
    %3644 = vmatprep.subr.mxu0 %v3310
    %3645 = vmatpush2.msra.mxu0 %v3309
    %3646 = vmatprep.subr.mxu0 %v3306
    %3647 = vmatpush2.msra.mxu0 %v3305
    %3648 = vmatprep.subr.mxu0 %v3302
    %3649 = vmatpush2.msra.mxu0 %v3301
    %3650 = vmatprep.subr.mxu0 %v3298
    %3651 = vmatpush2.msra.mxu0 %v3297
    %3652 = vmatprep.subr.mxu0 %v3294
    %3653 = vmatpush2.msra.mxu0 %v3293
    %3654 = vmatprep.subr.mxu0 %v3290
    %3655 = vmatpush2.msra.mxu0 %v3289
    %3656 = vmatprep.subr.mxu0 %v3286
    %3657 = vmatpush2.msra.mxu0 %v3285
    %3658 = vmatprep.subr.mxu0 %v3282
    %3659 = vmatpush2.msra.mxu0 %v3281
    %3660 = vmatprep.subr.mxu0 %v3278
    %3661 = vmatpush2.msra.mxu0 %v3277
    %3662 = vmatprep.mubr.f32.mxu0 %v3081
    %3663 = vmatmul.mubr.f32.gmra.mxu0 %v3526
    %v3664 = vpop.f32.mrf.mxu0
    %v3665 = vadd.f32 %v3346, %v3664
    %v3666 = vpop.f32.mrf.mxu0
    %v3667 = vadd.f32 %v3347, %v3666
    %3668 = vdwg.mxu0
    %v3669 = vxor.u32 %v3594, 2147483648
    %v3670 = vmul.f32 %v3669, 1.442695
    %v3671 = vpow.pop %v3670
    %v3672 = vadd.f32 %v3671, 1.0
    %v3673 = vrcp.pop %v3672
    %v3674 = vmul.f32 1.0, %v3673
    %v3675 = vxor.u32 %v3596, 2147483648
    %v3676 = vmul.f32 %v3675, 1.442695
    %v3677 = vpow.pop %v3676
    %v3678 = vadd.f32 %v3677, 1.0
    %v3679 = vrcp.pop %v3678
    %v3680 = vmul.f32 1.0, %v3679
    %v3681 = vmul.f32 %v3674, %v3667
    %v3682 = vadd.f32 %v3665, %v3681
    %v3683 = vtanh.pop %v3682
    %v3684 = vsub.f32 1.0, %v3680
    %v3685 = vmul.f32 %v3684, %v3683
    %v3686 = vmul.f32 %v3680, %v3081
    %v3687 = vadd.f32 %v3685, %v3686
    %3688 = vmatprep.subr.mxu0 0.0
    %3689 = vmatpush1.msra.mxu0 %v3363
    %3690 = vmatprep.subr.mxu0 0.0
    %3691 = vmatpush1.msra.mxu0 %v3362
    %3692 = vmatprep.subr.mxu0 0.0
    %3693 = vmatpush1.msra.mxu0 %v3361
    %3694 = vmatprep.subr.mxu0 0.0
    %3695 = vmatpush1.msra.mxu0 %v3360
    %3696 = vmatprep.subr.mxu0 0.0
    %3697 = vmatpush1.msra.mxu0 %v3359
    %3698 = vmatprep.subr.mxu0 0.0
    %3699 = vmatpush1.msra.mxu0 %v3358
    %3700 = vmatprep.subr.mxu0 0.0
    %3701 = vmatpush1.msra.mxu0 %v3357
    %3702 = vmatprep.subr.mxu0 0.0
    %3703 = vmatpush1.msra.mxu0 %v3356
    %3704 = vmatprep.subr.mxu0 0.0
    %3705 = vmatpush1.msra.mxu0 %v3355
    %3706 = vmatprep.subr.mxu0 0.0
    %3707 = vmatpush1.msra.mxu0 %v3354
    %3708 = vmatprep.subr.mxu0 0.0
    %3709 = vmatpush1.msra.mxu0 %v3353
    %3710 = vmatprep.subr.mxu0 0.0
    %3711 = vmatpush1.msra.mxu0 %v3352
    %3712 = vmatprep.subr.mxu0 0.0
    %3713 = vmatpush1.msra.mxu0 %v3351
    %3714 = vmatprep.subr.mxu0 0.0
    %3715 = vmatpush1.msra.mxu0 %v3350
    %3716 = vmatprep.subr.mxu0 0.0
    %3717 = vmatpush1.msra.mxu0 %v3349
    %3718 = vmatprep.subr.mxu0 0.0
    %3719 = vmatpush1.msra.mxu0 %v3348
    %3720 = vmatprep.subr.mxu0 0.0
    %3721 = vmatpush2.msra.mxu0 0.0
    %3722 = vmatprep.subr.mxu0 0.0
    %3723 = vmatpush2.msra.mxu0 0.0
    %3724 = vmatprep.subr.mxu0 0.0
    %3725 = vmatpush2.msra.mxu0 0.0
    %3726 = vmatprep.subr.mxu0 0.0
    %3727 = vmatpush2.msra.mxu0 0.0
    %3728 = vmatprep.subr.mxu0 0.0
    %3729 = vmatpush2.msra.mxu0 0.0
    %3730 = vmatprep.subr.mxu0 0.0
    %3731 = vmatpush2.msra.mxu0 0.0
    %3732 = vmatprep.subr.mxu0 0.0
    %3733 = vmatpush2.msra.mxu0 0.0
    %3734 = vmatprep.subr.mxu0 0.0
    %3735 = vmatpush2.msra.mxu0 0.0
    %3736 = vmatprep.subr.mxu0 0.0
    %3737 = vmatpush2.msra.mxu0 0.0
    %3738 = vmatprep.subr.mxu0 0.0
    %3739 = vmatpush2.msra.mxu0 0.0
    %3740 = vmatprep.subr.mxu0 0.0
    %3741 = vmatpush2.msra.mxu0 0.0
    %3742 = vmatprep.subr.mxu0 0.0
    %3743 = vmatpush2.msra.mxu0 0.0
    %3744 = vmatprep.subr.mxu0 0.0
    %3745 = vmatpush2.msra.mxu0 0.0
    %3746 = vmatprep.subr.mxu0 0.0
    %3747 = vmatpush2.msra.mxu0 0.0
    %3748 = vmatprep.subr.mxu0 0.0
    %3749 = vmatpush2.msra.mxu0 0.0
    %3750 = vmatprep.subr.mxu0 0.0
    %3751 = vmatpush2.msra.mxu0 0.0
    %3752 = vmatprep.mubr.f32.mxu0 0.0
    %3753 = vmatmul.mubr.f32.gmra.mxu0 %v3687
    %v3754 = vpop.f32.mrf.mxu0
    %v3755 = vadd.f32 %v3364, %v3754
    %v3756 = vpop.f32.mrf.mxu0
    %3757 = vdwg.mxu0
    %v3758 = vadd.f32 %v3755, %v3365
    %3759 = vst [vmem:[%s10] sm:$0xff] %v3758
    %3760 = vmatprep.subr.mxu0 %v3143
    %3761 = vmatpush1.msra.mxu0 %v3142
    %3762 = vmatprep.subr.mxu0 %v3139
    %3763 = vmatpush1.msra.mxu0 %v3138
    %3764 = vmatprep.subr.mxu0 %v3135
    %3765 = vmatpush1.msra.mxu0 %v3134
    %3766 = vmatprep.subr.mxu0 %v3131
    %3767 = vmatpush1.msra.mxu0 %v3130
    %3768 = vmatprep.subr.mxu0 %v3127
    %3769 = vmatpush1.msra.mxu0 %v3126
    %3770 = vmatprep.subr.mxu0 %v3123
    %3771 = vmatpush1.msra.mxu0 %v3122
    %3772 = vmatprep.subr.mxu0 %v3119
    %3773 = vmatpush1.msra.mxu0 %v3118
    %3774 = vmatprep.subr.mxu0 %v3115
    %3775 = vmatpush1.msra.mxu0 %v3114
    %3776 = vmatprep.subr.mxu0 %v3111
    %3777 = vmatpush1.msra.mxu0 %v3110
    %3778 = vmatprep.subr.mxu0 %v3107
    %3779 = vmatpush1.msra.mxu0 %v3106
    %3780 = vmatprep.subr.mxu0 %v3103
    %3781 = vmatpush1.msra.mxu0 %v3102
    %3782 = vmatprep.subr.mxu0 %v3099
    %3783 = vmatpush1.msra.mxu0 %v3098
    %3784 = vmatprep.subr.mxu0 %v3095
    %3785 = vmatpush1.msra.mxu0 %v3094
    %3786 = vmatprep.subr.mxu0 %v3091
    %3787 = vmatpush1.msra.mxu0 %v3090
    %3788 = vmatprep.subr.mxu0 %v3087
    %3789 = vmatpush1.msra.mxu0 %v3086
    %3790 = vmatprep.subr.mxu0 %v3083
    %3791 = vmatpush1.msra.mxu0 %v3082
    %3792 = vmatprep.subr.mxu0 %v3207
    %3793 = vmatpush2.msra.mxu0 %v3206
    %3794 = vmatprep.subr.mxu0 %v3203
    %3795 = vmatpush2.msra.mxu0 %v3202
    %3796 = vmatprep.subr.mxu0 %v3199
    %3797 = vmatpush2.msra.mxu0 %v3198
    %3798 = vmatprep.subr.mxu0 %v3195
    %3799 = vmatpush2.msra.mxu0 %v3194
    %3800 = vmatprep.subr.mxu0 %v3191
    %3801 = vmatpush2.msra.mxu0 %v3190
    %3802 = vmatprep.subr.mxu0 %v3187
    %3803 = vmatpush2.msra.mxu0 %v3186
    %3804 = vmatprep.subr.mxu0 %v3183
    %3805 = vmatpush2.msra.mxu0 %v3182
    %3806 = vmatprep.subr.mxu0 %v3179
    %3807 = vmatpush2.msra.mxu0 %v3178
    %3808 = vmatprep.subr.mxu0 %v3175
    %3809 = vmatpush2.msra.mxu0 %v3174
    %3810 = vmatprep.subr.mxu0 %v3171
    %3811 = vmatpush2.msra.mxu0 %v3170
    %3812 = vmatprep.subr.mxu0 %v3167
    %3813 = vmatpush2.msra.mxu0 %v3166
    %3814 = vmatprep.subr.mxu0 %v3163
    %3815 = vmatpush2.msra.mxu0 %v3162
    %3816 = vmatprep.subr.mxu0 %v3159
    %3817 = vmatpush2.msra.mxu0 %v3158
    %3818 = vmatprep.subr.mxu0 %v3155
    %3819 = vmatpush2.msra.mxu0 %v3154
    %3820 = vmatprep.subr.mxu0 %v3151
    %3821 = vmatpush2.msra.mxu0 %v3150
    %3822 = vmatprep.subr.mxu0 %v3147
    %3823 = vmatpush2.msra.mxu0 %v3146
    %3824 = vmatprep.mubr.f32.mxu0 %v3526
    %3825 = vmatmul.mubr.f32.gmra.mxu0 %v3758
    %v3826 = vpop.f32.mrf.mxu0
    %v3827 = vadd.f32 %v3339, %v3826
    %v3828 = vpop.f32.mrf.mxu0
    %v3829 = vadd.f32 %v3340, %v3828
    %3830 = vdwg.mxu0
    %3831 = vmatprep.subr.mxu0 %v3145
    %3832 = vmatpush1.msra.mxu0 %v3144
    %3833 = vmatprep.subr.mxu0 %v3141
    %3834 = vmatpush1.msra.mxu0 %v3140
    %3835 = vmatprep.subr.mxu0 %v3137
    %3836 = vmatpush1.msra.mxu0 %v3136
    %3837 = vmatprep.subr.mxu0 %v3133
    %3838 = vmatpush1.msra.mxu0 %v3132
    %3839 = vmatprep.subr.mxu0 %v3129
    %3840 = vmatpush1.msra.mxu0 %v3128
    %3841 = vmatprep.subr.mxu0 %v3125
    %3842 = vmatpush1.msra.mxu0 %v3124
    %3843 = vmatprep.subr.mxu0 %v3121
    %3844 = vmatpush1.msra.mxu0 %v3120
    %3845 = vmatprep.subr.mxu0 %v3117
    %3846 = vmatpush1.msra.mxu0 %v3116
    %3847 = vmatprep.subr.mxu0 %v3113
    %3848 = vmatpush1.msra.mxu0 %v3112
    %3849 = vmatprep.subr.mxu0 %v3109
    %3850 = vmatpush1.msra.mxu0 %v3108
    %3851 = vmatprep.subr.mxu0 %v3105
    %3852 = vmatpush1.msra.mxu0 %v3104
    %3853 = vmatprep.subr.mxu0 %v3101
    %3854 = vmatpush1.msra.mxu0 %v3100
    %3855 = vmatprep.subr.mxu0 %v3097
    %3856 = vmatpush1.msra.mxu0 %v3096
    %3857 = vmatprep.subr.mxu0 %v3093
    %3858 = vmatpush1.msra.mxu0 %v3092
    %3859 = vmatprep.subr.mxu0 %v3089
    %3860 = vmatpush1.msra.mxu0 %v3088
    %3861 = vmatprep.subr.mxu0 %v3085
    %3862 = vmatpush1.msra.mxu0 %v3084
    %3863 = vmatprep.subr.mxu0 %v3209
    %3864 = vmatpush2.msra.mxu0 %v3208
    %3865 = vmatprep.subr.mxu0 %v3205
    %3866 = vmatpush2.msra.mxu0 %v3204
    %3867 = vmatprep.subr.mxu0 %v3201
    %3868 = vmatpush2.msra.mxu0 %v3200
    %3869 = vmatprep.subr.mxu0 %v3197
    %3870 = vmatpush2.msra.mxu0 %v3196
    %3871 = vmatprep.subr.mxu0 %v3193
    %3872 = vmatpush2.msra.mxu0 %v3192
    %3873 = vmatprep.subr.mxu0 %v3189
    %3874 = vmatpush2.msra.mxu0 %v3188
    %3875 = vmatprep.subr.mxu0 %v3185
    %3876 = vmatpush2.msra.mxu0 %v3184
    %3877 = vmatprep.subr.mxu0 %v3181
    %3878 = vmatpush2.msra.mxu0 %v3180
    %3879 = vmatprep.subr.mxu0 %v3177
    %3880 = vmatpush2.msra.mxu0 %v3176
    %3881 = vmatprep.subr.mxu0 %v3173
    %3882 = vmatpush2.msra.mxu0 %v3172
    %3883 = vmatprep.subr.mxu0 %v3169
    %3884 = vmatpush2.msra.mxu0 %v3168
    %3885 = vmatprep.subr.mxu0 %v3165
    %3886 = vmatpush2.msra.mxu0 %v3164
    %3887 = vmatprep.subr.mxu0 %v3161
    %3888 = vmatpush2.msra.mxu0 %v3160
    %3889 = vmatprep.subr.mxu0 %v3157
    %3890 = vmatpush2.msra.mxu0 %v3156
    %3891 = vmatprep.subr.mxu0 %v3153
    %3892 = vmatpush2.msra.mxu0 %v3152
    %3893 = vmatprep.subr.mxu0 %v3149
    %3894 = vmatpush2.msra.mxu0 %v3148
    %3895 = vmatprep.mubr.f32.mxu0 %v3526
    %3896 = vmatmul.mubr.f32.gmra.mxu0 %v3758
    %v3897 = vpop.f32.mrf.mxu0
    %v3898 = vadd.f32 %v3341, %v3897
    %v3899 = vpop.f32.mrf.mxu0
    %v3900 = vadd.f32 %v3342, %v3899
    %3901 = vdwg.mxu0
    %v3902 = vxor.u32 %v3827, 2147483648
    %v3903 = vmul.f32 %v3902, 1.442695
    %v3904 = vpow.pop %v3903
    %v3905 = vadd.f32 %v3904, 1.0
    %v3906 = vrcp.pop %v3905
    %v3907 = vmul.f32 1.0, %v3906
    %v3908 = vxor.u32 %v3829, 2147483648
    %v3909 = vmul.f32 %v3908, 1.442695
    %v3910 = vpow.pop %v3909
    %v3911 = vadd.f32 %v3910, 1.0
    %v3912 = vrcp.pop %v3911
    %v3913 = vmul.f32 1.0, %v3912
    %v3914 = vmul.f32 %v3907, %v3900
    %v3915 = vadd.f32 %v3898, %v3914
    %v3916 = vtanh.pop %v3915
    %v3917 = vsub.f32 1.0, %v3913
    %v3918 = vmul.f32 %v3917, %v3916
    %v3919 = vmul.f32 %v3913, %v3526
    %v3920 = vadd.f32 %v3918, %v3919
    %3921 = vmatprep.subr.mxu0 %v3272
    %3922 = vmatpush1.msra.mxu0 %v3271
    %3923 = vmatprep.subr.mxu0 %v3268
    %3924 = vmatpush1.msra.mxu0 %v3267
    %3925 = vmatprep.subr.mxu0 %v3264
    %3926 = vmatpush1.msra.mxu0 %v3263
    %3927 = vmatprep.subr.mxu0 %v3260
    %3928 = vmatpush1.msra.mxu0 %v3259
    %3929 = vmatprep.subr.mxu0 %v3256
    %3930 = vmatpush1.msra.mxu0 %v3255
    %3931 = vmatprep.subr.mxu0 %v3252
    %3932 = vmatpush1.msra.mxu0 %v3251
    %3933 = vmatprep.subr.mxu0 %v3248
    %3934 = vmatpush1.msra.mxu0 %v3247
    %3935 = vmatprep.subr.mxu0 %v3244
    %3936 = vmatpush1.msra.mxu0 %v3243
    %3937 = vmatprep.subr.mxu0 %v3240
    %3938 = vmatpush1.msra.mxu0 %v3239
    %3939 = vmatprep.subr.mxu0 %v3236
    %3940 = vmatpush1.msra.mxu0 %v3235
    %3941 = vmatprep.subr.mxu0 %v3232
    %3942 = vmatpush1.msra.mxu0 %v3231
    %3943 = vmatprep.subr.mxu0 %v3228
    %3944 = vmatpush1.msra.mxu0 %v3227
    %3945 = vmatprep.subr.mxu0 %v3224
    %3946 = vmatpush1.msra.mxu0 %v3223
    %3947 = vmatprep.subr.mxu0 %v3220
    %3948 = vmatpush1.msra.mxu0 %v3219
    %3949 = vmatprep.subr.mxu0 %v3216
    %3950 = vmatpush1.msra.mxu0 %v3215
    %3951 = vmatprep.subr.mxu0 %v3212
    %3952 = vmatpush1.msra.mxu0 %v3211
    %3953 = vmatprep.subr.mxu0 %v3336
    %3954 = vmatpush2.msra.mxu0 %v3335
    %3955 = vmatprep.subr.mxu0 %v3332
    %3956 = vmatpush2.msra.mxu0 %v3331
    %3957 = vmatprep.subr.mxu0 %v3328
    %3958 = vmatpush2.msra.mxu0 %v3327
    %3959 = vmatprep.subr.mxu0 %v3324
    %3960 = vmatpush2.msra.mxu0 %v3323
    %3961 = vmatprep.subr.mxu0 %v3320
    %3962 = vmatpush2.msra.mxu0 %v3319
    %3963 = vmatprep.subr.mxu0 %v3316
    %3964 = vmatpush2.msra.mxu0 %v3315
    %3965 = vmatprep.subr.mxu0 %v3312
    %3966 = vmatpush2.msra.mxu0 %v3311
    %3967 = vmatprep.subr.mxu0 %v3308
    %3968 = vmatpush2.msra.mxu0 %v3307
    %3969 = vmatprep.subr.mxu0 %v3304
    %3970 = vmatpush2.msra.mxu0 %v3303
    %3971 = vmatprep.subr.mxu0 %v3300
    %3972 = vmatpush2.msra.mxu0 %v3299
    %3973 = vmatprep.subr.mxu0 %v3296
    %3974 = vmatpush2.msra.mxu0 %v3295
    %3975 = vmatprep.subr.mxu0 %v3292
    %3976 = vmatpush2.msra.mxu0 %v3291
    %3977 = vmatprep.subr.mxu0 %v3288
    %3978 = vmatpush2.msra.mxu0 %v3287
    %3979 = vmatprep.subr.mxu0 %v3284
    %3980 = vmatpush2.msra.mxu0 %v3283
    %3981 = vmatprep.subr.mxu0 %v3280
    %3982 = vmatpush2.msra.mxu0 %v3279
    %3983 = vmatprep.subr.mxu0 %v3276
    %3984 = vmatpush2.msra.mxu0 %v3275
    %3985 = vmatprep.mubr.f32.mxu0 %v3687
    %3986 = vmatmul.mubr.f32.gmra.mxu0 %v3920
    %v3987 = vpop.f32.mrf.mxu0
    %v3988 = vadd.f32 %v3344, %v3987
    %v3989 = vpop.f32.mrf.mxu0
    %v3990 = vadd.f32 %v3345, %v3989
    %3991 = vdwg.mxu0
    %3992 = vmatprep.subr.mxu0 %v3274
    %3993 = vmatpush1.msra.mxu0 %v3273
    %3994 = vmatprep.subr.mxu0 %v3270
    %3995 = vmatpush1.msra.mxu0 %v3269
    %3996 = vmatprep.subr.mxu0 %v3266
    %3997 = vmatpush1.msra.mxu0 %v3265
    %3998 = vmatprep.subr.mxu0 %v3262
    %3999 = vmatpush1.msra.mxu0 %v3261
    %4000 = vmatprep.subr.mxu0 %v3258
    %4001 = vmatpush1.msra.mxu0 %v3257
    %4002 = vmatprep.subr.mxu0 %v3254
    %4003 = vmatpush1.msra.mxu0 %v3253
    %4004 = vmatprep.subr.mxu0 %v3250
    %4005 = vmatpush1.msra.mxu0 %v3249
    %4006 = vmatprep.subr.mxu0 %v3246
    %4007 = vmatpush1.msra.mxu0 %v3245
    %4008 = vmatprep.subr.mxu0 %v3242
    %4009 = vmatpush1.msra.mxu0 %v3241
    %4010 = vmatprep.subr.mxu0 %v3238
    %4011 = vmatpush1.msra.mxu0 %v3237
    %4012 = vmatprep.subr.mxu0 %v3234
    %4013 = vmatpush1.msra.mxu0 %v3233
    %4014 = vmatprep.subr.mxu0 %v3230
    %4015 = vmatpush1.msra.mxu0 %v3229
    %4016 = vmatprep.subr.mxu0 %v3226
    %4017 = vmatpush1.msra.mxu0 %v3225
    %4018 = vmatprep.subr.mxu0 %v3222
    %4019 = vmatpush1.msra.mxu0 %v3221
    %4020 = vmatprep.subr.mxu0 %v3218
    %4021 = vmatpush1.msra.mxu0 %v3217
    %4022 = vmatprep.subr.mxu0 %v3214
    %4023 = vmatpush1.msra.mxu0 %v3213
    %4024 = vmatprep.subr.mxu0 %v3338
    %4025 = vmatpush2.msra.mxu0 %v3337
    %4026 = vmatprep.subr.mxu0 %v3334
    %4027 = vmatpush2.msra.mxu0 %v3333
    %4028 = vmatprep.subr.mxu0 %v3330
    %4029 = vmatpush2.msra.mxu0 %v3329
    %4030 = vmatprep.subr.mxu0 %v3326
    %4031 = vmatpush2.msra.mxu0 %v3325
    %4032 = vmatprep.subr.mxu0 %v3322
    %4033 = vmatpush2.msra.mxu0 %v3321
    %4034 = vmatprep.subr.mxu0 %v3318
    %4035 = vmatpush2.msra.mxu0 %v3317
    %4036 = vmatprep.subr.mxu0 %v3314
    %4037 = vmatpush2.msra.mxu0 %v3313
    %4038 = vmatprep.subr.mxu0 %v3310
    %4039 = vmatpush2.msra.mxu0 %v3309
    %4040 = vmatprep.subr.mxu0 %v3306
    %4041 = vmatpush2.msra.mxu0 %v3305
    %4042 = vmatprep.subr.mxu0 %v3302
    %4043 = vmatpush2.msra.mxu0 %v3301
    %4044 = vmatprep.subr.mxu0 %v3298
    %4045 = vmatpush2.msra.mxu0 %v3297
    %4046 = vmatprep.subr.mxu0 %v3294
    %4047 = vmatpush2.msra.mxu0 %v3293
    %4048 = vmatprep.subr.mxu0 %v3290
    %4049 = vmatpush2.msra.mxu0 %v3289
    %4050 = vmatprep.subr.mxu0 %v3286
    %4051 = vmatpush2.msra.mxu0 %v3285
    %4052 = vmatprep.subr.mxu0 %v3282
    %4053 = vmatpush2.msra.mxu0 %v3281
    %4054 = vmatprep.subr.mxu0 %v3278
    %4055 = vmatpush2.msra.mxu0 %v3277
    %4056 = vmatprep.mubr.f32.mxu0 %v3687
    %4057 = vmatmul.mubr.f32.gmra.mxu0 %v3920
    %v4058 = vpop.f32.mrf.mxu0
    %v4059 = vadd.f32 %v3346, %v4058
    %v4060 = vpop.f32.mrf.mxu0
    %v4061 = vadd.f32 %v3347, %v4060
    %4062 = vdwg.mxu0
    %v4063 = vxor.u32 %v3988, 2147483648
    %v4064 = vmul.f32 %v4063, 1.442695
    %v4065 = vpow.pop %v4064
    %v4066 = vadd.f32 %v4065, 1.0
    %v4067 = vrcp.pop %v4066
    %v4068 = vmul.f32 1.0, %v4067
    %v4069 = vxor.u32 %v3990, 2147483648
    %v4070 = vmul.f32 %v4069, 1.442695
    %v4071 = vpow.pop %v4070
    %v4072 = vadd.f32 %v4071, 1.0
    %v4073 = vrcp.pop %v4072
    %v4074 = vmul.f32 1.0, %v4073
    %v4075 = vmul.f32 %v4068, %v4061
    %v4076 = vadd.f32 %v4059, %v4075
    %v4077 = vtanh.pop %v4076
    %v4078 = vsub.f32 1.0, %v4074
    %v4079 = vmul.f32 %v4078, %v4077
    %v4080 = vmul.f32 %v4074, %v3687
    %v4081 = vadd.f32 %v4079, %v4080
    %4082 = vmatprep.subr.mxu0 0.0
    %4083 = vmatpush1.msra.mxu0 %v3363
    %4084 = vmatprep.subr.mxu0 0.0
    %4085 = vmatpush1.msra.mxu0 %v3362
    %4086 = vmatprep.subr.mxu0 0.0
    %4087 = vmatpush1.msra.mxu0 %v3361
    %4088 = vmatprep.subr.mxu0 0.0
    %4089 = vmatpush1.msra.mxu0 %v3360
    %4090 = vmatprep.subr.mxu0 0.0
    %4091 = vmatpush1.msra.mxu0 %v3359
    %4092 = vmatprep.subr.mxu0 0.0
    %4093 = vmatpush1.msra.mxu0 %v3358
    %4094 = vmatprep.subr.mxu0 0.0
    %4095 = vmatpush1.msra.mxu0 %v3357
    %4096 = vmatprep.subr.mxu0 0.0
    %4097 = vmatpush1.msra.mxu0 %v3356
    %4098 = vmatprep.subr.mxu0 0.0
    %4099 = vmatpush1.msra.mxu0 %v3355
    %4100 = vmatprep.subr.mxu0 0.0
    %4101 = vmatpush1.msra.mxu0 %v3354
    %4102 = vmatprep.subr.mxu0 0.0
    %4103 = vmatpush1.msra.mxu0 %v3353
    %4104 = vmatprep.subr.mxu0 0.0
    %4105 = vmatpush1.msra.mxu0 %v3352
    %4106 = vmatprep.subr.mxu0 0.0
    %4107 = vmatpush1.msra.mxu0 %v3351
    %4108 = vmatprep.subr.mxu0 0.0
    %4109 = vmatpush1.msra.mxu0 %v3350
    %4110 = vmatprep.subr.mxu0 0.0
    %4111 = vmatpush1.msra.mxu0 %v3349
    %4112 = vmatprep.subr.mxu0 0.0
    %4113 = vmatpush1.msra.mxu0 %v3348
    %4114 = vmatprep.subr.mxu0 0.0
    %4115 = vmatpush2.msra.mxu0 0.0
    %4116 = vmatprep.subr.mxu0 0.0
    %4117 = vmatpush2.msra.mxu0 0.0
    %4118 = vmatprep.subr.mxu0 0.0
    %4119 = vmatpush2.msra.mxu0 0.0
    %4120 = vmatprep.subr.mxu0 0.0
    %4121 = vmatpush2.msra.mxu0 0.0
    %4122 = vmatprep.subr.mxu0 0.0
    %4123 = vmatpush2.msra.mxu0 0.0
    %4124 = vmatprep.subr.mxu0 0.0
    %4125 = vmatpush2.msra.mxu0 0.0
    %4126 = vmatprep.subr.mxu0 0.0
    %4127 = vmatpush2.msra.mxu0 0.0
    %4128 = vmatprep.subr.mxu0 0.0
    %4129 = vmatpush2.msra.mxu0 0.0
    %4130 = vmatprep.subr.mxu0 0.0
    %4131 = vmatpush2.msra.mxu0 0.0
    %4132 = vmatprep.subr.mxu0 0.0
    %4133 = vmatpush2.msra.mxu0 0.0
    %4134 = vmatprep.subr.mxu0 0.0
    %4135 = vmatpush2.msra.mxu0 0.0
    %4136 = vmatprep.subr.mxu0 0.0
    %4137 = vmatpush2.msra.mxu0 0.0
    %4138 = vmatprep.subr.mxu0 0.0
    %4139 = vmatpush2.msra.mxu0 0.0
    %4140 = vmatprep.subr.mxu0 0.0
    %4141 = vmatpush2.msra.mxu0 0.0
    %4142 = vmatprep.subr.mxu0 0.0
    %4143 = vmatpush2.msra.mxu0 0.0
    %4144 = vmatprep.subr.mxu0 0.0
    %4145 = vmatpush2.msra.mxu0 0.0
    %4146 = vmatprep.mubr.f32.mxu0 0.0
    %4147 = vmatmul.mubr.f32.gmra.mxu0 %v4081
    %v4148 = vpop.f32.mrf.mxu0
    %v4149 = vadd.f32 %v3364, %v4148
    %v4150 = vpop.f32.mrf.mxu0
    %4151 = vdwg.mxu0
    %v4152 = vadd.f32 %v4149, %v3758
    %s4153 = scalar_lea.vmem %s10, 8
    %4154 = vst [vmem:[%s4153] sm:$0xff] %v4152
    %4155 = vmatprep.subr.mxu0 %v3143
    %4156 = vmatpush1.msra.mxu0 %v3142
    %4157 = vmatprep.subr.mxu0 %v3139
    %4158 = vmatpush1.msra.mxu0 %v3138
    %4159 = vmatprep.subr.mxu0 %v3135
    %4160 = vmatpush1.msra.mxu0 %v3134
    %4161 = vmatprep.subr.mxu0 %v3131
    %4162 = vmatpush1.msra.mxu0 %v3130
    %4163 = vmatprep.subr.mxu0 %v3127
    %4164 = vmatpush1.msra.mxu0 %v3126
    %4165 = vmatprep.subr.mxu0 %v3123
    %4166 = vmatpush1.msra.mxu0 %v3122
    %4167 = vmatprep.subr.mxu0 %v3119
    %4168 = vmatpush1.msra.mxu0 %v3118
    %4169 = vmatprep.subr.mxu0 %v3115
    %4170 = vmatpush1.msra.mxu0 %v3114
    %4171 = vmatprep.subr.mxu0 %v3111
    %4172 = vmatpush1.msra.mxu0 %v3110
    %4173 = vmatprep.subr.mxu0 %v3107
    %4174 = vmatpush1.msra.mxu0 %v3106
    %4175 = vmatprep.subr.mxu0 %v3103
    %4176 = vmatpush1.msra.mxu0 %v3102
    %4177 = vmatprep.subr.mxu0 %v3099
    %4178 = vmatpush1.msra.mxu0 %v3098
    %4179 = vmatprep.subr.mxu0 %v3095
    %4180 = vmatpush1.msra.mxu0 %v3094
    %4181 = vmatprep.subr.mxu0 %v3091
    %4182 = vmatpush1.msra.mxu0 %v3090
    %4183 = vmatprep.subr.mxu0 %v3087
    %4184 = vmatpush1.msra.mxu0 %v3086
    %4185 = vmatprep.subr.mxu0 %v3083
    %4186 = vmatpush1.msra.mxu0 %v3082
    %4187 = vmatprep.subr.mxu0 %v3207
    %4188 = vmatpush2.msra.mxu0 %v3206
    %4189 = vmatprep.subr.mxu0 %v3203
    %4190 = vmatpush2.msra.mxu0 %v3202
    %4191 = vmatprep.subr.mxu0 %v3199
    %4192 = vmatpush2.msra.mxu0 %v3198
    %4193 = vmatprep.subr.mxu0 %v3195
    %4194 = vmatpush2.msra.mxu0 %v3194
    %4195 = vmatprep.subr.mxu0 %v3191
    %4196 = vmatpush2.msra.mxu0 %v3190
    %4197 = vmatprep.subr.mxu0 %v3187
    %4198 = vmatpush2.msra.mxu0 %v3186
    %4199 = vmatprep.subr.mxu0 %v3183
    %4200 = vmatpush2.msra.mxu0 %v3182
    %4201 = vmatprep.subr.mxu0 %v3179
    %4202 = vmatpush2.msra.mxu0 %v3178
    %4203 = vmatprep.subr.mxu0 %v3175
    %4204 = vmatpush2.msra.mxu0 %v3174
    %4205 = vmatprep.subr.mxu0 %v3171
    %4206 = vmatpush2.msra.mxu0 %v3170
    %4207 = vmatprep.subr.mxu0 %v3167
    %4208 = vmatpush2.msra.mxu0 %v3166
    %4209 = vmatprep.subr.mxu0 %v3163
    %4210 = vmatpush2.msra.mxu0 %v3162
    %4211 = vmatprep.subr.mxu0 %v3159
    %4212 = vmatpush2.msra.mxu0 %v3158
    %4213 = vmatprep.subr.mxu0 %v3155
    %4214 = vmatpush2.msra.mxu0 %v3154
    %4215 = vmatprep.subr.mxu0 %v3151
    %4216 = vmatpush2.msra.mxu0 %v3150
    %4217 = vmatprep.subr.mxu0 %v3147
    %4218 = vmatpush2.msra.mxu0 %v3146
    %4219 = vmatprep.mubr.f32.mxu0 %v3920
    %4220 = vmatmul.mubr.f32.gmra.mxu0 %v4152
    %v4221 = vpop.f32.mrf.mxu0
    %v4222 = vadd.f32 %v3339, %v4221
    %v4223 = vpop.f32.mrf.mxu0
    %v4224 = vadd.f32 %v3340, %v4223
    %4225 = vdwg.mxu0
    %4226 = vmatprep.subr.mxu0 %v3145
    %4227 = vmatpush1.msra.mxu0 %v3144
    %4228 = vmatprep.subr.mxu0 %v3141
    %4229 = vmatpush1.msra.mxu0 %v3140
    %4230 = vmatprep.subr.mxu0 %v3137
    %4231 = vmatpush1.msra.mxu0 %v3136
    %4232 = vmatprep.subr.mxu0 %v3133
    %4233 = vmatpush1.msra.mxu0 %v3132
    %4234 = vmatprep.subr.mxu0 %v3129
    %4235 = vmatpush1.msra.mxu0 %v3128
    %4236 = vmatprep.subr.mxu0 %v3125
    %4237 = vmatpush1.msra.mxu0 %v3124
    %4238 = vmatprep.subr.mxu0 %v3121
    %4239 = vmatpush1.msra.mxu0 %v3120
    %4240 = vmatprep.subr.mxu0 %v3117
    %4241 = vmatpush1.msra.mxu0 %v3116
    %4242 = vmatprep.subr.mxu0 %v3113
    %4243 = vmatpush1.msra.mxu0 %v3112
    %4244 = vmatprep.subr.mxu0 %v3109
    %4245 = vmatpush1.msra.mxu0 %v3108
    %4246 = vmatprep.subr.mxu0 %v3105
    %4247 = vmatpush1.msra.mxu0 %v3104
    %4248 = vmatprep.subr.mxu0 %v3101
    %4249 = vmatpush1.msra.mxu0 %v3100
    %4250 = vmatprep.subr.mxu0 %v3097
    %4251 = vmatpush1.msra.mxu0 %v3096
    %4252 = vmatprep.subr.mxu0 %v3093
    %4253 = vmatpush1.msra.mxu0 %v3092
    %4254 = vmatprep.subr.mxu0 %v3089
    %4255 = vmatpush1.msra.mxu0 %v3088
    %4256 = vmatprep.subr.mxu0 %v3085
    %4257 = vmatpush1.msra.mxu0 %v3084
    %4258 = vmatprep.subr.mxu0 %v3209
    %4259 = vmatpush2.msra.mxu0 %v3208
    %4260 = vmatprep.subr.mxu0 %v3205
    %4261 = vmatpush2.msra.mxu0 %v3204
    %4262 = vmatprep.subr.mxu0 %v3201
    %4263 = vmatpush2.msra.mxu0 %v3200
    %4264 = vmatprep.subr.mxu0 %v3197
    %4265 = vmatpush2.msra.mxu0 %v3196
    %4266 = vmatprep.subr.mxu0 %v3193
    %4267 = vmatpush2.msra.mxu0 %v3192
    %4268 = vmatprep.subr.mxu0 %v3189
    %4269 = vmatpush2.msra.mxu0 %v3188
    %4270 = vmatprep.subr.mxu0 %v3185
    %4271 = vmatpush2.msra.mxu0 %v3184
    %4272 = vmatprep.subr.mxu0 %v3181
    %4273 = vmatpush2.msra.mxu0 %v3180
    %4274 = vmatprep.subr.mxu0 %v3177
    %4275 = vmatpush2.msra.mxu0 %v3176
    %4276 = vmatprep.subr.mxu0 %v3173
    %4277 = vmatpush2.msra.mxu0 %v3172
    %4278 = vmatprep.subr.mxu0 %v3169
    %4279 = vmatpush2.msra.mxu0 %v3168
    %4280 = vmatprep.subr.mxu0 %v3165
    %4281 = vmatpush2.msra.mxu0 %v3164
    %4282 = vmatprep.subr.mxu0 %v3161
    %4283 = vmatpush2.msra.mxu0 %v3160
    %4284 = vmatprep.subr.mxu0 %v3157
    %4285 = vmatpush2.msra.mxu0 %v3156
    %4286 = vmatprep.subr.mxu0 %v3153
    %4287 = vmatpush2.msra.mxu0 %v3152
    %4288 = vmatprep.subr.mxu0 %v3149
    %4289 = vmatpush2.msra.mxu0 %v3148
    %4290 = vmatprep.mubr.f32.mxu0 %v3920
    %4291 = vmatmul.mubr.f32.gmra.mxu0 %v4152
    %v4292 = vpop.f32.mrf.mxu0
    %v4293 = vadd.f32 %v3341, %v4292
    %v4294 = vpop.f32.mrf.mxu0
    %v4295 = vadd.f32 %v3342, %v4294
    %4296 = vdwg.mxu0
    %v4297 = vxor.u32 %v4222, 2147483648
    %v4298 = vmul.f32 %v4297, 1.442695
    %v4299 = vpow.pop %v4298
    %v4300 = vadd.f32 %v4299, 1.0
    %v4301 = vrcp.pop %v4300
    %v4302 = vmul.f32 1.0, %v4301
    %v4303 = vxor.u32 %v4224, 2147483648
    %v4304 = vmul.f32 %v4303, 1.442695
    %v4305 = vpow.pop %v4304
    %v4306 = vadd.f32 %v4305, 1.0
    %v4307 = vrcp.pop %v4306
    %v4308 = vmul.f32 1.0, %v4307
    %v4309 = vmul.f32 %v4302, %v4295
    %v4310 = vadd.f32 %v4293, %v4309
    %v4311 = vtanh.pop %v4310
    %v4312 = vsub.f32 1.0, %v4308
    %v4313 = vmul.f32 %v4312, %v4311
    %v4314 = vmul.f32 %v4308, %v3920
    %v4315 = vadd.f32 %v4313, %v4314
    %4316 = vmatprep.subr.mxu0 %v3272
    %4317 = vmatpush1.msra.mxu0 %v3271
    %4318 = vmatprep.subr.mxu0 %v3268
    %4319 = vmatpush1.msra.mxu0 %v3267
    %4320 = vmatprep.subr.mxu0 %v3264
    %4321 = vmatpush1.msra.mxu0 %v3263
    %4322 = vmatprep.subr.mxu0 %v3260
    %4323 = vmatpush1.msra.mxu0 %v3259
    %4324 = vmatprep.subr.mxu0 %v3256
    %4325 = vmatpush1.msra.mxu0 %v3255
    %4326 = vmatprep.subr.mxu0 %v3252
    %4327 = vmatpush1.msra.mxu0 %v3251
    %4328 = vmatprep.subr.mxu0 %v3248
    %4329 = vmatpush1.msra.mxu0 %v3247
    %4330 = vmatprep.subr.mxu0 %v3244
    %4331 = vmatpush1.msra.mxu0 %v3243
    %4332 = vmatprep.subr.mxu0 %v3240
    %4333 = vmatpush1.msra.mxu0 %v3239
    %4334 = vmatprep.subr.mxu0 %v3236
    %4335 = vmatpush1.msra.mxu0 %v3235
    %4336 = vmatprep.subr.mxu0 %v3232
    %4337 = vmatpush1.msra.mxu0 %v3231
    %4338 = vmatprep.subr.mxu0 %v3228
    %4339 = vmatpush1.msra.mxu0 %v3227
    %4340 = vmatprep.subr.mxu0 %v3224
    %4341 = vmatpush1.msra.mxu0 %v3223
    %4342 = vmatprep.subr.mxu0 %v3220
    %4343 = vmatpush1.msra.mxu0 %v3219
    %4344 = vmatprep.subr.mxu0 %v3216
    %4345 = vmatpush1.msra.mxu0 %v3215
    %4346 = vmatprep.subr.mxu0 %v3212
    %4347 = vmatpush1.msra.mxu0 %v3211
    %4348 = vmatprep.subr.mxu0 %v3336
    %4349 = vmatpush2.msra.mxu0 %v3335
    %4350 = vmatprep.subr.mxu0 %v3332
    %4351 = vmatpush2.msra.mxu0 %v3331
    %4352 = vmatprep.subr.mxu0 %v3328
    %4353 = vmatpush2.msra.mxu0 %v3327
    %4354 = vmatprep.subr.mxu0 %v3324
    %4355 = vmatpush2.msra.mxu0 %v3323
    %4356 = vmatprep.subr.mxu0 %v3320
    %4357 = vmatpush2.msra.mxu0 %v3319
    %4358 = vmatprep.subr.mxu0 %v3316
    %4359 = vmatpush2.msra.mxu0 %v3315
    %4360 = vmatprep.subr.mxu0 %v3312
    %4361 = vmatpush2.msra.mxu0 %v3311
    %4362 = vmatprep.subr.mxu0 %v3308
    %4363 = vmatpush2.msra.mxu0 %v3307
    %4364 = vmatprep.subr.mxu0 %v3304
    %4365 = vmatpush2.msra.mxu0 %v3303
    %4366 = vmatprep.subr.mxu0 %v3300
    %4367 = vmatpush2.msra.mxu0 %v3299
    %4368 = vmatprep.subr.mxu0 %v3296
    %4369 = vmatpush2.msra.mxu0 %v3295
    %4370 = vmatprep.subr.mxu0 %v3292
    %4371 = vmatpush2.msra.mxu0 %v3291
    %4372 = vmatprep.subr.mxu0 %v3288
    %4373 = vmatpush2.msra.mxu0 %v3287
    %4374 = vmatprep.subr.mxu0 %v3284
    %4375 = vmatpush2.msra.mxu0 %v3283
    %4376 = vmatprep.subr.mxu0 %v3280
    %4377 = vmatpush2.msra.mxu0 %v3279
    %4378 = vmatprep.subr.mxu0 %v3276
    %4379 = vmatpush2.msra.mxu0 %v3275
    %4380 = vmatprep.mubr.f32.mxu0 %v4081
    %4381 = vmatmul.mubr.f32.gmra.mxu0 %v4315
    %v4382 = vpop.f32.mrf.mxu0
    %v4383 = vadd.f32 %v3344, %v4382
    %v4384 = vpop.f32.mrf.mxu0
    %v4385 = vadd.f32 %v3345, %v4384
    %4386 = vdwg.mxu0
    %4387 = vmatprep.subr.mxu0 %v3274
    %4388 = vmatpush1.msra.mxu0 %v3273
    %4389 = vmatprep.subr.mxu0 %v3270
    %4390 = vmatpush1.msra.mxu0 %v3269
    %4391 = vmatprep.subr.mxu0 %v3266
    %4392 = vmatpush1.msra.mxu0 %v3265
    %4393 = vmatprep.subr.mxu0 %v3262
    %4394 = vmatpush1.msra.mxu0 %v3261
    %4395 = vmatprep.subr.mxu0 %v3258
    %4396 = vmatpush1.msra.mxu0 %v3257
    %4397 = vmatprep.subr.mxu0 %v3254
    %4398 = vmatpush1.msra.mxu0 %v3253
    %4399 = vmatprep.subr.mxu0 %v3250
    %4400 = vmatpush1.msra.mxu0 %v3249
    %4401 = vmatprep.subr.mxu0 %v3246
    %4402 = vmatpush1.msra.mxu0 %v3245
    %4403 = vmatprep.subr.mxu0 %v3242
    %4404 = vmatpush1.msra.mxu0 %v3241
    %4405 = vmatprep.subr.mxu0 %v3238
    %4406 = vmatpush1.msra.mxu0 %v3237
    %4407 = vmatprep.subr.mxu0 %v3234
    %4408 = vmatpush1.msra.mxu0 %v3233
    %4409 = vmatprep.subr.mxu0 %v3230
    %4410 = vmatpush1.msra.mxu0 %v3229
    %4411 = vmatprep.subr.mxu0 %v3226
    %4412 = vmatpush1.msra.mxu0 %v3225
    %4413 = vmatprep.subr.mxu0 %v3222
    %4414 = vmatpush1.msra.mxu0 %v3221
    %4415 = vmatprep.subr.mxu0 %v3218
    %4416 = vmatpush1.msra.mxu0 %v3217
    %4417 = vmatprep.subr.mxu0 %v3214
    %4418 = vmatpush1.msra.mxu0 %v3213
    %4419 = vmatprep.subr.mxu0 %v3338
    %4420 = vmatpush2.msra.mxu0 %v3337
    %4421 = vmatprep.subr.mxu0 %v3334
    %4422 = vmatpush2.msra.mxu0 %v3333
    %4423 = vmatprep.subr.mxu0 %v3330
    %4424 = vmatpush2.msra.mxu0 %v3329
    %4425 = vmatprep.subr.mxu0 %v3326
    %4426 = vmatpush2.msra.mxu0 %v3325
    %4427 = vmatprep.subr.mxu0 %v3322
    %4428 = vmatpush2.msra.mxu0 %v3321
    %4429 = vmatprep.subr.mxu0 %v3318
    %4430 = vmatpush2.msra.mxu0 %v3317
    %4431 = vmatprep.subr.mxu0 %v3314
    %4432 = vmatpush2.msra.mxu0 %v3313
    %4433 = vmatprep.subr.mxu0 %v3310
    %4434 = vmatpush2.msra.mxu0 %v3309
    %4435 = vmatprep.subr.mxu0 %v3306
    %4436 = vmatpush2.msra.mxu0 %v3305
    %4437 = vmatprep.subr.mxu0 %v3302
    %4438 = vmatpush2.msra.mxu0 %v3301
    %4439 = vmatprep.subr.mxu0 %v3298
    %4440 = vmatpush2.msra.mxu0 %v3297
    %4441 = vmatprep.subr.mxu0 %v3294
    %4442 = vmatpush2.msra.mxu0 %v3293
    %4443 = vmatprep.subr.mxu0 %v3290
    %4444 = vmatpush2.msra.mxu0 %v3289
    %4445 = vmatprep.subr.mxu0 %v3286
    %4446 = vmatpush2.msra.mxu0 %v3285
    %4447 = vmatprep.subr.mxu0 %v3282
    %4448 = vmatpush2.msra.mxu0 %v3281
    %4449 = vmatprep.subr.mxu0 %v3278
    %4450 = vmatpush2.msra.mxu0 %v3277
    %4451 = vmatprep.mubr.f32.mxu0 %v4081
    %4452 = vmatmul.mubr.f32.gmra.mxu0 %v4315
    %v4453 = vpop.f32.mrf.mxu0
    %v4454 = vadd.f32 %v3346, %v4453
    %v4455 = vpop.f32.mrf.mxu0
    %v4456 = vadd.f32 %v3347, %v4455
    %4457 = vdwg.mxu0
    %v4458 = vxor.u32 %v4383, 2147483648
    %v4459 = vmul.f32 %v4458, 1.442695
    %v4460 = vpow.pop %v4459
    %v4461 = vadd.f32 %v4460, 1.0
    %v4462 = vrcp.pop %v4461
    %v4463 = vmul.f32 1.0, %v4462
    %v4464 = vxor.u32 %v4385, 2147483648
    %v4465 = vmul.f32 %v4464, 1.442695
    %v4466 = vpow.pop %v4465
    %v4467 = vadd.f32 %v4466, 1.0
    %v4468 = vrcp.pop %v4467
    %v4469 = vmul.f32 1.0, %v4468
    %v4470 = vmul.f32 %v4463, %v4456
    %v4471 = vadd.f32 %v4454, %v4470
    %v4472 = vtanh.pop %v4471
    %v4473 = vsub.f32 1.0, %v4469
    %v4474 = vmul.f32 %v4473, %v4472
    %v4475 = vmul.f32 %v4469, %v4081
    %v4476 = vadd.f32 %v4474, %v4475
    %4477 = vmatprep.subr.mxu0 0.0
    %4478 = vmatpush1.msra.mxu0 %v3363
    %4479 = vmatprep.subr.mxu0 0.0
    %4480 = vmatpush1.msra.mxu0 %v3362
    %4481 = vmatprep.subr.mxu0 0.0
    %4482 = vmatpush1.msra.mxu0 %v3361
    %4483 = vmatprep.subr.mxu0 0.0
    %4484 = vmatpush1.msra.mxu0 %v3360
    %4485 = vmatprep.subr.mxu0 0.0
    %4486 = vmatpush1.msra.mxu0 %v3359
    %4487 = vmatprep.subr.mxu0 0.0
    %4488 = vmatpush1.msra.mxu0 %v3358
    %4489 = vmatprep.subr.mxu0 0.0
    %4490 = vmatpush1.msra.mxu0 %v3357
    %4491 = vmatprep.subr.mxu0 0.0
    %4492 = vmatpush1.msra.mxu0 %v3356
    %4493 = vmatprep.subr.mxu0 0.0
    %4494 = vmatpush1.msra.mxu0 %v3355
    %4495 = vmatprep.subr.mxu0 0.0
    %4496 = vmatpush1.msra.mxu0 %v3354
    %4497 = vmatprep.subr.mxu0 0.0
    %4498 = vmatpush1.msra.mxu0 %v3353
    %4499 = vmatprep.subr.mxu0 0.0
    %4500 = vmatpush1.msra.mxu0 %v3352
    %4501 = vmatprep.subr.mxu0 0.0
    %4502 = vmatpush1.msra.mxu0 %v3351
    %4503 = vmatprep.subr.mxu0 0.0
    %4504 = vmatpush1.msra.mxu0 %v3350
    %4505 = vmatprep.subr.mxu0 0.0
    %4506 = vmatpush1.msra.mxu0 %v3349
    %4507 = vmatprep.subr.mxu0 0.0
    %4508 = vmatpush1.msra.mxu0 %v3348
    %4509 = vmatprep.subr.mxu0 0.0
    %4510 = vmatpush2.msra.mxu0 0.0
    %4511 = vmatprep.subr.mxu0 0.0
    %4512 = vmatpush2.msra.mxu0 0.0
    %4513 = vmatprep.subr.mxu0 0.0
    %4514 = vmatpush2.msra.mxu0 0.0
    %4515 = vmatprep.subr.mxu0 0.0
    %4516 = vmatpush2.msra.mxu0 0.0
    %4517 = vmatprep.subr.mxu0 0.0
    %4518 = vmatpush2.msra.mxu0 0.0
    %4519 = vmatprep.subr.mxu0 0.0
    %4520 = vmatpush2.msra.mxu0 0.0
    %4521 = vmatprep.subr.mxu0 0.0
    %4522 = vmatpush2.msra.mxu0 0.0
    %4523 = vmatprep.subr.mxu0 0.0
    %4524 = vmatpush2.msra.mxu0 0.0
    %4525 = vmatprep.subr.mxu0 0.0
    %4526 = vmatpush2.msra.mxu0 0.0
    %4527 = vmatprep.subr.mxu0 0.0
    %4528 = vmatpush2.msra.mxu0 0.0
    %4529 = vmatprep.subr.mxu0 0.0
    %4530 = vmatpush2.msra.mxu0 0.0
    %4531 = vmatprep.subr.mxu0 0.0
    %4532 = vmatpush2.msra.mxu0 0.0
    %4533 = vmatprep.subr.mxu0 0.0
    %4534 = vmatpush2.msra.mxu0 0.0
    %4535 = vmatprep.subr.mxu0 0.0
    %4536 = vmatpush2.msra.mxu0 0.0
    %4537 = vmatprep.subr.mxu0 0.0
    %4538 = vmatpush2.msra.mxu0 0.0
    %4539 = vmatprep.subr.mxu0 0.0
    %4540 = vmatpush2.msra.mxu0 0.0
    %4541 = vmatprep.mubr.f32.mxu0 0.0
    %4542 = vmatmul.mubr.f32.gmra.mxu0 %v4476
    %v4543 = vpop.f32.mrf.mxu0
    %v4544 = vadd.f32 %v3364, %v4543
    %v4545 = vpop.f32.mrf.mxu0
    %4546 = vdwg.mxu0
    %v4547 = vadd.f32 %v4544, %v4152
    %s4548 = scalar_lea.vmem %s10, 16
    %4549 = vst [vmem:[%s4548] sm:$0xff] %v4547
    %4550 = vmatprep.subr.mxu0 %v3143
    %4551 = vmatpush1.msra.mxu0 %v3142
    %4552 = vmatprep.subr.mxu0 %v3139
    %4553 = vmatpush1.msra.mxu0 %v3138
    %4554 = vmatprep.subr.mxu0 %v3135
    %4555 = vmatpush1.msra.mxu0 %v3134
    %4556 = vmatprep.subr.mxu0 %v3131
    %4557 = vmatpush1.msra.mxu0 %v3130
    %4558 = vmatprep.subr.mxu0 %v3127
    %4559 = vmatpush1.msra.mxu0 %v3126
    %4560 = vmatprep.subr.mxu0 %v3123
    %4561 = vmatpush1.msra.mxu0 %v3122
    %4562 = vmatprep.subr.mxu0 %v3119
    %4563 = vmatpush1.msra.mxu0 %v3118
    %4564 = vmatprep.subr.mxu0 %v3115
    %4565 = vmatpush1.msra.mxu0 %v3114
    %4566 = vmatprep.subr.mxu0 %v3111
    %4567 = vmatpush1.msra.mxu0 %v3110
    %4568 = vmatprep.subr.mxu0 %v3107
    %4569 = vmatpush1.msra.mxu0 %v3106
    %4570 = vmatprep.subr.mxu0 %v3103
    %4571 = vmatpush1.msra.mxu0 %v3102
    %4572 = vmatprep.subr.mxu0 %v3099
    %4573 = vmatpush1.msra.mxu0 %v3098
    %4574 = vmatprep.subr.mxu0 %v3095
    %4575 = vmatpush1.msra.mxu0 %v3094
    %4576 = vmatprep.subr.mxu0 %v3091
    %4577 = vmatpush1.msra.mxu0 %v3090
    %4578 = vmatprep.subr.mxu0 %v3087
    %4579 = vmatpush1.msra.mxu0 %v3086
    %4580 = vmatprep.subr.mxu0 %v3083
    %4581 = vmatpush1.msra.mxu0 %v3082
    %4582 = vmatprep.subr.mxu0 %v3207
    %4583 = vmatpush2.msra.mxu0 %v3206
    %4584 = vmatprep.subr.mxu0 %v3203
    %4585 = vmatpush2.msra.mxu0 %v3202
    %4586 = vmatprep.subr.mxu0 %v3199
    %4587 = vmatpush2.msra.mxu0 %v3198
    %4588 = vmatprep.subr.mxu0 %v3195
    %4589 = vmatpush2.msra.mxu0 %v3194
    %4590 = vmatprep.subr.mxu0 %v3191
    %4591 = vmatpush2.msra.mxu0 %v3190
    %4592 = vmatprep.subr.mxu0 %v3187
    %4593 = vmatpush2.msra.mxu0 %v3186
    %4594 = vmatprep.subr.mxu0 %v3183
    %4595 = vmatpush2.msra.mxu0 %v3182
    %4596 = vmatprep.subr.mxu0 %v3179
    %4597 = vmatpush2.msra.mxu0 %v3178
    %4598 = vmatprep.subr.mxu0 %v3175
    %4599 = vmatpush2.msra.mxu0 %v3174
    %4600 = vmatprep.subr.mxu0 %v3171
    %4601 = vmatpush2.msra.mxu0 %v3170
    %4602 = vmatprep.subr.mxu0 %v3167
    %4603 = vmatpush2.msra.mxu0 %v3166
    %4604 = vmatprep.subr.mxu0 %v3163
    %4605 = vmatpush2.msra.mxu0 %v3162
    %4606 = vmatprep.subr.mxu0 %v3159
    %4607 = vmatpush2.msra.mxu0 %v3158
    %4608 = vmatprep.subr.mxu0 %v3155
    %4609 = vmatpush2.msra.mxu0 %v3154
    %4610 = vmatprep.subr.mxu0 %v3151
    %4611 = vmatpush2.msra.mxu0 %v3150
    %4612 = vmatprep.subr.mxu0 %v3147
    %4613 = vmatpush2.msra.mxu0 %v3146
    %4614 = vmatprep.mubr.f32.mxu0 %v4315
    %4615 = vmatmul.mubr.f32.gmra.mxu0 %v4547
    %v4616 = vpop.f32.mrf.mxu0
    %v4617 = vadd.f32 %v3339, %v4616
    %v4618 = vpop.f32.mrf.mxu0
    %v4619 = vadd.f32 %v3340, %v4618
    %4620 = vdwg.mxu0
    %4621 = vmatprep.subr.mxu0 %v3145
    %4622 = vmatpush1.msra.mxu0 %v3144
    %4623 = vmatprep.subr.mxu0 %v3141
    %4624 = vmatpush1.msra.mxu0 %v3140
    %4625 = vmatprep.subr.mxu0 %v3137
    %4626 = vmatpush1.msra.mxu0 %v3136
    %4627 = vmatprep.subr.mxu0 %v3133
    %4628 = vmatpush1.msra.mxu0 %v3132
    %4629 = vmatprep.subr.mxu0 %v3129
    %4630 = vmatpush1.msra.mxu0 %v3128
    %4631 = vmatprep.subr.mxu0 %v3125
    %4632 = vmatpush1.msra.mxu0 %v3124
    %4633 = vmatprep.subr.mxu0 %v3121
    %4634 = vmatpush1.msra.mxu0 %v3120
    %4635 = vmatprep.subr.mxu0 %v3117
    %4636 = vmatpush1.msra.mxu0 %v3116
    %4637 = vmatprep.subr.mxu0 %v3113
    %4638 = vmatpush1.msra.mxu0 %v3112
    %4639 = vmatprep.subr.mxu0 %v3109
    %4640 = vmatpush1.msra.mxu0 %v3108
    %4641 = vmatprep.subr.mxu0 %v3105
    %4642 = vmatpush1.msra.mxu0 %v3104
    %4643 = vmatprep.subr.mxu0 %v3101
    %4644 = vmatpush1.msra.mxu0 %v3100
    %4645 = vmatprep.subr.mxu0 %v3097
    %4646 = vmatpush1.msra.mxu0 %v3096
    %4647 = vmatprep.subr.mxu0 %v3093
    %4648 = vmatpush1.msra.mxu0 %v3092
    %4649 = vmatprep.subr.mxu0 %v3089
    %4650 = vmatpush1.msra.mxu0 %v3088
    %4651 = vmatprep.subr.mxu0 %v3085
    %4652 = vmatpush1.msra.mxu0 %v3084
    %4653 = vmatprep.subr.mxu0 %v3209
    %4654 = vmatpush2.msra.mxu0 %v3208
    %4655 = vmatprep.subr.mxu0 %v3205
    %4656 = vmatpush2.msra.mxu0 %v3204
    %4657 = vmatprep.subr.mxu0 %v3201
    %4658 = vmatpush2.msra.mxu0 %v3200
    %4659 = vmatprep.subr.mxu0 %v3197
    %4660 = vmatpush2.msra.mxu0 %v3196
    %4661 = vmatprep.subr.mxu0 %v3193
    %4662 = vmatpush2.msra.mxu0 %v3192
    %4663 = vmatprep.subr.mxu0 %v3189
    %4664 = vmatpush2.msra.mxu0 %v3188
    %4665 = vmatprep.subr.mxu0 %v3185
    %4666 = vmatpush2.msra.mxu0 %v3184
    %4667 = vmatprep.subr.mxu0 %v3181
    %4668 = vmatpush2.msra.mxu0 %v3180
    %4669 = vmatprep.subr.mxu0 %v3177
    %4670 = vmatpush2.msra.mxu0 %v3176
    %4671 = vmatprep.subr.mxu0 %v3173
    %4672 = vmatpush2.msra.mxu0 %v3172
    %4673 = vmatprep.subr.mxu0 %v3169
    %4674 = vmatpush2.msra.mxu0 %v3168
    %4675 = vmatprep.subr.mxu0 %v3165
    %4676 = vmatpush2.msra.mxu0 %v3164
    %4677 = vmatprep.subr.mxu0 %v3161
    %4678 = vmatpush2.msra.mxu0 %v3160
    %4679 = vmatprep.subr.mxu0 %v3157
    %4680 = vmatpush2.msra.mxu0 %v3156
    %4681 = vmatprep.subr.mxu0 %v3153
    %4682 = vmatpush2.msra.mxu0 %v3152
    %4683 = vmatprep.subr.mxu0 %v3149
    %4684 = vmatpush2.msra.mxu0 %v3148
    %4685 = vmatprep.mubr.f32.mxu0 %v4315
    %4686 = vmatmul.mubr.f32.gmra.mxu0 %v4547
    %v4687 = vpop.f32.mrf.mxu0
    %v4688 = vadd.f32 %v3341, %v4687
    %v4689 = vpop.f32.mrf.mxu0
    %v4690 = vadd.f32 %v3342, %v4689
    %4691 = vdwg.mxu0
    %v4692 = vxor.u32 %v4617, 2147483648
    %v4693 = vmul.f32 %v4692, 1.442695
    %v4694 = vpow.pop %v4693
    %v4695 = vadd.f32 %v4694, 1.0
    %v4696 = vrcp.pop %v4695
    %v4697 = vmul.f32 1.0, %v4696
    %v4698 = vxor.u32 %v4619, 2147483648
    %v4699 = vmul.f32 %v4698, 1.442695
    %v4700 = vpow.pop %v4699
    %v4701 = vadd.f32 %v4700, 1.0
    %v4702 = vrcp.pop %v4701
    %v4703 = vmul.f32 1.0, %v4702
    %v4704 = vmul.f32 %v4697, %v4690
    %v4705 = vadd.f32 %v4688, %v4704
    %v4706 = vtanh.pop %v4705
    %v4707 = vsub.f32 1.0, %v4703
    %v4708 = vmul.f32 %v4707, %v4706
    %v4709 = vmul.f32 %v4703, %v4315
    %v4710 = vadd.f32 %v4708, %v4709
    %4711 = vmatprep.subr.mxu0 %v3272
    %4712 = vmatpush1.msra.mxu0 %v3271
    %4713 = vmatprep.subr.mxu0 %v3268
    %4714 = vmatpush1.msra.mxu0 %v3267
    %4715 = vmatprep.subr.mxu0 %v3264
    %4716 = vmatpush1.msra.mxu0 %v3263
    %4717 = vmatprep.subr.mxu0 %v3260
    %4718 = vmatpush1.msra.mxu0 %v3259
    %4719 = vmatprep.subr.mxu0 %v3256
    %4720 = vmatpush1.msra.mxu0 %v3255
    %4721 = vmatprep.subr.mxu0 %v3252
    %4722 = vmatpush1.msra.mxu0 %v3251
    %4723 = vmatprep.subr.mxu0 %v3248
    %4724 = vmatpush1.msra.mxu0 %v3247
    %4725 = vmatprep.subr.mxu0 %v3244
    %4726 = vmatpush1.msra.mxu0 %v3243
    %4727 = vmatprep.subr.mxu0 %v3240
    %4728 = vmatpush1.msra.mxu0 %v3239
    %4729 = vmatprep.subr.mxu0 %v3236
    %4730 = vmatpush1.msra.mxu0 %v3235
    %4731 = vmatprep.subr.mxu0 %v3232
    %4732 = vmatpush1.msra.mxu0 %v3231
    %4733 = vmatprep.subr.mxu0 %v3228
    %4734 = vmatpush1.msra.mxu0 %v3227
    %4735 = vmatprep.subr.mxu0 %v3224
    %4736 = vmatpush1.msra.mxu0 %v3223
    %4737 = vmatprep.subr.mxu0 %v3220
    %4738 = vmatpush1.msra.mxu0 %v3219
    %4739 = vmatprep.subr.mxu0 %v3216
    %4740 = vmatpush1.msra.mxu0 %v3215
    %4741 = vmatprep.subr.mxu0 %v3212
    %4742 = vmatpush1.msra.mxu0 %v3211
    %4743 = vmatprep.subr.mxu0 %v3336
    %4744 = vmatpush2.msra.mxu0 %v3335
    %4745 = vmatprep.subr.mxu0 %v3332
    %4746 = vmatpush2.msra.mxu0 %v3331
    %4747 = vmatprep.subr.mxu0 %v3328
    %4748 = vmatpush2.msra.mxu0 %v3327
    %4749 = vmatprep.subr.mxu0 %v3324
    %4750 = vmatpush2.msra.mxu0 %v3323
    %4751 = vmatprep.subr.mxu0 %v3320
    %4752 = vmatpush2.msra.mxu0 %v3319
    %4753 = vmatprep.subr.mxu0 %v3316
    %4754 = vmatpush2.msra.mxu0 %v3315
    %4755 = vmatprep.subr.mxu0 %v3312
    %4756 = vmatpush2.msra.mxu0 %v3311
    %4757 = vmatprep.subr.mxu0 %v3308
    %4758 = vmatpush2.msra.mxu0 %v3307
    %4759 = vmatprep.subr.mxu0 %v3304
    %4760 = vmatpush2.msra.mxu0 %v3303
    %4761 = vmatprep.subr.mxu0 %v3300
    %4762 = vmatpush2.msra.mxu0 %v3299
    %4763 = vmatprep.subr.mxu0 %v3296
    %4764 = vmatpush2.msra.mxu0 %v3295
    %4765 = vmatprep.subr.mxu0 %v3292
    %4766 = vmatpush2.msra.mxu0 %v3291
    %4767 = vmatprep.subr.mxu0 %v3288
    %4768 = vmatpush2.msra.mxu0 %v3287
    %4769 = vmatprep.subr.mxu0 %v3284
    %4770 = vmatpush2.msra.mxu0 %v3283
    %4771 = vmatprep.subr.mxu0 %v3280
    %4772 = vmatpush2.msra.mxu0 %v3279
    %4773 = vmatprep.subr.mxu0 %v3276
    %4774 = vmatpush2.msra.mxu0 %v3275
    %4775 = vmatprep.mubr.f32.mxu0 %v4476
    %4776 = vmatmul.mubr.f32.gmra.mxu0 %v4710
    %v4777 = vpop.f32.mrf.mxu0
    %v4778 = vadd.f32 %v3344, %v4777
    %v4779 = vpop.f32.mrf.mxu0
    %v4780 = vadd.f32 %v3345, %v4779
    %4781 = vdwg.mxu0
    %4782 = vmatprep.subr.mxu0 %v3274
    %4783 = vmatpush1.msra.mxu0 %v3273
    %4784 = vmatprep.subr.mxu0 %v3270
    %4785 = vmatpush1.msra.mxu0 %v3269
    %4786 = vmatprep.subr.mxu0 %v3266
    %4787 = vmatpush1.msra.mxu0 %v3265
    %4788 = vmatprep.subr.mxu0 %v3262
    %4789 = vmatpush1.msra.mxu0 %v3261
    %4790 = vmatprep.subr.mxu0 %v3258
    %4791 = vmatpush1.msra.mxu0 %v3257
    %4792 = vmatprep.subr.mxu0 %v3254
    %4793 = vmatpush1.msra.mxu0 %v3253
    %4794 = vmatprep.subr.mxu0 %v3250
    %4795 = vmatpush1.msra.mxu0 %v3249
    %4796 = vmatprep.subr.mxu0 %v3246
    %4797 = vmatpush1.msra.mxu0 %v3245
    %4798 = vmatprep.subr.mxu0 %v3242
    %4799 = vmatpush1.msra.mxu0 %v3241
    %4800 = vmatprep.subr.mxu0 %v3238
    %4801 = vmatpush1.msra.mxu0 %v3237
    %4802 = vmatprep.subr.mxu0 %v3234
    %4803 = vmatpush1.msra.mxu0 %v3233
    %4804 = vmatprep.subr.mxu0 %v3230
    %4805 = vmatpush1.msra.mxu0 %v3229
    %4806 = vmatprep.subr.mxu0 %v3226
    %4807 = vmatpush1.msra.mxu0 %v3225
    %4808 = vmatprep.subr.mxu0 %v3222
    %4809 = vmatpush1.msra.mxu0 %v3221
    %4810 = vmatprep.subr.mxu0 %v3218
    %4811 = vmatpush1.msra.mxu0 %v3217
    %4812 = vmatprep.subr.mxu0 %v3214
    %4813 = vmatpush1.msra.mxu0 %v3213
    %4814 = vmatprep.subr.mxu0 %v3338
    %4815 = vmatpush2.msra.mxu0 %v3337
    %4816 = vmatprep.subr.mxu0 %v3334
    %4817 = vmatpush2.msra.mxu0 %v3333
    %4818 = vmatprep.subr.mxu0 %v3330
    %4819 = vmatpush2.msra.mxu0 %v3329
    %4820 = vmatprep.subr.mxu0 %v3326
    %4821 = vmatpush2.msra.mxu0 %v3325
    %4822 = vmatprep.subr.mxu0 %v3322
    %4823 = vmatpush2.msra.mxu0 %v3321
    %4824 = vmatprep.subr.mxu0 %v3318
    %4825 = vmatpush2.msra.mxu0 %v3317
    %4826 = vmatprep.subr.mxu0 %v3314
    %4827 = vmatpush2.msra.mxu0 %v3313
    %4828 = vmatprep.subr.mxu0 %v3310
    %4829 = vmatpush2.msra.mxu0 %v3309
    %4830 = vmatprep.subr.mxu0 %v3306
    %4831 = vmatpush2.msra.mxu0 %v3305
    %4832 = vmatprep.subr.mxu0 %v3302
    %4833 = vmatpush2.msra.mxu0 %v3301
    %4834 = vmatprep.subr.mxu0 %v3298
    %4835 = vmatpush2.msra.mxu0 %v3297
    %4836 = vmatprep.subr.mxu0 %v3294
    %4837 = vmatpush2.msra.mxu0 %v3293
    %4838 = vmatprep.subr.mxu0 %v3290
    %4839 = vmatpush2.msra.mxu0 %v3289
    %4840 = vmatprep.subr.mxu0 %v3286
    %4841 = vmatpush2.msra.mxu0 %v3285
    %4842 = vmatprep.subr.mxu0 %v3282
    %4843 = vmatpush2.msra.mxu0 %v3281
    %4844 = vmatprep.subr.mxu0 %v3278
    %4845 = vmatpush2.msra.mxu0 %v3277
    %4846 = vmatprep.mubr.f32.mxu0 %v4476
    %4847 = vmatmul.mubr.f32.gmra.mxu0 %v4710
    %v4848 = vpop.f32.mrf.mxu0
    %v4849 = vadd.f32 %v3346, %v4848
    %v4850 = vpop.f32.mrf.mxu0
    %v4851 = vadd.f32 %v3347, %v4850
    %4852 = vdwg.mxu0
    %v4853 = vxor.u32 %v4778, 2147483648
    %v4854 = vmul.f32 %v4853, 1.442695
    %v4855 = vpow.pop %v4854
    %v4856 = vadd.f32 %v4855, 1.0
    %v4857 = vrcp.pop %v4856
    %v4858 = vmul.f32 1.0, %v4857
    %v4859 = vxor.u32 %v4780, 2147483648
    %v4860 = vmul.f32 %v4859, 1.442695
    %v4861 = vpow.pop %v4860
    %v4862 = vadd.f32 %v4861, 1.0
    %v4863 = vrcp.pop %v4862
    %v4864 = vmul.f32 1.0, %v4863
    %v4865 = vmul.f32 %v4858, %v4851
    %v4866 = vadd.f32 %v4849, %v4865
    %v4867 = vtanh.pop %v4866
    %v4868 = vsub.f32 1.0, %v4864
    %v4869 = vmul.f32 %v4868, %v4867
    %v4870 = vmul.f32 %v4864, %v4476
    %v4871 = vadd.f32 %v4869, %v4870
    %4872 = vmatprep.subr.mxu0 0.0
    %4873 = vmatpush1.msra.mxu0 %v3363
    %4874 = vmatprep.subr.mxu0 0.0
    %4875 = vmatpush1.msra.mxu0 %v3362
    %4876 = vmatprep.subr.mxu0 0.0
    %4877 = vmatpush1.msra.mxu0 %v3361
    %4878 = vmatprep.subr.mxu0 0.0
    %4879 = vmatpush1.msra.mxu0 %v3360
    %4880 = vmatprep.subr.mxu0 0.0
    %4881 = vmatpush1.msra.mxu0 %v3359
    %4882 = vmatprep.subr.mxu0 0.0
    %4883 = vmatpush1.msra.mxu0 %v3358
    %4884 = vmatprep.subr.mxu0 0.0
    %4885 = vmatpush1.msra.mxu0 %v3357
    %4886 = vmatprep.subr.mxu0 0.0
    %4887 = vmatpush1.msra.mxu0 %v3356
    %4888 = vmatprep.subr.mxu0 0.0
    %4889 = vmatpush1.msra.mxu0 %v3355
    %4890 = vmatprep.subr.mxu0 0.0
    %4891 = vmatpush1.msra.mxu0 %v3354
    %4892 = vmatprep.subr.mxu0 0.0
    %4893 = vmatpush1.msra.mxu0 %v3353
    %4894 = vmatprep.subr.mxu0 0.0
    %4895 = vmatpush1.msra.mxu0 %v3352
    %4896 = vmatprep.subr.mxu0 0.0
    %4897 = vmatpush1.msra.mxu0 %v3351
    %4898 = vmatprep.subr.mxu0 0.0
    %4899 = vmatpush1.msra.mxu0 %v3350
    %4900 = vmatprep.subr.mxu0 0.0
    %4901 = vmatpush1.msra.mxu0 %v3349
    %4902 = vmatprep.subr.mxu0 0.0
    %4903 = vmatpush1.msra.mxu0 %v3348
    %4904 = vmatprep.subr.mxu0 0.0
    %4905 = vmatpush2.msra.mxu0 0.0
    %4906 = vmatprep.subr.mxu0 0.0
    %4907 = vmatpush2.msra.mxu0 0.0
    %4908 = vmatprep.subr.mxu0 0.0
    %4909 = vmatpush2.msra.mxu0 0.0
    %4910 = vmatprep.subr.mxu0 0.0
    %4911 = vmatpush2.msra.mxu0 0.0
    %4912 = vmatprep.subr.mxu0 0.0
    %4913 = vmatpush2.msra.mxu0 0.0
    %4914 = vmatprep.subr.mxu0 0.0
    %4915 = vmatpush2.msra.mxu0 0.0
    %4916 = vmatprep.subr.mxu0 0.0
    %4917 = vmatpush2.msra.mxu0 0.0
    %4918 = vmatprep.subr.mxu0 0.0
    %4919 = vmatpush2.msra.mxu0 0.0
    %4920 = vmatprep.subr.mxu0 0.0
    %4921 = vmatpush2.msra.mxu0 0.0
    %4922 = vmatprep.subr.mxu0 0.0
    %4923 = vmatpush2.msra.mxu0 0.0
    %4924 = vmatprep.subr.mxu0 0.0
    %4925 = vmatpush2.msra.mxu0 0.0
    %4926 = vmatprep.subr.mxu0 0.0
    %4927 = vmatpush2.msra.mxu0 0.0
    %4928 = vmatprep.subr.mxu0 0.0
    %4929 = vmatpush2.msra.mxu0 0.0
    %4930 = vmatprep.subr.mxu0 0.0
    %4931 = vmatpush2.msra.mxu0 0.0
    %4932 = vmatprep.subr.mxu0 0.0
    %4933 = vmatpush2.msra.mxu0 0.0
    %4934 = vmatprep.subr.mxu0 0.0
    %4935 = vmatpush2.msra.mxu0 0.0
    %4936 = vmatprep.mubr.f32.mxu0 0.0
    %4937 = vmatmul.mubr.f32.gmra.mxu0 %v4871
    %v4938 = vpop.f32.mrf.mxu0
    %v4939 = vadd.f32 %v3364, %v4938
    %v4940 = vpop.f32.mrf.mxu0
    %4941 = vdwg.mxu0
    %v4942 = vadd.f32 %v4939, %v4547
    %s4943 = scalar_lea.vmem %s10, 24
    %4944 = vst [vmem:[%s4943] sm:$0xff] %v4942
    // Predicated region
    $region54: #{seq2seq_forward.1} parent=1 // pred_check
      _
    $region55: #{seq2seq_forward.1} parent=1 // pred_check_branch
      %4946 = sbr.rel (0) target = $region57
    $region56: #{seq2seq_forward.1} parent=1 // pred_region
      _
    $region57: #{seq2seq_forward.1} parent=1 // pred_fallthru
      _
    // Predicated region
    $region58: #{seq2seq_forward.1} parent=1 // pred_check
      _
    $region59: #{seq2seq_forward.1} parent=1 // pred_check_branch
      %4948 = sbr.rel (0) target = $region61
    $region60: #{seq2seq_forward.1} parent=1 // pred_region
      _
    $region61: #{seq2seq_forward.1} parent=1 // pred_fallthru
      _
    %4949 = vsyncpa [#allocation3], 1
    %4950 = vsyncpa [#allocation5], 1

</llo_original>
